<compile_context>
chip_gen: v7x
topology: tpu7x:2x2x1
jax: 0.10.0
libtpu: 0.0.40
codegen_flags: <defaults>
</compile_context>

<pallas_src>
from functools import partial

import jax
import jax.numpy as jnp
from jax.experimental import pallas as pl
from jax.experimental.pallas import tpu as pltpu

# Layer widths: 2 -> 128 -> 256 -> 512 -> 512 -> 512 -> 512 -> 256 -> 128 -> 3
DIMS = [2, 128, 256, 512, 512, 512, 512, 256, 128, 3]
N_LAYERS = len(DIMS) - 1  # 9 Linear layers


def _mlp_kernel(x_ref, *refs, act_dtype):
    """Fused MLP over one batch tile.

    refs = (w0, b0, w1, b1, ..., w8, b8, o_ref)
      w0/b0            : float32  (layer 0 runs on the VPU in f32)
      w1..w8           : bfloat16 [F_in, F_out]  (MXU operands, resident in VMEM)
      b1..b7           : act_dtype (bf16 on v6e/v7x, f32 on v5e)
      b8               : float32  (final sigmoid epilogue stays f32)
    """
    o_ref = refs[-1]
    p = refs[:-1]

    # ---- Layer 0: 2 -> 128 as two f32 broadcast FMAs on the VPU -----------
    # Avoids a degenerate K=2 bf16 MXU matmul and preserves full coordinate
    # precision (important for coordinate-MLP output quality).
    x = x_ref[...]                                   # (tile_m, 2) f32
    w0 = p[0][...]                                   # (2, 128)    f32
    b0 = p[1][...]                                   # (1, 128)    f32
    h = x[:, 0:1] * w0[0:1, :] + x[:, 1:2] * w0[1:2, :] + b0
    h = jnp.maximum(h, 0.0).astype(act_dtype)        # ReLU, then epilogue dtype

    # ---- Layers 1..8: bf16 MXU matmul + f32 accumulation -------------------
    for layer in range(1, N_LAYERS):
        w = p[2 * layer][...]                        # (F_in, F_out) bf16
        b = p[2 * layer + 1][...]                    # (1, F_out)
        acc = jnp.dot(h.astype(jnp.bfloat16), w,
                      preferred_element_type=jnp.float32)
        if layer < N_LAYERS - 1:
            if act_dtype == jnp.bfloat16:
                # bf16 VPU epilogue (v6e/v7x): halves VALU work, keeps the
                # activation in bf16 so the next matmul needs no extra cast.
                h = jnp.maximum(acc.astype(jnp.bfloat16) + b, 0)
            else:
                # f32 epilogue (v5e: no bf16 VPU; hidden under MXU slack).
                h = jnp.maximum(acc + b, 0.0)
        else:
            # Final 128 -> 3 layer: bias + sigmoid in f32 (EUP exp).
            h = jax.nn.sigmoid(acc + b)

    # Output last dim is 3 (< 128 lanes) -> masked stores; tiny, low priority.
    # TODO(synk): lane-dense output layout only if stores ever show in profiles.
    o_ref[...] = h.astype(o_ref.dtype)


def default_bf16_epilogue():
    """bf16 bias/ReLU epilogue only on chips with bf16 VPUs (v6e / v7x)."""
    try:
        kind = jax.devices()[0].device_kind.lower()
    except Exception:
        return True
    return not any(tag in kind for tag in ("v2", "v3", "v4", "v5"))


def prepare_params(weights, biases, *, bf16_epilogue):
    """One-time cast/layout of parameters (hoisted out of the forward call).

    weights[i]: [DIMS[i], DIMS[i+1]] f32 (torch nn.Linear.weight TRANSPOSED),
    biases[i]:  [1, DIMS[i+1]] f32.
    """
    act_dt = jnp.bfloat16 if bf16_epilogue else jnp.float32
    params = []
    for layer in range(N_LAYERS):
        w, b = weights[layer], biases[layer]
        assert w.shape == (DIMS[layer], DIMS[layer + 1])
        if layer == 0:
            params += [w.astype(jnp.float32), b.astype(jnp.float32)]
        elif layer == N_LAYERS - 1:
            params += [w.astype(jnp.bfloat16), b.astype(jnp.float32)]
        else:
            params += [w.astype(jnp.bfloat16), b.astype(act_dt)]
    return tuple(params)


def _pick_tile_m(n):
    """Biggest MXU-friendly tile that still leaves >= 2 grid steps (v7x megacore)."""
    half = -(-n // 2)                  # ceil(n / 2)
    tile = -(-half // 256) * 256       # round up to a multiple of 256
    return max(256, min(1024, tile))


def image_mlp_forward(x, params, *, bf16_epilogue, tile_m=None):
    """x: [N, 2] f32; params from prepare_params(). Returns [N, 3] f32."""
    n, f_in = x.shape
    assert f_in == DIMS[0]
    if tile_m is None:
        tile_m = _pick_tile_m(n)

    # Ragged batch: pad to a multiple of tile_m so tile size is never dictated by N.
    num_tiles = pl.cdiv(n, tile_m)
    n_pad = num_tiles * tile_m
    if n_pad != n:
        x = jnp.pad(x, ((0, n_pad - n), (0, 0)))

    # Grid-invariant index maps: all weights/biases (~2.2 MiB bf16) stay
    # resident in VMEM across the whole batch grid.
    # TODO(synk): pipeline_mode=pl.Buffered(1) on these specs if VMEM ever
    # tightens on v7x; redundant second buffers are only ~2.2 MiB today.
    in_specs = [pl.BlockSpec((tile_m, DIMS[0]), lambda i: (i, 0))]
    for prm in params:
        in_specs.append(pl.BlockSpec(prm.shape, lambda i: (0, 0)))
    out_spec = pl.BlockSpec((tile_m, DIMS[-1]), lambda i: (i, 0))

    act_dtype = jnp.bfloat16 if bf16_epilogue else jnp.float32
    vmem_limit = (32 << 20) if tile_m <= 512 else (48 << 20)

    out = pl.pallas_call(
        partial(_mlp_kernel, act_dtype=act_dtype),
        out_shape=jax.ShapeDtypeStruct((n_pad, DIMS[-1]), jnp.float32),
        grid_spec=pltpu.PrefetchScalarGridSpec(
            num_scalar_prefetch=0,
            grid=(num_tiles,),
            in_specs=in_specs,
            out_specs=out_spec,
        ),
        compiler_params=pltpu.CompilerParams(
            dimension_semantics=("parallel",),   # batch tiles split across TCs
            vmem_limit_bytes=vmem_limit,
        ),
    )(x, *params)
    return out[:n]


def init_params(key):
    """Deterministic synthetic parameters (PyTorch nn.Linear-style init), f32."""
    weights, biases = [], []
    for layer in range(N_LAYERS):
        fan_in, fan_out = DIMS[layer], DIMS[layer + 1]
        key, wk, bk = jax.random.split(key, 3)
        bound = 1.0 / jnp.sqrt(jnp.float32(fan_in))
        weights.append(jax.random.uniform(wk, (fan_in, fan_out), jnp.float32, -bound, bound))
        biases.append(jax.random.uniform(bk, (1, fan_out), jnp.float32, -bound, bound))
    return weights, biases


def reference_forward(x, weights, biases, *, bf16_epilogue):
    """Pure-JAX reference applying the exact same per-layer dtype choices."""
    act_dt = jnp.bfloat16 if bf16_epilogue else jnp.float32
    h = (x[:, 0:1] * weights[0][0:1, :] + x[:, 1:2] * weights[0][1:2, :]
         + biases[0])
    h = jnp.maximum(h, 0.0).astype(act_dt)
    for layer in range(1, N_LAYERS):
        w = weights[layer].astype(jnp.bfloat16)
        acc = jnp.dot(h.astype(jnp.bfloat16), w,
                      preferred_element_type=jnp.float32)
        if layer < N_LAYERS - 1:
            if bf16_epilogue:
                h = jnp.maximum(acc.astype(jnp.bfloat16)
                                + biases[layer].astype(jnp.bfloat16), 0)
            else:
                h = jnp.maximum(acc + biases[layer], 0.0)
        else:
            h = jax.nn.sigmoid(acc + biases[layer])
    return h


if __name__ == "__main__":
    key = jax.random.PRNGKey(0)
    key, xk = jax.random.split(key)

    n = 512  # 512 (x, y) coordinate pairs -> 2 grid tiles of 256 rows
    x = jax.random.normal(xk, (n, DIMS[0]), jnp.float32)

    weights, biases = init_params(key)
    bf16_epi = default_bf16_epilogue()
    params = prepare_params(weights, biases, bf16_epilogue=bf16_epi)  # cast ONCE

    out = image_mlp_forward(x, params, bf16_epilogue=bf16_epi)
    out = jax.block_until_ready(out)

    ref = reference_forward(x, weights, biases, bf16_epilogue=bf16_epi)
    assert out.shape == (n, DIMS[-1])
    assert bool(jnp.all(jnp.isfinite(out)))
    tol = 2e-2 if bf16_epi else 1e-3
    assert jnp.allclose(out, ref, atol=tol, rtol=tol), float(
        jnp.max(jnp.abs(out - ref)))

    print("KERNEL_OK")
</pallas_src>

<mosaic_0001>
module attributes {stable_mosaic.version = 11 : i64} {
  func.func @_mlp_kernel(%arg0: i32, %arg1: memref<256x2xf32, #tpu.memory_space<vmem>>, %arg2: memref<2x128xf32, #tpu.memory_space<vmem>>, %arg3: memref<1x128xf32, #tpu.memory_space<vmem>>, %arg4: memref<128x256xbf16, #tpu.memory_space<vmem>>, %arg5: memref<1x256xbf16, #tpu.memory_space<vmem>>, %arg6: memref<256x512xbf16, #tpu.memory_space<vmem>>, %arg7: memref<1x512xbf16, #tpu.memory_space<vmem>>, %arg8: memref<512x512xbf16, #tpu.memory_space<vmem>>, %arg9: memref<1x512xbf16, #tpu.memory_space<vmem>>, %arg10: memref<512x512xbf16, #tpu.memory_space<vmem>>, %arg11: memref<1x512xbf16, #tpu.memory_space<vmem>>, %arg12: memref<512x512xbf16, #tpu.memory_space<vmem>>, %arg13: memref<1x512xbf16, #tpu.memory_space<vmem>>, %arg14: memref<512x256xbf16, #tpu.memory_space<vmem>>, %arg15: memref<1x256xbf16, #tpu.memory_space<vmem>>, %arg16: memref<256x128xbf16, #tpu.memory_space<vmem>>, %arg17: memref<1x128xbf16, #tpu.memory_space<vmem>>, %arg18: memref<128x3xbf16, #tpu.memory_space<vmem>>, %arg19: memref<1x3xf32, #tpu.memory_space<vmem>>, %arg20: memref<256x3xf32, #tpu.memory_space<vmem>>) attributes {dimension_semantics = [#tpu.dimension_semantics<parallel>], iteration_bounds = array<i64: 2>, scalar_prefetch = 0 : i64, scratch_operands = 0 : i64, tpu.core_type = #tpu.core_type<tc>, window_params = [{transform_indices = @transform_0, window_bounds = array<i64: 256, 2>}, {pipeline_mode = #tpu.pipeline_mode<synchronous>, transform_indices = @transform_1, window_bounds = array<i64: 2, 128>}, {pipeline_mode = #tpu.pipeline_mode<synchronous>, transform_indices = @transform_2, window_bounds = array<i64: 1, 128>}, {pipeline_mode = #tpu.pipeline_mode<synchronous>, transform_indices = @transform_3, window_bounds = array<i64: 128, 256>}, {pipeline_mode = #tpu.pipeline_mode<synchronous>, transform_indices = @transform_4, window_bounds = array<i64: 1, 256>}, {pipeline_mode = #tpu.pipeline_mode<synchronous>, transform_indices = @transform_5, window_bounds = array<i64: 256, 512>}, {pipeline_mode = #tpu.pipeline_mode<synchronous>, transform_indices = @transform_6, window_bounds = array<i64: 1, 512>}, {pipeline_mode = #tpu.pipeline_mode<synchronous>, transform_indices = @transform_7, window_bounds = array<i64: 512, 512>}, {pipeline_mode = #tpu.pipeline_mode<synchronous>, transform_indices = @transform_8, window_bounds = array<i64: 1, 512>}, {pipeline_mode = #tpu.pipeline_mode<synchronous>, transform_indices = @transform_9, window_bounds = array<i64: 512, 512>}, {pipeline_mode = #tpu.pipeline_mode<synchronous>, transform_indices = @transform_10, window_bounds = array<i64: 1, 512>}, {pipeline_mode = #tpu.pipeline_mode<synchronous>, transform_indices = @transform_11, window_bounds = array<i64: 512, 512>}, {pipeline_mode = #tpu.pipeline_mode<synchronous>, transform_indices = @transform_12, window_bounds = array<i64: 1, 512>}, {pipeline_mode = #tpu.pipeline_mode<synchronous>, transform_indices = @transform_13, window_bounds = array<i64: 512, 256>}, {pipeline_mode = #tpu.pipeline_mode<synchronous>, transform_indices = @transform_14, window_bounds = array<i64: 1, 256>}, {pipeline_mode = #tpu.pipeline_mode<synchronous>, transform_indices = @transform_15, window_bounds = array<i64: 256, 128>}, {pipeline_mode = #tpu.pipeline_mode<synchronous>, transform_indices = @transform_16, window_bounds = array<i64: 1, 128>}, {pipeline_mode = #tpu.pipeline_mode<synchronous>, transform_indices = @transform_17, window_bounds = array<i64: 128, 3>}, {pipeline_mode = #tpu.pipeline_mode<synchronous>, transform_indices = @transform_18, window_bounds = array<i64: 1, 3>}, {transform_indices = @transform_19, window_bounds = array<i64: 256, 3>}]} {
    %c0 = arith.constant 0 : index
    %c0_0 = arith.constant 0 : index
    %0 = vector.load %arg1[%c0, %c0_0] : memref<256x2xf32, #tpu.memory_space<vmem>>, vector<256x2xf32>
    %c0_1 = arith.constant 0 : index
    %c0_2 = arith.constant 0 : index
    %1 = vector.load %arg2[%c0_1, %c0_2] : memref<2x128xf32, #tpu.memory_space<vmem>>, vector<2x128xf32>
    %c0_3 = arith.constant 0 : index
    %c0_4 = arith.constant 0 : index
    %2 = vector.load %arg3[%c0_3, %c0_4] : memref<1x128xf32, #tpu.memory_space<vmem>>, vector<1x128xf32>
    %3 = vector.extract_strided_slice %0 {offsets = [0, 0], sizes = [256, 1], strides = [1, 1]} : vector<256x2xf32> to vector<256x1xf32>
    %4 = vector.extract_strided_slice %1 {offsets = [0, 0], sizes = [1, 128], strides = [1, 1]} : vector<2x128xf32> to vector<1x128xf32>
    %5 = vector.broadcast %3 : vector<256x1xf32> to vector<256x128xf32>
    %6 = vector.broadcast %4 : vector<1x128xf32> to vector<256x128xf32>
    %7 = arith.mulf %5, %6 : vector<256x128xf32>
    %8 = vector.extract_strided_slice %0 {offsets = [0, 1], sizes = [256, 1], strides = [1, 1]} : vector<256x2xf32> to vector<256x1xf32>
    %9 = vector.extract_strided_slice %1 {offsets = [1, 0], sizes = [1, 128], strides = [1, 1]} : vector<2x128xf32> to vector<1x128xf32>
    %10 = vector.broadcast %8 : vector<256x1xf32> to vector<256x128xf32>
    %11 = vector.broadcast %9 : vector<1x128xf32> to vector<256x128xf32>
    %12 = arith.mulf %10, %11 : vector<256x128xf32>
    %13 = arith.addf %7, %12 : vector<256x128xf32>
    %14 = vector.broadcast %2 : vector<1x128xf32> to vector<256x128xf32>
    %15 = arith.addf %13, %14 : vector<256x128xf32>
    %cst = arith.constant 0.000000e+00 : f32
    %16 = vector.broadcast %cst : f32 to vector<256x128xf32>
    %17 = arith.maximumf %15, %16 : vector<256x128xf32>
    %18 = arith.truncf %17 : vector<256x128xf32> to vector<256x128xbf16>
    %c0_5 = arith.constant 0 : index
    %c0_6 = arith.constant 0 : index
    %19 = vector.load %arg4[%c0_5, %c0_6] : memref<128x256xbf16, #tpu.memory_space<vmem>>, vector<128x256xbf16>
    %c0_7 = arith.constant 0 : index
    %c0_8 = arith.constant 0 : index
    %20 = vector.load %arg5[%c0_7, %c0_8] : memref<1x256xbf16, #tpu.memory_space<vmem>>, vector<1x256xbf16>
    %cst_9 = arith.constant dense<0.000000e+00> : vector<256x256xf32>
    %21 = tpu.matmul %18, %19, %cst_9 {dimension_numbers = #tpu.dot_dimension_numbers<[1], [0], [0], [1], [0, 0, 1, 1], [], []>} : vector<256x128xbf16>, vector<128x256xbf16>, vector<256x256xf32> -> vector<256x256xf32>
    %22 = arith.truncf %21 : vector<256x256xf32> to vector<256x256xbf16>
    %23 = vector.broadcast %20 : vector<1x256xbf16> to vector<256x256xbf16>
    %24 = arith.addf %22, %23 : vector<256x256xbf16>
    %cst_10 = arith.constant 0.000000e+00 : bf16
    %25 = vector.broadcast %cst_10 : bf16 to vector<256x256xbf16>
    %26 = arith.maximumf %24, %25 : vector<256x256xbf16>
    %c0_11 = arith.constant 0 : index
    %c0_12 = arith.constant 0 : index
    %27 = vector.load %arg6[%c0_11, %c0_12] : memref<256x512xbf16, #tpu.memory_space<vmem>>, vector<256x512xbf16>
    %c0_13 = arith.constant 0 : index
    %c0_14 = arith.constant 0 : index
    %28 = vector.load %arg7[%c0_13, %c0_14] : memref<1x512xbf16, #tpu.memory_space<vmem>>, vector<1x512xbf16>
    %cst_15 = arith.constant dense<0.000000e+00> : vector<256x512xf32>
    %29 = tpu.matmul %26, %27, %cst_15 {dimension_numbers = #tpu.dot_dimension_numbers<[1], [0], [0], [1], [0, 0, 1, 1], [], []>} : vector<256x256xbf16>, vector<256x512xbf16>, vector<256x512xf32> -> vector<256x512xf32>
    %30 = arith.truncf %29 : vector<256x512xf32> to vector<256x512xbf16>
    %31 = vector.broadcast %28 : vector<1x512xbf16> to vector<256x512xbf16>
    %32 = arith.addf %30, %31 : vector<256x512xbf16>
    %cst_16 = arith.constant 0.000000e+00 : bf16
    %33 = vector.broadcast %cst_16 : bf16 to vector<256x512xbf16>
    %34 = arith.maximumf %32, %33 : vector<256x512xbf16>
    %c0_17 = arith.constant 0 : index
    %c0_18 = arith.constant 0 : index
    %35 = vector.load %arg8[%c0_17, %c0_18] : memref<512x512xbf16, #tpu.memory_space<vmem>>, vector<512x512xbf16>
    %c0_19 = arith.constant 0 : index
    %c0_20 = arith.constant 0 : index
    %36 = vector.load %arg9[%c0_19, %c0_20] : memref<1x512xbf16, #tpu.memory_space<vmem>>, vector<1x512xbf16>
    %cst_21 = arith.constant dense<0.000000e+00> : vector<256x512xf32>
    %37 = tpu.matmul %34, %35, %cst_21 {dimension_numbers = #tpu.dot_dimension_numbers<[1], [0], [0], [1], [0, 0, 1, 1], [], []>} : vector<256x512xbf16>, vector<512x512xbf16>, vector<256x512xf32> -> vector<256x512xf32>
    %38 = arith.truncf %37 : vector<256x512xf32> to vector<256x512xbf16>
    %39 = vector.broadcast %36 : vector<1x512xbf16> to vector<256x512xbf16>
    %40 = arith.addf %38, %39 : vector<256x512xbf16>
    %cst_22 = arith.constant 0.000000e+00 : bf16
    %41 = vector.broadcast %cst_22 : bf16 to vector<256x512xbf16>
    %42 = arith.maximumf %40, %41 : vector<256x512xbf16>
    %c0_23 = arith.constant 0 : index
    %c0_24 = arith.constant 0 : index
    %43 = vector.load %arg10[%c0_23, %c0_24] : memref<512x512xbf16, #tpu.memory_space<vmem>>, vector<512x512xbf16>
    %c0_25 = arith.constant 0 : index
    %c0_26 = arith.constant 0 : index
    %44 = vector.load %arg11[%c0_25, %c0_26] : memref<1x512xbf16, #tpu.memory_space<vmem>>, vector<1x512xbf16>
    %cst_27 = arith.constant dense<0.000000e+00> : vector<256x512xf32>
    %45 = tpu.matmul %42, %43, %cst_27 {dimension_numbers = #tpu.dot_dimension_numbers<[1], [0], [0], [1], [0, 0, 1, 1], [], []>} : vector<256x512xbf16>, vector<512x512xbf16>, vector<256x512xf32> -> vector<256x512xf32>
    %46 = arith.truncf %45 : vector<256x512xf32> to vector<256x512xbf16>
    %47 = vector.broadcast %44 : vector<1x512xbf16> to vector<256x512xbf16>
    %48 = arith.addf %46, %47 : vector<256x512xbf16>
    %cst_28 = arith.constant 0.000000e+00 : bf16
    %49 = vector.broadcast %cst_28 : bf16 to vector<256x512xbf16>
    %50 = arith.maximumf %48, %49 : vector<256x512xbf16>
    %c0_29 = arith.constant 0 : index
    %c0_30 = arith.constant 0 : index
    %51 = vector.load %arg12[%c0_29, %c0_30] : memref<512x512xbf16, #tpu.memory_space<vmem>>, vector<512x512xbf16>
    %c0_31 = arith.constant 0 : index
    %c0_32 = arith.constant 0 : index
    %52 = vector.load %arg13[%c0_31, %c0_32] : memref<1x512xbf16, #tpu.memory_space<vmem>>, vector<1x512xbf16>
    %cst_33 = arith.constant dense<0.000000e+00> : vector<256x512xf32>
    %53 = tpu.matmul %50, %51, %cst_33 {dimension_numbers = #tpu.dot_dimension_numbers<[1], [0], [0], [1], [0, 0, 1, 1], [], []>} : vector<256x512xbf16>, vector<512x512xbf16>, vector<256x512xf32> -> vector<256x512xf32>
    %54 = arith.truncf %53 : vector<256x512xf32> to vector<256x512xbf16>
    %55 = vector.broadcast %52 : vector<1x512xbf16> to vector<256x512xbf16>
    %56 = arith.addf %54, %55 : vector<256x512xbf16>
    %cst_34 = arith.constant 0.000000e+00 : bf16
    %57 = vector.broadcast %cst_34 : bf16 to vector<256x512xbf16>
    %58 = arith.maximumf %56, %57 : vector<256x512xbf16>
    %c0_35 = arith.constant 0 : index
    %c0_36 = arith.constant 0 : index
    %59 = vector.load %arg14[%c0_35, %c0_36] : memref<512x256xbf16, #tpu.memory_space<vmem>>, vector<512x256xbf16>
    %c0_37 = arith.constant 0 : index
    %c0_38 = arith.constant 0 : index
    %60 = vector.load %arg15[%c0_37, %c0_38] : memref<1x256xbf16, #tpu.memory_space<vmem>>, vector<1x256xbf16>
    %cst_39 = arith.constant dense<0.000000e+00> : vector<256x256xf32>
    %61 = tpu.matmul %58, %59, %cst_39 {dimension_numbers = #tpu.dot_dimension_numbers<[1], [0], [0], [1], [0, 0, 1, 1], [], []>} : vector<256x512xbf16>, vector<512x256xbf16>, vector<256x256xf32> -> vector<256x256xf32>
    %62 = arith.truncf %61 : vector<256x256xf32> to vector<256x256xbf16>
    %63 = vector.broadcast %60 : vector<1x256xbf16> to vector<256x256xbf16>
    %64 = arith.addf %62, %63 : vector<256x256xbf16>
    %cst_40 = arith.constant 0.000000e+00 : bf16
    %65 = vector.broadcast %cst_40 : bf16 to vector<256x256xbf16>
    %66 = arith.maximumf %64, %65 : vector<256x256xbf16>
    %c0_41 = arith.constant 0 : index
    %c0_42 = arith.constant 0 : index
    %67 = vector.load %arg16[%c0_41, %c0_42] : memref<256x128xbf16, #tpu.memory_space<vmem>>, vector<256x128xbf16>
    %c0_43 = arith.constant 0 : index
    %c0_44 = arith.constant 0 : index
    %68 = vector.load %arg17[%c0_43, %c0_44] : memref<1x128xbf16, #tpu.memory_space<vmem>>, vector<1x128xbf16>
    %cst_45 = arith.constant dense<0.000000e+00> : vector<256x128xf32>
    %69 = tpu.matmul %66, %67, %cst_45 {dimension_numbers = #tpu.dot_dimension_numbers<[1], [0], [0], [1], [0, 0, 1, 1], [], []>} : vector<256x256xbf16>, vector<256x128xbf16>, vector<256x128xf32> -> vector<256x128xf32>
    %70 = arith.truncf %69 : vector<256x128xf32> to vector<256x128xbf16>
    %71 = vector.broadcast %68 : vector<1x128xbf16> to vector<256x128xbf16>
    %72 = arith.addf %70, %71 : vector<256x128xbf16>
    %cst_46 = arith.constant 0.000000e+00 : bf16
    %73 = vector.broadcast %cst_46 : bf16 to vector<256x128xbf16>
    %74 = arith.maximumf %72, %73 : vector<256x128xbf16>
    %c0_47 = arith.constant 0 : index
    %c0_48 = arith.constant 0 : index
    %75 = vector.load %arg18[%c0_47, %c0_48] : memref<128x3xbf16, #tpu.memory_space<vmem>>, vector<128x3xbf16>
    %c0_49 = arith.constant 0 : index
    %c0_50 = arith.constant 0 : index
    %76 = vector.load %arg19[%c0_49, %c0_50] : memref<1x3xf32, #tpu.memory_space<vmem>>, vector<1x3xf32>
    %cst_51 = arith.constant dense<0.000000e+00> : vector<256x3xf32>
    %77 = tpu.matmul %74, %75, %cst_51 {dimension_numbers = #tpu.dot_dimension_numbers<[1], [0], [0], [1], [0, 0, 1, 1], [], []>} : vector<256x128xbf16>, vector<128x3xbf16>, vector<256x3xf32> -> vector<256x3xf32>
    %78 = vector.broadcast %76 : vector<1x3xf32> to vector<256x3xf32>
    %79 = arith.addf %77, %78 : vector<256x3xf32>
    %80 = arith.negf %79 : vector<256x3xf32>
    %81 = math.exp %80 : vector<256x3xf32>
    %cst_52 = arith.constant 1.000000e+00 : f32
    %82 = vector.broadcast %cst_52 : f32 to vector<256x3xf32>
    %83 = arith.addf %82, %81 : vector<256x3xf32>
    %84 = arith.divf %82, %83 : vector<256x3xf32>
    %c0_53 = arith.constant 0 : index
    %c0_54 = arith.constant 0 : index
    %85 = vector.load %arg20[%c0_53, %c0_54] : memref<256x3xf32, #tpu.memory_space<vmem>>, vector<256x3xf32>
    tpu.vector_store %arg20[%c0_53, %c0_54], %84 {strides = array<i32>} : memref<256x3xf32, #tpu.memory_space<vmem>>, vector<256x3xf32>,
    return
  }
  func.func @transform_0(%arg0: i32) -> (i32, i32) {
    %c0_i32 = arith.constant 0 : i32
    %c0_i32_0 = arith.constant 0 : i32
    return %arg0, %c0_i32 : i32, i32
  }
  func.func @transform_1(%arg0: i32) -> (i32, i32) {
    %c0_i32 = arith.constant 0 : i32
    %c0_i32_0 = arith.constant 0 : i32
    %c0_i32_1 = arith.constant 0 : i32
    return %c0_i32, %c0_i32_0 : i32, i32
  }
  func.func @transform_2(%arg0: i32) -> (i32, i32) {
    %c0_i32 = arith.constant 0 : i32
    %c0_i32_0 = arith.constant 0 : i32
    %c0_i32_1 = arith.constant 0 : i32
    return %c0_i32, %c0_i32_0 : i32, i32
  }
  func.func @transform_3(%arg0: i32) -> (i32, i32) {
    %c0_i32 = arith.constant 0 : i32
    %c0_i32_0 = arith.constant 0 : i32
    %c0_i32_1 = arith.constant 0 : i32
    return %c0_i32, %c0_i32_0 : i32, i32
  }
  func.func @transform_4(%arg0: i32) -> (i32, i32) {
    %c0_i32 = arith.constant 0 : i32
    %c0_i32_0 = arith.constant 0 : i32
    %c0_i32_1 = arith.constant 0 : i32
    return %c0_i32, %c0_i32_0 : i32, i32
  }
  func.func @transform_5(%arg0: i32) -> (i32, i32) {
    %c0_i32 = arith.constant 0 : i32
    %c0_i32_0 = arith.constant 0 : i32
    %c0_i32_1 = arith.constant 0 : i32
    return %c0_i32, %c0_i32_0 : i32, i32
  }
  func.func @transform_6(%arg0: i32) -> (i32, i32) {
    %c0_i32 = arith.constant 0 : i32
    %c0_i32_0 = arith.constant 0 : i32
    %c0_i32_1 = arith.constant 0 : i32
    return %c0_i32, %c0_i32_0 : i32, i32
  }
  func.func @transform_7(%arg0: i32) -> (i32, i32) {
    %c0_i32 = arith.constant 0 : i32
    %c0_i32_0 = arith.constant 0 : i32
    %c0_i32_1 = arith.constant 0 : i32
    return %c0_i32, %c0_i32_0 : i32, i32
  }
  func.func @transform_8(%arg0: i32) -> (i32, i32) {
    %c0_i32 = arith.constant 0 : i32
    %c0_i32_0 = arith.constant 0 : i32
    %c0_i32_1 = arith.constant 0 : i32
    return %c0_i32, %c0_i32_0 : i32, i32
  }
  func.func @transform_9(%arg0: i32) -> (i32, i32) {
    %c0_i32 = arith.constant 0 : i32
    %c0_i32_0 = arith.constant 0 : i32
    %c0_i32_1 = arith.constant 0 : i32
    return %c0_i32, %c0_i32_0 : i32, i32
  }
  func.func @transform_10(%arg0: i32) -> (i32, i32) {
    %c0_i32 = arith.constant 0 : i32
    %c0_i32_0 = arith.constant 0 : i32
    %c0_i32_1 = arith.constant 0 : i32
    return %c0_i32, %c0_i32_0 : i32, i32
  }
  func.func @transform_11(%arg0: i32) -> (i32, i32) {
    %c0_i32 = arith.constant 0 : i32
    %c0_i32_0 = arith.constant 0 : i32
    %c0_i32_1 = arith.constant 0 : i32
    return %c0_i32, %c0_i32_0 : i32, i32
  }
  func.func @transform_12(%arg0: i32) -> (i32, i32) {
    %c0_i32 = arith.constant 0 : i32
    %c0_i32_0 = arith.constant 0 : i32
    %c0_i32_1 = arith.constant 0 : i32
    return %c0_i32, %c0_i32_0 : i32, i32
  }
  func.func @transform_13(%arg0: i32) -> (i32, i32) {
    %c0_i32 = arith.constant 0 : i32
    %c0_i32_0 = arith.constant 0 : i32
    %c0_i32_1 = arith.constant 0 : i32
    return %c0_i32, %c0_i32_0 : i32, i32
  }
  func.func @transform_14(%arg0: i32) -> (i32, i32) {
    %c0_i32 = arith.constant 0 : i32
    %c0_i32_0 = arith.constant 0 : i32
    %c0_i32_1 = arith.constant 0 : i32
    return %c0_i32, %c0_i32_0 : i32, i32
  }
  func.func @transform_15(%arg0: i32) -> (i32, i32) {
    %c0_i32 = arith.constant 0 : i32
    %c0_i32_0 = arith.constant 0 : i32
    %c0_i32_1 = arith.constant 0 : i32
    return %c0_i32, %c0_i32_0 : i32, i32
  }
  func.func @transform_16(%arg0: i32) -> (i32, i32) {
    %c0_i32 = arith.constant 0 : i32
    %c0_i32_0 = arith.constant 0 : i32
    %c0_i32_1 = arith.constant 0 : i32
    return %c0_i32, %c0_i32_0 : i32, i32
  }
  func.func @transform_17(%arg0: i32) -> (i32, i32) {
    %c0_i32 = arith.constant 0 : i32
    %c0_i32_0 = arith.constant 0 : i32
    %c0_i32_1 = arith.constant 0 : i32
    return %c0_i32, %c0_i32_0 : i32, i32
  }
  func.func @transform_18(%arg0: i32) -> (i32, i32) {
    %c0_i32 = arith.constant 0 : i32
    %c0_i32_0 = arith.constant 0 : i32
    %c0_i32_1 = arith.constant 0 : i32
    return %c0_i32, %c0_i32_0 : i32, i32
  }
  func.func @transform_19(%arg0: i32) -> (i32, i32) {
    %c0_i32 = arith.constant 0 : i32
    %c0_i32_0 = arith.constant 0 : i32
    return %arg0, %c0_i32 : i32, i32
  }
}

</mosaic_0001>

<llo_original>
// kernel: tpu_custom_call.1
$region0: #{tpu_custom_call.1}
  #allocation0 [shape = 'u32[]', space=smem, size = 0x4, offset = 0x4, fixed_abs, tag = 'smem constant byte address 0x4 - core index']
  #allocation1 [shape = 'u32[144,128]{1,0:T(1,128)}', space=vmem, size = 0x12000, scoped, tag = 'internal scratch']
  %s0 = inlined_call_operand.vmem [shape: f32[512,2], index: 0, kind: input, shape index: {}]
  %s1 = inlined_call_operand.vmem [shape: f32[2,128], index: 1, kind: input, shape index: {}]
  %s2 = inlined_call_operand.vmem [shape: f32[1,128], index: 2, kind: input, shape index: {}]
  %s3 = inlined_call_operand.hbm [shape: bf16[128,256], index: 3, kind: input, shape index: {}]
  %s4 = inlined_call_operand.vmem [shape: bf16[1,256], index: 4, kind: input, shape index: {}]
  %s5 = inlined_call_operand.vmem [shape: bf16[256,512], index: 5, kind: input, shape index: {}]
  %s6 = inlined_call_operand.vmem [shape: bf16[1,512], index: 6, kind: input, shape index: {}]
  %s7 = inlined_call_operand.hbm [shape: bf16[512,512], index: 7, kind: input, shape index: {}]
  %s8 = inlined_call_operand.vmem [shape: bf16[1,512], index: 8, kind: input, shape index: {}]
  %s9 = inlined_call_operand.hbm [shape: bf16[512,512], index: 9, kind: input, shape index: {}]
  %s10 = inlined_call_operand.vmem [shape: bf16[1,512], index: 10, kind: input, shape index: {}]
  %s11 = inlined_call_operand.hbm [shape: bf16[512,512], index: 11, kind: input, shape index: {}]
  %s12 = inlined_call_operand.vmem [shape: bf16[1,512], index: 12, kind: input, shape index: {}]
  %s13 = inlined_call_operand.hbm [shape: bf16[512,256], index: 13, kind: input, shape index: {}]
  %s14 = inlined_call_operand.vmem [shape: bf16[1,256], index: 14, kind: input, shape index: {}]
  %s15 = inlined_call_operand.hbm [shape: bf16[256,128], index: 15, kind: input, shape index: {}]
  %s16 = inlined_call_operand.vmem [shape: bf16[1,128], index: 16, kind: input, shape index: {}]
  %s17 = inlined_call_operand.vmem [shape: bf16[128,3], index: 17, kind: input, shape index: {}]
  %s18 = inlined_call_operand.vmem [shape: f32[1,3], index: 18, kind: input, shape index: {}]
  %s19 = inlined_call_operand.vmem [shape: f32[512,3], index: 19, kind: output, shape index: {}]
  %s20 = sld [smem:[#allocation0]]
  $region133: #{tpu_custom_call.1} parent=0
    _
  %s22 = ssub.s32 1, %s20
  %s23 = scalar_select 0, %s22, %s20
  $region1: #{tpu_custom_call.1} parent=0
    #allocation2 [shape = 'u8[65536]{0}', space=vmem, size = 0x10000, scoped, tag = 'input window, operand 3, single buffered']
    #allocation3 [shape = 's32[2]{0}', space=sflag, size = 0x8, scoped, tag = 'scoped memory for tpu_custom_call.1']
    #allocation4 [shape = 'u8[524288]{0}', space=vmem, size = 0x80000, scoped, tag = 'input window, operand 7, single buffered']
    #allocation5 [shape = 's32[1]{0}', space=sflag, size = 0x4, scoped, tag = 'scoped memory for tpu_custom_call.1']
    #allocation6 [shape = 'u8[524288]{0}', space=vmem, size = 0x80000, scoped, tag = 'input window, operand 9, single buffered']
    #allocation7 [shape = 'u8[524288]{0}', space=vmem, size = 0x80000, scoped, tag = 'input window, operand 11, single buffered']
    #allocation8 [shape = 's32[1]{0}', space=sflag, size = 0x4, scoped, tag = 'scoped memory for tpu_custom_call.1']
    #allocation9 [shape = 'u8[262144]{0}', space=vmem, size = 0x40000, scoped, tag = 'input window, operand 13, single buffered']
    #allocation10 [shape = 'u8[65536]{0}', space=vmem, size = 0x10000, scoped, tag = 'input window, operand 15, single buffered']
    #allocation11 [shape = 's32[1]{0}', space=sflag, size = 0x4, scoped, tag = 'scoped memory for tpu_custom_call.1']
    %24 = vsyncpa [#allocation3], 0
    %25 = vsyncpa [#allocation5], 0
    %26 = vsyncpa [#allocation8], 0
    %27 = vsyncpa [#allocation11], 0
    loop: start=0, step=1, limit=4
    $region2: #{tpu_custom_call.1} parent=1 // loop_pre_header
      _
    $region3: #{tpu_custom_call.1} parent=1 // loop_header
      %s29 = sphi 0, %s33
      %p30 = scmp.ge.s32.totalorder %s29, 4
      %s39 = sphi 0, %s41
      %s42 = sphi 0, %s39
      %s43 = sphi 0, %s42
      %s59 = sphi 0, %s43
      %s63 = sphi 0, %s63
      %s65 = sphi 0, %s63
      %s66 = sphi 0, %s65
      %s80 = sphi 0, %s66
      %s84 = sphi 0, %s84
      %s86 = sphi 0, %s84
      %s87 = sphi 0, %s86
      %s101 = sphi 0, %s87
      %s105 = sphi 0, %s105
      %s107 = sphi 0, %s105
      %s108 = sphi 0, %s107
      %s122 = sphi 0, %s108
      %s126 = sphi 0, %s126
      %s128 = sphi 0, %s126
      %s129 = sphi 0, %s128
      %s143 = sphi 0, %s129
      %s147 = sphi 0, %s147
      %s149 = sphi 0, %s147
      %s150 = sphi 0, %s149
      %s164 = sphi 0, %s150
      %s168 = sphi 0, %s168
      %s170 = sphi 0, %s168
      %s171 = sphi 0, %s170
      %s185 = sphi 0, %s171
      %s189 = sphi 0, %s189
      %s191 = sphi 0, %s189
      %s192 = sphi 0, %s191
      %s206 = sphi 0, %s192
      %s210 = sphi 0, %s210
      %s212 = sphi 0, %s210
      %s213 = sphi 0, %s212
      %s227 = sphi 0, %s213
      %s231 = sphi 0, %s231
      %s233 = sphi 0, %s231
      %s234 = sphi 0, %s233
      %s248 = sphi 0, %s234
      %s252 = sphi 0, %s252
      %s254 = sphi 0, %s252
      %s255 = sphi 0, %s254
      %s269 = sphi 0, %s255
      %s273 = sphi 0, %s273
      %s275 = sphi 0, %s273
      %s276 = sphi 0, %s275
      %s290 = sphi 0, %s276
      %s294 = sphi 0, %s294
      %s296 = sphi 0, %s294
      %s297 = sphi 0, %s296
      %s311 = sphi 0, %s297
      %s315 = sphi 0, %s315
      %s317 = sphi 0, %s315
      %s318 = sphi 0, %s317
      %s332 = sphi 0, %s318
      %s336 = sphi 0, %s336
      %s338 = sphi 0, %s336
      %s339 = sphi 0, %s338
      %s353 = sphi 0, %s339
      %s357 = sphi 0, %s357
      %s359 = sphi 0, %s357
      %s360 = sphi 0, %s359
      %s374 = sphi 0, %s360
      %s378 = sphi 0, %s378
      %s380 = sphi 0, %s378
      %s381 = sphi 0, %s380
      %s395 = sphi 0, %s381
      %s399 = sphi 0, %s399
      %s401 = sphi 0, %s399
      %s402 = sphi 0, %s401
      %s416 = sphi 0, %s402
      %s420 = sphi 0, %s420
      %s422 = sphi 0, %s420
      %s423 = sphi 0, %s422
      %s437 = sphi 0, %s423
      %s443 = sphi 0, %s445
      %s446 = sphi 0, %s443
      %s447 = sphi 0, %s446
      %s463 = sphi 0, %s447
    $region4: #{tpu_custom_call.1} parent=1 // loop_header_branch
      %32 = sbr.rel (%p30) target = $region8
    $region5: #{tpu_custom_call.1} parent=1 // loop_body
      %s34 = ssub.s32 %s29, 1
      %s35 = ssub.s32 %s29, 2
      %s36 = sadd.s32 %s29, 1
      %s37 = ssub.s32 %s29, %s36
      %p38 = scmp.eq.s32.totalorder %s37, 0
      %s40 = sadd.s32 %s39, 1
      %s41 = scalar_select %p38, %s39, %s40
      %p44 = pneg %p38
      %p45 = scmp.eq.s32.totalorder %s29, 1
      %p46 = por %p44, %p45
      %p47 = scmp.ne.s32.totalorder %s39, %s42
      %p48 = scmp.eq.s32.totalorder %s29, 0
      %p49 = por %p47, %p48
      %p50 = scmp.ne.s32.totalorder %s39, %s42
      %p51 = scmp.eq.s32.totalorder %s34, 1
      %p52 = por %p50, %p51
      %p53 = scmp.ne.s32.totalorder %s42, %s43
      %p54 = scmp.eq.s32.totalorder %s34, 0
      %p55 = por %p53, %p54
      %p56 = scmp.ne.s32.totalorder %s42, %s43
      %p57 = scmp.eq.s32.totalorder %s35, 1
      %p58 = por %p56, %p57
      %p60 = scmp.ne.s32.totalorder %s43, %s59
      %p61 = scmp.eq.s32.totalorder %s35, 0
      %p62 = por %p60, %p61
      %s64 = sadd.s32 %s63, 1
      %p67 = scmp.eq.s32.totalorder %s29, 1
      %p68 = scmp.ne.s32.totalorder %s63, %s65
      %p69 = scmp.eq.s32.totalorder %s29, 0
      %p70 = por %p68, %p69
      %p71 = scmp.ne.s32.totalorder %s63, %s65
      %p72 = scmp.eq.s32.totalorder %s34, 1
      %p73 = por %p71, %p72
      %p74 = scmp.ne.s32.totalorder %s65, %s66
      %p75 = scmp.eq.s32.totalorder %s34, 0
      %p76 = por %p74, %p75
      %p77 = scmp.ne.s32.totalorder %s65, %s66
      %p78 = scmp.eq.s32.totalorder %s35, 1
      %p79 = por %p77, %p78
      %p81 = scmp.ne.s32.totalorder %s66, %s80
      %p82 = scmp.eq.s32.totalorder %s35, 0
      %p83 = por %p81, %p82
      %s85 = sadd.s32 %s84, 1
      %p88 = scmp.eq.s32.totalorder %s29, 1
      %p89 = scmp.ne.s32.totalorder %s84, %s86
      %p90 = scmp.eq.s32.totalorder %s29, 0
      %p91 = por %p89, %p90
      %p92 = scmp.ne.s32.totalorder %s84, %s86
      %p93 = scmp.eq.s32.totalorder %s34, 1
      %p94 = por %p92, %p93
      %p95 = scmp.ne.s32.totalorder %s86, %s87
      %p96 = scmp.eq.s32.totalorder %s34, 0
      %p97 = por %p95, %p96
      %p98 = scmp.ne.s32.totalorder %s86, %s87
      %p99 = scmp.eq.s32.totalorder %s35, 1
      %p100 = por %p98, %p99
      %p102 = scmp.ne.s32.totalorder %s87, %s101
      %p103 = scmp.eq.s32.totalorder %s35, 0
      %p104 = por %p102, %p103
      %s106 = sadd.s32 %s105, 1
      %p109 = scmp.eq.s32.totalorder %s29, 1
      %p110 = scmp.ne.s32.totalorder %s105, %s107
      %p111 = scmp.eq.s32.totalorder %s29, 0
      %p112 = por %p110, %p111
      %p113 = scmp.ne.s32.totalorder %s105, %s107
      %p114 = scmp.eq.s32.totalorder %s34, 1
      %p115 = por %p113, %p114
      %p116 = scmp.ne.s32.totalorder %s107, %s108
      %p117 = scmp.eq.s32.totalorder %s34, 0
      %p118 = por %p116, %p117
      %p119 = scmp.ne.s32.totalorder %s107, %s108
      %p120 = scmp.eq.s32.totalorder %s35, 1
      %p121 = por %p119, %p120
      %p123 = scmp.ne.s32.totalorder %s108, %s122
      %p124 = scmp.eq.s32.totalorder %s35, 0
      %p125 = por %p123, %p124
      %s127 = sadd.s32 %s126, 1
      %p130 = scmp.eq.s32.totalorder %s29, 1
      %p131 = scmp.ne.s32.totalorder %s126, %s128
      %p132 = scmp.eq.s32.totalorder %s29, 0
      %p133 = por %p131, %p132
      %p134 = scmp.ne.s32.totalorder %s126, %s128
      %p135 = scmp.eq.s32.totalorder %s34, 1
      %p136 = por %p134, %p135
      %p137 = scmp.ne.s32.totalorder %s128, %s129
      %p138 = scmp.eq.s32.totalorder %s34, 0
      %p139 = por %p137, %p138
      %p140 = scmp.ne.s32.totalorder %s128, %s129
      %p141 = scmp.eq.s32.totalorder %s35, 1
      %p142 = por %p140, %p141
      %p144 = scmp.ne.s32.totalorder %s129, %s143
      %p145 = scmp.eq.s32.totalorder %s35, 0
      %p146 = por %p144, %p145
      %s148 = sadd.s32 %s147, 1
      %p151 = scmp.eq.s32.totalorder %s29, 1
      %p152 = scmp.ne.s32.totalorder %s147, %s149
      %p153 = scmp.eq.s32.totalorder %s29, 0
      %p154 = por %p152, %p153
      %p155 = scmp.ne.s32.totalorder %s147, %s149
      %p156 = scmp.eq.s32.totalorder %s34, 1
      %p157 = por %p155, %p156
      %p158 = scmp.ne.s32.totalorder %s149, %s150
      %p159 = scmp.eq.s32.totalorder %s34, 0
      %p160 = por %p158, %p159
      %p161 = scmp.ne.s32.totalorder %s149, %s150
      %p162 = scmp.eq.s32.totalorder %s35, 1
      %p163 = por %p161, %p162
      %p165 = scmp.ne.s32.totalorder %s150, %s164
      %p166 = scmp.eq.s32.totalorder %s35, 0
      %p167 = por %p165, %p166
      %s169 = sadd.s32 %s168, 1
      %p172 = scmp.eq.s32.totalorder %s29, 1
      %p173 = scmp.ne.s32.totalorder %s168, %s170
      %p174 = scmp.eq.s32.totalorder %s29, 0
      %p175 = por %p173, %p174
      %p176 = scmp.ne.s32.totalorder %s168, %s170
      %p177 = scmp.eq.s32.totalorder %s34, 1
      %p178 = por %p176, %p177
      %p179 = scmp.ne.s32.totalorder %s170, %s171
      %p180 = scmp.eq.s32.totalorder %s34, 0
      %p181 = por %p179, %p180
      %p182 = scmp.ne.s32.totalorder %s170, %s171
      %p183 = scmp.eq.s32.totalorder %s35, 1
      %p184 = por %p182, %p183
      %p186 = scmp.ne.s32.totalorder %s171, %s185
      %p187 = scmp.eq.s32.totalorder %s35, 0
      %p188 = por %p186, %p187
      %s190 = sadd.s32 %s189, 1
      %p193 = scmp.eq.s32.totalorder %s29, 1
      %p194 = scmp.ne.s32.totalorder %s189, %s191
      %p195 = scmp.eq.s32.totalorder %s29, 0
      %p196 = por %p194, %p195
      %p197 = scmp.ne.s32.totalorder %s189, %s191
      %p198 = scmp.eq.s32.totalorder %s34, 1
      %p199 = por %p197, %p198
      %p200 = scmp.ne.s32.totalorder %s191, %s192
      %p201 = scmp.eq.s32.totalorder %s34, 0
      %p202 = por %p200, %p201
      %p203 = scmp.ne.s32.totalorder %s191, %s192
      %p204 = scmp.eq.s32.totalorder %s35, 1
      %p205 = por %p203, %p204
      %p207 = scmp.ne.s32.totalorder %s192, %s206
      %p208 = scmp.eq.s32.totalorder %s35, 0
      %p209 = por %p207, %p208
      %s211 = sadd.s32 %s210, 1
      %p214 = scmp.eq.s32.totalorder %s29, 1
      %p215 = scmp.ne.s32.totalorder %s210, %s212
      %p216 = scmp.eq.s32.totalorder %s29, 0
      %p217 = por %p215, %p216
      %p218 = scmp.ne.s32.totalorder %s210, %s212
      %p219 = scmp.eq.s32.totalorder %s34, 1
      %p220 = por %p218, %p219
      %p221 = scmp.ne.s32.totalorder %s212, %s213
      %p222 = scmp.eq.s32.totalorder %s34, 0
      %p223 = por %p221, %p222
      %p224 = scmp.ne.s32.totalorder %s212, %s213
      %p225 = scmp.eq.s32.totalorder %s35, 1
      %p226 = por %p224, %p225
      %p228 = scmp.ne.s32.totalorder %s213, %s227
      %p229 = scmp.eq.s32.totalorder %s35, 0
      %p230 = por %p228, %p229
      %s232 = sadd.s32 %s231, 1
      %p235 = scmp.eq.s32.totalorder %s29, 1
      %p236 = scmp.ne.s32.totalorder %s231, %s233
      %p237 = scmp.eq.s32.totalorder %s29, 0
      %p238 = por %p236, %p237
      %p239 = scmp.ne.s32.totalorder %s231, %s233
      %p240 = scmp.eq.s32.totalorder %s34, 1
      %p241 = por %p239, %p240
      %p242 = scmp.ne.s32.totalorder %s233, %s234
      %p243 = scmp.eq.s32.totalorder %s34, 0
      %p244 = por %p242, %p243
      %p245 = scmp.ne.s32.totalorder %s233, %s234
      %p246 = scmp.eq.s32.totalorder %s35, 1
      %p247 = por %p245, %p246
      %p249 = scmp.ne.s32.totalorder %s234, %s248
      %p250 = scmp.eq.s32.totalorder %s35, 0
      %p251 = por %p249, %p250
      %s253 = sadd.s32 %s252, 1
      %p256 = scmp.eq.s32.totalorder %s29, 1
      %p257 = scmp.ne.s32.totalorder %s252, %s254
      %p258 = scmp.eq.s32.totalorder %s29, 0
      %p259 = por %p257, %p258
      %p260 = scmp.ne.s32.totalorder %s252, %s254
      %p261 = scmp.eq.s32.totalorder %s34, 1
      %p262 = por %p260, %p261
      %p263 = scmp.ne.s32.totalorder %s254, %s255
      %p264 = scmp.eq.s32.totalorder %s34, 0
      %p265 = por %p263, %p264
      %p266 = scmp.ne.s32.totalorder %s254, %s255
      %p267 = scmp.eq.s32.totalorder %s35, 1
      %p268 = por %p266, %p267
      %p270 = scmp.ne.s32.totalorder %s255, %s269
      %p271 = scmp.eq.s32.totalorder %s35, 0
      %p272 = por %p270, %p271
      %s274 = sadd.s32 %s273, 1
      %p277 = scmp.eq.s32.totalorder %s29, 1
      %p278 = scmp.ne.s32.totalorder %s273, %s275
      %p279 = scmp.eq.s32.totalorder %s29, 0
      %p280 = por %p278, %p279
      %p281 = scmp.ne.s32.totalorder %s273, %s275
      %p282 = scmp.eq.s32.totalorder %s34, 1
      %p283 = por %p281, %p282
      %p284 = scmp.ne.s32.totalorder %s275, %s276
      %p285 = scmp.eq.s32.totalorder %s34, 0
      %p286 = por %p284, %p285
      %p287 = scmp.ne.s32.totalorder %s275, %s276
      %p288 = scmp.eq.s32.totalorder %s35, 1
      %p289 = por %p287, %p288
      %p291 = scmp.ne.s32.totalorder %s276, %s290
      %p292 = scmp.eq.s32.totalorder %s35, 0
      %p293 = por %p291, %p292
      %s295 = sadd.s32 %s294, 1
      %p298 = scmp.eq.s32.totalorder %s29, 1
      %p299 = scmp.ne.s32.totalorder %s294, %s296
      %p300 = scmp.eq.s32.totalorder %s29, 0
      %p301 = por %p299, %p300
      %p302 = scmp.ne.s32.totalorder %s294, %s296
      %p303 = scmp.eq.s32.totalorder %s34, 1
      %p304 = por %p302, %p303
      %p305 = scmp.ne.s32.totalorder %s296, %s297
      %p306 = scmp.eq.s32.totalorder %s34, 0
      %p307 = por %p305, %p306
      %p308 = scmp.ne.s32.totalorder %s296, %s297
      %p309 = scmp.eq.s32.totalorder %s35, 1
      %p310 = por %p308, %p309
      %p312 = scmp.ne.s32.totalorder %s297, %s311
      %p313 = scmp.eq.s32.totalorder %s35, 0
      %p314 = por %p312, %p313
      %s316 = sadd.s32 %s315, 1
      %p319 = scmp.eq.s32.totalorder %s29, 1
      %p320 = scmp.ne.s32.totalorder %s315, %s317
      %p321 = scmp.eq.s32.totalorder %s29, 0
      %p322 = por %p320, %p321
      %p323 = scmp.ne.s32.totalorder %s315, %s317
      %p324 = scmp.eq.s32.totalorder %s34, 1
      %p325 = por %p323, %p324
      %p326 = scmp.ne.s32.totalorder %s317, %s318
      %p327 = scmp.eq.s32.totalorder %s34, 0
      %p328 = por %p326, %p327
      %p329 = scmp.ne.s32.totalorder %s317, %s318
      %p330 = scmp.eq.s32.totalorder %s35, 1
      %p331 = por %p329, %p330
      %p333 = scmp.ne.s32.totalorder %s318, %s332
      %p334 = scmp.eq.s32.totalorder %s35, 0
      %p335 = por %p333, %p334
      %s337 = sadd.s32 %s336, 1
      %p340 = scmp.eq.s32.totalorder %s29, 1
      %p341 = scmp.ne.s32.totalorder %s336, %s338
      %p342 = scmp.eq.s32.totalorder %s29, 0
      %p343 = por %p341, %p342
      %p344 = scmp.ne.s32.totalorder %s336, %s338
      %p345 = scmp.eq.s32.totalorder %s34, 1
      %p346 = por %p344, %p345
      %p347 = scmp.ne.s32.totalorder %s338, %s339
      %p348 = scmp.eq.s32.totalorder %s34, 0
      %p349 = por %p347, %p348
      %p350 = scmp.ne.s32.totalorder %s338, %s339
      %p351 = scmp.eq.s32.totalorder %s35, 1
      %p352 = por %p350, %p351
      %p354 = scmp.ne.s32.totalorder %s339, %s353
      %p355 = scmp.eq.s32.totalorder %s35, 0
      %p356 = por %p354, %p355
      %s358 = sadd.s32 %s357, 1
      %p361 = scmp.eq.s32.totalorder %s29, 1
      %p362 = scmp.ne.s32.totalorder %s357, %s359
      %p363 = scmp.eq.s32.totalorder %s29, 0
      %p364 = por %p362, %p363
      %p365 = scmp.ne.s32.totalorder %s357, %s359
      %p366 = scmp.eq.s32.totalorder %s34, 1
      %p367 = por %p365, %p366
      %p368 = scmp.ne.s32.totalorder %s359, %s360
      %p369 = scmp.eq.s32.totalorder %s34, 0
      %p370 = por %p368, %p369
      %p371 = scmp.ne.s32.totalorder %s359, %s360
      %p372 = scmp.eq.s32.totalorder %s35, 1
      %p373 = por %p371, %p372
      %p375 = scmp.ne.s32.totalorder %s360, %s374
      %p376 = scmp.eq.s32.totalorder %s35, 0
      %p377 = por %p375, %p376
      %s379 = sadd.s32 %s378, 1
      %p382 = scmp.eq.s32.totalorder %s29, 1
      %p383 = scmp.ne.s32.totalorder %s378, %s380
      %p384 = scmp.eq.s32.totalorder %s29, 0
      %p385 = por %p383, %p384
      %p386 = scmp.ne.s32.totalorder %s378, %s380
      %p387 = scmp.eq.s32.totalorder %s34, 1
      %p388 = por %p386, %p387
      %p389 = scmp.ne.s32.totalorder %s380, %s381
      %p390 = scmp.eq.s32.totalorder %s34, 0
      %p391 = por %p389, %p390
      %p392 = scmp.ne.s32.totalorder %s380, %s381
      %p393 = scmp.eq.s32.totalorder %s35, 1
      %p394 = por %p392, %p393
      %p396 = scmp.ne.s32.totalorder %s381, %s395
      %p397 = scmp.eq.s32.totalorder %s35, 0
      %p398 = por %p396, %p397
      %s400 = sadd.s32 %s399, 1
      %p403 = scmp.eq.s32.totalorder %s29, 1
      %p404 = scmp.ne.s32.totalorder %s399, %s401
      %p405 = scmp.eq.s32.totalorder %s29, 0
      %p406 = por %p404, %p405
      %p407 = scmp.ne.s32.totalorder %s399, %s401
      %p408 = scmp.eq.s32.totalorder %s34, 1
      %p409 = por %p407, %p408
      %p410 = scmp.ne.s32.totalorder %s401, %s402
      %p411 = scmp.eq.s32.totalorder %s34, 0
      %p412 = por %p410, %p411
      %p413 = scmp.ne.s32.totalorder %s401, %s402
      %p414 = scmp.eq.s32.totalorder %s35, 1
      %p415 = por %p413, %p414
      %p417 = scmp.ne.s32.totalorder %s402, %s416
      %p418 = scmp.eq.s32.totalorder %s35, 0
      %p419 = por %p417, %p418
      %s421 = sadd.s32 %s420, 1
      %p424 = scmp.eq.s32.totalorder %s29, 1
      %p425 = scmp.ne.s32.totalorder %s420, %s422
      %p426 = scmp.eq.s32.totalorder %s29, 0
      %p427 = por %p425, %p426
      %p428 = scmp.ne.s32.totalorder %s420, %s422
      %p429 = scmp.eq.s32.totalorder %s34, 1
      %p430 = por %p428, %p429
      %p431 = scmp.ne.s32.totalorder %s422, %s423
      %p432 = scmp.eq.s32.totalorder %s34, 0
      %p433 = por %p431, %p432
      %p434 = scmp.ne.s32.totalorder %s422, %s423
      %p435 = scmp.eq.s32.totalorder %s35, 1
      %p436 = por %p434, %p435
      %p438 = scmp.ne.s32.totalorder %s423, %s437
      %p439 = scmp.eq.s32.totalorder %s35, 0
      %p440 = por %p438, %p439
      %s441 = ssub.s32 %s29, %s36
      %p442 = scmp.eq.s32.totalorder %s441, 0
      %s444 = sadd.s32 %s443, 1
      %s445 = scalar_select %p442, %s443, %s444
      %p448 = pneg %p442
      %p449 = scmp.eq.s32.totalorder %s29, 1
      %p450 = por %p448, %p449
      %p451 = scmp.ne.s32.totalorder %s443, %s446
      %p452 = scmp.eq.s32.totalorder %s29, 0
      %p453 = por %p451, %p452
      %p454 = scmp.ne.s32.totalorder %s443, %s446
      %p455 = scmp.eq.s32.totalorder %s34, 1
      %p456 = por %p454, %p455
      %p457 = scmp.ne.s32.totalorder %s446, %s447
      %p458 = scmp.eq.s32.totalorder %s34, 0
      %p459 = por %p457, %p458
      %p460 = scmp.ne.s32.totalorder %s446, %s447
      %p461 = scmp.eq.s32.totalorder %s35, 1
      %p462 = por %p460, %p461
      %p464 = scmp.ne.s32.totalorder %s447, %s463
      %p465 = scmp.eq.s32.totalorder %s35, 0
      %p466 = por %p464, %p465
      %p467 = scmp.le.s32.totalorder 1, %s29
      %p468 = scmp.lt.s32.totalorder %s29, 3
      %p469 = pnand %p467, %p468
      %p470 = pneg %p469
      // Predicated region
      $region9: #{tpu_custom_call.1} parent=5 // pred_check
        _
      $region10: #{tpu_custom_call.1} parent=5 // pred_check_branch
        %472 = sbr.rel (%p469) target = $region12
      $region11: #{tpu_custom_call.1} parent=5 // pred_region
        %s473 = ssub.s32 %s29, 1
        // Predicated region
        $region13: #{tpu_custom_call.1} parent=11 // pred_check
          %p474 = pneg %p76
        $region14: #{tpu_custom_call.1} parent=11 // pred_check_branch
          %476 = sbr.rel (%p474) target = $region16
        $region15: #{tpu_custom_call.1} parent=11 // pred_region
          _
        $region16: #{tpu_custom_call.1} parent=11 // pred_fallthru
          _
        // Predicated region
        $region17: #{tpu_custom_call.1} parent=11 // pred_check
          %p477 = pneg %p97
        $region18: #{tpu_custom_call.1} parent=11 // pred_check_branch
          %479 = sbr.rel (%p477) target = $region20
        $region19: #{tpu_custom_call.1} parent=11 // pred_region
          _
        $region20: #{tpu_custom_call.1} parent=11 // pred_fallthru
          _
        // Predicated region
        $region21: #{tpu_custom_call.1} parent=11 // pred_check
          %p480 = pneg %p118
        $region22: #{tpu_custom_call.1} parent=11 // pred_check_branch
          %482 = sbr.rel (%p480) target = $region24
        $region23: #{tpu_custom_call.1} parent=11 // pred_region
          %s484 = ssub.s32 2048, 2048
          %485 = vsyncadd [#allocation3], %s484
          %s486 = sshll.u32 [#allocation2], 4
          %s487 = int_to_ptr.vmem [resolvable:$true] %s486
          %492 = dma.hbm_to_vmem [thread:$0]  %s3, 2048, %s487, [#allocation3], 128, 128, 8
        $region24: #{tpu_custom_call.1} parent=11 // pred_fallthru
          _
        // Predicated region
        $region25: #{tpu_custom_call.1} parent=11 // pred_check
          %p493 = pneg %p139
        $region26: #{tpu_custom_call.1} parent=11 // pred_check_branch
          %495 = sbr.rel (%p493) target = $region28
        $region27: #{tpu_custom_call.1} parent=11 // pred_region
          _
        $region28: #{tpu_custom_call.1} parent=11 // pred_fallthru
          _
        // Predicated region
        $region29: #{tpu_custom_call.1} parent=11 // pred_check
          %p496 = pneg %p160
        $region30: #{tpu_custom_call.1} parent=11 // pred_check_branch
          %498 = sbr.rel (%p496) target = $region32
        $region31: #{tpu_custom_call.1} parent=11 // pred_region
          _
        $region32: #{tpu_custom_call.1} parent=11 // pred_fallthru
          _
        // Predicated region
        $region33: #{tpu_custom_call.1} parent=11 // pred_check
          %p499 = pneg %p181
        $region34: #{tpu_custom_call.1} parent=11 // pred_check_branch
          %501 = sbr.rel (%p499) target = $region36
        $region35: #{tpu_custom_call.1} parent=11 // pred_region
          _
        $region36: #{tpu_custom_call.1} parent=11 // pred_fallthru
          _
        // Predicated region
        $region37: #{tpu_custom_call.1} parent=11 // pred_check
          %p502 = pneg %p202
        $region38: #{tpu_custom_call.1} parent=11 // pred_check_branch
          %504 = sbr.rel (%p502) target = $region40
        $region39: #{tpu_custom_call.1} parent=11 // pred_region
          %s506 = ssub.s32 16384, 16384
          %507 = vsyncadd [#allocation5], %s506
          %s508 = sshll.u32 [#allocation4], 4
          %s509 = int_to_ptr.vmem [resolvable:$true] %s508
          %514 = dma.hbm_to_vmem [thread:$0]  %s7, 16384, %s509, [#allocation5], 256, 256, 16
        $region40: #{tpu_custom_call.1} parent=11 // pred_fallthru
          _
        // Predicated region
        $region41: #{tpu_custom_call.1} parent=11 // pred_check
          %p515 = pneg %p223
        $region42: #{tpu_custom_call.1} parent=11 // pred_check_branch
          %517 = sbr.rel (%p515) target = $region44
        $region43: #{tpu_custom_call.1} parent=11 // pred_region
          _
        $region44: #{tpu_custom_call.1} parent=11 // pred_fallthru
          _
        // Predicated region
        $region45: #{tpu_custom_call.1} parent=11 // pred_check
          %p518 = pneg %p244
        $region46: #{tpu_custom_call.1} parent=11 // pred_check_branch
          %520 = sbr.rel (%p518) target = $region48
        $region47: #{tpu_custom_call.1} parent=11 // pred_region
          %s522 = ssub.s32 16384, 16384
          %523 = vsyncadd [#allocation5], %s522
          %s524 = sshll.u32 [#allocation6], 4
          %s525 = int_to_ptr.vmem [resolvable:$true] %s524
          %530 = dma.hbm_to_vmem [thread:$0]  %s9, 16384, %s525, [#allocation5], 256, 256, 16
        $region48: #{tpu_custom_call.1} parent=11 // pred_fallthru
          _
        // Predicated region
        $region49: #{tpu_custom_call.1} parent=11 // pred_check
          %p531 = pneg %p265
        $region50: #{tpu_custom_call.1} parent=11 // pred_check_branch
          %533 = sbr.rel (%p531) target = $region52
        $region51: #{tpu_custom_call.1} parent=11 // pred_region
          _
        $region52: #{tpu_custom_call.1} parent=11 // pred_fallthru
          _
        // Predicated region
        $region53: #{tpu_custom_call.1} parent=11 // pred_check
          %p534 = pneg %p286
        $region54: #{tpu_custom_call.1} parent=11 // pred_check_branch
          %536 = sbr.rel (%p534) target = $region56
        $region55: #{tpu_custom_call.1} parent=11 // pred_region
          %s538 = ssub.s32 16384, 16384
          %539 = vsyncadd [#allocation8], %s538
          %s540 = sshll.u32 [#allocation7], 4
          %s541 = int_to_ptr.vmem [resolvable:$true] %s540
          %546 = dma.hbm_to_vmem [thread:$0]  %s11, 16384, %s541, [#allocation8], 256, 256, 16
        $region56: #{tpu_custom_call.1} parent=11 // pred_fallthru
          _
        // Predicated region
        $region57: #{tpu_custom_call.1} parent=11 // pred_check
          %p547 = pneg %p307
        $region58: #{tpu_custom_call.1} parent=11 // pred_check_branch
          %549 = sbr.rel (%p547) target = $region60
        $region59: #{tpu_custom_call.1} parent=11 // pred_region
          _
        $region60: #{tpu_custom_call.1} parent=11 // pred_fallthru
          _
        // Predicated region
        $region61: #{tpu_custom_call.1} parent=11 // pred_check
          %p550 = pneg %p328
        $region62: #{tpu_custom_call.1} parent=11 // pred_check_branch
          %552 = sbr.rel (%p550) target = $region64
        $region63: #{tpu_custom_call.1} parent=11 // pred_region
          %s554 = ssub.s32 8192, 8192
          %555 = vsyncadd [#allocation8], %s554
          %s556 = sshll.u32 [#allocation9], 4
          %s557 = int_to_ptr.vmem [resolvable:$true] %s556
          %562 = dma.hbm_to_vmem [thread:$0]  %s13, 8192, %s557, [#allocation8], 128, 128, 8
        $region64: #{tpu_custom_call.1} parent=11 // pred_fallthru
          _
        // Predicated region
        $region65: #{tpu_custom_call.1} parent=11 // pred_check
          %p563 = pneg %p349
        $region66: #{tpu_custom_call.1} parent=11 // pred_check_branch
          %565 = sbr.rel (%p563) target = $region68
        $region67: #{tpu_custom_call.1} parent=11 // pred_region
          _
        $region68: #{tpu_custom_call.1} parent=11 // pred_fallthru
          _
        // Predicated region
        $region69: #{tpu_custom_call.1} parent=11 // pred_check
          %p566 = pneg %p370
        $region70: #{tpu_custom_call.1} parent=11 // pred_check_branch
          %568 = sbr.rel (%p566) target = $region72
        $region71: #{tpu_custom_call.1} parent=11 // pred_region
          %s570 = ssub.s32 2048, 2048
          %571 = vsyncadd [#allocation11], %s570
          %s572 = sshll.u32 [#allocation10], 4
          %s573 = int_to_ptr.vmem [resolvable:$true] %s572
          %578 = dma.hbm_to_vmem [thread:$0]  %s15, 2048, %s573, [#allocation11], 64, 64, 4
        $region72: #{tpu_custom_call.1} parent=11 // pred_fallthru
          _
        // Predicated region
        $region73: #{tpu_custom_call.1} parent=11 // pred_check
          %p579 = pneg %p391
        $region74: #{tpu_custom_call.1} parent=11 // pred_check_branch
          %581 = sbr.rel (%p579) target = $region76
        $region75: #{tpu_custom_call.1} parent=11 // pred_region
          _
        $region76: #{tpu_custom_call.1} parent=11 // pred_fallthru
          _
        // Predicated region
        $region77: #{tpu_custom_call.1} parent=11 // pred_check
          %p582 = pneg %p412
        $region78: #{tpu_custom_call.1} parent=11 // pred_check_branch
          %584 = sbr.rel (%p582) target = $region80
        $region79: #{tpu_custom_call.1} parent=11 // pred_region
          _
        $region80: #{tpu_custom_call.1} parent=11 // pred_fallthru
          _
        // Predicated region
        $region81: #{tpu_custom_call.1} parent=11 // pred_check
          %p585 = pneg %p433
        $region82: #{tpu_custom_call.1} parent=11 // pred_check_branch
          %587 = sbr.rel (%p585) target = $region84
        $region83: #{tpu_custom_call.1} parent=11 // pred_region
          _
        $region84: #{tpu_custom_call.1} parent=11 // pred_fallthru
          _
      $region12: #{tpu_custom_call.1} parent=5 // pred_fallthru
        _
      %p588 = scmp.lt.s32.totalorder %s29, 2
      // Predicated region
      $region85: #{tpu_custom_call.1} parent=5 // pred_check
        %p589 = pneg %p588
      $region86: #{tpu_custom_call.1} parent=5 // pred_check_branch
        %591 = sbr.rel (%p589) target = $region88
      $region87: #{tpu_custom_call.1} parent=5 // pred_region
        // Predicated region
        $region89: #{tpu_custom_call.1} parent=87 // pred_check
          %p592 = pneg %p49
        $region90: #{tpu_custom_call.1} parent=87 // pred_check_branch
          %594 = sbr.rel (%p592) target = $region92
        $region91: #{tpu_custom_call.1} parent=87 // pred_region
          %s595 = smul.u32 32, %s29
          %p596 = scmp.lt.s32.totalorder %s595, 63
          %s597 = scalar_select %p596, %s595, 63
          %s598 = smul.addr %s597, 8
          %s599 = scalar_lea.vmem %s0, %s598
          %s600 = smul.u32 32, %s29
        $region92: #{tpu_custom_call.1} parent=87 // pred_fallthru
          _
      $region88: #{tpu_custom_call.1} parent=5 // pred_fallthru
        _
      %p601 = scmp.le.s32.totalorder 1, %s29
      %p602 = scmp.lt.s32.totalorder %s29, 3
      %p603 = pnand %p601, %p602
      %p604 = pneg %p603
      // Predicated region
      $region93: #{tpu_custom_call.1} parent=5 // pred_check
        _
      $region94: #{tpu_custom_call.1} parent=5 // pred_check_branch
        %606 = sbr.rel (%p603) target = $region96
      $region95: #{tpu_custom_call.1} parent=5 // pred_region
        %s607 = ssub.s32 %s29, 1
        // Predicated region
        $region97: #{tpu_custom_call.1} parent=95 // pred_check
          %p608 = pneg %p118
        $region98: #{tpu_custom_call.1} parent=95 // pred_check_branch
          %610 = sbr.rel (%p608) target = $region100
        $region99: #{tpu_custom_call.1} parent=95 // pred_region
          %611 = dma.done [#allocation3], 2048
        $region100: #{tpu_custom_call.1} parent=95 // pred_fallthru
          _
        // Predicated region
        $region101: #{tpu_custom_call.1} parent=95 // pred_check
          %p612 = pneg %p202
        $region102: #{tpu_custom_call.1} parent=95 // pred_check_branch
          %614 = sbr.rel (%p612) target = $region104
        $region103: #{tpu_custom_call.1} parent=95 // pred_region
          %615 = dma.done [#allocation5], 16384
        $region104: #{tpu_custom_call.1} parent=95 // pred_fallthru
          _
        // Predicated region
        $region105: #{tpu_custom_call.1} parent=95 // pred_check
          %p616 = pneg %p244
        $region106: #{tpu_custom_call.1} parent=95 // pred_check_branch
          %618 = sbr.rel (%p616) target = $region108
        $region107: #{tpu_custom_call.1} parent=95 // pred_region
          %619 = dma.done [#allocation5], 16384
        $region108: #{tpu_custom_call.1} parent=95 // pred_fallthru
          _
        // Predicated region
        $region109: #{tpu_custom_call.1} parent=95 // pred_check
          %p620 = pneg %p286
        $region110: #{tpu_custom_call.1} parent=95 // pred_check_branch
          %622 = sbr.rel (%p620) target = $region112
        $region111: #{tpu_custom_call.1} parent=95 // pred_region
          %623 = dma.done [#allocation8], 16384
        $region112: #{tpu_custom_call.1} parent=95 // pred_fallthru
          _
        // Predicated region
        $region113: #{tpu_custom_call.1} parent=95 // pred_check
          %p624 = pneg %p328
        $region114: #{tpu_custom_call.1} parent=95 // pred_check_branch
          %626 = sbr.rel (%p624) target = $region116
        $region115: #{tpu_custom_call.1} parent=95 // pred_region
          %627 = dma.done [#allocation8], 8192
        $region116: #{tpu_custom_call.1} parent=95 // pred_fallthru
          _
        // Predicated region
        $region117: #{tpu_custom_call.1} parent=95 // pred_check
          %p628 = pneg %p370
        $region118: #{tpu_custom_call.1} parent=95 // pred_check_branch
          %630 = sbr.rel (%p628) target = $region120
        $region119: #{tpu_custom_call.1} parent=95 // pred_region
          %631 = dma.done [#allocation11], 2048
        $region120: #{tpu_custom_call.1} parent=95 // pred_fallthru
          _
        %s632 = smul.u32 32, %s34
        %p633 = scmp.lt.s32.totalorder %s632, 63
        %s634 = scalar_select %p633, %s632, 63
        %s635 = smul.addr %s634, 8
        %s636 = scalar_lea.vmem %s0, %s635
        %p637 = pneg %p55
        %p638 = pneg %p52
        %p639 = pneg %p76
        %p640 = pneg %p73
        %p641 = pneg %p97
        %p642 = pneg %p94
        %p643 = pneg %p118
        %p644 = pneg %p115
        %p645 = pneg %p139
        %p646 = pneg %p136
        %p647 = pneg %p160
        %p648 = pneg %p157
        %p649 = pneg %p181
        %p650 = pneg %p178
        %p651 = pneg %p202
        %p652 = pneg %p199
        %p653 = pneg %p223
        %p654 = pneg %p220
        %p655 = pneg %p244
        %p656 = pneg %p241
        %p657 = pneg %p265
        %p658 = pneg %p262
        %p659 = pneg %p286
        %p660 = pneg %p283
        %p661 = pneg %p307
        %p662 = pneg %p304
        %p663 = pneg %p328
        %p664 = pneg %p325
        %p665 = pneg %p349
        %p666 = pneg %p346
        %p667 = pneg %p370
        %p668 = pneg %p367
        %p669 = pneg %p391
        %p670 = pneg %p388
        %p671 = pneg %p412
        %p672 = pneg %p409
        %p673 = pneg %p433
        %p674 = pneg %p430
        %p675 = pneg %p459
        %p676 = pneg %p456
        %s677 = smul.u32 32, %s34
        %p678 = scmp.lt.s32.totalorder %s677, 63
        %s679 = scalar_select %p678, %s677, 63
        %s680 = smul.addr %s679, 8
        %s681 = scalar_lea.vmem %s19, %s680
        %s682 = smul.u32 32, %s34
        %p683 = scmp.lt.s32.totalorder %s682, 63
        %s684 = scalar_select %p683, %s682, 63
        %s685 = smul.addr %s684, 8
        %s686 = scalar_lea.vmem %s0, %s685
        %s687 = smul.u32 32, %s34
        %s688 = smul.u32 32, %s34
        %p689 = scmp.lt.s32.totalorder %s688, 63
        %s690 = scalar_select %p689, %s688, 63
        %s691 = smul.addr %s690, 8
        %s692 = scalar_lea.vmem %s19, %s691
        %s693 = smul.u32 32, %s34
        %v695 = vld [vmem:[%s686] sm:$0xff]
        %v696 = vld [vmem:[%s686 + $0x8] sm:$0xff]
        %v697 = vld [vmem:[%s686 + $0x10] sm:$0xff]
        %v698 = vld [vmem:[%s686 + $0x18] sm:$0xff]
        %v699 = vld [vmem:[%s686 + $0x20] sm:$0xff]
        %v700 = vld [vmem:[%s686 + $0x28] sm:$0xff]
        %v701 = vld [vmem:[%s686 + $0x30] sm:$0xff]
        %v702 = vld [vmem:[%s686 + $0x38] sm:$0xff]
        %v703 = vld [vmem:[%s686 + $0x40] sm:$0xff]
        %v704 = vld [vmem:[%s686 + $0x48] sm:$0xff]
        %v705 = vld [vmem:[%s686 + $0x50] sm:$0xff]
        %v706 = vld [vmem:[%s686 + $0x58] sm:$0xff]
        %v707 = vld [vmem:[%s686 + $0x60] sm:$0xff]
        %v708 = vld [vmem:[%s686 + $0x68] sm:$0xff]
        %v709 = vld [vmem:[%s686 + $0x70] sm:$0xff]
        %v710 = vld [vmem:[%s686 + $0x78] sm:$0xff]
        %v711 = vld [vmem:[%s686 + $0x80] sm:$0xff]
        %v712 = vld [vmem:[%s686 + $0x88] sm:$0xff]
        %v713 = vld [vmem:[%s686 + $0x90] sm:$0xff]
        %v714 = vld [vmem:[%s686 + $0x98] sm:$0xff]
        %v715 = vld [vmem:[%s686 + $0xa0] sm:$0xff]
        %v716 = vld [vmem:[%s686 + $0xa8] sm:$0xff]
        %v717 = vld [vmem:[%s686 + $0xb0] sm:$0xff]
        %v718 = vld [vmem:[%s686 + $0xb8] sm:$0xff]
        %v719 = vld [vmem:[%s686 + $0xc0] sm:$0xff]
        %v720 = vld [vmem:[%s686 + $0xc8] sm:$0xff]
        %v721 = vld [vmem:[%s686 + $0xd0] sm:$0xff]
        %v722 = vld [vmem:[%s686 + $0xd8] sm:$0xff]
        %v723 = vld [vmem:[%s686 + $0xe0] sm:$0xff]
        %v724 = vld [vmem:[%s686 + $0xe8] sm:$0xff]
        %v725 = vld [vmem:[%s686 + $0xf0] sm:$0xff]
        %v726 = vld [vmem:[%s686 + $0xf8] sm:$0xff]
        %v727 = vld [vmem:[%s1] sm:$0x3]
        %v728 = vld [vmem:[%s2] sm:$0x1]
        %730 = vset.pattern.permute.xlu0 0
        %731 = vperm.xlu0 %730, %v695
        %v732 = vpop.permute.xlu0 %731
        %735 = vset.pattern.permute.xlu0 0
        %736 = vperm.xlu0 %735, %v696
        %v737 = vpop.permute.xlu0 %736
        %740 = vset.pattern.permute.xlu0 0
        %741 = vperm.xlu0 %740, %v697
        %v742 = vpop.permute.xlu0 %741
        %745 = vset.pattern.permute.xlu0 0
        %746 = vperm.xlu0 %745, %v698
        %v747 = vpop.permute.xlu0 %746
        %750 = vset.pattern.permute.xlu0 0
        %751 = vperm.xlu0 %750, %v699
        %v752 = vpop.permute.xlu0 %751
        %755 = vset.pattern.permute.xlu0 0
        %756 = vperm.xlu0 %755, %v700
        %v757 = vpop.permute.xlu0 %756
        %760 = vset.pattern.permute.xlu0 0
        %761 = vperm.xlu0 %760, %v701
        %v762 = vpop.permute.xlu0 %761
        %765 = vset.pattern.permute.xlu0 0
        %766 = vperm.xlu0 %765, %v702
        %v767 = vpop.permute.xlu0 %766
        %770 = vset.pattern.permute.xlu0 0
        %771 = vperm.xlu0 %770, %v703
        %v772 = vpop.permute.xlu0 %771
        %775 = vset.pattern.permute.xlu0 0
        %776 = vperm.xlu0 %775, %v704
        %v777 = vpop.permute.xlu0 %776
        %780 = vset.pattern.permute.xlu0 0
        %781 = vperm.xlu0 %780, %v705
        %v782 = vpop.permute.xlu0 %781
        %785 = vset.pattern.permute.xlu0 0
        %786 = vperm.xlu0 %785, %v706
        %v787 = vpop.permute.xlu0 %786
        %790 = vset.pattern.permute.xlu0 0
        %791 = vperm.xlu0 %790, %v707
        %v792 = vpop.permute.xlu0 %791
        %795 = vset.pattern.permute.xlu0 0
        %796 = vperm.xlu0 %795, %v708
        %v797 = vpop.permute.xlu0 %796
        %800 = vset.pattern.permute.xlu0 0
        %801 = vperm.xlu0 %800, %v709
        %v802 = vpop.permute.xlu0 %801
        %805 = vset.pattern.permute.xlu0 0
        %806 = vperm.xlu0 %805, %v710
        %v807 = vpop.permute.xlu0 %806
        %810 = vset.pattern.permute.xlu0 0
        %811 = vperm.xlu0 %810, %v711
        %v812 = vpop.permute.xlu0 %811
        %815 = vset.pattern.permute.xlu0 0
        %816 = vperm.xlu0 %815, %v712
        %v817 = vpop.permute.xlu0 %816
        %820 = vset.pattern.permute.xlu0 0
        %821 = vperm.xlu0 %820, %v713
        %v822 = vpop.permute.xlu0 %821
        %825 = vset.pattern.permute.xlu0 0
        %826 = vperm.xlu0 %825, %v714
        %v827 = vpop.permute.xlu0 %826
        %830 = vset.pattern.permute.xlu0 0
        %831 = vperm.xlu0 %830, %v715
        %v832 = vpop.permute.xlu0 %831
        %835 = vset.pattern.permute.xlu0 0
        %836 = vperm.xlu0 %835, %v716
        %v837 = vpop.permute.xlu0 %836
        %840 = vset.pattern.permute.xlu0 0
        %841 = vperm.xlu0 %840, %v717
        %v842 = vpop.permute.xlu0 %841
        %845 = vset.pattern.permute.xlu0 0
        %846 = vperm.xlu0 %845, %v718
        %v847 = vpop.permute.xlu0 %846
        %850 = vset.pattern.permute.xlu0 0
        %851 = vperm.xlu0 %850, %v719
        %v852 = vpop.permute.xlu0 %851
        %855 = vset.pattern.permute.xlu0 0
        %856 = vperm.xlu0 %855, %v720
        %v857 = vpop.permute.xlu0 %856
        %860 = vset.pattern.permute.xlu0 0
        %861 = vperm.xlu0 %860, %v721
        %v862 = vpop.permute.xlu0 %861
        %865 = vset.pattern.permute.xlu0 0
        %866 = vperm.xlu0 %865, %v722
        %v867 = vpop.permute.xlu0 %866
        %870 = vset.pattern.permute.xlu0 0
        %871 = vperm.xlu0 %870, %v723
        %v872 = vpop.permute.xlu0 %871
        %875 = vset.pattern.permute.xlu0 0
        %876 = vperm.xlu0 %875, %v724
        %v877 = vpop.permute.xlu0 %876
        %880 = vset.pattern.permute.xlu0 0
        %881 = vperm.xlu0 %880, %v725
        %v882 = vpop.permute.xlu0 %881
        %885 = vset.pattern.permute.xlu0 0
        %886 = vperm.xlu0 %885, %v726
        %v887 = vpop.permute.xlu0 %886
        %v889 = vlaneseq
        %v890 = vshrl.u32 %v889, 7
        %v891 = vsub.s32 0, %v890
        %v892 = vrot.slane %v727, %v891
        %v893 = vmul.f32 %v732, %v892
        %v894 = vmul.f32 %v737, %v892
        %v895 = vmul.f32 %v742, %v892
        %v896 = vmul.f32 %v747, %v892
        %v897 = vmul.f32 %v752, %v892
        %v898 = vmul.f32 %v757, %v892
        %v899 = vmul.f32 %v762, %v892
        %v900 = vmul.f32 %v767, %v892
        %v901 = vmul.f32 %v772, %v892
        %v902 = vmul.f32 %v777, %v892
        %v903 = vmul.f32 %v782, %v892
        %v904 = vmul.f32 %v787, %v892
        %v905 = vmul.f32 %v792, %v892
        %v906 = vmul.f32 %v797, %v892
        %v907 = vmul.f32 %v802, %v892
        %v908 = vmul.f32 %v807, %v892
        %v909 = vmul.f32 %v812, %v892
        %v910 = vmul.f32 %v817, %v892
        %v911 = vmul.f32 %v822, %v892
        %v912 = vmul.f32 %v827, %v892
        %v913 = vmul.f32 %v832, %v892
        %v914 = vmul.f32 %v837, %v892
        %v915 = vmul.f32 %v842, %v892
        %v916 = vmul.f32 %v847, %v892
        %v917 = vmul.f32 %v852, %v892
        %v918 = vmul.f32 %v857, %v892
        %v919 = vmul.f32 %v862, %v892
        %v920 = vmul.f32 %v867, %v892
        %v921 = vmul.f32 %v872, %v892
        %v922 = vmul.f32 %v877, %v892
        %v923 = vmul.f32 %v882, %v892
        %v924 = vmul.f32 %v887, %v892
        %925 = vset.pattern.permute.xlu0 1
        %926 = vperm.xlu0 %925, %v695
        %v927 = vpop.permute.xlu0 %926
        %929 = vset.pattern.permute.xlu0 1
        %930 = vperm.xlu0 %929, %v696
        %v931 = vpop.permute.xlu0 %930
        %933 = vset.pattern.permute.xlu0 1
        %934 = vperm.xlu0 %933, %v697
        %v935 = vpop.permute.xlu0 %934
        %937 = vset.pattern.permute.xlu0 1
        %938 = vperm.xlu0 %937, %v698
        %v939 = vpop.permute.xlu0 %938
        %941 = vset.pattern.permute.xlu0 1
        %942 = vperm.xlu0 %941, %v699
        %v943 = vpop.permute.xlu0 %942
        %945 = vset.pattern.permute.xlu0 1
        %946 = vperm.xlu0 %945, %v700
        %v947 = vpop.permute.xlu0 %946
        %949 = vset.pattern.permute.xlu0 1
        %950 = vperm.xlu0 %949, %v701
        %v951 = vpop.permute.xlu0 %950
        %953 = vset.pattern.permute.xlu0 1
        %954 = vperm.xlu0 %953, %v702
        %v955 = vpop.permute.xlu0 %954
        %957 = vset.pattern.permute.xlu0 1
        %958 = vperm.xlu0 %957, %v703
        %v959 = vpop.permute.xlu0 %958
        %961 = vset.pattern.permute.xlu0 1
        %962 = vperm.xlu0 %961, %v704
        %v963 = vpop.permute.xlu0 %962
        %965 = vset.pattern.permute.xlu0 1
        %966 = vperm.xlu0 %965, %v705
        %v967 = vpop.permute.xlu0 %966
        %969 = vset.pattern.permute.xlu0 1
        %970 = vperm.xlu0 %969, %v706
        %v971 = vpop.permute.xlu0 %970
        %973 = vset.pattern.permute.xlu0 1
        %974 = vperm.xlu0 %973, %v707
        %v975 = vpop.permute.xlu0 %974
        %977 = vset.pattern.permute.xlu0 1
        %978 = vperm.xlu0 %977, %v708
        %v979 = vpop.permute.xlu0 %978
        %981 = vset.pattern.permute.xlu0 1
        %982 = vperm.xlu0 %981, %v709
        %v983 = vpop.permute.xlu0 %982
        %985 = vset.pattern.permute.xlu0 1
        %986 = vperm.xlu0 %985, %v710
        %v987 = vpop.permute.xlu0 %986
        %989 = vset.pattern.permute.xlu0 1
        %990 = vperm.xlu0 %989, %v711
        %v991 = vpop.permute.xlu0 %990
        %993 = vset.pattern.permute.xlu0 1
        %994 = vperm.xlu0 %993, %v712
        %v995 = vpop.permute.xlu0 %994
        %997 = vset.pattern.permute.xlu0 1
        %998 = vperm.xlu0 %997, %v713
        %v999 = vpop.permute.xlu0 %998
        %1001 = vset.pattern.permute.xlu0 1
        %1002 = vperm.xlu0 %1001, %v714
        %v1003 = vpop.permute.xlu0 %1002
        %1005 = vset.pattern.permute.xlu0 1
        %1006 = vperm.xlu0 %1005, %v715
        %v1007 = vpop.permute.xlu0 %1006
        %1009 = vset.pattern.permute.xlu0 1
        %1010 = vperm.xlu0 %1009, %v716
        %v1011 = vpop.permute.xlu0 %1010
        %1013 = vset.pattern.permute.xlu0 1
        %1014 = vperm.xlu0 %1013, %v717
        %v1015 = vpop.permute.xlu0 %1014
        %1017 = vset.pattern.permute.xlu0 1
        %1018 = vperm.xlu0 %1017, %v718
        %v1019 = vpop.permute.xlu0 %1018
        %1021 = vset.pattern.permute.xlu0 1
        %1022 = vperm.xlu0 %1021, %v719
        %v1023 = vpop.permute.xlu0 %1022
        %1025 = vset.pattern.permute.xlu0 1
        %1026 = vperm.xlu0 %1025, %v720
        %v1027 = vpop.permute.xlu0 %1026
        %1029 = vset.pattern.permute.xlu0 1
        %1030 = vperm.xlu0 %1029, %v721
        %v1031 = vpop.permute.xlu0 %1030
        %1033 = vset.pattern.permute.xlu0 1
        %1034 = vperm.xlu0 %1033, %v722
        %v1035 = vpop.permute.xlu0 %1034
        %1037 = vset.pattern.permute.xlu0 1
        %1038 = vperm.xlu0 %1037, %v723
        %v1039 = vpop.permute.xlu0 %1038
        %1041 = vset.pattern.permute.xlu0 1
        %1042 = vperm.xlu0 %1041, %v724
        %v1043 = vpop.permute.xlu0 %1042
        %1045 = vset.pattern.permute.xlu0 1
        %1046 = vperm.xlu0 %1045, %v725
        %v1047 = vpop.permute.xlu0 %1046
        %1049 = vset.pattern.permute.xlu0 1
        %1050 = vperm.xlu0 %1049, %v726
        %v1051 = vpop.permute.xlu0 %1050
        %v1053 = vlaneseq
        %v1054 = vshrl.u32 %v1053, 7
        %v1055 = vsub.s32 1, %v1054
        %v1056 = vrot.slane %v727, %v1055
        %v1057 = vmul.f32 %v927, %v1056
        %v1058 = vmul.f32 %v931, %v1056
        %v1059 = vmul.f32 %v935, %v1056
        %v1060 = vmul.f32 %v939, %v1056
        %v1061 = vmul.f32 %v943, %v1056
        %v1062 = vmul.f32 %v947, %v1056
        %v1063 = vmul.f32 %v951, %v1056
        %v1064 = vmul.f32 %v955, %v1056
        %v1065 = vmul.f32 %v959, %v1056
        %v1066 = vmul.f32 %v963, %v1056
        %v1067 = vmul.f32 %v967, %v1056
        %v1068 = vmul.f32 %v971, %v1056
        %v1069 = vmul.f32 %v975, %v1056
        %v1070 = vmul.f32 %v979, %v1056
        %v1071 = vmul.f32 %v983, %v1056
        %v1072 = vmul.f32 %v987, %v1056
        %v1073 = vmul.f32 %v991, %v1056
        %v1074 = vmul.f32 %v995, %v1056
        %v1075 = vmul.f32 %v999, %v1056
        %v1076 = vmul.f32 %v1003, %v1056
        %v1077 = vmul.f32 %v1007, %v1056
        %v1078 = vmul.f32 %v1011, %v1056
        %v1079 = vmul.f32 %v1015, %v1056
        %v1080 = vmul.f32 %v1019, %v1056
        %v1081 = vmul.f32 %v1023, %v1056
        %v1082 = vmul.f32 %v1027, %v1056
        %v1083 = vmul.f32 %v1031, %v1056
        %v1084 = vmul.f32 %v1035, %v1056
        %v1085 = vmul.f32 %v1039, %v1056
        %v1086 = vmul.f32 %v1043, %v1056
        %v1087 = vmul.f32 %v1047, %v1056
        %v1088 = vmul.f32 %v1051, %v1056
        %v1089 = vadd.f32 %v893, %v1057
        %v1090 = vadd.f32 %v894, %v1058
        %v1091 = vadd.f32 %v895, %v1059
        %v1092 = vadd.f32 %v896, %v1060
        %v1093 = vadd.f32 %v897, %v1061
        %v1094 = vadd.f32 %v898, %v1062
        %v1095 = vadd.f32 %v899, %v1063
        %v1096 = vadd.f32 %v900, %v1064
        %v1097 = vadd.f32 %v901, %v1065
        %v1098 = vadd.f32 %v902, %v1066
        %v1099 = vadd.f32 %v903, %v1067
        %v1100 = vadd.f32 %v904, %v1068
        %v1101 = vadd.f32 %v905, %v1069
        %v1102 = vadd.f32 %v906, %v1070
        %v1103 = vadd.f32 %v907, %v1071
        %v1104 = vadd.f32 %v908, %v1072
        %v1105 = vadd.f32 %v909, %v1073
        %v1106 = vadd.f32 %v910, %v1074
        %v1107 = vadd.f32 %v911, %v1075
        %v1108 = vadd.f32 %v912, %v1076
        %v1109 = vadd.f32 %v913, %v1077
        %v1110 = vadd.f32 %v914, %v1078
        %v1111 = vadd.f32 %v915, %v1079
        %v1112 = vadd.f32 %v916, %v1080
        %v1113 = vadd.f32 %v917, %v1081
        %v1114 = vadd.f32 %v918, %v1082
        %v1115 = vadd.f32 %v919, %v1083
        %v1116 = vadd.f32 %v920, %v1084
        %v1117 = vadd.f32 %v921, %v1085
        %v1118 = vadd.f32 %v922, %v1086
        %v1119 = vadd.f32 %v923, %v1087
        %v1120 = vadd.f32 %v924, %v1088
        %v1122 = vlaneseq
        %v1123 = vshrl.u32 %v1122, 7
        %v1124 = vsub.s32 0, %v1123
        %v1125 = vrot.slane %v728, %v1124
        %v1127 = vadd.f32 %v1089, %v1125
        %v1128 = vadd.f32 %v1090, %v1125
        %v1129 = vadd.f32 %v1091, %v1125
        %v1130 = vadd.f32 %v1092, %v1125
        %v1131 = vadd.f32 %v1093, %v1125
        %v1132 = vadd.f32 %v1094, %v1125
        %v1133 = vadd.f32 %v1095, %v1125
        %v1134 = vadd.f32 %v1096, %v1125
        %v1135 = vadd.f32 %v1097, %v1125
        %v1136 = vadd.f32 %v1098, %v1125
        %v1137 = vadd.f32 %v1099, %v1125
        %v1138 = vadd.f32 %v1100, %v1125
        %v1139 = vadd.f32 %v1101, %v1125
        %v1140 = vadd.f32 %v1102, %v1125
        %v1141 = vadd.f32 %v1103, %v1125
        %v1142 = vadd.f32 %v1104, %v1125
        %v1143 = vadd.f32 %v1105, %v1125
        %v1144 = vadd.f32 %v1106, %v1125
        %v1145 = vadd.f32 %v1107, %v1125
        %v1146 = vadd.f32 %v1108, %v1125
        %v1147 = vadd.f32 %v1109, %v1125
        %v1148 = vadd.f32 %v1110, %v1125
        %v1149 = vadd.f32 %v1111, %v1125
        %v1150 = vadd.f32 %v1112, %v1125
        %v1151 = vadd.f32 %v1113, %v1125
        %v1152 = vadd.f32 %v1114, %v1125
        %v1153 = vadd.f32 %v1115, %v1125
        %v1154 = vadd.f32 %v1116, %v1125
        %v1155 = vadd.f32 %v1117, %v1125
        %v1156 = vadd.f32 %v1118, %v1125
        %v1157 = vadd.f32 %v1119, %v1125
        %v1158 = vadd.f32 %v1120, %v1125
        %v1159 = vmax.f32 %v1127, 0.0
        %v1160 = vmax.f32 %v1128, 0.0
        %v1161 = vmax.f32 %v1129, 0.0
        %v1162 = vmax.f32 %v1130, 0.0
        %v1163 = vmax.f32 %v1131, 0.0
        %v1164 = vmax.f32 %v1132, 0.0
        %v1165 = vmax.f32 %v1133, 0.0
        %v1166 = vmax.f32 %v1134, 0.0
        %v1167 = vmax.f32 %v1135, 0.0
        %v1168 = vmax.f32 %v1136, 0.0
        %v1169 = vmax.f32 %v1137, 0.0
        %v1170 = vmax.f32 %v1138, 0.0
        %v1171 = vmax.f32 %v1139, 0.0
        %v1172 = vmax.f32 %v1140, 0.0
        %v1173 = vmax.f32 %v1141, 0.0
        %v1174 = vmax.f32 %v1142, 0.0
        %v1175 = vmax.f32 %v1143, 0.0
        %v1176 = vmax.f32 %v1144, 0.0
        %v1177 = vmax.f32 %v1145, 0.0
        %v1178 = vmax.f32 %v1146, 0.0
        %v1179 = vmax.f32 %v1147, 0.0
        %v1180 = vmax.f32 %v1148, 0.0
        %v1181 = vmax.f32 %v1149, 0.0
        %v1182 = vmax.f32 %v1150, 0.0
        %v1183 = vmax.f32 %v1151, 0.0
        %v1184 = vmax.f32 %v1152, 0.0
        %v1185 = vmax.f32 %v1153, 0.0
        %v1186 = vmax.f32 %v1154, 0.0
        %v1187 = vmax.f32 %v1155, 0.0
        %v1188 = vmax.f32 %v1156, 0.0
        %v1189 = vmax.f32 %v1157, 0.0
        %v1190 = vmax.f32 %v1158, 0.0
        %v1191 = vpack.c.bf16 %v1160, %v1159
        %v1192 = vpack.c.bf16 %v1162, %v1161
        %v1193 = vpack.c.bf16 %v1164, %v1163
        %v1194 = vpack.c.bf16 %v1166, %v1165
        %v1195 = vpack.c.bf16 %v1168, %v1167
        %v1196 = vpack.c.bf16 %v1170, %v1169
        %v1197 = vpack.c.bf16 %v1172, %v1171
        %v1198 = vpack.c.bf16 %v1174, %v1173
        %v1199 = vpack.c.bf16 %v1176, %v1175
        %v1200 = vpack.c.bf16 %v1178, %v1177
        %v1201 = vpack.c.bf16 %v1180, %v1179
        %v1202 = vpack.c.bf16 %v1182, %v1181
        %v1203 = vpack.c.bf16 %v1184, %v1183
        %v1204 = vpack.c.bf16 %v1186, %v1185
        %v1205 = vpack.c.bf16 %v1188, %v1187
        %v1206 = vpack.c.bf16 %v1190, %v1189
        %v1207 = vld [vmem:[#allocation2] sm:$0xff]
        %v1208 = vld [vmem:[#allocation2 + $0x8] sm:$0xff]
        %v1209 = vld [vmem:[#allocation2 + $0x10] sm:$0xff]
        %v1210 = vld [vmem:[#allocation2 + $0x18] sm:$0xff]
        %v1211 = vld [vmem:[#allocation2 + $0x20] sm:$0xff]
        %v1212 = vld [vmem:[#allocation2 + $0x28] sm:$0xff]
        %v1213 = vld [vmem:[#allocation2 + $0x30] sm:$0xff]
        %v1214 = vld [vmem:[#allocation2 + $0x38] sm:$0xff]
        %v1215 = vld [vmem:[#allocation2 + $0x40] sm:$0xff]
        %v1216 = vld [vmem:[#allocation2 + $0x48] sm:$0xff]
        %v1217 = vld [vmem:[#allocation2 + $0x50] sm:$0xff]
        %v1218 = vld [vmem:[#allocation2 + $0x58] sm:$0xff]
        %v1219 = vld [vmem:[#allocation2 + $0x60] sm:$0xff]
        %v1220 = vld [vmem:[#allocation2 + $0x68] sm:$0xff]
        %v1221 = vld [vmem:[#allocation2 + $0x70] sm:$0xff]
        %v1222 = vld [vmem:[#allocation2 + $0x78] sm:$0xff]
        %v1223 = vld [vmem:[%s4] sm:$0x3]
        %v1240 = vunpack.c.l.b16 %v1207
        %v1241 = vunpack.c.h.b16 %v1207
        %v1242 = vunpack.c.l.b16 %v1208
        %v1243 = vunpack.c.h.b16 %v1208
        %v1244 = vunpack.c.l.b16 %v1209
        %v1245 = vunpack.c.h.b16 %v1209
        %v1246 = vunpack.c.l.b16 %v1210
        %v1247 = vunpack.c.h.b16 %v1210
        %v1248 = vunpack.c.l.b16 %v1211
        %v1249 = vunpack.c.h.b16 %v1211
        %v1250 = vunpack.c.l.b16 %v1212
        %v1251 = vunpack.c.h.b16 %v1212
        %v1252 = vunpack.c.l.b16 %v1213
        %v1253 = vunpack.c.h.b16 %v1213
        %v1254 = vunpack.c.l.b16 %v1214
        %v1255 = vunpack.c.h.b16 %v1214
        %v1256 = vunpack.c.l.b16 %v1215
        %v1257 = vunpack.c.h.b16 %v1215
        %v1258 = vunpack.c.l.b16 %v1216
        %v1259 = vunpack.c.h.b16 %v1216
        %v1260 = vunpack.c.l.b16 %v1217
        %v1261 = vunpack.c.h.b16 %v1217
        %v1262 = vunpack.c.l.b16 %v1218
        %v1263 = vunpack.c.h.b16 %v1218
        %v1264 = vunpack.c.l.b16 %v1219
        %v1265 = vunpack.c.h.b16 %v1219
        %v1266 = vunpack.c.l.b16 %v1220
        %v1267 = vunpack.c.h.b16 %v1220
        %v1268 = vunpack.c.l.b16 %v1221
        %v1269 = vunpack.c.h.b16 %v1221
        %v1270 = vunpack.c.l.b16 %v1222
        %v1271 = vunpack.c.h.b16 %v1222
        %v1272 = vpack.c.b16 %v1242, %v1240
        %v1273 = vpack.c.b16 %v1243, %v1241
        %v1274 = vpack.c.b16 %v1246, %v1244
        %v1275 = vpack.c.b16 %v1247, %v1245
        %v1276 = vpack.c.b16 %v1250, %v1248
        %v1277 = vpack.c.b16 %v1251, %v1249
        %v1278 = vpack.c.b16 %v1254, %v1252
        %v1279 = vpack.c.b16 %v1255, %v1253
        %v1280 = vpack.c.b16 %v1258, %v1256
        %v1281 = vpack.c.b16 %v1259, %v1257
        %v1282 = vpack.c.b16 %v1262, %v1260
        %v1283 = vpack.c.b16 %v1263, %v1261
        %v1284 = vpack.c.b16 %v1266, %v1264
        %v1285 = vpack.c.b16 %v1267, %v1265
        %v1286 = vpack.c.b16 %v1270, %v1268
        %v1287 = vpack.c.b16 %v1271, %v1269
        %1304 = vmatprep.subr.bf16.mxu0 %v1273
        %1305 = vmatpush1.bf16.msra.mxu0 %v1272
        %1306 = vmatprep.subr.bf16.mxu0 %v1275
        %1307 = vmatpush1.bf16.msra.mxu0 %v1274
        %1308 = vmatprep.subr.bf16.mxu0 %v1277
        %1309 = vmatpush1.bf16.msra.mxu0 %v1276
        %1310 = vmatprep.subr.bf16.mxu0 %v1279
        %1311 = vmatpush1.bf16.msra.mxu0 %v1278
        %1312 = vmatprep.subr.bf16.mxu0 %v1281
        %1313 = vmatpush1.bf16.msra.mxu0 %v1280
        %1314 = vmatprep.subr.bf16.mxu0 %v1283
        %1315 = vmatpush1.bf16.msra.mxu0 %v1282
        %1316 = vmatprep.subr.bf16.mxu0 %v1285
        %1317 = vmatpush1.bf16.msra.mxu0 %v1284
        %1318 = vmatprep.subr.bf16.mxu0 %v1287
        %1319 = vmatpush1.bf16.msra.mxu0 %v1286
        %1320 = vmatprep.subr.bf16.mxu0 0
        %1321 = vmatpush1.bf16.msra.mxu0 0
        %1322 = vmatprep.subr.bf16.mxu0 0
        %1323 = vmatpush1.bf16.msra.mxu0 0
        %1324 = vmatprep.subr.bf16.mxu0 0
        %1325 = vmatpush1.bf16.msra.mxu0 0
        %1326 = vmatprep.subr.bf16.mxu0 0
        %1327 = vmatpush1.bf16.msra.mxu0 0
        %1328 = vmatprep.subr.bf16.mxu0 0
        %1329 = vmatpush1.bf16.msra.mxu0 0
        %1330 = vmatprep.subr.bf16.mxu0 0
        %1331 = vmatpush1.bf16.msra.mxu0 0
        %1332 = vmatprep.subr.bf16.mxu0 0
        %1333 = vmatpush1.bf16.msra.mxu0 0
        %1334 = vmatprep.subr.bf16.mxu0 0
        %1335 = vmatpush1.bf16.msra.mxu0 0
        %1336 = vmatprep.mubr.bf16.mxu0 0
        %1337 = vmatmul.mubr.bf16.gmra.mrb[0].mxu0 %v1191
        %v1338 = vpop.f32.mrb[0].mxu0
        %v1339 = vadd.f32 0.0, %v1338
        %v1340 = vpop.f32.mrb[0].mxu0
        %v1341 = vadd.f32 0.0, %v1340
        %v1342 = vpop.f32.mrb[0].mxu0
        %v1343 = vadd.f32 0.0, %v1342
        %v1344 = vpop.f32.mrb[0].mxu0
        %v1345 = vadd.f32 0.0, %v1344
        %1346 = vmatprep.mubr.bf16.mxu0 0
        %1347 = vmatmul.mubr.bf16.gmra.mrb[0].mxu0 %v1192
        %v1348 = vpop.f32.mrb[0].mxu0
        %v1349 = vadd.f32 0.0, %v1348
        %v1350 = vpop.f32.mrb[0].mxu0
        %v1351 = vadd.f32 0.0, %v1350
        %v1352 = vpop.f32.mrb[0].mxu0
        %v1353 = vadd.f32 0.0, %v1352
        %v1354 = vpop.f32.mrb[0].mxu0
        %v1355 = vadd.f32 0.0, %v1354
        %1356 = vmatprep.mubr.bf16.mxu0 0
        %1357 = vmatmul.mubr.bf16.gmra.mrb[0].mxu0 %v1193
        %v1358 = vpop.f32.mrb[0].mxu0
        %v1359 = vadd.f32 0.0, %v1358
        %v1360 = vpop.f32.mrb[0].mxu0
        %v1361 = vadd.f32 0.0, %v1360
        %v1362 = vpop.f32.mrb[0].mxu0
        %v1363 = vadd.f32 0.0, %v1362
        %v1364 = vpop.f32.mrb[0].mxu0
        %v1365 = vadd.f32 0.0, %v1364
        %1366 = vmatprep.mubr.bf16.mxu0 0
        %1367 = vmatmul.mubr.bf16.gmra.mrb[0].mxu0 %v1194
        %v1368 = vpop.f32.mrb[0].mxu0
        %v1369 = vadd.f32 0.0, %v1368
        %v1370 = vpop.f32.mrb[0].mxu0
        %v1371 = vadd.f32 0.0, %v1370
        %v1372 = vpop.f32.mrb[0].mxu0
        %v1373 = vadd.f32 0.0, %v1372
        %v1374 = vpop.f32.mrb[0].mxu0
        %v1375 = vadd.f32 0.0, %v1374
        %1376 = vmatprep.mubr.bf16.mxu0 0
        %1377 = vmatmul.mubr.bf16.gmra.mrb[0].mxu0 %v1195
        %v1378 = vpop.f32.mrb[0].mxu0
        %v1379 = vadd.f32 0.0, %v1378
        %v1380 = vpop.f32.mrb[0].mxu0
        %v1381 = vadd.f32 0.0, %v1380
        %v1382 = vpop.f32.mrb[0].mxu0
        %v1383 = vadd.f32 0.0, %v1382
        %v1384 = vpop.f32.mrb[0].mxu0
        %v1385 = vadd.f32 0.0, %v1384
        %1386 = vmatprep.mubr.bf16.mxu0 0
        %1387 = vmatmul.mubr.bf16.gmra.mrb[0].mxu0 %v1196
        %v1388 = vpop.f32.mrb[0].mxu0
        %v1389 = vadd.f32 0.0, %v1388
        %v1390 = vpop.f32.mrb[0].mxu0
        %v1391 = vadd.f32 0.0, %v1390
        %v1392 = vpop.f32.mrb[0].mxu0
        %v1393 = vadd.f32 0.0, %v1392
        %v1394 = vpop.f32.mrb[0].mxu0
        %v1395 = vadd.f32 0.0, %v1394
        %1396 = vmatprep.mubr.bf16.mxu0 0
        %1397 = vmatmul.mubr.bf16.gmra.mrb[0].mxu0 %v1197
        %v1398 = vpop.f32.mrb[0].mxu0
        %v1399 = vadd.f32 0.0, %v1398
        %v1400 = vpop.f32.mrb[0].mxu0
        %v1401 = vadd.f32 0.0, %v1400
        %v1402 = vpop.f32.mrb[0].mxu0
        %v1403 = vadd.f32 0.0, %v1402
        %v1404 = vpop.f32.mrb[0].mxu0
        %v1405 = vadd.f32 0.0, %v1404
        %1406 = vmatprep.mubr.bf16.mxu0 0
        %1407 = vmatmul.mubr.bf16.gmra.mrb[0].mxu0 %v1198
        %v1408 = vpop.f32.mrb[0].mxu0
        %v1409 = vadd.f32 0.0, %v1408
        %v1410 = vpop.f32.mrb[0].mxu0
        %v1411 = vadd.f32 0.0, %v1410
        %v1412 = vpop.f32.mrb[0].mxu0
        %v1413 = vadd.f32 0.0, %v1412
        %v1414 = vpop.f32.mrb[0].mxu0
        %v1415 = vadd.f32 0.0, %v1414
        %1416 = vmatprep.mubr.bf16.mxu0 0
        %1417 = vmatmul.mubr.bf16.gmra.mrb[0].mxu0 %v1199
        %v1418 = vpop.f32.mrb[0].mxu0
        %v1419 = vadd.f32 0.0, %v1418
        %v1420 = vpop.f32.mrb[0].mxu0
        %v1421 = vadd.f32 0.0, %v1420
        %v1422 = vpop.f32.mrb[0].mxu0
        %v1423 = vadd.f32 0.0, %v1422
        %v1424 = vpop.f32.mrb[0].mxu0
        %v1425 = vadd.f32 0.0, %v1424
        %1426 = vmatprep.mubr.bf16.mxu0 0
        %1427 = vmatmul.mubr.bf16.gmra.mrb[0].mxu0 %v1200
        %v1428 = vpop.f32.mrb[0].mxu0
        %v1429 = vadd.f32 0.0, %v1428
        %v1430 = vpop.f32.mrb[0].mxu0
        %v1431 = vadd.f32 0.0, %v1430
        %v1432 = vpop.f32.mrb[0].mxu0
        %v1433 = vadd.f32 0.0, %v1432
        %v1434 = vpop.f32.mrb[0].mxu0
        %v1435 = vadd.f32 0.0, %v1434
        %1436 = vmatprep.mubr.bf16.mxu0 0
        %1437 = vmatmul.mubr.bf16.gmra.mrb[0].mxu0 %v1201
        %v1438 = vpop.f32.mrb[0].mxu0
        %v1439 = vadd.f32 0.0, %v1438
        %v1440 = vpop.f32.mrb[0].mxu0
        %v1441 = vadd.f32 0.0, %v1440
        %v1442 = vpop.f32.mrb[0].mxu0
        %v1443 = vadd.f32 0.0, %v1442
        %v1444 = vpop.f32.mrb[0].mxu0
        %v1445 = vadd.f32 0.0, %v1444
        %1446 = vmatprep.mubr.bf16.mxu0 0
        %1447 = vmatmul.mubr.bf16.gmra.mrb[0].mxu0 %v1202
        %v1448 = vpop.f32.mrb[0].mxu0
        %v1449 = vadd.f32 0.0, %v1448
        %v1450 = vpop.f32.mrb[0].mxu0
        %v1451 = vadd.f32 0.0, %v1450
        %v1452 = vpop.f32.mrb[0].mxu0
        %v1453 = vadd.f32 0.0, %v1452
        %v1454 = vpop.f32.mrb[0].mxu0
        %v1455 = vadd.f32 0.0, %v1454
        %1456 = vmatprep.mubr.bf16.mxu0 0
        %1457 = vmatmul.mubr.bf16.gmra.mrb[0].mxu0 %v1203
        %v1458 = vpop.f32.mrb[0].mxu0
        %v1459 = vadd.f32 0.0, %v1458
        %v1460 = vpop.f32.mrb[0].mxu0
        %v1461 = vadd.f32 0.0, %v1460
        %v1462 = vpop.f32.mrb[0].mxu0
        %v1463 = vadd.f32 0.0, %v1462
        %v1464 = vpop.f32.mrb[0].mxu0
        %v1465 = vadd.f32 0.0, %v1464
        %1466 = vmatprep.mubr.bf16.mxu0 0
        %1467 = vmatmul.mubr.bf16.gmra.mrb[0].mxu0 %v1204
        %v1468 = vpop.f32.mrb[0].mxu0
        %v1469 = vadd.f32 0.0, %v1468
        %v1470 = vpop.f32.mrb[0].mxu0
        %v1471 = vadd.f32 0.0, %v1470
        %v1472 = vpop.f32.mrb[0].mxu0
        %v1473 = vadd.f32 0.0, %v1472
        %v1474 = vpop.f32.mrb[0].mxu0
        %v1475 = vadd.f32 0.0, %v1474
        %1476 = vmatprep.mubr.bf16.mxu0 0
        %1477 = vmatmul.mubr.bf16.gmra.mrb[0].mxu0 %v1205
        %v1478 = vpop.f32.mrb[0].mxu0
        %v1479 = vadd.f32 0.0, %v1478
        %v1480 = vpop.f32.mrb[0].mxu0
        %v1481 = vadd.f32 0.0, %v1480
        %v1482 = vpop.f32.mrb[0].mxu0
        %v1483 = vadd.f32 0.0, %v1482
        %v1484 = vpop.f32.mrb[0].mxu0
        %v1485 = vadd.f32 0.0, %v1484
        %1486 = vmatprep.mubr.bf16.mxu0 0
        %1487 = vmatmul.mubr.bf16.gmra.mrb[0].mxu0 %v1206
        %v1488 = vpop.f32.mrb[0].mxu0
        %v1489 = vadd.f32 0.0, %v1488
        %v1490 = vpop.f32.mrb[0].mxu0
        %v1491 = vadd.f32 0.0, %v1490
        %v1492 = vpop.f32.mrb[0].mxu0
        %v1493 = vadd.f32 0.0, %v1492
        %v1494 = vpop.f32.mrb[0].mxu0
        %v1495 = vadd.f32 0.0, %v1494
        %1496 = vdwg.mxu0
        %v1497 = vpack.c.bf16 %v1343, %v1339
        %v1498 = vpack.c.bf16 %v1345, %v1341
        %v1499 = vpack.c.bf16 %v1353, %v1349
        %v1500 = vpack.c.bf16 %v1355, %v1351
        %v1501 = vpack.c.bf16 %v1363, %v1359
        %v1502 = vpack.c.bf16 %v1365, %v1361
        %v1503 = vpack.c.bf16 %v1373, %v1369
        %v1504 = vpack.c.bf16 %v1375, %v1371
        %v1505 = vpack.c.bf16 %v1383, %v1379
        %v1506 = vpack.c.bf16 %v1385, %v1381
        %v1507 = vpack.c.bf16 %v1393, %v1389
        %v1508 = vpack.c.bf16 %v1395, %v1391
        %v1509 = vpack.c.bf16 %v1403, %v1399
        %v1510 = vpack.c.bf16 %v1405, %v1401
        %v1511 = vpack.c.bf16 %v1413, %v1409
        %v1512 = vpack.c.bf16 %v1415, %v1411
        %v1513 = vpack.c.bf16 %v1423, %v1419
        %v1514 = vpack.c.bf16 %v1425, %v1421
        %v1515 = vpack.c.bf16 %v1433, %v1429
        %v1516 = vpack.c.bf16 %v1435, %v1431
        %v1517 = vpack.c.bf16 %v1443, %v1439
        %v1518 = vpack.c.bf16 %v1445, %v1441
        %v1519 = vpack.c.bf16 %v1453, %v1449
        %v1520 = vpack.c.bf16 %v1455, %v1451
        %v1521 = vpack.c.bf16 %v1463, %v1459
        %v1522 = vpack.c.bf16 %v1465, %v1461
        %v1523 = vpack.c.bf16 %v1473, %v1469
        %v1524 = vpack.c.bf16 %v1475, %v1471
        %v1525 = vpack.c.bf16 %v1483, %v1479
        %v1526 = vpack.c.bf16 %v1485, %v1481
        %v1527 = vpack.c.bf16 %v1493, %v1489
        %v1528 = vpack.c.bf16 %v1495, %v1491
        %v1531 = vunpack.c.l.s4 1966171168
        %v1532 = vunpack.c.0.s8 %v1531
        %v1533 = vlaneseq
        %v1534 = vshrl.u32 %v1533, 7
        %v1535 = vsub.s32 %v1532, %v1534
        %v1536 = vrot.slane %v1223, %v1535
        %v1537 = vcombine.high %v1536, %v1536
        %v1539 = vunpack.c.l.s4 1966171168
        %v1540 = vunpack.c.0.s8 %v1539
        %v1541 = vlaneseq
        %v1542 = vshrl.u32 %v1541, 7
        %v1543 = vsub.s32 %v1540, %v1542
        %v1544 = vrot.slane %v1536, %v1543
        %v1546 = vunpack.c.l.s4 1966171168
        %v1547 = vunpack.c.0.s8 %v1546
        %v1548 = vlaneseq
        %v1549 = vshrl.u32 %v1548, 7
        %v1550 = vsub.s32 %v1547, %v1549
        %v1551 = vrot.slane %v1537, %v1550
        %v1553 = vpack.i.b16 %v1544, %v1544
        %v1555 = vlaneseq
        %v1556 = vshrl.u32 %v1555, 7
        %v1557 = vsub.s32 0, %v1556
        %v1558 = vrot.slane %v1553, %v1557
        %v1560 = vpack.i.b16 %v1551, %v1551
        %v1562 = vlaneseq
        %v1563 = vshrl.u32 %v1562, 7
        %v1564 = vsub.s32 0, %v1563
        %v1565 = vrot.slane %v1560, %v1564
        %v1566 = vadd.bf16 %v1497, %v1558
        %v1567 = vadd.bf16 %v1498, %v1565
        %v1568 = vadd.bf16 %v1499, %v1558
        %v1569 = vadd.bf16 %v1500, %v1565
        %v1570 = vadd.bf16 %v1501, %v1558
        %v1571 = vadd.bf16 %v1502, %v1565
        %v1572 = vadd.bf16 %v1503, %v1558
        %v1573 = vadd.bf16 %v1504, %v1565
        %v1574 = vadd.bf16 %v1505, %v1558
        %v1575 = vadd.bf16 %v1506, %v1565
        %v1576 = vadd.bf16 %v1507, %v1558
        %v1577 = vadd.bf16 %v1508, %v1565
        %v1578 = vadd.bf16 %v1509, %v1558
        %v1579 = vadd.bf16 %v1510, %v1565
        %v1580 = vadd.bf16 %v1511, %v1558
        %v1581 = vadd.bf16 %v1512, %v1565
        %v1582 = vadd.bf16 %v1513, %v1558
        %v1583 = vadd.bf16 %v1514, %v1565
        %v1584 = vadd.bf16 %v1515, %v1558
        %v1585 = vadd.bf16 %v1516, %v1565
        %v1586 = vadd.bf16 %v1517, %v1558
        %v1587 = vadd.bf16 %v1518, %v1565
        %v1588 = vadd.bf16 %v1519, %v1558
        %v1589 = vadd.bf16 %v1520, %v1565
        %v1590 = vadd.bf16 %v1521, %v1558
        %v1591 = vadd.bf16 %v1522, %v1565
        %v1592 = vadd.bf16 %v1523, %v1558
        %v1593 = vadd.bf16 %v1524, %v1565
        %v1594 = vadd.bf16 %v1525, %v1558
        %v1595 = vadd.bf16 %v1526, %v1565
        %v1596 = vadd.bf16 %v1527, %v1558
        %v1597 = vadd.bf16 %v1528, %v1565
        %v1598 = vmax.bf16 %v1566, 0
        %v1599 = vmax.bf16 %v1567, 0
        %v1600 = vmax.bf16 %v1568, 0
        %v1601 = vmax.bf16 %v1569, 0
        %v1602 = vmax.bf16 %v1570, 0
        %v1603 = vmax.bf16 %v1571, 0
        %v1604 = vmax.bf16 %v1572, 0
        %v1605 = vmax.bf16 %v1573, 0
        %v1606 = vmax.bf16 %v1574, 0
        %v1607 = vmax.bf16 %v1575, 0
        %v1608 = vmax.bf16 %v1576, 0
        %v1609 = vmax.bf16 %v1577, 0
        %v1610 = vmax.bf16 %v1578, 0
        %v1611 = vmax.bf16 %v1579, 0
        %v1612 = vmax.bf16 %v1580, 0
        %v1613 = vmax.bf16 %v1581, 0
        %v1614 = vmax.bf16 %v1582, 0
        %v1615 = vmax.bf16 %v1583, 0
        %v1616 = vmax.bf16 %v1584, 0
        %v1617 = vmax.bf16 %v1585, 0
        %v1618 = vmax.bf16 %v1586, 0
        %v1619 = vmax.bf16 %v1587, 0
        %v1620 = vmax.bf16 %v1588, 0
        %v1621 = vmax.bf16 %v1589, 0
        %v1622 = vmax.bf16 %v1590, 0
        %v1623 = vmax.bf16 %v1591, 0
        %v1624 = vmax.bf16 %v1592, 0
        %v1625 = vmax.bf16 %v1593, 0
        %v1626 = vmax.bf16 %v1594, 0
        %v1627 = vmax.bf16 %v1595, 0
        %v1628 = vmax.bf16 %v1596, 0
        %v1629 = vmax.bf16 %v1597, 0
        %v1630 = vld [vmem:[%s5] sm:$0xff]
        %v1631 = vld [vmem:[%s5 + $0x8] sm:$0xff]
        %v1632 = vld [vmem:[%s5 + $0x10] sm:$0xff]
        %v1633 = vld [vmem:[%s5 + $0x18] sm:$0xff]
        %v1634 = vld [vmem:[%s5 + $0x20] sm:$0xff]
        %v1635 = vld [vmem:[%s5 + $0x28] sm:$0xff]
        %v1636 = vld [vmem:[%s5 + $0x30] sm:$0xff]
        %v1637 = vld [vmem:[%s5 + $0x38] sm:$0xff]
        %v1638 = vld [vmem:[%s5 + $0x40] sm:$0xff]
        %v1639 = vld [vmem:[%s5 + $0x48] sm:$0xff]
        %v1640 = vld [vmem:[%s5 + $0x50] sm:$0xff]
        %v1641 = vld [vmem:[%s5 + $0x58] sm:$0xff]
        %v1642 = vld [vmem:[%s5 + $0x60] sm:$0xff]
        %v1643 = vld [vmem:[%s5 + $0x68] sm:$0xff]
        %v1644 = vld [vmem:[%s5 + $0x70] sm:$0xff]
        %v1645 = vld [vmem:[%s5 + $0x78] sm:$0xff]
        %v1646 = vld [vmem:[%s5 + $0x80] sm:$0xff]
        %v1647 = vld [vmem:[%s5 + $0x88] sm:$0xff]
        %v1648 = vld [vmem:[%s5 + $0x90] sm:$0xff]
        %v1649 = vld [vmem:[%s5 + $0x98] sm:$0xff]
        %v1650 = vld [vmem:[%s5 + $0xa0] sm:$0xff]
        %v1651 = vld [vmem:[%s5 + $0xa8] sm:$0xff]
        %v1652 = vld [vmem:[%s5 + $0xb0] sm:$0xff]
        %v1653 = vld [vmem:[%s5 + $0xb8] sm:$0xff]
        %v1654 = vld [vmem:[%s5 + $0xc0] sm:$0xff]
        %v1655 = vld [vmem:[%s5 + $0xc8] sm:$0xff]
        %v1656 = vld [vmem:[%s5 + $0xd0] sm:$0xff]
        %v1657 = vld [vmem:[%s5 + $0xd8] sm:$0xff]
        %v1658 = vld [vmem:[%s5 + $0xe0] sm:$0xff]
        %v1659 = vld [vmem:[%s5 + $0xe8] sm:$0xff]
        %v1660 = vld [vmem:[%s5 + $0xf0] sm:$0xff]
        %v1661 = vld [vmem:[%s5 + $0xf8] sm:$0xff]
        %v1662 = vld [vmem:[%s5 + $0x100] sm:$0xff]
        %v1663 = vld [vmem:[%s5 + $0x108] sm:$0xff]
        %v1664 = vld [vmem:[%s5 + $0x110] sm:$0xff]
        %v1665 = vld [vmem:[%s5 + $0x118] sm:$0xff]
        %v1666 = vld [vmem:[%s5 + $0x120] sm:$0xff]
        %v1667 = vld [vmem:[%s5 + $0x128] sm:$0xff]
        %v1668 = vld [vmem:[%s5 + $0x130] sm:$0xff]
        %v1669 = vld [vmem:[%s5 + $0x138] sm:$0xff]
        %v1670 = vld [vmem:[%s5 + $0x140] sm:$0xff]
        %v1671 = vld [vmem:[%s5 + $0x148] sm:$0xff]
        %v1672 = vld [vmem:[%s5 + $0x150] sm:$0xff]
        %v1673 = vld [vmem:[%s5 + $0x158] sm:$0xff]
        %v1674 = vld [vmem:[%s5 + $0x160] sm:$0xff]
        %v1675 = vld [vmem:[%s5 + $0x168] sm:$0xff]
        %v1676 = vld [vmem:[%s5 + $0x170] sm:$0xff]
        %v1677 = vld [vmem:[%s5 + $0x178] sm:$0xff]
        %v1678 = vld [vmem:[%s5 + $0x180] sm:$0xff]
        %v1679 = vld [vmem:[%s5 + $0x188] sm:$0xff]
        %v1680 = vld [vmem:[%s5 + $0x190] sm:$0xff]
        %v1681 = vld [vmem:[%s5 + $0x198] sm:$0xff]
        %v1682 = vld [vmem:[%s5 + $0x1a0] sm:$0xff]
        %v1683 = vld [vmem:[%s5 + $0x1a8] sm:$0xff]
        %v1684 = vld [vmem:[%s5 + $0x1b0] sm:$0xff]
        %v1685 = vld [vmem:[%s5 + $0x1b8] sm:$0xff]
        %v1686 = vld [vmem:[%s5 + $0x1c0] sm:$0xff]
        %v1687 = vld [vmem:[%s5 + $0x1c8] sm:$0xff]
        %v1688 = vld [vmem:[%s5 + $0x1d0] sm:$0xff]
        %v1689 = vld [vmem:[%s5 + $0x1d8] sm:$0xff]
        %v1690 = vld [vmem:[%s5 + $0x1e0] sm:$0xff]
        %v1691 = vld [vmem:[%s5 + $0x1e8] sm:$0xff]
        %v1692 = vld [vmem:[%s5 + $0x1f0] sm:$0xff]
        %v1693 = vld [vmem:[%s5 + $0x1f8] sm:$0xff]
        %v1694 = vld [vmem:[%s6] sm:$0xf]
        %v1759 = vunpack.c.l.b16 %v1630
        %v1760 = vunpack.c.h.b16 %v1630
        %v1761 = vunpack.c.l.b16 %v1631
        %v1762 = vunpack.c.h.b16 %v1631
        %v1763 = vunpack.c.l.b16 %v1632
        %v1764 = vunpack.c.h.b16 %v1632
        %v1765 = vunpack.c.l.b16 %v1633
        %v1766 = vunpack.c.h.b16 %v1633
        %v1767 = vunpack.c.l.b16 %v1634
        %v1768 = vunpack.c.h.b16 %v1634
        %v1769 = vunpack.c.l.b16 %v1635
        %v1770 = vunpack.c.h.b16 %v1635
        %v1771 = vunpack.c.l.b16 %v1636
        %v1772 = vunpack.c.h.b16 %v1636
        %v1773 = vunpack.c.l.b16 %v1637
        %v1774 = vunpack.c.h.b16 %v1637
        %v1775 = vunpack.c.l.b16 %v1638
        %v1776 = vunpack.c.h.b16 %v1638
        %v1777 = vunpack.c.l.b16 %v1639
        %v1778 = vunpack.c.h.b16 %v1639
        %v1779 = vunpack.c.l.b16 %v1640
        %v1780 = vunpack.c.h.b16 %v1640
        %v1781 = vunpack.c.l.b16 %v1641
        %v1782 = vunpack.c.h.b16 %v1641
        %v1783 = vunpack.c.l.b16 %v1642
        %v1784 = vunpack.c.h.b16 %v1642
        %v1785 = vunpack.c.l.b16 %v1643
        %v1786 = vunpack.c.h.b16 %v1643
        %v1787 = vunpack.c.l.b16 %v1644
        %v1788 = vunpack.c.h.b16 %v1644
        %v1789 = vunpack.c.l.b16 %v1645
        %v1790 = vunpack.c.h.b16 %v1645
        %v1791 = vunpack.c.l.b16 %v1646
        %v1792 = vunpack.c.h.b16 %v1646
        %v1793 = vunpack.c.l.b16 %v1647
        %v1794 = vunpack.c.h.b16 %v1647
        %v1795 = vunpack.c.l.b16 %v1648
        %v1796 = vunpack.c.h.b16 %v1648
        %v1797 = vunpack.c.l.b16 %v1649
        %v1798 = vunpack.c.h.b16 %v1649
        %v1799 = vunpack.c.l.b16 %v1650
        %v1800 = vunpack.c.h.b16 %v1650
        %v1801 = vunpack.c.l.b16 %v1651
        %v1802 = vunpack.c.h.b16 %v1651
        %v1803 = vunpack.c.l.b16 %v1652
        %v1804 = vunpack.c.h.b16 %v1652
        %v1805 = vunpack.c.l.b16 %v1653
        %v1806 = vunpack.c.h.b16 %v1653
        %v1807 = vunpack.c.l.b16 %v1654
        %v1808 = vunpack.c.h.b16 %v1654
        %v1809 = vunpack.c.l.b16 %v1655
        %v1810 = vunpack.c.h.b16 %v1655
        %v1811 = vunpack.c.l.b16 %v1656
        %v1812 = vunpack.c.h.b16 %v1656
        %v1813 = vunpack.c.l.b16 %v1657
        %v1814 = vunpack.c.h.b16 %v1657
        %v1815 = vunpack.c.l.b16 %v1658
        %v1816 = vunpack.c.h.b16 %v1658
        %v1817 = vunpack.c.l.b16 %v1659
        %v1818 = vunpack.c.h.b16 %v1659
        %v1819 = vunpack.c.l.b16 %v1660
        %v1820 = vunpack.c.h.b16 %v1660
        %v1821 = vunpack.c.l.b16 %v1661
        %v1822 = vunpack.c.h.b16 %v1661
        %v1823 = vunpack.c.l.b16 %v1662
        %v1824 = vunpack.c.h.b16 %v1662
        %v1825 = vunpack.c.l.b16 %v1663
        %v1826 = vunpack.c.h.b16 %v1663
        %v1827 = vunpack.c.l.b16 %v1664
        %v1828 = vunpack.c.h.b16 %v1664
        %v1829 = vunpack.c.l.b16 %v1665
        %v1830 = vunpack.c.h.b16 %v1665
        %v1831 = vunpack.c.l.b16 %v1666
        %v1832 = vunpack.c.h.b16 %v1666
        %v1833 = vunpack.c.l.b16 %v1667
        %v1834 = vunpack.c.h.b16 %v1667
        %v1835 = vunpack.c.l.b16 %v1668
        %v1836 = vunpack.c.h.b16 %v1668
        %v1837 = vunpack.c.l.b16 %v1669
        %v1838 = vunpack.c.h.b16 %v1669
        %v1839 = vunpack.c.l.b16 %v1670
        %v1840 = vunpack.c.h.b16 %v1670
        %v1841 = vunpack.c.l.b16 %v1671
        %v1842 = vunpack.c.h.b16 %v1671
        %v1843 = vunpack.c.l.b16 %v1672
        %v1844 = vunpack.c.h.b16 %v1672
        %v1845 = vunpack.c.l.b16 %v1673
        %v1846 = vunpack.c.h.b16 %v1673
        %v1847 = vunpack.c.l.b16 %v1674
        %v1848 = vunpack.c.h.b16 %v1674
        %v1849 = vunpack.c.l.b16 %v1675
        %v1850 = vunpack.c.h.b16 %v1675
        %v1851 = vunpack.c.l.b16 %v1676
        %v1852 = vunpack.c.h.b16 %v1676
        %v1853 = vunpack.c.l.b16 %v1677
        %v1854 = vunpack.c.h.b16 %v1677
        %v1855 = vunpack.c.l.b16 %v1678
        %v1856 = vunpack.c.h.b16 %v1678
        %v1857 = vunpack.c.l.b16 %v1679
        %v1858 = vunpack.c.h.b16 %v1679
        %v1859 = vunpack.c.l.b16 %v1680
        %v1860 = vunpack.c.h.b16 %v1680
        %v1861 = vunpack.c.l.b16 %v1681
        %v1862 = vunpack.c.h.b16 %v1681
        %v1863 = vunpack.c.l.b16 %v1682
        %v1864 = vunpack.c.h.b16 %v1682
        %v1865 = vunpack.c.l.b16 %v1683
        %v1866 = vunpack.c.h.b16 %v1683
        %v1867 = vunpack.c.l.b16 %v1684
        %v1868 = vunpack.c.h.b16 %v1684
        %v1869 = vunpack.c.l.b16 %v1685
        %v1870 = vunpack.c.h.b16 %v1685
        %v1871 = vunpack.c.l.b16 %v1686
        %v1872 = vunpack.c.h.b16 %v1686
        %v1873 = vunpack.c.l.b16 %v1687
        %v1874 = vunpack.c.h.b16 %v1687
        %v1875 = vunpack.c.l.b16 %v1688
        %v1876 = vunpack.c.h.b16 %v1688
        %v1877 = vunpack.c.l.b16 %v1689
        %v1878 = vunpack.c.h.b16 %v1689
        %v1879 = vunpack.c.l.b16 %v1690
        %v1880 = vunpack.c.h.b16 %v1690
        %v1881 = vunpack.c.l.b16 %v1691
        %v1882 = vunpack.c.h.b16 %v1691
        %v1883 = vunpack.c.l.b16 %v1692
        %v1884 = vunpack.c.h.b16 %v1692
        %v1885 = vunpack.c.l.b16 %v1693
        %v1886 = vunpack.c.h.b16 %v1693
        %v1887 = vpack.c.b16 %v1763, %v1759
        %v1888 = vpack.c.b16 %v1764, %v1760
        %v1889 = vpack.c.b16 %v1765, %v1761
        %v1890 = vpack.c.b16 %v1766, %v1762
        %v1891 = vpack.c.b16 %v1771, %v1767
        %v1892 = vpack.c.b16 %v1772, %v1768
        %v1893 = vpack.c.b16 %v1773, %v1769
        %v1894 = vpack.c.b16 %v1774, %v1770
        %v1895 = vpack.c.b16 %v1779, %v1775
        %v1896 = vpack.c.b16 %v1780, %v1776
        %v1897 = vpack.c.b16 %v1781, %v1777
        %v1898 = vpack.c.b16 %v1782, %v1778
        %v1899 = vpack.c.b16 %v1787, %v1783
        %v1900 = vpack.c.b16 %v1788, %v1784
        %v1901 = vpack.c.b16 %v1789, %v1785
        %v1902 = vpack.c.b16 %v1790, %v1786
        %v1903 = vpack.c.b16 %v1795, %v1791
        %v1904 = vpack.c.b16 %v1796, %v1792
        %v1905 = vpack.c.b16 %v1797, %v1793
        %v1906 = vpack.c.b16 %v1798, %v1794
        %v1907 = vpack.c.b16 %v1803, %v1799
        %v1908 = vpack.c.b16 %v1804, %v1800
        %v1909 = vpack.c.b16 %v1805, %v1801
        %v1910 = vpack.c.b16 %v1806, %v1802
        %v1911 = vpack.c.b16 %v1811, %v1807
        %v1912 = vpack.c.b16 %v1812, %v1808
        %v1913 = vpack.c.b16 %v1813, %v1809
        %v1914 = vpack.c.b16 %v1814, %v1810
        %v1915 = vpack.c.b16 %v1819, %v1815
        %v1916 = vpack.c.b16 %v1820, %v1816
        %v1917 = vpack.c.b16 %v1821, %v1817
        %v1918 = vpack.c.b16 %v1822, %v1818
        %v1919 = vpack.c.b16 %v1827, %v1823
        %v1920 = vpack.c.b16 %v1828, %v1824
        %v1921 = vpack.c.b16 %v1829, %v1825
        %v1922 = vpack.c.b16 %v1830, %v1826
        %v1923 = vpack.c.b16 %v1835, %v1831
        %v1924 = vpack.c.b16 %v1836, %v1832
        %v1925 = vpack.c.b16 %v1837, %v1833
        %v1926 = vpack.c.b16 %v1838, %v1834
        %v1927 = vpack.c.b16 %v1843, %v1839
        %v1928 = vpack.c.b16 %v1844, %v1840
        %v1929 = vpack.c.b16 %v1845, %v1841
        %v1930 = vpack.c.b16 %v1846, %v1842
        %v1931 = vpack.c.b16 %v1851, %v1847
        %v1932 = vpack.c.b16 %v1852, %v1848
        %v1933 = vpack.c.b16 %v1853, %v1849
        %v1934 = vpack.c.b16 %v1854, %v1850
        %v1935 = vpack.c.b16 %v1859, %v1855
        %v1936 = vpack.c.b16 %v1860, %v1856
        %v1937 = vpack.c.b16 %v1861, %v1857
        %v1938 = vpack.c.b16 %v1862, %v1858
        %v1939 = vpack.c.b16 %v1867, %v1863
        %v1940 = vpack.c.b16 %v1868, %v1864
        %v1941 = vpack.c.b16 %v1869, %v1865
        %v1942 = vpack.c.b16 %v1870, %v1866
        %v1943 = vpack.c.b16 %v1875, %v1871
        %v1944 = vpack.c.b16 %v1876, %v1872
        %v1945 = vpack.c.b16 %v1877, %v1873
        %v1946 = vpack.c.b16 %v1878, %v1874
        %v1947 = vpack.c.b16 %v1883, %v1879
        %v1948 = vpack.c.b16 %v1884, %v1880
        %v1949 = vpack.c.b16 %v1885, %v1881
        %v1950 = vpack.c.b16 %v1886, %v1882
        %2015 = vmatprep.subr.bf16.mxu0 %v1888
        %2016 = vmatpush1.bf16.msra.mxu0 %v1887
        %2017 = vmatprep.subr.bf16.mxu0 %v1892
        %2018 = vmatpush1.bf16.msra.mxu0 %v1891
        %2019 = vmatprep.subr.bf16.mxu0 %v1896
        %2020 = vmatpush1.bf16.msra.mxu0 %v1895
        %2021 = vmatprep.subr.bf16.mxu0 %v1900
        %2022 = vmatpush1.bf16.msra.mxu0 %v1899
        %2023 = vmatprep.subr.bf16.mxu0 %v1904
        %2024 = vmatpush1.bf16.msra.mxu0 %v1903
        %2025 = vmatprep.subr.bf16.mxu0 %v1908
        %2026 = vmatpush1.bf16.msra.mxu0 %v1907
        %2027 = vmatprep.subr.bf16.mxu0 %v1912
        %2028 = vmatpush1.bf16.msra.mxu0 %v1911
        %2029 = vmatprep.subr.bf16.mxu0 %v1916
        %2030 = vmatpush1.bf16.msra.mxu0 %v1915
        %2031 = vmatprep.subr.bf16.mxu0 %v1920
        %2032 = vmatpush1.bf16.msra.mxu0 %v1919
        %2033 = vmatprep.subr.bf16.mxu0 %v1924
        %2034 = vmatpush1.bf16.msra.mxu0 %v1923
        %2035 = vmatprep.subr.bf16.mxu0 %v1928
        %2036 = vmatpush1.bf16.msra.mxu0 %v1927
        %2037 = vmatprep.subr.bf16.mxu0 %v1932
        %2038 = vmatpush1.bf16.msra.mxu0 %v1931
        %2039 = vmatprep.subr.bf16.mxu0 %v1936
        %2040 = vmatpush1.bf16.msra.mxu0 %v1935
        %2041 = vmatprep.subr.bf16.mxu0 %v1940
        %2042 = vmatpush1.bf16.msra.mxu0 %v1939
        %2043 = vmatprep.subr.bf16.mxu0 %v1944
        %2044 = vmatpush1.bf16.msra.mxu0 %v1943
        %2045 = vmatprep.subr.bf16.mxu0 %v1948
        %2046 = vmatpush1.bf16.msra.mxu0 %v1947
        %2047 = vmatprep.mubr.bf16.mxu0 %v1599
        %2048 = vmatmul.mubr.bf16.gmra.mrb[0].mxu0 %v1598
        %v2049 = vpop.f32.mrb[0].mxu0
        %v2050 = vadd.f32 0.0, %v2049
        %v2051 = vpop.f32.mrb[0].mxu0
        %v2052 = vadd.f32 0.0, %v2051
        %v2053 = vpop.f32.mrb[0].mxu0
        %v2054 = vadd.f32 0.0, %v2053
        %v2055 = vpop.f32.mrb[0].mxu0
        %v2056 = vadd.f32 0.0, %v2055
        %2057 = vmatprep.mubr.bf16.mxu0 %v1601
        %2058 = vmatmul.mubr.bf16.gmra.mrb[0].mxu0 %v1600
        %v2059 = vpop.f32.mrb[0].mxu0
        %v2060 = vadd.f32 0.0, %v2059
        %v2061 = vpop.f32.mrb[0].mxu0
        %v2062 = vadd.f32 0.0, %v2061
        %v2063 = vpop.f32.mrb[0].mxu0
        %v2064 = vadd.f32 0.0, %v2063
        %v2065 = vpop.f32.mrb[0].mxu0
        %v2066 = vadd.f32 0.0, %v2065
        %2067 = vmatprep.mubr.bf16.mxu0 %v1603
        %2068 = vmatmul.mubr.bf16.gmra.mrb[0].mxu0 %v1602
        %v2069 = vpop.f32.mrb[0].mxu0
        %v2070 = vadd.f32 0.0, %v2069
        %v2071 = vpop.f32.mrb[0].mxu0
        %v2072 = vadd.f32 0.0, %v2071
        %v2073 = vpop.f32.mrb[0].mxu0
        %v2074 = vadd.f32 0.0, %v2073
        %v2075 = vpop.f32.mrb[0].mxu0
        %v2076 = vadd.f32 0.0, %v2075
        %2077 = vmatprep.mubr.bf16.mxu0 %v1605
        %2078 = vmatmul.mubr.bf16.gmra.mrb[0].mxu0 %v1604
        %v2079 = vpop.f32.mrb[0].mxu0
        %v2080 = vadd.f32 0.0, %v2079
        %v2081 = vpop.f32.mrb[0].mxu0
        %v2082 = vadd.f32 0.0, %v2081
        %v2083 = vpop.f32.mrb[0].mxu0
        %v2084 = vadd.f32 0.0, %v2083
        %v2085 = vpop.f32.mrb[0].mxu0
        %v2086 = vadd.f32 0.0, %v2085
        %2087 = vmatprep.mubr.bf16.mxu0 %v1607
        %2088 = vmatmul.mubr.bf16.gmra.mrb[0].mxu0 %v1606
        %v2089 = vpop.f32.mrb[0].mxu0
        %v2090 = vadd.f32 0.0, %v2089
        %v2091 = vpop.f32.mrb[0].mxu0
        %v2092 = vadd.f32 0.0, %v2091
        %v2093 = vpop.f32.mrb[0].mxu0
        %v2094 = vadd.f32 0.0, %v2093
        %v2095 = vpop.f32.mrb[0].mxu0
        %v2096 = vadd.f32 0.0, %v2095
        %2097 = vmatprep.mubr.bf16.mxu0 %v1609
        %2098 = vmatmul.mubr.bf16.gmra.mrb[0].mxu0 %v1608
        %v2099 = vpop.f32.mrb[0].mxu0
        %v2100 = vadd.f32 0.0, %v2099
        %v2101 = vpop.f32.mrb[0].mxu0
        %v2102 = vadd.f32 0.0, %v2101
        %v2103 = vpop.f32.mrb[0].mxu0
        %v2104 = vadd.f32 0.0, %v2103
        %v2105 = vpop.f32.mrb[0].mxu0
        %v2106 = vadd.f32 0.0, %v2105
        %2107 = vmatprep.mubr.bf16.mxu0 %v1611
        %2108 = vmatmul.mubr.bf16.gmra.mrb[0].mxu0 %v1610
        %v2109 = vpop.f32.mrb[0].mxu0
        %v2110 = vadd.f32 0.0, %v2109
        %v2111 = vpop.f32.mrb[0].mxu0
        %v2112 = vadd.f32 0.0, %v2111
        %v2113 = vpop.f32.mrb[0].mxu0
        %v2114 = vadd.f32 0.0, %v2113
        %v2115 = vpop.f32.mrb[0].mxu0
        %v2116 = vadd.f32 0.0, %v2115
        %2117 = vmatprep.mubr.bf16.mxu0 %v1613
        %2118 = vmatmul.mubr.bf16.gmra.mrb[0].mxu0 %v1612
        %v2119 = vpop.f32.mrb[0].mxu0
        %v2120 = vadd.f32 0.0, %v2119
        %v2121 = vpop.f32.mrb[0].mxu0
        %v2122 = vadd.f32 0.0, %v2121
        %v2123 = vpop.f32.mrb[0].mxu0
        %v2124 = vadd.f32 0.0, %v2123
        %v2125 = vpop.f32.mrb[0].mxu0
        %v2126 = vadd.f32 0.0, %v2125
        %2127 = vmatprep.mubr.bf16.mxu0 %v1615
        %2128 = vmatmul.mubr.bf16.gmra.mrb[0].mxu0 %v1614
        %v2129 = vpop.f32.mrb[0].mxu0
        %v2130 = vadd.f32 0.0, %v2129
        %v2131 = vpop.f32.mrb[0].mxu0
        %v2132 = vadd.f32 0.0, %v2131
        %v2133 = vpop.f32.mrb[0].mxu0
        %v2134 = vadd.f32 0.0, %v2133
        %v2135 = vpop.f32.mrb[0].mxu0
        %v2136 = vadd.f32 0.0, %v2135
        %2137 = vmatprep.mubr.bf16.mxu0 %v1617
        %2138 = vmatmul.mubr.bf16.gmra.mrb[0].mxu0 %v1616
        %v2139 = vpop.f32.mrb[0].mxu0
        %v2140 = vadd.f32 0.0, %v2139
        %v2141 = vpop.f32.mrb[0].mxu0
        %v2142 = vadd.f32 0.0, %v2141
        %v2143 = vpop.f32.mrb[0].mxu0
        %v2144 = vadd.f32 0.0, %v2143
        %v2145 = vpop.f32.mrb[0].mxu0
        %v2146 = vadd.f32 0.0, %v2145
        %2147 = vmatprep.mubr.bf16.mxu0 %v1619
        %2148 = vmatmul.mubr.bf16.gmra.mrb[0].mxu0 %v1618
        %v2149 = vpop.f32.mrb[0].mxu0
        %v2150 = vadd.f32 0.0, %v2149
        %v2151 = vpop.f32.mrb[0].mxu0
        %v2152 = vadd.f32 0.0, %v2151
        %v2153 = vpop.f32.mrb[0].mxu0
        %v2154 = vadd.f32 0.0, %v2153
        %v2155 = vpop.f32.mrb[0].mxu0
        %v2156 = vadd.f32 0.0, %v2155
        %2157 = vmatprep.mubr.bf16.mxu0 %v1621
        %2158 = vmatmul.mubr.bf16.gmra.mrb[0].mxu0 %v1620
        %v2159 = vpop.f32.mrb[0].mxu0
        %v2160 = vadd.f32 0.0, %v2159
        %v2161 = vpop.f32.mrb[0].mxu0
        %v2162 = vadd.f32 0.0, %v2161
        %v2163 = vpop.f32.mrb[0].mxu0
        %v2164 = vadd.f32 0.0, %v2163
        %v2165 = vpop.f32.mrb[0].mxu0
        %v2166 = vadd.f32 0.0, %v2165
        %2167 = vmatprep.mubr.bf16.mxu0 %v1623
        %2168 = vmatmul.mubr.bf16.gmra.mrb[0].mxu0 %v1622
        %v2169 = vpop.f32.mrb[0].mxu0
        %v2170 = vadd.f32 0.0, %v2169
        %v2171 = vpop.f32.mrb[0].mxu0
        %v2172 = vadd.f32 0.0, %v2171
        %v2173 = vpop.f32.mrb[0].mxu0
        %v2174 = vadd.f32 0.0, %v2173
        %v2175 = vpop.f32.mrb[0].mxu0
        %v2176 = vadd.f32 0.0, %v2175
        %2177 = vmatprep.mubr.bf16.mxu0 %v1625
        %2178 = vmatmul.mubr.bf16.gmra.mrb[0].mxu0 %v1624
        %v2179 = vpop.f32.mrb[0].mxu0
        %v2180 = vadd.f32 0.0, %v2179
        %v2181 = vpop.f32.mrb[0].mxu0
        %v2182 = vadd.f32 0.0, %v2181
        %v2183 = vpop.f32.mrb[0].mxu0
        %v2184 = vadd.f32 0.0, %v2183
        %v2185 = vpop.f32.mrb[0].mxu0
        %v2186 = vadd.f32 0.0, %v2185
        %2187 = vmatprep.mubr.bf16.mxu0 %v1627
        %2188 = vmatmul.mubr.bf16.gmra.mrb[0].mxu0 %v1626
        %v2189 = vpop.f32.mrb[0].mxu0
        %v2190 = vadd.f32 0.0, %v2189
        %v2191 = vpop.f32.mrb[0].mxu0
        %v2192 = vadd.f32 0.0, %v2191
        %v2193 = vpop.f32.mrb[0].mxu0
        %v2194 = vadd.f32 0.0, %v2193
        %v2195 = vpop.f32.mrb[0].mxu0
        %v2196 = vadd.f32 0.0, %v2195
        %2197 = vmatprep.mubr.bf16.mxu0 %v1629
        %2198 = vmatmul.mubr.bf16.gmra.mrb[0].mxu0 %v1628
        %v2199 = vpop.f32.mrb[0].mxu0
        %v2200 = vadd.f32 0.0, %v2199
        %v2201 = vpop.f32.mrb[0].mxu0
        %v2202 = vadd.f32 0.0, %v2201
        %v2203 = vpop.f32.mrb[0].mxu0
        %v2204 = vadd.f32 0.0, %v2203
        %v2205 = vpop.f32.mrb[0].mxu0
        %v2206 = vadd.f32 0.0, %v2205
        %2207 = vdwg.mxu0
        %2208 = vmatprep.subr.bf16.mxu0 %v1890
        %2209 = vmatpush1.bf16.msra.mxu0 %v1889
        %2210 = vmatprep.subr.bf16.mxu0 %v1894
        %2211 = vmatpush1.bf16.msra.mxu0 %v1893
        %2212 = vmatprep.subr.bf16.mxu0 %v1898
        %2213 = vmatpush1.bf16.msra.mxu0 %v1897
        %2214 = vmatprep.subr.bf16.mxu0 %v1902
        %2215 = vmatpush1.bf16.msra.mxu0 %v1901
        %2216 = vmatprep.subr.bf16.mxu0 %v1906
        %2217 = vmatpush1.bf16.msra.mxu0 %v1905
        %2218 = vmatprep.subr.bf16.mxu0 %v1910
        %2219 = vmatpush1.bf16.msra.mxu0 %v1909
        %2220 = vmatprep.subr.bf16.mxu0 %v1914
        %2221 = vmatpush1.bf16.msra.mxu0 %v1913
        %2222 = vmatprep.subr.bf16.mxu0 %v1918
        %2223 = vmatpush1.bf16.msra.mxu0 %v1917
        %2224 = vmatprep.subr.bf16.mxu0 %v1922
        %2225 = vmatpush1.bf16.msra.mxu0 %v1921
        %2226 = vmatprep.subr.bf16.mxu0 %v1926
        %2227 = vmatpush1.bf16.msra.mxu0 %v1925
        %2228 = vmatprep.subr.bf16.mxu0 %v1930
        %2229 = vmatpush1.bf16.msra.mxu0 %v1929
        %2230 = vmatprep.subr.bf16.mxu0 %v1934
        %2231 = vmatpush1.bf16.msra.mxu0 %v1933
        %2232 = vmatprep.subr.bf16.mxu0 %v1938
        %2233 = vmatpush1.bf16.msra.mxu0 %v1937
        %2234 = vmatprep.subr.bf16.mxu0 %v1942
        %2235 = vmatpush1.bf16.msra.mxu0 %v1941
        %2236 = vmatprep.subr.bf16.mxu0 %v1946
        %2237 = vmatpush1.bf16.msra.mxu0 %v1945
        %2238 = vmatprep.subr.bf16.mxu0 %v1950
        %2239 = vmatpush1.bf16.msra.mxu0 %v1949
        %2240 = vmatprep.mubr.bf16.mxu0 %v1599
        %2241 = vmatmul.mubr.bf16.gmra.mrb[0].mxu0 %v1598
        %v2242 = vpop.f32.mrb[0].mxu0
        %v2243 = vadd.f32 0.0, %v2242
        %v2244 = vpop.f32.mrb[0].mxu0
        %v2245 = vadd.f32 0.0, %v2244
        %v2246 = vpop.f32.mrb[0].mxu0
        %v2247 = vadd.f32 0.0, %v2246
        %v2248 = vpop.f32.mrb[0].mxu0
        %v2249 = vadd.f32 0.0, %v2248
        %2250 = vmatprep.mubr.bf16.mxu0 %v1601
        %2251 = vmatmul.mubr.bf16.gmra.mrb[0].mxu0 %v1600
        %v2252 = vpop.f32.mrb[0].mxu0
        %v2253 = vadd.f32 0.0, %v2252
        %v2254 = vpop.f32.mrb[0].mxu0
        %v2255 = vadd.f32 0.0, %v2254
        %v2256 = vpop.f32.mrb[0].mxu0
        %v2257 = vadd.f32 0.0, %v2256
        %v2258 = vpop.f32.mrb[0].mxu0
        %v2259 = vadd.f32 0.0, %v2258
        %2260 = vmatprep.mubr.bf16.mxu0 %v1603
        %2261 = vmatmul.mubr.bf16.gmra.mrb[0].mxu0 %v1602
        %v2262 = vpop.f32.mrb[0].mxu0
        %v2263 = vadd.f32 0.0, %v2262
        %v2264 = vpop.f32.mrb[0].mxu0
        %v2265 = vadd.f32 0.0, %v2264
        %v2266 = vpop.f32.mrb[0].mxu0
        %v2267 = vadd.f32 0.0, %v2266
        %v2268 = vpop.f32.mrb[0].mxu0
        %v2269 = vadd.f32 0.0, %v2268
        %2270 = vmatprep.mubr.bf16.mxu0 %v1605
        %2271 = vmatmul.mubr.bf16.gmra.mrb[0].mxu0 %v1604
        %v2272 = vpop.f32.mrb[0].mxu0
        %v2273 = vadd.f32 0.0, %v2272
        %v2274 = vpop.f32.mrb[0].mxu0
        %v2275 = vadd.f32 0.0, %v2274
        %v2276 = vpop.f32.mrb[0].mxu0
        %v2277 = vadd.f32 0.0, %v2276
        %v2278 = vpop.f32.mrb[0].mxu0
        %v2279 = vadd.f32 0.0, %v2278
        %2280 = vmatprep.mubr.bf16.mxu0 %v1607
        %2281 = vmatmul.mubr.bf16.gmra.mrb[0].mxu0 %v1606
        %v2282 = vpop.f32.mrb[0].mxu0
        %v2283 = vadd.f32 0.0, %v2282
        %v2284 = vpop.f32.mrb[0].mxu0
        %v2285 = vadd.f32 0.0, %v2284
        %v2286 = vpop.f32.mrb[0].mxu0
        %v2287 = vadd.f32 0.0, %v2286
        %v2288 = vpop.f32.mrb[0].mxu0
        %v2289 = vadd.f32 0.0, %v2288
        %2290 = vmatprep.mubr.bf16.mxu0 %v1609
        %2291 = vmatmul.mubr.bf16.gmra.mrb[0].mxu0 %v1608
        %v2292 = vpop.f32.mrb[0].mxu0
        %v2293 = vadd.f32 0.0, %v2292
        %v2294 = vpop.f32.mrb[0].mxu0
        %v2295 = vadd.f32 0.0, %v2294
        %v2296 = vpop.f32.mrb[0].mxu0
        %v2297 = vadd.f32 0.0, %v2296
        %v2298 = vpop.f32.mrb[0].mxu0
        %v2299 = vadd.f32 0.0, %v2298
        %2300 = vmatprep.mubr.bf16.mxu0 %v1611
        %2301 = vmatmul.mubr.bf16.gmra.mrb[0].mxu0 %v1610
        %v2302 = vpop.f32.mrb[0].mxu0
        %v2303 = vadd.f32 0.0, %v2302
        %v2304 = vpop.f32.mrb[0].mxu0
        %v2305 = vadd.f32 0.0, %v2304
        %v2306 = vpop.f32.mrb[0].mxu0
        %v2307 = vadd.f32 0.0, %v2306
        %v2308 = vpop.f32.mrb[0].mxu0
        %v2309 = vadd.f32 0.0, %v2308
        %2310 = vmatprep.mubr.bf16.mxu0 %v1613
        %2311 = vmatmul.mubr.bf16.gmra.mrb[0].mxu0 %v1612
        %v2312 = vpop.f32.mrb[0].mxu0
        %v2313 = vadd.f32 0.0, %v2312
        %v2314 = vpop.f32.mrb[0].mxu0
        %v2315 = vadd.f32 0.0, %v2314
        %v2316 = vpop.f32.mrb[0].mxu0
        %v2317 = vadd.f32 0.0, %v2316
        %v2318 = vpop.f32.mrb[0].mxu0
        %v2319 = vadd.f32 0.0, %v2318
        %2320 = vmatprep.mubr.bf16.mxu0 %v1615
        %2321 = vmatmul.mubr.bf16.gmra.mrb[0].mxu0 %v1614
        %v2322 = vpop.f32.mrb[0].mxu0
        %v2323 = vadd.f32 0.0, %v2322
        %v2324 = vpop.f32.mrb[0].mxu0
        %v2325 = vadd.f32 0.0, %v2324
        %v2326 = vpop.f32.mrb[0].mxu0
        %v2327 = vadd.f32 0.0, %v2326
        %v2328 = vpop.f32.mrb[0].mxu0
        %v2329 = vadd.f32 0.0, %v2328
        %2330 = vmatprep.mubr.bf16.mxu0 %v1617
        %2331 = vmatmul.mubr.bf16.gmra.mrb[0].mxu0 %v1616
        %v2332 = vpop.f32.mrb[0].mxu0
        %v2333 = vadd.f32 0.0, %v2332
        %v2334 = vpop.f32.mrb[0].mxu0
        %v2335 = vadd.f32 0.0, %v2334
        %v2336 = vpop.f32.mrb[0].mxu0
        %v2337 = vadd.f32 0.0, %v2336
        %v2338 = vpop.f32.mrb[0].mxu0
        %v2339 = vadd.f32 0.0, %v2338
        %2340 = vmatprep.mubr.bf16.mxu0 %v1619
        %2341 = vmatmul.mubr.bf16.gmra.mrb[0].mxu0 %v1618
        %v2342 = vpop.f32.mrb[0].mxu0
        %v2343 = vadd.f32 0.0, %v2342
        %v2344 = vpop.f32.mrb[0].mxu0
        %v2345 = vadd.f32 0.0, %v2344
        %v2346 = vpop.f32.mrb[0].mxu0
        %v2347 = vadd.f32 0.0, %v2346
        %v2348 = vpop.f32.mrb[0].mxu0
        %v2349 = vadd.f32 0.0, %v2348
        %2350 = vmatprep.mubr.bf16.mxu0 %v1621
        %2351 = vmatmul.mubr.bf16.gmra.mrb[0].mxu0 %v1620
        %v2352 = vpop.f32.mrb[0].mxu0
        %v2353 = vadd.f32 0.0, %v2352
        %v2354 = vpop.f32.mrb[0].mxu0
        %v2355 = vadd.f32 0.0, %v2354
        %v2356 = vpop.f32.mrb[0].mxu0
        %v2357 = vadd.f32 0.0, %v2356
        %v2358 = vpop.f32.mrb[0].mxu0
        %v2359 = vadd.f32 0.0, %v2358
        %2360 = vmatprep.mubr.bf16.mxu0 %v1623
        %2361 = vmatmul.mubr.bf16.gmra.mrb[0].mxu0 %v1622
        %v2362 = vpop.f32.mrb[0].mxu0
        %v2363 = vadd.f32 0.0, %v2362
        %v2364 = vpop.f32.mrb[0].mxu0
        %v2365 = vadd.f32 0.0, %v2364
        %v2366 = vpop.f32.mrb[0].mxu0
        %v2367 = vadd.f32 0.0, %v2366
        %v2368 = vpop.f32.mrb[0].mxu0
        %v2369 = vadd.f32 0.0, %v2368
        %2370 = vmatprep.mubr.bf16.mxu0 %v1625
        %2371 = vmatmul.mubr.bf16.gmra.mrb[0].mxu0 %v1624
        %v2372 = vpop.f32.mrb[0].mxu0
        %v2373 = vadd.f32 0.0, %v2372
        %v2374 = vpop.f32.mrb[0].mxu0
        %v2375 = vadd.f32 0.0, %v2374
        %v2376 = vpop.f32.mrb[0].mxu0
        %v2377 = vadd.f32 0.0, %v2376
        %v2378 = vpop.f32.mrb[0].mxu0
        %v2379 = vadd.f32 0.0, %v2378
        %2380 = vmatprep.mubr.bf16.mxu0 %v1627
        %2381 = vmatmul.mubr.bf16.gmra.mrb[0].mxu0 %v1626
        %v2382 = vpop.f32.mrb[0].mxu0
        %v2383 = vadd.f32 0.0, %v2382
        %v2384 = vpop.f32.mrb[0].mxu0
        %v2385 = vadd.f32 0.0, %v2384
        %v2386 = vpop.f32.mrb[0].mxu0
        %v2387 = vadd.f32 0.0, %v2386
        %v2388 = vpop.f32.mrb[0].mxu0
        %v2389 = vadd.f32 0.0, %v2388
        %2390 = vmatprep.mubr.bf16.mxu0 %v1629
        %2391 = vmatmul.mubr.bf16.gmra.mrb[0].mxu0 %v1628
        %v2392 = vpop.f32.mrb[0].mxu0
        %v2393 = vadd.f32 0.0, %v2392
        %v2394 = vpop.f32.mrb[0].mxu0
        %v2395 = vadd.f32 0.0, %v2394
        %v2396 = vpop.f32.mrb[0].mxu0
        %v2397 = vadd.f32 0.0, %v2396
        %v2398 = vpop.f32.mrb[0].mxu0
        %v2399 = vadd.f32 0.0, %v2398
        %2400 = vdwg.mxu0
        %v2401 = vpack.c.bf16 %v2054, %v2050
        %v2402 = vpack.c.bf16 %v2056, %v2052
        %v2403 = vpack.c.bf16 %v2247, %v2243
        %v2404 = vpack.c.bf16 %v2249, %v2245
        %v2405 = vpack.c.bf16 %v2064, %v2060
        %v2406 = vpack.c.bf16 %v2066, %v2062
        %v2407 = vpack.c.bf16 %v2257, %v2253
        %v2408 = vpack.c.bf16 %v2259, %v2255
        %v2409 = vpack.c.bf16 %v2074, %v2070
        %v2410 = vpack.c.bf16 %v2076, %v2072
        %v2411 = vpack.c.bf16 %v2267, %v2263
        %v2412 = vpack.c.bf16 %v2269, %v2265
        %v2413 = vpack.c.bf16 %v2084, %v2080
        %v2414 = vpack.c.bf16 %v2086, %v2082
        %v2415 = vpack.c.bf16 %v2277, %v2273
        %v2416 = vpack.c.bf16 %v2279, %v2275
        %v2417 = vpack.c.bf16 %v2094, %v2090
        %v2418 = vpack.c.bf16 %v2096, %v2092
        %v2419 = vpack.c.bf16 %v2287, %v2283
        %v2420 = vpack.c.bf16 %v2289, %v2285
        %v2421 = vpack.c.bf16 %v2104, %v2100
        %v2422 = vpack.c.bf16 %v2106, %v2102
        %v2423 = vpack.c.bf16 %v2297, %v2293
        %v2424 = vpack.c.bf16 %v2299, %v2295
        %v2425 = vpack.c.bf16 %v2114, %v2110
        %v2426 = vpack.c.bf16 %v2116, %v2112
        %v2427 = vpack.c.bf16 %v2307, %v2303
        %v2428 = vpack.c.bf16 %v2309, %v2305
        %v2429 = vpack.c.bf16 %v2124, %v2120
        %v2430 = vpack.c.bf16 %v2126, %v2122
        %v2431 = vpack.c.bf16 %v2317, %v2313
        %v2432 = vpack.c.bf16 %v2319, %v2315
        %v2433 = vpack.c.bf16 %v2134, %v2130
        %v2434 = vpack.c.bf16 %v2136, %v2132
        %v2435 = vpack.c.bf16 %v2327, %v2323
        %v2436 = vpack.c.bf16 %v2329, %v2325
        %v2437 = vpack.c.bf16 %v2144, %v2140
        %v2438 = vpack.c.bf16 %v2146, %v2142
        %v2439 = vpack.c.bf16 %v2337, %v2333
        %v2440 = vpack.c.bf16 %v2339, %v2335
        %v2441 = vpack.c.bf16 %v2154, %v2150
        %v2442 = vpack.c.bf16 %v2156, %v2152
        %v2443 = vpack.c.bf16 %v2347, %v2343
        %v2444 = vpack.c.bf16 %v2349, %v2345
        %v2445 = vpack.c.bf16 %v2164, %v2160
        %v2446 = vpack.c.bf16 %v2166, %v2162
        %v2447 = vpack.c.bf16 %v2357, %v2353
        %v2448 = vpack.c.bf16 %v2359, %v2355
        %v2449 = vpack.c.bf16 %v2174, %v2170
        %v2450 = vpack.c.bf16 %v2176, %v2172
        %v2451 = vpack.c.bf16 %v2367, %v2363
        %v2452 = vpack.c.bf16 %v2369, %v2365
        %v2453 = vpack.c.bf16 %v2184, %v2180
        %v2454 = vpack.c.bf16 %v2186, %v2182
        %v2455 = vpack.c.bf16 %v2377, %v2373
        %v2456 = vpack.c.bf16 %v2379, %v2375
        %v2457 = vpack.c.bf16 %v2194, %v2190
        %v2458 = vpack.c.bf16 %v2196, %v2192
        %v2459 = vpack.c.bf16 %v2387, %v2383
        %v2460 = vpack.c.bf16 %v2389, %v2385
        %v2461 = vpack.c.bf16 %v2204, %v2200
        %v2462 = vpack.c.bf16 %v2206, %v2202
        %v2463 = vpack.c.bf16 %v2397, %v2393
        %v2464 = vpack.c.bf16 %v2399, %v2395
        %v2467 = vunpack.c.l.s4 1966171168
        %v2468 = vunpack.c.0.s8 %v2467
        %v2469 = vlaneseq
        %v2470 = vshrl.u32 %v2469, 7
        %v2471 = vsub.s32 %v2468, %v2470
        %v2472 = vrot.slane %v1694, %v2471
        %v2473 = vcombine.high %v2472, %v2472
        %v2475 = vunpack.c.l.s4 1966171168
        %v2476 = vunpack.c.0.s8 %v2475
        %v2477 = vlaneseq
        %v2478 = vshrl.u32 %v2477, 7
        %v2479 = vsub.s32 %v2476, %v2478
        %v2480 = vrot.slane %v2472, %v2479
        %v2482 = vunpack.c.l.s4 1966171168
        %v2483 = vunpack.c.0.s8 %v2482
        %v2484 = vlaneseq
        %v2485 = vshrl.u32 %v2484, 7
        %v2486 = vsub.s32 %v2483, %v2485
        %v2487 = vrot.slane %v2473, %v2486
        %v2488 = vcombine.high %v2480, %v2480
        %v2489 = vcombine.high %v2487, %v2487
        %v2491 = vpack.i.b16 %v2480, %v2480
        %v2493 = vlaneseq
        %v2494 = vshrl.u32 %v2493, 7
        %v2495 = vsub.s32 0, %v2494
        %v2496 = vrot.slane %v2491, %v2495
        %v2498 = vpack.i.b16 %v2487, %v2487
        %v2500 = vlaneseq
        %v2501 = vshrl.u32 %v2500, 7
        %v2502 = vsub.s32 0, %v2501
        %v2503 = vrot.slane %v2498, %v2502
        %v2505 = vpack.i.b16 %v2488, %v2488
        %v2507 = vlaneseq
        %v2508 = vshrl.u32 %v2507, 7
        %v2509 = vsub.s32 0, %v2508
        %v2510 = vrot.slane %v2505, %v2509
        %v2512 = vpack.i.b16 %v2489, %v2489
        %v2514 = vlaneseq
        %v2515 = vshrl.u32 %v2514, 7
        %v2516 = vsub.s32 0, %v2515
        %v2517 = vrot.slane %v2512, %v2516
        %v2518 = vadd.bf16 %v2401, %v2496
        %v2519 = vadd.bf16 %v2402, %v2503
        %v2520 = vadd.bf16 %v2403, %v2510
        %v2521 = vadd.bf16 %v2404, %v2517
        %v2522 = vadd.bf16 %v2405, %v2496
        %v2523 = vadd.bf16 %v2406, %v2503
        %v2524 = vadd.bf16 %v2407, %v2510
        %v2525 = vadd.bf16 %v2408, %v2517
        %v2526 = vadd.bf16 %v2409, %v2496
        %v2527 = vadd.bf16 %v2410, %v2503
        %v2528 = vadd.bf16 %v2411, %v2510
        %v2529 = vadd.bf16 %v2412, %v2517
        %v2530 = vadd.bf16 %v2413, %v2496
        %v2531 = vadd.bf16 %v2414, %v2503
        %v2532 = vadd.bf16 %v2415, %v2510
        %v2533 = vadd.bf16 %v2416, %v2517
        %v2534 = vadd.bf16 %v2417, %v2496
        %v2535 = vadd.bf16 %v2418, %v2503
        %v2536 = vadd.bf16 %v2419, %v2510
        %v2537 = vadd.bf16 %v2420, %v2517
        %v2538 = vadd.bf16 %v2421, %v2496
        %v2539 = vadd.bf16 %v2422, %v2503
        %v2540 = vadd.bf16 %v2423, %v2510
        %v2541 = vadd.bf16 %v2424, %v2517
        %v2542 = vadd.bf16 %v2425, %v2496
        %v2543 = vadd.bf16 %v2426, %v2503
        %v2544 = vadd.bf16 %v2427, %v2510
        %v2545 = vadd.bf16 %v2428, %v2517
        %v2546 = vadd.bf16 %v2429, %v2496
        %v2547 = vadd.bf16 %v2430, %v2503
        %v2548 = vadd.bf16 %v2431, %v2510
        %v2549 = vadd.bf16 %v2432, %v2517
        %v2550 = vadd.bf16 %v2433, %v2496
        %v2551 = vadd.bf16 %v2434, %v2503
        %v2552 = vadd.bf16 %v2435, %v2510
        %v2553 = vadd.bf16 %v2436, %v2517
        %v2554 = vadd.bf16 %v2437, %v2496
        %v2555 = vadd.bf16 %v2438, %v2503
        %v2556 = vadd.bf16 %v2439, %v2510
        %v2557 = vadd.bf16 %v2440, %v2517
        %v2558 = vadd.bf16 %v2441, %v2496
        %v2559 = vadd.bf16 %v2442, %v2503
        %v2560 = vadd.bf16 %v2443, %v2510
        %v2561 = vadd.bf16 %v2444, %v2517
        %v2562 = vadd.bf16 %v2445, %v2496
        %v2563 = vadd.bf16 %v2446, %v2503
        %v2564 = vadd.bf16 %v2447, %v2510
        %v2565 = vadd.bf16 %v2448, %v2517
        %v2566 = vadd.bf16 %v2449, %v2496
        %v2567 = vadd.bf16 %v2450, %v2503
        %v2568 = vadd.bf16 %v2451, %v2510
        %v2569 = vadd.bf16 %v2452, %v2517
        %v2570 = vadd.bf16 %v2453, %v2496
        %v2571 = vadd.bf16 %v2454, %v2503
        %v2572 = vadd.bf16 %v2455, %v2510
        %v2573 = vadd.bf16 %v2456, %v2517
        %v2574 = vadd.bf16 %v2457, %v2496
        %v2575 = vadd.bf16 %v2458, %v2503
        %v2576 = vadd.bf16 %v2459, %v2510
        %v2577 = vadd.bf16 %v2460, %v2517
        %v2578 = vadd.bf16 %v2461, %v2496
        %v2579 = vadd.bf16 %v2462, %v2503
        %v2580 = vadd.bf16 %v2463, %v2510
        %v2581 = vadd.bf16 %v2464, %v2517
        %v2582 = vmax.bf16 %v2518, 0
        %v2583 = vmax.bf16 %v2519, 0
        %v2584 = vmax.bf16 %v2520, 0
        %v2585 = vmax.bf16 %v2521, 0
        %v2586 = vmax.bf16 %v2522, 0
        %v2587 = vmax.bf16 %v2523, 0
        %v2588 = vmax.bf16 %v2524, 0
        %v2589 = vmax.bf16 %v2525, 0
        %v2590 = vmax.bf16 %v2526, 0
        %v2591 = vmax.bf16 %v2527, 0
        %v2592 = vmax.bf16 %v2528, 0
        %v2593 = vmax.bf16 %v2529, 0
        %v2594 = vmax.bf16 %v2530, 0
        %v2595 = vmax.bf16 %v2531, 0
        %v2596 = vmax.bf16 %v2532, 0
        %v2597 = vmax.bf16 %v2533, 0
        %v2598 = vmax.bf16 %v2534, 0
        %v2599 = vmax.bf16 %v2535, 0
        %v2600 = vmax.bf16 %v2536, 0
        %v2601 = vmax.bf16 %v2537, 0
        %v2602 = vmax.bf16 %v2538, 0
        %v2603 = vmax.bf16 %v2539, 0
        %v2604 = vmax.bf16 %v2540, 0
        %v2605 = vmax.bf16 %v2541, 0
        %v2606 = vmax.bf16 %v2542, 0
        %v2607 = vmax.bf16 %v2543, 0
        %v2608 = vmax.bf16 %v2544, 0
        %v2609 = vmax.bf16 %v2545, 0
        %v2610 = vmax.bf16 %v2546, 0
        %v2611 = vmax.bf16 %v2547, 0
        %v2612 = vmax.bf16 %v2548, 0
        %v2613 = vmax.bf16 %v2549, 0
        %v2614 = vmax.bf16 %v2550, 0
        %v2615 = vmax.bf16 %v2551, 0
        %v2616 = vmax.bf16 %v2552, 0
        %v2617 = vmax.bf16 %v2553, 0
        %v2618 = vmax.bf16 %v2554, 0
        %v2619 = vmax.bf16 %v2555, 0
        %v2620 = vmax.bf16 %v2556, 0
        %v2621 = vmax.bf16 %v2557, 0
        %v2622 = vmax.bf16 %v2558, 0
        %v2623 = vmax.bf16 %v2559, 0
        %v2624 = vmax.bf16 %v2560, 0
        %v2625 = vmax.bf16 %v2561, 0
        %v2626 = vmax.bf16 %v2562, 0
        %v2627 = vmax.bf16 %v2563, 0
        %v2628 = vmax.bf16 %v2564, 0
        %v2629 = vmax.bf16 %v2565, 0
        %v2630 = vmax.bf16 %v2566, 0
        %v2631 = vmax.bf16 %v2567, 0
        %v2632 = vmax.bf16 %v2568, 0
        %v2633 = vmax.bf16 %v2569, 0
        %v2634 = vmax.bf16 %v2570, 0
        %v2635 = vmax.bf16 %v2571, 0
        %v2636 = vmax.bf16 %v2572, 0
        %v2637 = vmax.bf16 %v2573, 0
        %v2638 = vmax.bf16 %v2574, 0
        %v2639 = vmax.bf16 %v2575, 0
        %v2640 = vmax.bf16 %v2576, 0
        %v2641 = vmax.bf16 %v2577, 0
        %v2642 = vmax.bf16 %v2578, 0
        %v2643 = vmax.bf16 %v2579, 0
        %v2644 = vmax.bf16 %v2580, 0
        %v2645 = vmax.bf16 %v2581, 0
        %v2646 = vld [vmem:[#allocation4] sm:$0xff]
        %v2647 = vld [vmem:[#allocation4 + $0x8] sm:$0xff]
        %v2648 = vld [vmem:[#allocation4 + $0x10] sm:$0xff]
        %v2649 = vld [vmem:[#allocation4 + $0x18] sm:$0xff]
        %v2650 = vld [vmem:[#allocation4 + $0x20] sm:$0xff]
        %v2651 = vld [vmem:[#allocation4 + $0x28] sm:$0xff]
        %v2652 = vld [vmem:[#allocation4 + $0x30] sm:$0xff]
        %v2653 = vld [vmem:[#allocation4 + $0x38] sm:$0xff]
        %v2654 = vld [vmem:[#allocation4 + $0x40] sm:$0xff]
        %v2655 = vld [vmem:[#allocation4 + $0x48] sm:$0xff]
        %v2656 = vld [vmem:[#allocation4 + $0x50] sm:$0xff]
        %v2657 = vld [vmem:[#allocation4 + $0x58] sm:$0xff]
        %v2658 = vld [vmem:[#allocation4 + $0x60] sm:$0xff]
        %v2659 = vld [vmem:[#allocation4 + $0x68] sm:$0xff]
        %v2660 = vld [vmem:[#allocation4 + $0x70] sm:$0xff]
        %v2661 = vld [vmem:[#allocation4 + $0x78] sm:$0xff]
        %v2662 = vld [vmem:[#allocation4 + $0x80] sm:$0xff]
        %v2663 = vld [vmem:[#allocation4 + $0x88] sm:$0xff]
        %v2664 = vld [vmem:[#allocation4 + $0x90] sm:$0xff]
        %v2665 = vld [vmem:[#allocation4 + $0x98] sm:$0xff]
        %v2666 = vld [vmem:[#allocation4 + $0xa0] sm:$0xff]
        %v2667 = vld [vmem:[#allocation4 + $0xa8] sm:$0xff]
        %v2668 = vld [vmem:[#allocation4 + $0xb0] sm:$0xff]
        %v2669 = vld [vmem:[#allocation4 + $0xb8] sm:$0xff]
        %v2670 = vld [vmem:[#allocation4 + $0xc0] sm:$0xff]
        %v2671 = vld [vmem:[#allocation4 + $0xc8] sm:$0xff]
        %v2672 = vld [vmem:[#allocation4 + $0xd0] sm:$0xff]
        %v2673 = vld [vmem:[#allocation4 + $0xd8] sm:$0xff]
        %v2674 = vld [vmem:[#allocation4 + $0xe0] sm:$0xff]
        %v2675 = vld [vmem:[#allocation4 + $0xe8] sm:$0xff]
        %v2676 = vld [vmem:[#allocation4 + $0xf0] sm:$0xff]
        %v2677 = vld [vmem:[#allocation4 + $0xf8] sm:$0xff]
        %v2678 = vld [vmem:[#allocation4 + $0x100] sm:$0xff]
        %v2679 = vld [vmem:[#allocation4 + $0x108] sm:$0xff]
        %v2680 = vld [vmem:[#allocation4 + $0x110] sm:$0xff]
        %v2681 = vld [vmem:[#allocation4 + $0x118] sm:$0xff]
        %v2682 = vld [vmem:[#allocation4 + $0x120] sm:$0xff]
        %v2683 = vld [vmem:[#allocation4 + $0x128] sm:$0xff]
        %v2684 = vld [vmem:[#allocation4 + $0x130] sm:$0xff]
        %v2685 = vld [vmem:[#allocation4 + $0x138] sm:$0xff]
        %v2686 = vld [vmem:[#allocation4 + $0x140] sm:$0xff]
        %v2687 = vld [vmem:[#allocation4 + $0x148] sm:$0xff]
        %v2688 = vld [vmem:[#allocation4 + $0x150] sm:$0xff]
        %v2689 = vld [vmem:[#allocation4 + $0x158] sm:$0xff]
        %v2690 = vld [vmem:[#allocation4 + $0x160] sm:$0xff]
        %v2691 = vld [vmem:[#allocation4 + $0x168] sm:$0xff]
        %v2692 = vld [vmem:[#allocation4 + $0x170] sm:$0xff]
        %v2693 = vld [vmem:[#allocation4 + $0x178] sm:$0xff]
        %v2694 = vld [vmem:[#allocation4 + $0x180] sm:$0xff]
        %v2695 = vld [vmem:[#allocation4 + $0x188] sm:$0xff]
        %v2696 = vld [vmem:[#allocation4 + $0x190] sm:$0xff]
        %v2697 = vld [vmem:[#allocation4 + $0x198] sm:$0xff]
        %v2698 = vld [vmem:[#allocation4 + $0x1a0] sm:$0xff]
        %v2699 = vld [vmem:[#allocation4 + $0x1a8] sm:$0xff]
        %v2700 = vld [vmem:[#allocation4 + $0x1b0] sm:$0xff]
        %v2701 = vld [vmem:[#allocation4 + $0x1b8] sm:$0xff]
        %v2702 = vld [vmem:[#allocation4 + $0x1c0] sm:$0xff]
        %v2703 = vld [vmem:[#allocation4 + $0x1c8] sm:$0xff]
        %v2704 = vld [vmem:[#allocation4 + $0x1d0] sm:$0xff]
        %v2705 = vld [vmem:[#allocation4 + $0x1d8] sm:$0xff]
        %v2706 = vld [vmem:[#allocation4 + $0x1e0] sm:$0xff]
        %v2707 = vld [vmem:[#allocation4 + $0x1e8] sm:$0xff]
        %v2708 = vld [vmem:[#allocation4 + $0x1f0] sm:$0xff]
        %v2709 = vld [vmem:[#allocation4 + $0x1f8] sm:$0xff]
        %v2710 = vld [vmem:[#allocation4 + $0x200] sm:$0xff]
        %v2711 = vld [vmem:[#allocation4 + $0x208] sm:$0xff]
        %v2712 = vld [vmem:[#allocation4 + $0x210] sm:$0xff]
        %v2713 = vld [vmem:[#allocation4 + $0x218] sm:$0xff]
        %v2714 = vld [vmem:[#allocation4 + $0x220] sm:$0xff]
        %v2715 = vld [vmem:[#allocation4 + $0x228] sm:$0xff]
        %v2716 = vld [vmem:[#allocation4 + $0x230] sm:$0xff]
        %v2717 = vld [vmem:[#allocation4 + $0x238] sm:$0xff]
        %v2718 = vld [vmem:[#allocation4 + $0x240] sm:$0xff]
        %v2719 = vld [vmem:[#allocation4 + $0x248] sm:$0xff]
        %v2720 = vld [vmem:[#allocation4 + $0x250] sm:$0xff]
        %v2721 = vld [vmem:[#allocation4 + $0x258] sm:$0xff]
        %v2722 = vld [vmem:[#allocation4 + $0x260] sm:$0xff]
        %v2723 = vld [vmem:[#allocation4 + $0x268] sm:$0xff]
        %v2724 = vld [vmem:[#allocation4 + $0x270] sm:$0xff]
        %v2725 = vld [vmem:[#allocation4 + $0x278] sm:$0xff]
        %v2726 = vld [vmem:[#allocation4 + $0x280] sm:$0xff]
        %v2727 = vld [vmem:[#allocation4 + $0x288] sm:$0xff]
        %v2728 = vld [vmem:[#allocation4 + $0x290] sm:$0xff]
        %v2729 = vld [vmem:[#allocation4 + $0x298] sm:$0xff]
        %v2730 = vld [vmem:[#allocation4 + $0x2a0] sm:$0xff]
        %v2731 = vld [vmem:[#allocation4 + $0x2a8] sm:$0xff]
        %v2732 = vld [vmem:[#allocation4 + $0x2b0] sm:$0xff]
        %v2733 = vld [vmem:[#allocation4 + $0x2b8] sm:$0xff]
        %v2734 = vld [vmem:[#allocation4 + $0x2c0] sm:$0xff]
        %v2735 = vld [vmem:[#allocation4 + $0x2c8] sm:$0xff]
        %v2736 = vld [vmem:[#allocation4 + $0x2d0] sm:$0xff]
        %v2737 = vld [vmem:[#allocation4 + $0x2d8] sm:$0xff]
        %v2738 = vld [vmem:[#allocation4 + $0x2e0] sm:$0xff]
        %v2739 = vld [vmem:[#allocation4 + $0x2e8] sm:$0xff]
        %v2740 = vld [vmem:[#allocation4 + $0x2f0] sm:$0xff]
        %v2741 = vld [vmem:[#allocation4 + $0x2f8] sm:$0xff]
        %v2742 = vld [vmem:[#allocation4 + $0x300] sm:$0xff]
        %v2743 = vld [vmem:[#allocation4 + $0x308] sm:$0xff]
        %v2744 = vld [vmem:[#allocation4 + $0x310] sm:$0xff]
        %v2745 = vld [vmem:[#allocation4 + $0x318] sm:$0xff]
        %v2746 = vld [vmem:[#allocation4 + $0x320] sm:$0xff]
        %v2747 = vld [vmem:[#allocation4 + $0x328] sm:$0xff]
        %v2748 = vld [vmem:[#allocation4 + $0x330] sm:$0xff]
        %v2749 = vld [vmem:[#allocation4 + $0x338] sm:$0xff]
        %v2750 = vld [vmem:[#allocation4 + $0x340] sm:$0xff]
        %v2751 = vld [vmem:[#allocation4 + $0x348] sm:$0xff]
        %v2752 = vld [vmem:[#allocation4 + $0x350] sm:$0xff]
        %v2753 = vld [vmem:[#allocation4 + $0x358] sm:$0xff]
        %v2754 = vld [vmem:[#allocation4 + $0x360] sm:$0xff]
        %v2755 = vld [vmem:[#allocation4 + $0x368] sm:$0xff]
        %v2756 = vld [vmem:[#allocation4 + $0x370] sm:$0xff]
        %v2757 = vld [vmem:[#allocation4 + $0x378] sm:$0xff]
        %v2758 = vld [vmem:[#allocation4 + $0x380] sm:$0xff]
        %v2759 = vld [vmem:[#allocation4 + $0x388] sm:$0xff]
        %v2760 = vld [vmem:[#allocation4 + $0x390] sm:$0xff]
        %v2761 = vld [vmem:[#allocation4 + $0x398] sm:$0xff]
        %v2762 = vld [vmem:[#allocation4 + $0x3a0] sm:$0xff]
        %v2763 = vld [vmem:[#allocation4 + $0x3a8] sm:$0xff]
        %v2764 = vld [vmem:[#allocation4 + $0x3b0] sm:$0xff]
        %v2765 = vld [vmem:[#allocation4 + $0x3b8] sm:$0xff]
        %v2766 = vld [vmem:[#allocation4 + $0x3c0] sm:$0xff]
        %v2767 = vld [vmem:[#allocation4 + $0x3c8] sm:$0xff]
        %v2768 = vld [vmem:[#allocation4 + $0x3d0] sm:$0xff]
        %v2769 = vld [vmem:[#allocation4 + $0x3d8] sm:$0xff]
        %v2770 = vld [vmem:[#allocation4 + $0x3e0] sm:$0xff]
        %v2771 = vld [vmem:[#allocation4 + $0x3e8] sm:$0xff]
        %v2772 = vld [vmem:[#allocation4 + $0x3f0] sm:$0xff]
        %v2773 = vld [vmem:[#allocation4 + $0x3f8] sm:$0xff]
        %v2774 = vld [vmem:[%s8] sm:$0xf]
        %v2903 = vunpack.c.l.b16 %v2646
        %v2904 = vunpack.c.h.b16 %v2646
        %v2905 = vunpack.c.l.b16 %v2647
        %v2906 = vunpack.c.h.b16 %v2647
        %v2907 = vunpack.c.l.b16 %v2648
        %v2908 = vunpack.c.h.b16 %v2648
        %v2909 = vunpack.c.l.b16 %v2649
        %v2910 = vunpack.c.h.b16 %v2649
        %v2911 = vunpack.c.l.b16 %v2650
        %v2912 = vunpack.c.h.b16 %v2650
        %v2913 = vunpack.c.l.b16 %v2651
        %v2914 = vunpack.c.h.b16 %v2651
        %v2915 = vunpack.c.l.b16 %v2652
        %v2916 = vunpack.c.h.b16 %v2652
        %v2917 = vunpack.c.l.b16 %v2653
        %v2918 = vunpack.c.h.b16 %v2653
        %v2919 = vunpack.c.l.b16 %v2654
        %v2920 = vunpack.c.h.b16 %v2654
        %v2921 = vunpack.c.l.b16 %v2655
        %v2922 = vunpack.c.h.b16 %v2655
        %v2923 = vunpack.c.l.b16 %v2656
        %v2924 = vunpack.c.h.b16 %v2656
        %v2925 = vunpack.c.l.b16 %v2657
        %v2926 = vunpack.c.h.b16 %v2657
        %v2927 = vunpack.c.l.b16 %v2658
        %v2928 = vunpack.c.h.b16 %v2658
        %v2929 = vunpack.c.l.b16 %v2659
        %v2930 = vunpack.c.h.b16 %v2659
        %v2931 = vunpack.c.l.b16 %v2660
        %v2932 = vunpack.c.h.b16 %v2660
        %v2933 = vunpack.c.l.b16 %v2661
        %v2934 = vunpack.c.h.b16 %v2661
        %v2935 = vunpack.c.l.b16 %v2662
        %v2936 = vunpack.c.h.b16 %v2662
        %v2937 = vunpack.c.l.b16 %v2663
        %v2938 = vunpack.c.h.b16 %v2663
        %v2939 = vunpack.c.l.b16 %v2664
        %v2940 = vunpack.c.h.b16 %v2664
        %v2941 = vunpack.c.l.b16 %v2665
        %v2942 = vunpack.c.h.b16 %v2665
        %v2943 = vunpack.c.l.b16 %v2666
        %v2944 = vunpack.c.h.b16 %v2666
        %v2945 = vunpack.c.l.b16 %v2667
        %v2946 = vunpack.c.h.b16 %v2667
        %v2947 = vunpack.c.l.b16 %v2668
        %v2948 = vunpack.c.h.b16 %v2668
        %v2949 = vunpack.c.l.b16 %v2669
        %v2950 = vunpack.c.h.b16 %v2669
        %v2951 = vunpack.c.l.b16 %v2670
        %v2952 = vunpack.c.h.b16 %v2670
        %v2953 = vunpack.c.l.b16 %v2671
        %v2954 = vunpack.c.h.b16 %v2671
        %v2955 = vunpack.c.l.b16 %v2672
        %v2956 = vunpack.c.h.b16 %v2672
        %v2957 = vunpack.c.l.b16 %v2673
        %v2958 = vunpack.c.h.b16 %v2673
        %v2959 = vunpack.c.l.b16 %v2674
        %v2960 = vunpack.c.h.b16 %v2674
        %v2961 = vunpack.c.l.b16 %v2675
        %v2962 = vunpack.c.h.b16 %v2675
        %v2963 = vunpack.c.l.b16 %v2676
        %v2964 = vunpack.c.h.b16 %v2676
        %v2965 = vunpack.c.l.b16 %v2677
        %v2966 = vunpack.c.h.b16 %v2677
        %v2967 = vunpack.c.l.b16 %v2678
        %v2968 = vunpack.c.h.b16 %v2678
        %v2969 = vunpack.c.l.b16 %v2679
        %v2970 = vunpack.c.h.b16 %v2679
        %v2971 = vunpack.c.l.b16 %v2680
        %v2972 = vunpack.c.h.b16 %v2680
        %v2973 = vunpack.c.l.b16 %v2681
        %v2974 = vunpack.c.h.b16 %v2681
        %v2975 = vunpack.c.l.b16 %v2682
        %v2976 = vunpack.c.h.b16 %v2682
        %v2977 = vunpack.c.l.b16 %v2683
        %v2978 = vunpack.c.h.b16 %v2683
        %v2979 = vunpack.c.l.b16 %v2684
        %v2980 = vunpack.c.h.b16 %v2684
        %v2981 = vunpack.c.l.b16 %v2685
        %v2982 = vunpack.c.h.b16 %v2685
        %v2983 = vunpack.c.l.b16 %v2686
        %v2984 = vunpack.c.h.b16 %v2686
        %v2985 = vunpack.c.l.b16 %v2687
        %v2986 = vunpack.c.h.b16 %v2687
        %v2987 = vunpack.c.l.b16 %v2688
        %v2988 = vunpack.c.h.b16 %v2688
        %v2989 = vunpack.c.l.b16 %v2689
        %v2990 = vunpack.c.h.b16 %v2689
        %v2991 = vunpack.c.l.b16 %v2690
        %v2992 = vunpack.c.h.b16 %v2690
        %v2993 = vunpack.c.l.b16 %v2691
        %v2994 = vunpack.c.h.b16 %v2691
        %v2995 = vunpack.c.l.b16 %v2692
        %v2996 = vunpack.c.h.b16 %v2692
        %v2997 = vunpack.c.l.b16 %v2693
        %v2998 = vunpack.c.h.b16 %v2693
        %v2999 = vunpack.c.l.b16 %v2694
        %v3000 = vunpack.c.h.b16 %v2694
        %v3001 = vunpack.c.l.b16 %v2695
        %v3002 = vunpack.c.h.b16 %v2695
        %v3003 = vunpack.c.l.b16 %v2696
        %v3004 = vunpack.c.h.b16 %v2696
        %v3005 = vunpack.c.l.b16 %v2697
        %v3006 = vunpack.c.h.b16 %v2697
        %v3007 = vunpack.c.l.b16 %v2698
        %v3008 = vunpack.c.h.b16 %v2698
        %v3009 = vunpack.c.l.b16 %v2699
        %v3010 = vunpack.c.h.b16 %v2699
        %v3011 = vunpack.c.l.b16 %v2700
        %v3012 = vunpack.c.h.b16 %v2700
        %v3013 = vunpack.c.l.b16 %v2701
        %v3014 = vunpack.c.h.b16 %v2701
        %v3015 = vunpack.c.l.b16 %v2702
        %v3016 = vunpack.c.h.b16 %v2702
        %v3017 = vunpack.c.l.b16 %v2703
        %v3018 = vunpack.c.h.b16 %v2703
        %v3019 = vunpack.c.l.b16 %v2704
        %v3020 = vunpack.c.h.b16 %v2704
        %v3021 = vunpack.c.l.b16 %v2705
        %v3022 = vunpack.c.h.b16 %v2705
        %v3023 = vunpack.c.l.b16 %v2706
        %v3024 = vunpack.c.h.b16 %v2706
        %v3025 = vunpack.c.l.b16 %v2707
        %v3026 = vunpack.c.h.b16 %v2707
        %v3027 = vunpack.c.l.b16 %v2708
        %v3028 = vunpack.c.h.b16 %v2708
        %v3029 = vunpack.c.l.b16 %v2709
        %v3030 = vunpack.c.h.b16 %v2709
        %v3031 = vunpack.c.l.b16 %v2710
        %v3032 = vunpack.c.h.b16 %v2710
        %v3033 = vunpack.c.l.b16 %v2711
        %v3034 = vunpack.c.h.b16 %v2711
        %v3035 = vunpack.c.l.b16 %v2712
        %v3036 = vunpack.c.h.b16 %v2712
        %v3037 = vunpack.c.l.b16 %v2713
        %v3038 = vunpack.c.h.b16 %v2713
        %v3039 = vunpack.c.l.b16 %v2714
        %v3040 = vunpack.c.h.b16 %v2714
        %v3041 = vunpack.c.l.b16 %v2715
        %v3042 = vunpack.c.h.b16 %v2715
        %v3043 = vunpack.c.l.b16 %v2716
        %v3044 = vunpack.c.h.b16 %v2716
        %v3045 = vunpack.c.l.b16 %v2717
        %v3046 = vunpack.c.h.b16 %v2717
        %v3047 = vunpack.c.l.b16 %v2718
        %v3048 = vunpack.c.h.b16 %v2718
        %v3049 = vunpack.c.l.b16 %v2719
        %v3050 = vunpack.c.h.b16 %v2719
        %v3051 = vunpack.c.l.b16 %v2720
        %v3052 = vunpack.c.h.b16 %v2720
        %v3053 = vunpack.c.l.b16 %v2721
        %v3054 = vunpack.c.h.b16 %v2721
        %v3055 = vunpack.c.l.b16 %v2722
        %v3056 = vunpack.c.h.b16 %v2722
        %v3057 = vunpack.c.l.b16 %v2723
        %v3058 = vunpack.c.h.b16 %v2723
        %v3059 = vunpack.c.l.b16 %v2724
        %v3060 = vunpack.c.h.b16 %v2724
        %v3061 = vunpack.c.l.b16 %v2725
        %v3062 = vunpack.c.h.b16 %v2725
        %v3063 = vunpack.c.l.b16 %v2726
        %v3064 = vunpack.c.h.b16 %v2726
        %v3065 = vunpack.c.l.b16 %v2727
        %v3066 = vunpack.c.h.b16 %v2727
        %v3067 = vunpack.c.l.b16 %v2728
        %v3068 = vunpack.c.h.b16 %v2728
        %v3069 = vunpack.c.l.b16 %v2729
        %v3070 = vunpack.c.h.b16 %v2729
        %v3071 = vunpack.c.l.b16 %v2730
        %v3072 = vunpack.c.h.b16 %v2730
        %v3073 = vunpack.c.l.b16 %v2731
        %v3074 = vunpack.c.h.b16 %v2731
        %v3075 = vunpack.c.l.b16 %v2732
        %v3076 = vunpack.c.h.b16 %v2732
        %v3077 = vunpack.c.l.b16 %v2733
        %v3078 = vunpack.c.h.b16 %v2733
        %v3079 = vunpack.c.l.b16 %v2734
        %v3080 = vunpack.c.h.b16 %v2734
        %v3081 = vunpack.c.l.b16 %v2735
        %v3082 = vunpack.c.h.b16 %v2735
        %v3083 = vunpack.c.l.b16 %v2736
        %v3084 = vunpack.c.h.b16 %v2736
        %v3085 = vunpack.c.l.b16 %v2737
        %v3086 = vunpack.c.h.b16 %v2737
        %v3087 = vunpack.c.l.b16 %v2738
        %v3088 = vunpack.c.h.b16 %v2738
        %v3089 = vunpack.c.l.b16 %v2739
        %v3090 = vunpack.c.h.b16 %v2739
        %v3091 = vunpack.c.l.b16 %v2740
        %v3092 = vunpack.c.h.b16 %v2740
        %v3093 = vunpack.c.l.b16 %v2741
        %v3094 = vunpack.c.h.b16 %v2741
        %v3095 = vunpack.c.l.b16 %v2742
        %v3096 = vunpack.c.h.b16 %v2742
        %v3097 = vunpack.c.l.b16 %v2743
        %v3098 = vunpack.c.h.b16 %v2743
        %v3099 = vunpack.c.l.b16 %v2744
        %v3100 = vunpack.c.h.b16 %v2744
        %v3101 = vunpack.c.l.b16 %v2745
        %v3102 = vunpack.c.h.b16 %v2745
        %v3103 = vunpack.c.l.b16 %v2746
        %v3104 = vunpack.c.h.b16 %v2746
        %v3105 = vunpack.c.l.b16 %v2747
        %v3106 = vunpack.c.h.b16 %v2747
        %v3107 = vunpack.c.l.b16 %v2748
        %v3108 = vunpack.c.h.b16 %v2748
        %v3109 = vunpack.c.l.b16 %v2749
        %v3110 = vunpack.c.h.b16 %v2749
        %v3111 = vunpack.c.l.b16 %v2750
        %v3112 = vunpack.c.h.b16 %v2750
        %v3113 = vunpack.c.l.b16 %v2751
        %v3114 = vunpack.c.h.b16 %v2751
        %v3115 = vunpack.c.l.b16 %v2752
        %v3116 = vunpack.c.h.b16 %v2752
        %v3117 = vunpack.c.l.b16 %v2753
        %v3118 = vunpack.c.h.b16 %v2753
        %v3119 = vunpack.c.l.b16 %v2754
        %v3120 = vunpack.c.h.b16 %v2754
        %v3121 = vunpack.c.l.b16 %v2755
        %v3122 = vunpack.c.h.b16 %v2755
        %v3123 = vunpack.c.l.b16 %v2756
        %v3124 = vunpack.c.h.b16 %v2756
        %v3125 = vunpack.c.l.b16 %v2757
        %v3126 = vunpack.c.h.b16 %v2757
        %v3127 = vunpack.c.l.b16 %v2758
        %v3128 = vunpack.c.h.b16 %v2758
        %v3129 = vunpack.c.l.b16 %v2759
        %v3130 = vunpack.c.h.b16 %v2759
        %v3131 = vunpack.c.l.b16 %v2760
        %v3132 = vunpack.c.h.b16 %v2760
        %v3133 = vunpack.c.l.b16 %v2761
        %v3134 = vunpack.c.h.b16 %v2761
        %v3135 = vunpack.c.l.b16 %v2762
        %v3136 = vunpack.c.h.b16 %v2762
        %v3137 = vunpack.c.l.b16 %v2763
        %v3138 = vunpack.c.h.b16 %v2763
        %v3139 = vunpack.c.l.b16 %v2764
        %v3140 = vunpack.c.h.b16 %v2764
        %v3141 = vunpack.c.l.b16 %v2765
        %v3142 = vunpack.c.h.b16 %v2765
        %v3143 = vunpack.c.l.b16 %v2766
        %v3144 = vunpack.c.h.b16 %v2766
        %v3145 = vunpack.c.l.b16 %v2767
        %v3146 = vunpack.c.h.b16 %v2767
        %v3147 = vunpack.c.l.b16 %v2768
        %v3148 = vunpack.c.h.b16 %v2768
        %v3149 = vunpack.c.l.b16 %v2769
        %v3150 = vunpack.c.h.b16 %v2769
        %v3151 = vunpack.c.l.b16 %v2770
        %v3152 = vunpack.c.h.b16 %v2770
        %v3153 = vunpack.c.l.b16 %v2771
        %v3154 = vunpack.c.h.b16 %v2771
        %v3155 = vunpack.c.l.b16 %v2772
        %v3156 = vunpack.c.h.b16 %v2772
        %v3157 = vunpack.c.l.b16 %v2773
        %v3158 = vunpack.c.h.b16 %v2773
        %v3159 = vpack.c.b16 %v2907, %v2903
        %v3160 = vpack.c.b16 %v2908, %v2904
        %v3161 = vpack.c.b16 %v2909, %v2905
        %v3162 = vpack.c.b16 %v2910, %v2906
        %v3163 = vpack.c.b16 %v2915, %v2911
        %v3164 = vpack.c.b16 %v2916, %v2912
        %v3165 = vpack.c.b16 %v2917, %v2913
        %v3166 = vpack.c.b16 %v2918, %v2914
        %v3167 = vpack.c.b16 %v2923, %v2919
        %v3168 = vpack.c.b16 %v2924, %v2920
        %v3169 = vpack.c.b16 %v2925, %v2921
        %v3170 = vpack.c.b16 %v2926, %v2922
        %v3171 = vpack.c.b16 %v2931, %v2927
        %v3172 = vpack.c.b16 %v2932, %v2928
        %v3173 = vpack.c.b16 %v2933, %v2929
        %v3174 = vpack.c.b16 %v2934, %v2930
        %v3175 = vpack.c.b16 %v2939, %v2935
        %v3176 = vpack.c.b16 %v2940, %v2936
        %v3177 = vpack.c.b16 %v2941, %v2937
        %v3178 = vpack.c.b16 %v2942, %v2938
        %v3179 = vpack.c.b16 %v2947, %v2943
        %v3180 = vpack.c.b16 %v2948, %v2944
        %v3181 = vpack.c.b16 %v2949, %v2945
        %v3182 = vpack.c.b16 %v2950, %v2946
        %v3183 = vpack.c.b16 %v2955, %v2951
        %v3184 = vpack.c.b16 %v2956, %v2952
        %v3185 = vpack.c.b16 %v2957, %v2953
        %v3186 = vpack.c.b16 %v2958, %v2954
        %v3187 = vpack.c.b16 %v2963, %v2959
        %v3188 = vpack.c.b16 %v2964, %v2960
        %v3189 = vpack.c.b16 %v2965, %v2961
        %v3190 = vpack.c.b16 %v2966, %v2962
        %v3191 = vpack.c.b16 %v2971, %v2967
        %v3192 = vpack.c.b16 %v2972, %v2968
        %v3193 = vpack.c.b16 %v2973, %v2969
        %v3194 = vpack.c.b16 %v2974, %v2970
        %v3195 = vpack.c.b16 %v2979, %v2975
        %v3196 = vpack.c.b16 %v2980, %v2976
        %v3197 = vpack.c.b16 %v2981, %v2977
        %v3198 = vpack.c.b16 %v2982, %v2978
        %v3199 = vpack.c.b16 %v2987, %v2983
        %v3200 = vpack.c.b16 %v2988, %v2984
        %v3201 = vpack.c.b16 %v2989, %v2985
        %v3202 = vpack.c.b16 %v2990, %v2986
        %v3203 = vpack.c.b16 %v2995, %v2991
        %v3204 = vpack.c.b16 %v2996, %v2992
        %v3205 = vpack.c.b16 %v2997, %v2993
        %v3206 = vpack.c.b16 %v2998, %v2994
        %v3207 = vpack.c.b16 %v3003, %v2999
        %v3208 = vpack.c.b16 %v3004, %v3000
        %v3209 = vpack.c.b16 %v3005, %v3001
        %v3210 = vpack.c.b16 %v3006, %v3002
        %v3211 = vpack.c.b16 %v3011, %v3007
        %v3212 = vpack.c.b16 %v3012, %v3008
        %v3213 = vpack.c.b16 %v3013, %v3009
        %v3214 = vpack.c.b16 %v3014, %v3010
        %v3215 = vpack.c.b16 %v3019, %v3015
        %v3216 = vpack.c.b16 %v3020, %v3016
        %v3217 = vpack.c.b16 %v3021, %v3017
        %v3218 = vpack.c.b16 %v3022, %v3018
        %v3219 = vpack.c.b16 %v3027, %v3023
        %v3220 = vpack.c.b16 %v3028, %v3024
        %v3221 = vpack.c.b16 %v3029, %v3025
        %v3222 = vpack.c.b16 %v3030, %v3026
        %v3223 = vpack.c.b16 %v3035, %v3031
        %v3224 = vpack.c.b16 %v3036, %v3032
        %v3225 = vpack.c.b16 %v3037, %v3033
        %v3226 = vpack.c.b16 %v3038, %v3034
        %v3227 = vpack.c.b16 %v3043, %v3039
        %v3228 = vpack.c.b16 %v3044, %v3040
        %v3229 = vpack.c.b16 %v3045, %v3041
        %v3230 = vpack.c.b16 %v3046, %v3042
        %v3231 = vpack.c.b16 %v3051, %v3047
        %v3232 = vpack.c.b16 %v3052, %v3048
        %v3233 = vpack.c.b16 %v3053, %v3049
        %v3234 = vpack.c.b16 %v3054, %v3050
        %v3235 = vpack.c.b16 %v3059, %v3055
        %v3236 = vpack.c.b16 %v3060, %v3056
        %v3237 = vpack.c.b16 %v3061, %v3057
        %v3238 = vpack.c.b16 %v3062, %v3058
        %v3239 = vpack.c.b16 %v3067, %v3063
        %v3240 = vpack.c.b16 %v3068, %v3064
        %v3241 = vpack.c.b16 %v3069, %v3065
        %v3242 = vpack.c.b16 %v3070, %v3066
        %v3243 = vpack.c.b16 %v3075, %v3071
        %v3244 = vpack.c.b16 %v3076, %v3072
        %v3245 = vpack.c.b16 %v3077, %v3073
        %v3246 = vpack.c.b16 %v3078, %v3074
        %v3247 = vpack.c.b16 %v3083, %v3079
        %v3248 = vpack.c.b16 %v3084, %v3080
        %v3249 = vpack.c.b16 %v3085, %v3081
        %v3250 = vpack.c.b16 %v3086, %v3082
        %v3251 = vpack.c.b16 %v3091, %v3087
        %v3252 = vpack.c.b16 %v3092, %v3088
        %v3253 = vpack.c.b16 %v3093, %v3089
        %v3254 = vpack.c.b16 %v3094, %v3090
        %v3255 = vpack.c.b16 %v3099, %v3095
        %v3256 = vpack.c.b16 %v3100, %v3096
        %v3257 = vpack.c.b16 %v3101, %v3097
        %v3258 = vpack.c.b16 %v3102, %v3098
        %v3259 = vpack.c.b16 %v3107, %v3103
        %v3260 = vpack.c.b16 %v3108, %v3104
        %v3261 = vpack.c.b16 %v3109, %v3105
        %v3262 = vpack.c.b16 %v3110, %v3106
        %v3263 = vpack.c.b16 %v3115, %v3111
        %v3264 = vpack.c.b16 %v3116, %v3112
        %v3265 = vpack.c.b16 %v3117, %v3113
        %v3266 = vpack.c.b16 %v3118, %v3114
        %v3267 = vpack.c.b16 %v3123, %v3119
        %v3268 = vpack.c.b16 %v3124, %v3120
        %v3269 = vpack.c.b16 %v3125, %v3121
        %v3270 = vpack.c.b16 %v3126, %v3122
        %v3271 = vpack.c.b16 %v3131, %v3127
        %v3272 = vpack.c.b16 %v3132, %v3128
        %v3273 = vpack.c.b16 %v3133, %v3129
        %v3274 = vpack.c.b16 %v3134, %v3130
        %v3275 = vpack.c.b16 %v3139, %v3135
        %v3276 = vpack.c.b16 %v3140, %v3136
        %v3277 = vpack.c.b16 %v3141, %v3137
        %v3278 = vpack.c.b16 %v3142, %v3138
        %v3279 = vpack.c.b16 %v3147, %v3143
        %v3280 = vpack.c.b16 %v3148, %v3144
        %v3281 = vpack.c.b16 %v3149, %v3145
        %v3282 = vpack.c.b16 %v3150, %v3146
        %v3283 = vpack.c.b16 %v3155, %v3151
        %v3284 = vpack.c.b16 %v3156, %v3152
        %v3285 = vpack.c.b16 %v3157, %v3153
        %v3286 = vpack.c.b16 %v3158, %v3154
        %3415 = vmatprep.subr.bf16.mxu0 %v3160
        %3416 = vmatpush1.bf16.msra.mxu0 %v3159
        %3417 = vmatprep.subr.bf16.mxu0 %v3164
        %3418 = vmatpush1.bf16.msra.mxu0 %v3163
        %3419 = vmatprep.subr.bf16.mxu0 %v3168
        %3420 = vmatpush1.bf16.msra.mxu0 %v3167
        %3421 = vmatprep.subr.bf16.mxu0 %v3172
        %3422 = vmatpush1.bf16.msra.mxu0 %v3171
        %3423 = vmatprep.subr.bf16.mxu0 %v3176
        %3424 = vmatpush1.bf16.msra.mxu0 %v3175
        %3425 = vmatprep.subr.bf16.mxu0 %v3180
        %3426 = vmatpush1.bf16.msra.mxu0 %v3179
        %3427 = vmatprep.subr.bf16.mxu0 %v3184
        %3428 = vmatpush1.bf16.msra.mxu0 %v3183
        %3429 = vmatprep.subr.bf16.mxu0 %v3188
        %3430 = vmatpush1.bf16.msra.mxu0 %v3187
        %3431 = vmatprep.subr.bf16.mxu0 %v3192
        %3432 = vmatpush1.bf16.msra.mxu0 %v3191
        %3433 = vmatprep.subr.bf16.mxu0 %v3196
        %3434 = vmatpush1.bf16.msra.mxu0 %v3195
        %3435 = vmatprep.subr.bf16.mxu0 %v3200
        %3436 = vmatpush1.bf16.msra.mxu0 %v3199
        %3437 = vmatprep.subr.bf16.mxu0 %v3204
        %3438 = vmatpush1.bf16.msra.mxu0 %v3203
        %3439 = vmatprep.subr.bf16.mxu0 %v3208
        %3440 = vmatpush1.bf16.msra.mxu0 %v3207
        %3441 = vmatprep.subr.bf16.mxu0 %v3212
        %3442 = vmatpush1.bf16.msra.mxu0 %v3211
        %3443 = vmatprep.subr.bf16.mxu0 %v3216
        %3444 = vmatpush1.bf16.msra.mxu0 %v3215
        %3445 = vmatprep.subr.bf16.mxu0 %v3220
        %3446 = vmatpush1.bf16.msra.mxu0 %v3219
        %3447 = vmatprep.mubr.bf16.mxu0 %v2583
        %3448 = vmatmul.mubr.bf16.gmra.mrb[0].mxu0 %v2582
        %v3449 = vpop.f32.mrb[0].mxu0
        %v3450 = vadd.f32 0.0, %v3449
        %v3451 = vpop.f32.mrb[0].mxu0
        %v3452 = vadd.f32 0.0, %v3451
        %v3453 = vpop.f32.mrb[0].mxu0
        %v3454 = vadd.f32 0.0, %v3453
        %v3455 = vpop.f32.mrb[0].mxu0
        %v3456 = vadd.f32 0.0, %v3455
        %3457 = vmatprep.mubr.bf16.mxu0 %v2587
        %3458 = vmatmul.mubr.bf16.gmra.mrb[0].mxu0 %v2586
        %v3459 = vpop.f32.mrb[0].mxu0
        %v3460 = vadd.f32 0.0, %v3459
        %v3461 = vpop.f32.mrb[0].mxu0
        %v3462 = vadd.f32 0.0, %v3461
        %v3463 = vpop.f32.mrb[0].mxu0
        %v3464 = vadd.f32 0.0, %v3463
        %v3465 = vpop.f32.mrb[0].mxu0
        %v3466 = vadd.f32 0.0, %v3465
        %3467 = vmatprep.mubr.bf16.mxu0 %v2591
        %3468 = vmatmul.mubr.bf16.gmra.mrb[0].mxu0 %v2590
        %v3469 = vpop.f32.mrb[0].mxu0
        %v3470 = vadd.f32 0.0, %v3469
        %v3471 = vpop.f32.mrb[0].mxu0
        %v3472 = vadd.f32 0.0, %v3471
        %v3473 = vpop.f32.mrb[0].mxu0
        %v3474 = vadd.f32 0.0, %v3473
        %v3475 = vpop.f32.mrb[0].mxu0
        %v3476 = vadd.f32 0.0, %v3475
        %3477 = vmatprep.mubr.bf16.mxu0 %v2595
        %3478 = vmatmul.mubr.bf16.gmra.mrb[0].mxu0 %v2594
        %v3479 = vpop.f32.mrb[0].mxu0
        %v3480 = vadd.f32 0.0, %v3479
        %v3481 = vpop.f32.mrb[0].mxu0
        %v3482 = vadd.f32 0.0, %v3481
        %v3483 = vpop.f32.mrb[0].mxu0
        %v3484 = vadd.f32 0.0, %v3483
        %v3485 = vpop.f32.mrb[0].mxu0
        %v3486 = vadd.f32 0.0, %v3485
        %3487 = vmatprep.mubr.bf16.mxu0 %v2599
        %3488 = vmatmul.mubr.bf16.gmra.mrb[0].mxu0 %v2598
        %v3489 = vpop.f32.mrb[0].mxu0
        %v3490 = vadd.f32 0.0, %v3489
        %v3491 = vpop.f32.mrb[0].mxu0
        %v3492 = vadd.f32 0.0, %v3491
        %v3493 = vpop.f32.mrb[0].mxu0
        %v3494 = vadd.f32 0.0, %v3493
        %v3495 = vpop.f32.mrb[0].mxu0
        %v3496 = vadd.f32 0.0, %v3495
        %3497 = vmatprep.mubr.bf16.mxu0 %v2603
        %3498 = vmatmul.mubr.bf16.gmra.mrb[0].mxu0 %v2602
        %v3499 = vpop.f32.mrb[0].mxu0
        %v3500 = vadd.f32 0.0, %v3499
        %v3501 = vpop.f32.mrb[0].mxu0
        %v3502 = vadd.f32 0.0, %v3501
        %v3503 = vpop.f32.mrb[0].mxu0
        %v3504 = vadd.f32 0.0, %v3503
        %v3505 = vpop.f32.mrb[0].mxu0
        %v3506 = vadd.f32 0.0, %v3505
        %3507 = vmatprep.mubr.bf16.mxu0 %v2607
        %3508 = vmatmul.mubr.bf16.gmra.mrb[0].mxu0 %v2606
        %v3509 = vpop.f32.mrb[0].mxu0
        %v3510 = vadd.f32 0.0, %v3509
        %v3511 = vpop.f32.mrb[0].mxu0
        %v3512 = vadd.f32 0.0, %v3511
        %v3513 = vpop.f32.mrb[0].mxu0
        %v3514 = vadd.f32 0.0, %v3513
        %v3515 = vpop.f32.mrb[0].mxu0
        %v3516 = vadd.f32 0.0, %v3515
        %3517 = vmatprep.mubr.bf16.mxu0 %v2611
        %3518 = vmatmul.mubr.bf16.gmra.mrb[0].mxu0 %v2610
        %v3519 = vpop.f32.mrb[0].mxu0
        %v3520 = vadd.f32 0.0, %v3519
        %v3521 = vpop.f32.mrb[0].mxu0
        %v3522 = vadd.f32 0.0, %v3521
        %v3523 = vpop.f32.mrb[0].mxu0
        %v3524 = vadd.f32 0.0, %v3523
        %v3525 = vpop.f32.mrb[0].mxu0
        %v3526 = vadd.f32 0.0, %v3525
        %3527 = vmatprep.mubr.bf16.mxu0 %v2615
        %3528 = vmatmul.mubr.bf16.gmra.mrb[0].mxu0 %v2614
        %v3529 = vpop.f32.mrb[0].mxu0
        %v3530 = vadd.f32 0.0, %v3529
        %v3531 = vpop.f32.mrb[0].mxu0
        %v3532 = vadd.f32 0.0, %v3531
        %v3533 = vpop.f32.mrb[0].mxu0
        %v3534 = vadd.f32 0.0, %v3533
        %v3535 = vpop.f32.mrb[0].mxu0
        %v3536 = vadd.f32 0.0, %v3535
        %3537 = vmatprep.mubr.bf16.mxu0 %v2619
        %3538 = vmatmul.mubr.bf16.gmra.mrb[0].mxu0 %v2618
        %v3539 = vpop.f32.mrb[0].mxu0
        %v3540 = vadd.f32 0.0, %v3539
        %v3541 = vpop.f32.mrb[0].mxu0
        %v3542 = vadd.f32 0.0, %v3541
        %v3543 = vpop.f32.mrb[0].mxu0
        %v3544 = vadd.f32 0.0, %v3543
        %v3545 = vpop.f32.mrb[0].mxu0
        %v3546 = vadd.f32 0.0, %v3545
        %3547 = vmatprep.mubr.bf16.mxu0 %v2623
        %3548 = vmatmul.mubr.bf16.gmra.mrb[0].mxu0 %v2622
        %v3549 = vpop.f32.mrb[0].mxu0
        %v3550 = vadd.f32 0.0, %v3549
        %v3551 = vpop.f32.mrb[0].mxu0
        %v3552 = vadd.f32 0.0, %v3551
        %v3553 = vpop.f32.mrb[0].mxu0
        %v3554 = vadd.f32 0.0, %v3553
        %v3555 = vpop.f32.mrb[0].mxu0
        %v3556 = vadd.f32 0.0, %v3555
        %3557 = vmatprep.mubr.bf16.mxu0 %v2627
        %3558 = vmatmul.mubr.bf16.gmra.mrb[0].mxu0 %v2626
        %v3559 = vpop.f32.mrb[0].mxu0
        %v3560 = vadd.f32 0.0, %v3559
        %v3561 = vpop.f32.mrb[0].mxu0
        %v3562 = vadd.f32 0.0, %v3561
        %v3563 = vpop.f32.mrb[0].mxu0
        %v3564 = vadd.f32 0.0, %v3563
        %v3565 = vpop.f32.mrb[0].mxu0
        %v3566 = vadd.f32 0.0, %v3565
        %3567 = vmatprep.mubr.bf16.mxu0 %v2631
        %3568 = vmatmul.mubr.bf16.gmra.mrb[0].mxu0 %v2630
        %v3569 = vpop.f32.mrb[0].mxu0
        %v3570 = vadd.f32 0.0, %v3569
        %v3571 = vpop.f32.mrb[0].mxu0
        %v3572 = vadd.f32 0.0, %v3571
        %v3573 = vpop.f32.mrb[0].mxu0
        %v3574 = vadd.f32 0.0, %v3573
        %v3575 = vpop.f32.mrb[0].mxu0
        %v3576 = vadd.f32 0.0, %v3575
        %3577 = vmatprep.mubr.bf16.mxu0 %v2635
        %3578 = vmatmul.mubr.bf16.gmra.mrb[0].mxu0 %v2634
        %v3579 = vpop.f32.mrb[0].mxu0
        %v3580 = vadd.f32 0.0, %v3579
        %v3581 = vpop.f32.mrb[0].mxu0
        %v3582 = vadd.f32 0.0, %v3581
        %v3583 = vpop.f32.mrb[0].mxu0
        %v3584 = vadd.f32 0.0, %v3583
        %v3585 = vpop.f32.mrb[0].mxu0
        %v3586 = vadd.f32 0.0, %v3585
        %3587 = vmatprep.mubr.bf16.mxu0 %v2639
        %3588 = vmatmul.mubr.bf16.gmra.mrb[0].mxu0 %v2638
        %v3589 = vpop.f32.mrb[0].mxu0
        %v3590 = vadd.f32 0.0, %v3589
        %v3591 = vpop.f32.mrb[0].mxu0
        %v3592 = vadd.f32 0.0, %v3591
        %v3593 = vpop.f32.mrb[0].mxu0
        %v3594 = vadd.f32 0.0, %v3593
        %v3595 = vpop.f32.mrb[0].mxu0
        %v3596 = vadd.f32 0.0, %v3595
        %3597 = vmatprep.mubr.bf16.mxu0 %v2643
        %3598 = vmatmul.mubr.bf16.gmra.mrb[0].mxu0 %v2642
        %v3599 = vpop.f32.mrb[0].mxu0
        %v3600 = vadd.f32 0.0, %v3599
        %v3601 = vpop.f32.mrb[0].mxu0
        %v3602 = vadd.f32 0.0, %v3601
        %v3603 = vpop.f32.mrb[0].mxu0
        %v3604 = vadd.f32 0.0, %v3603
        %v3605 = vpop.f32.mrb[0].mxu0
        %v3606 = vadd.f32 0.0, %v3605
        %3607 = vdwg.mxu0
        %3608 = vmatprep.subr.bf16.mxu0 %v3224
        %3609 = vmatpush1.bf16.msra.mxu0 %v3223
        %3610 = vmatprep.subr.bf16.mxu0 %v3228
        %3611 = vmatpush1.bf16.msra.mxu0 %v3227
        %3612 = vmatprep.subr.bf16.mxu0 %v3232
        %3613 = vmatpush1.bf16.msra.mxu0 %v3231
        %3614 = vmatprep.subr.bf16.mxu0 %v3236
        %3615 = vmatpush1.bf16.msra.mxu0 %v3235
        %3616 = vmatprep.subr.bf16.mxu0 %v3240
        %3617 = vmatpush1.bf16.msra.mxu0 %v3239
        %3618 = vmatprep.subr.bf16.mxu0 %v3244
        %3619 = vmatpush1.bf16.msra.mxu0 %v3243
        %3620 = vmatprep.subr.bf16.mxu0 %v3248
        %3621 = vmatpush1.bf16.msra.mxu0 %v3247
        %3622 = vmatprep.subr.bf16.mxu0 %v3252
        %3623 = vmatpush1.bf16.msra.mxu0 %v3251
        %3624 = vmatprep.subr.bf16.mxu0 %v3256
        %3625 = vmatpush1.bf16.msra.mxu0 %v3255
        %3626 = vmatprep.subr.bf16.mxu0 %v3260
        %3627 = vmatpush1.bf16.msra.mxu0 %v3259
        %3628 = vmatprep.subr.bf16.mxu0 %v3264
        %3629 = vmatpush1.bf16.msra.mxu0 %v3263
        %3630 = vmatprep.subr.bf16.mxu0 %v3268
        %3631 = vmatpush1.bf16.msra.mxu0 %v3267
        %3632 = vmatprep.subr.bf16.mxu0 %v3272
        %3633 = vmatpush1.bf16.msra.mxu0 %v3271
        %3634 = vmatprep.subr.bf16.mxu0 %v3276
        %3635 = vmatpush1.bf16.msra.mxu0 %v3275
        %3636 = vmatprep.subr.bf16.mxu0 %v3280
        %3637 = vmatpush1.bf16.msra.mxu0 %v3279
        %3638 = vmatprep.subr.bf16.mxu0 %v3284
        %3639 = vmatpush1.bf16.msra.mxu0 %v3283
        %3640 = vmatprep.mubr.bf16.mxu0 %v2585
        %3641 = vmatmul.mubr.bf16.gmra.mrb[0].mxu0 %v2584
        %v3642 = vpop.f32.mrb[0].mxu0
        %v3643 = vadd.f32 %v3450, %v3642
        %v3644 = vpop.f32.mrb[0].mxu0
        %v3645 = vadd.f32 %v3452, %v3644
        %v3646 = vpop.f32.mrb[0].mxu0
        %v3647 = vadd.f32 %v3454, %v3646
        %v3648 = vpop.f32.mrb[0].mxu0
        %v3649 = vadd.f32 %v3456, %v3648
        %3650 = vmatprep.mubr.bf16.mxu0 %v2589
        %3651 = vmatmul.mubr.bf16.gmra.mrb[0].mxu0 %v2588
        %v3652 = vpop.f32.mrb[0].mxu0
        %v3653 = vadd.f32 %v3460, %v3652
        %v3654 = vpop.f32.mrb[0].mxu0
        %v3655 = vadd.f32 %v3462, %v3654
        %v3656 = vpop.f32.mrb[0].mxu0
        %v3657 = vadd.f32 %v3464, %v3656
        %v3658 = vpop.f32.mrb[0].mxu0
        %v3659 = vadd.f32 %v3466, %v3658
        %3660 = vmatprep.mubr.bf16.mxu0 %v2593
        %3661 = vmatmul.mubr.bf16.gmra.mrb[0].mxu0 %v2592
        %v3662 = vpop.f32.mrb[0].mxu0
        %v3663 = vadd.f32 %v3470, %v3662
        %v3664 = vpop.f32.mrb[0].mxu0
        %v3665 = vadd.f32 %v3472, %v3664
        %v3666 = vpop.f32.mrb[0].mxu0
        %v3667 = vadd.f32 %v3474, %v3666
        %v3668 = vpop.f32.mrb[0].mxu0
        %v3669 = vadd.f32 %v3476, %v3668
        %3670 = vmatprep.mubr.bf16.mxu0 %v2597
        %3671 = vmatmul.mubr.bf16.gmra.mrb[0].mxu0 %v2596
        %v3672 = vpop.f32.mrb[0].mxu0
        %v3673 = vadd.f32 %v3480, %v3672
        %v3674 = vpop.f32.mrb[0].mxu0
        %v3675 = vadd.f32 %v3482, %v3674
        %v3676 = vpop.f32.mrb[0].mxu0
        %v3677 = vadd.f32 %v3484, %v3676
        %v3678 = vpop.f32.mrb[0].mxu0
        %v3679 = vadd.f32 %v3486, %v3678
        %3680 = vmatprep.mubr.bf16.mxu0 %v2601
        %3681 = vmatmul.mubr.bf16.gmra.mrb[0].mxu0 %v2600
        %v3682 = vpop.f32.mrb[0].mxu0
        %v3683 = vadd.f32 %v3490, %v3682
        %v3684 = vpop.f32.mrb[0].mxu0
        %v3685 = vadd.f32 %v3492, %v3684
        %v3686 = vpop.f32.mrb[0].mxu0
        %v3687 = vadd.f32 %v3494, %v3686
        %v3688 = vpop.f32.mrb[0].mxu0
        %v3689 = vadd.f32 %v3496, %v3688
        %3690 = vmatprep.mubr.bf16.mxu0 %v2605
        %3691 = vmatmul.mubr.bf16.gmra.mrb[0].mxu0 %v2604
        %v3692 = vpop.f32.mrb[0].mxu0
        %v3693 = vadd.f32 %v3500, %v3692
        %v3694 = vpop.f32.mrb[0].mxu0
        %v3695 = vadd.f32 %v3502, %v3694
        %v3696 = vpop.f32.mrb[0].mxu0
        %v3697 = vadd.f32 %v3504, %v3696
        %v3698 = vpop.f32.mrb[0].mxu0
        %v3699 = vadd.f32 %v3506, %v3698
        %3700 = vmatprep.mubr.bf16.mxu0 %v2609
        %3701 = vmatmul.mubr.bf16.gmra.mrb[0].mxu0 %v2608
        %v3702 = vpop.f32.mrb[0].mxu0
        %v3703 = vadd.f32 %v3510, %v3702
        %v3704 = vpop.f32.mrb[0].mxu0
        %v3705 = vadd.f32 %v3512, %v3704
        %v3706 = vpop.f32.mrb[0].mxu0
        %v3707 = vadd.f32 %v3514, %v3706
        %v3708 = vpop.f32.mrb[0].mxu0
        %v3709 = vadd.f32 %v3516, %v3708
        %3710 = vmatprep.mubr.bf16.mxu0 %v2613
        %3711 = vmatmul.mubr.bf16.gmra.mrb[0].mxu0 %v2612
        %v3712 = vpop.f32.mrb[0].mxu0
        %v3713 = vadd.f32 %v3520, %v3712
        %v3714 = vpop.f32.mrb[0].mxu0
        %v3715 = vadd.f32 %v3522, %v3714
        %v3716 = vpop.f32.mrb[0].mxu0
        %v3717 = vadd.f32 %v3524, %v3716
        %v3718 = vpop.f32.mrb[0].mxu0
        %v3719 = vadd.f32 %v3526, %v3718
        %3720 = vmatprep.mubr.bf16.mxu0 %v2617
        %3721 = vmatmul.mubr.bf16.gmra.mrb[0].mxu0 %v2616
        %v3722 = vpop.f32.mrb[0].mxu0
        %v3723 = vadd.f32 %v3530, %v3722
        %v3724 = vpop.f32.mrb[0].mxu0
        %v3725 = vadd.f32 %v3532, %v3724
        %v3726 = vpop.f32.mrb[0].mxu0
        %v3727 = vadd.f32 %v3534, %v3726
        %v3728 = vpop.f32.mrb[0].mxu0
        %v3729 = vadd.f32 %v3536, %v3728
        %3730 = vmatprep.mubr.bf16.mxu0 %v2621
        %3731 = vmatmul.mubr.bf16.gmra.mrb[0].mxu0 %v2620
        %v3732 = vpop.f32.mrb[0].mxu0
        %v3733 = vadd.f32 %v3540, %v3732
        %v3734 = vpop.f32.mrb[0].mxu0
        %v3735 = vadd.f32 %v3542, %v3734
        %v3736 = vpop.f32.mrb[0].mxu0
        %v3737 = vadd.f32 %v3544, %v3736
        %v3738 = vpop.f32.mrb[0].mxu0
        %v3739 = vadd.f32 %v3546, %v3738
        %3740 = vmatprep.mubr.bf16.mxu0 %v2625
        %3741 = vmatmul.mubr.bf16.gmra.mrb[0].mxu0 %v2624
        %v3742 = vpop.f32.mrb[0].mxu0
        %v3743 = vadd.f32 %v3550, %v3742
        %v3744 = vpop.f32.mrb[0].mxu0
        %v3745 = vadd.f32 %v3552, %v3744
        %v3746 = vpop.f32.mrb[0].mxu0
        %v3747 = vadd.f32 %v3554, %v3746
        %v3748 = vpop.f32.mrb[0].mxu0
        %v3749 = vadd.f32 %v3556, %v3748
        %3750 = vmatprep.mubr.bf16.mxu0 %v2629
        %3751 = vmatmul.mubr.bf16.gmra.mrb[0].mxu0 %v2628
        %v3752 = vpop.f32.mrb[0].mxu0
        %v3753 = vadd.f32 %v3560, %v3752
        %v3754 = vpop.f32.mrb[0].mxu0
        %v3755 = vadd.f32 %v3562, %v3754
        %v3756 = vpop.f32.mrb[0].mxu0
        %v3757 = vadd.f32 %v3564, %v3756
        %v3758 = vpop.f32.mrb[0].mxu0
        %v3759 = vadd.f32 %v3566, %v3758
        %3760 = vmatprep.mubr.bf16.mxu0 %v2633
        %3761 = vmatmul.mubr.bf16.gmra.mrb[0].mxu0 %v2632
        %v3762 = vpop.f32.mrb[0].mxu0
        %v3763 = vadd.f32 %v3570, %v3762
        %v3764 = vpop.f32.mrb[0].mxu0
        %v3765 = vadd.f32 %v3572, %v3764
        %v3766 = vpop.f32.mrb[0].mxu0
        %v3767 = vadd.f32 %v3574, %v3766
        %v3768 = vpop.f32.mrb[0].mxu0
        %v3769 = vadd.f32 %v3576, %v3768
        %3770 = vmatprep.mubr.bf16.mxu0 %v2637
        %3771 = vmatmul.mubr.bf16.gmra.mrb[0].mxu0 %v2636
        %v3772 = vpop.f32.mrb[0].mxu0
        %v3773 = vadd.f32 %v3580, %v3772
        %v3774 = vpop.f32.mrb[0].mxu0
        %v3775 = vadd.f32 %v3582, %v3774
        %v3776 = vpop.f32.mrb[0].mxu0
        %v3777 = vadd.f32 %v3584, %v3776
        %v3778 = vpop.f32.mrb[0].mxu0
        %v3779 = vadd.f32 %v3586, %v3778
        %3780 = vmatprep.mubr.bf16.mxu0 %v2641
        %3781 = vmatmul.mubr.bf16.gmra.mrb[0].mxu0 %v2640
        %v3782 = vpop.f32.mrb[0].mxu0
        %v3783 = vadd.f32 %v3590, %v3782
        %v3784 = vpop.f32.mrb[0].mxu0
        %v3785 = vadd.f32 %v3592, %v3784
        %v3786 = vpop.f32.mrb[0].mxu0
        %v3787 = vadd.f32 %v3594, %v3786
        %v3788 = vpop.f32.mrb[0].mxu0
        %v3789 = vadd.f32 %v3596, %v3788
        %3790 = vmatprep.mubr.bf16.mxu0 %v2645
        %3791 = vmatmul.mubr.bf16.gmra.mrb[0].mxu0 %v2644
        %v3792 = vpop.f32.mrb[0].mxu0
        %v3793 = vadd.f32 %v3600, %v3792
        %v3794 = vpop.f32.mrb[0].mxu0
        %v3795 = vadd.f32 %v3602, %v3794
        %v3796 = vpop.f32.mrb[0].mxu0
        %v3797 = vadd.f32 %v3604, %v3796
        %v3798 = vpop.f32.mrb[0].mxu0
        %v3799 = vadd.f32 %v3606, %v3798
        %3800 = vdwg.mxu0
        %3801 = vmatprep.subr.bf16.mxu0 %v3162
        %3802 = vmatpush1.bf16.msra.mxu0 %v3161
        %3803 = vmatprep.subr.bf16.mxu0 %v3166
        %3804 = vmatpush1.bf16.msra.mxu0 %v3165
        %3805 = vmatprep.subr.bf16.mxu0 %v3170
        %3806 = vmatpush1.bf16.msra.mxu0 %v3169
        %3807 = vmatprep.subr.bf16.mxu0 %v3174
        %3808 = vmatpush1.bf16.msra.mxu0 %v3173
        %3809 = vmatprep.subr.bf16.mxu0 %v3178
        %3810 = vmatpush1.bf16.msra.mxu0 %v3177
        %3811 = vmatprep.subr.bf16.mxu0 %v3182
        %3812 = vmatpush1.bf16.msra.mxu0 %v3181
        %3813 = vmatprep.subr.bf16.mxu0 %v3186
        %3814 = vmatpush1.bf16.msra.mxu0 %v3185
        %3815 = vmatprep.subr.bf16.mxu0 %v3190
        %3816 = vmatpush1.bf16.msra.mxu0 %v3189
        %3817 = vmatprep.subr.bf16.mxu0 %v3194
        %3818 = vmatpush1.bf16.msra.mxu0 %v3193
        %3819 = vmatprep.subr.bf16.mxu0 %v3198
        %3820 = vmatpush1.bf16.msra.mxu0 %v3197
        %3821 = vmatprep.subr.bf16.mxu0 %v3202
        %3822 = vmatpush1.bf16.msra.mxu0 %v3201
        %3823 = vmatprep.subr.bf16.mxu0 %v3206
        %3824 = vmatpush1.bf16.msra.mxu0 %v3205
        %3825 = vmatprep.subr.bf16.mxu0 %v3210
        %3826 = vmatpush1.bf16.msra.mxu0 %v3209
        %3827 = vmatprep.subr.bf16.mxu0 %v3214
        %3828 = vmatpush1.bf16.msra.mxu0 %v3213
        %3829 = vmatprep.subr.bf16.mxu0 %v3218
        %3830 = vmatpush1.bf16.msra.mxu0 %v3217
        %3831 = vmatprep.subr.bf16.mxu0 %v3222
        %3832 = vmatpush1.bf16.msra.mxu0 %v3221
        %3833 = vmatprep.mubr.bf16.mxu0 %v2583
        %3834 = vmatmul.mubr.bf16.gmra.mrb[0].mxu0 %v2582
        %v3835 = vpop.f32.mrb[0].mxu0
        %v3836 = vadd.f32 0.0, %v3835
        %v3837 = vpop.f32.mrb[0].mxu0
        %v3838 = vadd.f32 0.0, %v3837
        %v3839 = vpop.f32.mrb[0].mxu0
        %v3840 = vadd.f32 0.0, %v3839
        %v3841 = vpop.f32.mrb[0].mxu0
        %v3842 = vadd.f32 0.0, %v3841
        %3843 = vmatprep.mubr.bf16.mxu0 %v2587
        %3844 = vmatmul.mubr.bf16.gmra.mrb[0].mxu0 %v2586
        %v3845 = vpop.f32.mrb[0].mxu0
        %v3846 = vadd.f32 0.0, %v3845
        %v3847 = vpop.f32.mrb[0].mxu0
        %v3848 = vadd.f32 0.0, %v3847
        %v3849 = vpop.f32.mrb[0].mxu0
        %v3850 = vadd.f32 0.0, %v3849
        %v3851 = vpop.f32.mrb[0].mxu0
        %v3852 = vadd.f32 0.0, %v3851
        %3853 = vmatprep.mubr.bf16.mxu0 %v2591
        %3854 = vmatmul.mubr.bf16.gmra.mrb[0].mxu0 %v2590
        %v3855 = vpop.f32.mrb[0].mxu0
        %v3856 = vadd.f32 0.0, %v3855
        %v3857 = vpop.f32.mrb[0].mxu0
        %v3858 = vadd.f32 0.0, %v3857
        %v3859 = vpop.f32.mrb[0].mxu0
        %v3860 = vadd.f32 0.0, %v3859
        %v3861 = vpop.f32.mrb[0].mxu0
        %v3862 = vadd.f32 0.0, %v3861
        %3863 = vmatprep.mubr.bf16.mxu0 %v2595
        %3864 = vmatmul.mubr.bf16.gmra.mrb[0].mxu0 %v2594
        %v3865 = vpop.f32.mrb[0].mxu0
        %v3866 = vadd.f32 0.0, %v3865
        %v3867 = vpop.f32.mrb[0].mxu0
        %v3868 = vadd.f32 0.0, %v3867
        %v3869 = vpop.f32.mrb[0].mxu0
        %v3870 = vadd.f32 0.0, %v3869
        %v3871 = vpop.f32.mrb[0].mxu0
        %v3872 = vadd.f32 0.0, %v3871
        %3873 = vmatprep.mubr.bf16.mxu0 %v2599
        %3874 = vmatmul.mubr.bf16.gmra.mrb[0].mxu0 %v2598
        %v3875 = vpop.f32.mrb[0].mxu0
        %v3876 = vadd.f32 0.0, %v3875
        %v3877 = vpop.f32.mrb[0].mxu0
        %v3878 = vadd.f32 0.0, %v3877
        %v3879 = vpop.f32.mrb[0].mxu0
        %v3880 = vadd.f32 0.0, %v3879
        %v3881 = vpop.f32.mrb[0].mxu0
        %v3882 = vadd.f32 0.0, %v3881
        %3883 = vmatprep.mubr.bf16.mxu0 %v2603
        %3884 = vmatmul.mubr.bf16.gmra.mrb[0].mxu0 %v2602
        %v3885 = vpop.f32.mrb[0].mxu0
        %v3886 = vadd.f32 0.0, %v3885
        %v3887 = vpop.f32.mrb[0].mxu0
        %v3888 = vadd.f32 0.0, %v3887
        %v3889 = vpop.f32.mrb[0].mxu0
        %v3890 = vadd.f32 0.0, %v3889
        %v3891 = vpop.f32.mrb[0].mxu0
        %v3892 = vadd.f32 0.0, %v3891
        %3893 = vmatprep.mubr.bf16.mxu0 %v2607
        %3894 = vmatmul.mubr.bf16.gmra.mrb[0].mxu0 %v2606
        %v3895 = vpop.f32.mrb[0].mxu0
        %v3896 = vadd.f32 0.0, %v3895
        %v3897 = vpop.f32.mrb[0].mxu0
        %v3898 = vadd.f32 0.0, %v3897
        %v3899 = vpop.f32.mrb[0].mxu0
        %v3900 = vadd.f32 0.0, %v3899
        %v3901 = vpop.f32.mrb[0].mxu0
        %v3902 = vadd.f32 0.0, %v3901
        %3903 = vmatprep.mubr.bf16.mxu0 %v2611
        %3904 = vmatmul.mubr.bf16.gmra.mrb[0].mxu0 %v2610
        %v3905 = vpop.f32.mrb[0].mxu0
        %v3906 = vadd.f32 0.0, %v3905
        %v3907 = vpop.f32.mrb[0].mxu0
        %v3908 = vadd.f32 0.0, %v3907
        %v3909 = vpop.f32.mrb[0].mxu0
        %v3910 = vadd.f32 0.0, %v3909
        %v3911 = vpop.f32.mrb[0].mxu0
        %v3912 = vadd.f32 0.0, %v3911
        %3913 = vmatprep.mubr.bf16.mxu0 %v2615
        %3914 = vmatmul.mubr.bf16.gmra.mrb[0].mxu0 %v2614
        %v3915 = vpop.f32.mrb[0].mxu0
        %v3916 = vadd.f32 0.0, %v3915
        %v3917 = vpop.f32.mrb[0].mxu0
        %v3918 = vadd.f32 0.0, %v3917
        %v3919 = vpop.f32.mrb[0].mxu0
        %v3920 = vadd.f32 0.0, %v3919
        %v3921 = vpop.f32.mrb[0].mxu0
        %v3922 = vadd.f32 0.0, %v3921
        %3923 = vmatprep.mubr.bf16.mxu0 %v2619
        %3924 = vmatmul.mubr.bf16.gmra.mrb[0].mxu0 %v2618
        %v3925 = vpop.f32.mrb[0].mxu0
        %v3926 = vadd.f32 0.0, %v3925
        %v3927 = vpop.f32.mrb[0].mxu0
        %v3928 = vadd.f32 0.0, %v3927
        %v3929 = vpop.f32.mrb[0].mxu0
        %v3930 = vadd.f32 0.0, %v3929
        %v3931 = vpop.f32.mrb[0].mxu0
        %v3932 = vadd.f32 0.0, %v3931
        %3933 = vmatprep.mubr.bf16.mxu0 %v2623
        %3934 = vmatmul.mubr.bf16.gmra.mrb[0].mxu0 %v2622
        %v3935 = vpop.f32.mrb[0].mxu0
        %v3936 = vadd.f32 0.0, %v3935
        %v3937 = vpop.f32.mrb[0].mxu0
        %v3938 = vadd.f32 0.0, %v3937
        %v3939 = vpop.f32.mrb[0].mxu0
        %v3940 = vadd.f32 0.0, %v3939
        %v3941 = vpop.f32.mrb[0].mxu0
        %v3942 = vadd.f32 0.0, %v3941
        %3943 = vmatprep.mubr.bf16.mxu0 %v2627
        %3944 = vmatmul.mubr.bf16.gmra.mrb[0].mxu0 %v2626
        %v3945 = vpop.f32.mrb[0].mxu0
        %v3946 = vadd.f32 0.0, %v3945
        %v3947 = vpop.f32.mrb[0].mxu0
        %v3948 = vadd.f32 0.0, %v3947
        %v3949 = vpop.f32.mrb[0].mxu0
        %v3950 = vadd.f32 0.0, %v3949
        %v3951 = vpop.f32.mrb[0].mxu0
        %v3952 = vadd.f32 0.0, %v3951
        %3953 = vmatprep.mubr.bf16.mxu0 %v2631
        %3954 = vmatmul.mubr.bf16.gmra.mrb[0].mxu0 %v2630
        %v3955 = vpop.f32.mrb[0].mxu0
        %v3956 = vadd.f32 0.0, %v3955
        %v3957 = vpop.f32.mrb[0].mxu0
        %v3958 = vadd.f32 0.0, %v3957
        %v3959 = vpop.f32.mrb[0].mxu0
        %v3960 = vadd.f32 0.0, %v3959
        %v3961 = vpop.f32.mrb[0].mxu0
        %v3962 = vadd.f32 0.0, %v3961
        %3963 = vmatprep.mubr.bf16.mxu0 %v2635
        %3964 = vmatmul.mubr.bf16.gmra.mrb[0].mxu0 %v2634
        %v3965 = vpop.f32.mrb[0].mxu0
        %v3966 = vadd.f32 0.0, %v3965
        %v3967 = vpop.f32.mrb[0].mxu0
        %v3968 = vadd.f32 0.0, %v3967
        %v3969 = vpop.f32.mrb[0].mxu0
        %v3970 = vadd.f32 0.0, %v3969
        %v3971 = vpop.f32.mrb[0].mxu0
        %v3972 = vadd.f32 0.0, %v3971
        %3973 = vmatprep.mubr.bf16.mxu0 %v2639
        %3974 = vmatmul.mubr.bf16.gmra.mrb[0].mxu0 %v2638
        %v3975 = vpop.f32.mrb[0].mxu0
        %v3976 = vadd.f32 0.0, %v3975
        %v3977 = vpop.f32.mrb[0].mxu0
        %v3978 = vadd.f32 0.0, %v3977
        %v3979 = vpop.f32.mrb[0].mxu0
        %v3980 = vadd.f32 0.0, %v3979
        %v3981 = vpop.f32.mrb[0].mxu0
        %v3982 = vadd.f32 0.0, %v3981
        %3983 = vmatprep.mubr.bf16.mxu0 %v2643
        %3984 = vmatmul.mubr.bf16.gmra.mrb[0].mxu0 %v2642
        %v3985 = vpop.f32.mrb[0].mxu0
        %v3986 = vadd.f32 0.0, %v3985
        %v3987 = vpop.f32.mrb[0].mxu0
        %v3988 = vadd.f32 0.0, %v3987
        %v3989 = vpop.f32.mrb[0].mxu0
        %v3990 = vadd.f32 0.0, %v3989
        %v3991 = vpop.f32.mrb[0].mxu0
        %v3992 = vadd.f32 0.0, %v3991
        %3993 = vdwg.mxu0
        %3994 = vmatprep.subr.bf16.mxu0 %v3226
        %3995 = vmatpush1.bf16.msra.mxu0 %v3225
        %3996 = vmatprep.subr.bf16.mxu0 %v3230
        %3997 = vmatpush1.bf16.msra.mxu0 %v3229
        %3998 = vmatprep.subr.bf16.mxu0 %v3234
        %3999 = vmatpush1.bf16.msra.mxu0 %v3233
        %4000 = vmatprep.subr.bf16.mxu0 %v3238
        %4001 = vmatpush1.bf16.msra.mxu0 %v3237
        %4002 = vmatprep.subr.bf16.mxu0 %v3242
        %4003 = vmatpush1.bf16.msra.mxu0 %v3241
        %4004 = vmatprep.subr.bf16.mxu0 %v3246
        %4005 = vmatpush1.bf16.msra.mxu0 %v3245
        %4006 = vmatprep.subr.bf16.mxu0 %v3250
        %4007 = vmatpush1.bf16.msra.mxu0 %v3249
        %4008 = vmatprep.subr.bf16.mxu0 %v3254
        %4009 = vmatpush1.bf16.msra.mxu0 %v3253
        %4010 = vmatprep.subr.bf16.mxu0 %v3258
        %4011 = vmatpush1.bf16.msra.mxu0 %v3257
        %4012 = vmatprep.subr.bf16.mxu0 %v3262
        %4013 = vmatpush1.bf16.msra.mxu0 %v3261
        %4014 = vmatprep.subr.bf16.mxu0 %v3266
        %4015 = vmatpush1.bf16.msra.mxu0 %v3265
        %4016 = vmatprep.subr.bf16.mxu0 %v3270
        %4017 = vmatpush1.bf16.msra.mxu0 %v3269
        %4018 = vmatprep.subr.bf16.mxu0 %v3274
        %4019 = vmatpush1.bf16.msra.mxu0 %v3273
        %4020 = vmatprep.subr.bf16.mxu0 %v3278
        %4021 = vmatpush1.bf16.msra.mxu0 %v3277
        %4022 = vmatprep.subr.bf16.mxu0 %v3282
        %4023 = vmatpush1.bf16.msra.mxu0 %v3281
        %4024 = vmatprep.subr.bf16.mxu0 %v3286
        %4025 = vmatpush1.bf16.msra.mxu0 %v3285
        %4026 = vmatprep.mubr.bf16.mxu0 %v2585
        %4027 = vmatmul.mubr.bf16.gmra.mrb[0].mxu0 %v2584
        %v4028 = vpop.f32.mrb[0].mxu0
        %v4029 = vadd.f32 %v3836, %v4028
        %v4030 = vpop.f32.mrb[0].mxu0
        %v4031 = vadd.f32 %v3838, %v4030
        %v4032 = vpop.f32.mrb[0].mxu0
        %v4033 = vadd.f32 %v3840, %v4032
        %v4034 = vpop.f32.mrb[0].mxu0
        %v4035 = vadd.f32 %v3842, %v4034
        %4036 = vmatprep.mubr.bf16.mxu0 %v2589
        %4037 = vmatmul.mubr.bf16.gmra.mrb[0].mxu0 %v2588
        %v4038 = vpop.f32.mrb[0].mxu0
        %v4039 = vadd.f32 %v3846, %v4038
        %v4040 = vpop.f32.mrb[0].mxu0
        %v4041 = vadd.f32 %v3848, %v4040
        %v4042 = vpop.f32.mrb[0].mxu0
        %v4043 = vadd.f32 %v3850, %v4042
        %v4044 = vpop.f32.mrb[0].mxu0
        %v4045 = vadd.f32 %v3852, %v4044
        %4046 = vmatprep.mubr.bf16.mxu0 %v2593
        %4047 = vmatmul.mubr.bf16.gmra.mrb[0].mxu0 %v2592
        %v4048 = vpop.f32.mrb[0].mxu0
        %v4049 = vadd.f32 %v3856, %v4048
        %v4050 = vpop.f32.mrb[0].mxu0
        %v4051 = vadd.f32 %v3858, %v4050
        %v4052 = vpop.f32.mrb[0].mxu0
        %v4053 = vadd.f32 %v3860, %v4052
        %v4054 = vpop.f32.mrb[0].mxu0
        %v4055 = vadd.f32 %v3862, %v4054
        %4056 = vmatprep.mubr.bf16.mxu0 %v2597
        %4057 = vmatmul.mubr.bf16.gmra.mrb[0].mxu0 %v2596
        %v4058 = vpop.f32.mrb[0].mxu0
        %v4059 = vadd.f32 %v3866, %v4058
        %v4060 = vpop.f32.mrb[0].mxu0
        %v4061 = vadd.f32 %v3868, %v4060
        %v4062 = vpop.f32.mrb[0].mxu0
        %v4063 = vadd.f32 %v3870, %v4062
        %v4064 = vpop.f32.mrb[0].mxu0
        %v4065 = vadd.f32 %v3872, %v4064
        %4066 = vmatprep.mubr.bf16.mxu0 %v2601
        %4067 = vmatmul.mubr.bf16.gmra.mrb[0].mxu0 %v2600
        %v4068 = vpop.f32.mrb[0].mxu0
        %v4069 = vadd.f32 %v3876, %v4068
        %v4070 = vpop.f32.mrb[0].mxu0
        %v4071 = vadd.f32 %v3878, %v4070
        %v4072 = vpop.f32.mrb[0].mxu0
        %v4073 = vadd.f32 %v3880, %v4072
        %v4074 = vpop.f32.mrb[0].mxu0
        %v4075 = vadd.f32 %v3882, %v4074
        %4076 = vmatprep.mubr.bf16.mxu0 %v2605
        %4077 = vmatmul.mubr.bf16.gmra.mrb[0].mxu0 %v2604
        %v4078 = vpop.f32.mrb[0].mxu0
        %v4079 = vadd.f32 %v3886, %v4078
        %v4080 = vpop.f32.mrb[0].mxu0
        %v4081 = vadd.f32 %v3888, %v4080
        %v4082 = vpop.f32.mrb[0].mxu0
        %v4083 = vadd.f32 %v3890, %v4082
        %v4084 = vpop.f32.mrb[0].mxu0
        %v4085 = vadd.f32 %v3892, %v4084
        %4086 = vmatprep.mubr.bf16.mxu0 %v2609
        %4087 = vmatmul.mubr.bf16.gmra.mrb[0].mxu0 %v2608
        %v4088 = vpop.f32.mrb[0].mxu0
        %v4089 = vadd.f32 %v3896, %v4088
        %v4090 = vpop.f32.mrb[0].mxu0
        %v4091 = vadd.f32 %v3898, %v4090
        %v4092 = vpop.f32.mrb[0].mxu0
        %v4093 = vadd.f32 %v3900, %v4092
        %v4094 = vpop.f32.mrb[0].mxu0
        %v4095 = vadd.f32 %v3902, %v4094
        %4096 = vmatprep.mubr.bf16.mxu0 %v2613
        %4097 = vmatmul.mubr.bf16.gmra.mrb[0].mxu0 %v2612
        %v4098 = vpop.f32.mrb[0].mxu0
        %v4099 = vadd.f32 %v3906, %v4098
        %v4100 = vpop.f32.mrb[0].mxu0
        %v4101 = vadd.f32 %v3908, %v4100
        %v4102 = vpop.f32.mrb[0].mxu0
        %v4103 = vadd.f32 %v3910, %v4102
        %v4104 = vpop.f32.mrb[0].mxu0
        %v4105 = vadd.f32 %v3912, %v4104
        %4106 = vmatprep.mubr.bf16.mxu0 %v2617
        %4107 = vmatmul.mubr.bf16.gmra.mrb[0].mxu0 %v2616
        %v4108 = vpop.f32.mrb[0].mxu0
        %v4109 = vadd.f32 %v3916, %v4108
        %v4110 = vpop.f32.mrb[0].mxu0
        %v4111 = vadd.f32 %v3918, %v4110
        %v4112 = vpop.f32.mrb[0].mxu0
        %v4113 = vadd.f32 %v3920, %v4112
        %v4114 = vpop.f32.mrb[0].mxu0
        %v4115 = vadd.f32 %v3922, %v4114
        %4116 = vmatprep.mubr.bf16.mxu0 %v2621
        %4117 = vmatmul.mubr.bf16.gmra.mrb[0].mxu0 %v2620
        %v4118 = vpop.f32.mrb[0].mxu0
        %v4119 = vadd.f32 %v3926, %v4118
        %v4120 = vpop.f32.mrb[0].mxu0
        %v4121 = vadd.f32 %v3928, %v4120
        %v4122 = vpop.f32.mrb[0].mxu0
        %v4123 = vadd.f32 %v3930, %v4122
        %v4124 = vpop.f32.mrb[0].mxu0
        %v4125 = vadd.f32 %v3932, %v4124
        %4126 = vmatprep.mubr.bf16.mxu0 %v2625
        %4127 = vmatmul.mubr.bf16.gmra.mrb[0].mxu0 %v2624
        %v4128 = vpop.f32.mrb[0].mxu0
        %v4129 = vadd.f32 %v3936, %v4128
        %v4130 = vpop.f32.mrb[0].mxu0
        %v4131 = vadd.f32 %v3938, %v4130
        %v4132 = vpop.f32.mrb[0].mxu0
        %v4133 = vadd.f32 %v3940, %v4132
        %v4134 = vpop.f32.mrb[0].mxu0
        %v4135 = vadd.f32 %v3942, %v4134
        %4136 = vmatprep.mubr.bf16.mxu0 %v2629
        %4137 = vmatmul.mubr.bf16.gmra.mrb[0].mxu0 %v2628
        %v4138 = vpop.f32.mrb[0].mxu0
        %v4139 = vadd.f32 %v3946, %v4138
        %v4140 = vpop.f32.mrb[0].mxu0
        %v4141 = vadd.f32 %v3948, %v4140
        %v4142 = vpop.f32.mrb[0].mxu0
        %v4143 = vadd.f32 %v3950, %v4142
        %v4144 = vpop.f32.mrb[0].mxu0
        %v4145 = vadd.f32 %v3952, %v4144
        %4146 = vmatprep.mubr.bf16.mxu0 %v2633
        %4147 = vmatmul.mubr.bf16.gmra.mrb[0].mxu0 %v2632
        %v4148 = vpop.f32.mrb[0].mxu0
        %v4149 = vadd.f32 %v3956, %v4148
        %v4150 = vpop.f32.mrb[0].mxu0
        %v4151 = vadd.f32 %v3958, %v4150
        %v4152 = vpop.f32.mrb[0].mxu0
        %v4153 = vadd.f32 %v3960, %v4152
        %v4154 = vpop.f32.mrb[0].mxu0
        %v4155 = vadd.f32 %v3962, %v4154
        %4156 = vmatprep.mubr.bf16.mxu0 %v2637
        %4157 = vmatmul.mubr.bf16.gmra.mrb[0].mxu0 %v2636
        %v4158 = vpop.f32.mrb[0].mxu0
        %v4159 = vadd.f32 %v3966, %v4158
        %v4160 = vpop.f32.mrb[0].mxu0
        %v4161 = vadd.f32 %v3968, %v4160
        %v4162 = vpop.f32.mrb[0].mxu0
        %v4163 = vadd.f32 %v3970, %v4162
        %v4164 = vpop.f32.mrb[0].mxu0
        %v4165 = vadd.f32 %v3972, %v4164
        %4166 = vmatprep.mubr.bf16.mxu0 %v2641
        %4167 = vmatmul.mubr.bf16.gmra.mrb[0].mxu0 %v2640
        %v4168 = vpop.f32.mrb[0].mxu0
        %v4169 = vadd.f32 %v3976, %v4168
        %v4170 = vpop.f32.mrb[0].mxu0
        %v4171 = vadd.f32 %v3978, %v4170
        %v4172 = vpop.f32.mrb[0].mxu0
        %v4173 = vadd.f32 %v3980, %v4172
        %v4174 = vpop.f32.mrb[0].mxu0
        %v4175 = vadd.f32 %v3982, %v4174
        %4176 = vmatprep.mubr.bf16.mxu0 %v2645
        %4177 = vmatmul.mubr.bf16.gmra.mrb[0].mxu0 %v2644
        %v4178 = vpop.f32.mrb[0].mxu0
        %v4179 = vadd.f32 %v3986, %v4178
        %v4180 = vpop.f32.mrb[0].mxu0
        %v4181 = vadd.f32 %v3988, %v4180
        %v4182 = vpop.f32.mrb[0].mxu0
        %v4183 = vadd.f32 %v3990, %v4182
        %v4184 = vpop.f32.mrb[0].mxu0
        %v4185 = vadd.f32 %v3992, %v4184
        %4186 = vdwg.mxu0
        %v4187 = vpack.c.bf16 %v3647, %v3643
        %v4188 = vpack.c.bf16 %v3649, %v3645
        %v4189 = vpack.c.bf16 %v4033, %v4029
        %v4190 = vpack.c.bf16 %v4035, %v4031
        %v4191 = vpack.c.bf16 %v3657, %v3653
        %v4192 = vpack.c.bf16 %v3659, %v3655
        %v4193 = vpack.c.bf16 %v4043, %v4039
        %v4194 = vpack.c.bf16 %v4045, %v4041
        %v4195 = vpack.c.bf16 %v3667, %v3663
        %v4196 = vpack.c.bf16 %v3669, %v3665
        %v4197 = vpack.c.bf16 %v4053, %v4049
        %v4198 = vpack.c.bf16 %v4055, %v4051
        %v4199 = vpack.c.bf16 %v3677, %v3673
        %v4200 = vpack.c.bf16 %v3679, %v3675
        %v4201 = vpack.c.bf16 %v4063, %v4059
        %v4202 = vpack.c.bf16 %v4065, %v4061
        %v4203 = vpack.c.bf16 %v3687, %v3683
        %v4204 = vpack.c.bf16 %v3689, %v3685
        %v4205 = vpack.c.bf16 %v4073, %v4069
        %v4206 = vpack.c.bf16 %v4075, %v4071
        %v4207 = vpack.c.bf16 %v3697, %v3693
        %v4208 = vpack.c.bf16 %v3699, %v3695
        %v4209 = vpack.c.bf16 %v4083, %v4079
        %v4210 = vpack.c.bf16 %v4085, %v4081
        %v4211 = vpack.c.bf16 %v3707, %v3703
        %v4212 = vpack.c.bf16 %v3709, %v3705
        %v4213 = vpack.c.bf16 %v4093, %v4089
        %v4214 = vpack.c.bf16 %v4095, %v4091
        %v4215 = vpack.c.bf16 %v3717, %v3713
        %v4216 = vpack.c.bf16 %v3719, %v3715
        %v4217 = vpack.c.bf16 %v4103, %v4099
        %v4218 = vpack.c.bf16 %v4105, %v4101
        %v4219 = vpack.c.bf16 %v3727, %v3723
        %v4220 = vpack.c.bf16 %v3729, %v3725
        %v4221 = vpack.c.bf16 %v4113, %v4109
        %v4222 = vpack.c.bf16 %v4115, %v4111
        %v4223 = vpack.c.bf16 %v3737, %v3733
        %v4224 = vpack.c.bf16 %v3739, %v3735
        %v4225 = vpack.c.bf16 %v4123, %v4119
        %v4226 = vpack.c.bf16 %v4125, %v4121
        %v4227 = vpack.c.bf16 %v3747, %v3743
        %v4228 = vpack.c.bf16 %v3749, %v3745
        %v4229 = vpack.c.bf16 %v4133, %v4129
        %v4230 = vpack.c.bf16 %v4135, %v4131
        %v4231 = vpack.c.bf16 %v3757, %v3753
        %v4232 = vpack.c.bf16 %v3759, %v3755
        %v4233 = vpack.c.bf16 %v4143, %v4139
        %v4234 = vpack.c.bf16 %v4145, %v4141
        %v4235 = vpack.c.bf16 %v3767, %v3763
        %v4236 = vpack.c.bf16 %v3769, %v3765
        %v4237 = vpack.c.bf16 %v4153, %v4149
        %v4238 = vpack.c.bf16 %v4155, %v4151
        %v4239 = vpack.c.bf16 %v3777, %v3773
        %v4240 = vpack.c.bf16 %v3779, %v3775
        %v4241 = vpack.c.bf16 %v4163, %v4159
        %v4242 = vpack.c.bf16 %v4165, %v4161
        %v4243 = vpack.c.bf16 %v3787, %v3783
        %v4244 = vpack.c.bf16 %v3789, %v3785
        %v4245 = vpack.c.bf16 %v4173, %v4169
        %v4246 = vpack.c.bf16 %v4175, %v4171
        %v4247 = vpack.c.bf16 %v3797, %v3793
        %v4248 = vpack.c.bf16 %v3799, %v3795
        %v4249 = vpack.c.bf16 %v4183, %v4179
        %v4250 = vpack.c.bf16 %v4185, %v4181
        %v4253 = vunpack.c.l.s4 1966171168
        %v4254 = vunpack.c.0.s8 %v4253
        %v4255 = vlaneseq
        %v4256 = vshrl.u32 %v4255, 7
        %v4257 = vsub.s32 %v4254, %v4256
        %v4258 = vrot.slane %v2774, %v4257
        %v4259 = vcombine.high %v4258, %v4258
        %v4261 = vunpack.c.l.s4 1966171168
        %v4262 = vunpack.c.0.s8 %v4261
        %v4263 = vlaneseq
        %v4264 = vshrl.u32 %v4263, 7
        %v4265 = vsub.s32 %v4262, %v4264
        %v4266 = vrot.slane %v4258, %v4265
        %v4268 = vunpack.c.l.s4 1966171168
        %v4269 = vunpack.c.0.s8 %v4268
        %v4270 = vlaneseq
        %v4271 = vshrl.u32 %v4270, 7
        %v4272 = vsub.s32 %v4269, %v4271
        %v4273 = vrot.slane %v4259, %v4272
        %v4274 = vcombine.high %v4266, %v4266
        %v4275 = vcombine.high %v4273, %v4273
        %v4277 = vpack.i.b16 %v4266, %v4266
        %v4279 = vlaneseq
        %v4280 = vshrl.u32 %v4279, 7
        %v4281 = vsub.s32 0, %v4280
        %v4282 = vrot.slane %v4277, %v4281
        %v4284 = vpack.i.b16 %v4273, %v4273
        %v4286 = vlaneseq
        %v4287 = vshrl.u32 %v4286, 7
        %v4288 = vsub.s32 0, %v4287
        %v4289 = vrot.slane %v4284, %v4288
        %v4291 = vpack.i.b16 %v4274, %v4274
        %v4293 = vlaneseq
        %v4294 = vshrl.u32 %v4293, 7
        %v4295 = vsub.s32 0, %v4294
        %v4296 = vrot.slane %v4291, %v4295
        %v4298 = vpack.i.b16 %v4275, %v4275
        %v4300 = vlaneseq
        %v4301 = vshrl.u32 %v4300, 7
        %v4302 = vsub.s32 0, %v4301
        %v4303 = vrot.slane %v4298, %v4302
        %v4304 = vadd.bf16 %v4187, %v4282
        %v4305 = vadd.bf16 %v4188, %v4289
        %v4306 = vadd.bf16 %v4189, %v4296
        %v4307 = vadd.bf16 %v4190, %v4303
        %v4308 = vadd.bf16 %v4191, %v4282
        %v4309 = vadd.bf16 %v4192, %v4289
        %v4310 = vadd.bf16 %v4193, %v4296
        %v4311 = vadd.bf16 %v4194, %v4303
        %v4312 = vadd.bf16 %v4195, %v4282
        %v4313 = vadd.bf16 %v4196, %v4289
        %v4314 = vadd.bf16 %v4197, %v4296
        %v4315 = vadd.bf16 %v4198, %v4303
        %v4316 = vadd.bf16 %v4199, %v4282
        %v4317 = vadd.bf16 %v4200, %v4289
        %v4318 = vadd.bf16 %v4201, %v4296
        %v4319 = vadd.bf16 %v4202, %v4303
        %v4320 = vadd.bf16 %v4203, %v4282
        %v4321 = vadd.bf16 %v4204, %v4289
        %v4322 = vadd.bf16 %v4205, %v4296
        %v4323 = vadd.bf16 %v4206, %v4303
        %v4324 = vadd.bf16 %v4207, %v4282
        %v4325 = vadd.bf16 %v4208, %v4289
        %v4326 = vadd.bf16 %v4209, %v4296
        %v4327 = vadd.bf16 %v4210, %v4303
        %v4328 = vadd.bf16 %v4211, %v4282
        %v4329 = vadd.bf16 %v4212, %v4289
        %v4330 = vadd.bf16 %v4213, %v4296
        %v4331 = vadd.bf16 %v4214, %v4303
        %v4332 = vadd.bf16 %v4215, %v4282
        %v4333 = vadd.bf16 %v4216, %v4289
        %v4334 = vadd.bf16 %v4217, %v4296
        %v4335 = vadd.bf16 %v4218, %v4303
        %v4336 = vadd.bf16 %v4219, %v4282
        %v4337 = vadd.bf16 %v4220, %v4289
        %v4338 = vadd.bf16 %v4221, %v4296
        %v4339 = vadd.bf16 %v4222, %v4303
        %v4340 = vadd.bf16 %v4223, %v4282
        %v4341 = vadd.bf16 %v4224, %v4289
        %v4342 = vadd.bf16 %v4225, %v4296
        %v4343 = vadd.bf16 %v4226, %v4303
        %v4344 = vadd.bf16 %v4227, %v4282
        %v4345 = vadd.bf16 %v4228, %v4289
        %v4346 = vadd.bf16 %v4229, %v4296
        %v4347 = vadd.bf16 %v4230, %v4303
        %v4348 = vadd.bf16 %v4231, %v4282
        %v4349 = vadd.bf16 %v4232, %v4289
        %v4350 = vadd.bf16 %v4233, %v4296
        %v4351 = vadd.bf16 %v4234, %v4303
        %v4352 = vadd.bf16 %v4235, %v4282
        %v4353 = vadd.bf16 %v4236, %v4289
        %v4354 = vadd.bf16 %v4237, %v4296
        %v4355 = vadd.bf16 %v4238, %v4303
        %v4356 = vadd.bf16 %v4239, %v4282
        %v4357 = vadd.bf16 %v4240, %v4289
        %v4358 = vadd.bf16 %v4241, %v4296
        %v4359 = vadd.bf16 %v4242, %v4303
        %v4360 = vadd.bf16 %v4243, %v4282
        %v4361 = vadd.bf16 %v4244, %v4289
        %v4362 = vadd.bf16 %v4245, %v4296
        %v4363 = vadd.bf16 %v4246, %v4303
        %v4364 = vadd.bf16 %v4247, %v4282
        %v4365 = vadd.bf16 %v4248, %v4289
        %v4366 = vadd.bf16 %v4249, %v4296
        %v4367 = vadd.bf16 %v4250, %v4303
        %v4368 = vmax.bf16 %v4304, 0
        %v4369 = vmax.bf16 %v4305, 0
        %v4370 = vmax.bf16 %v4306, 0
        %v4371 = vmax.bf16 %v4307, 0
        %v4372 = vmax.bf16 %v4308, 0
        %v4373 = vmax.bf16 %v4309, 0
        %v4374 = vmax.bf16 %v4310, 0
        %v4375 = vmax.bf16 %v4311, 0
        %v4376 = vmax.bf16 %v4312, 0
        %v4377 = vmax.bf16 %v4313, 0
        %v4378 = vmax.bf16 %v4314, 0
        %v4379 = vmax.bf16 %v4315, 0
        %v4380 = vmax.bf16 %v4316, 0
        %v4381 = vmax.bf16 %v4317, 0
        %v4382 = vmax.bf16 %v4318, 0
        %v4383 = vmax.bf16 %v4319, 0
        %v4384 = vmax.bf16 %v4320, 0
        %v4385 = vmax.bf16 %v4321, 0
        %v4386 = vmax.bf16 %v4322, 0
        %v4387 = vmax.bf16 %v4323, 0
        %v4388 = vmax.bf16 %v4324, 0
        %v4389 = vmax.bf16 %v4325, 0
        %v4390 = vmax.bf16 %v4326, 0
        %v4391 = vmax.bf16 %v4327, 0
        %v4392 = vmax.bf16 %v4328, 0
        %v4393 = vmax.bf16 %v4329, 0
        %v4394 = vmax.bf16 %v4330, 0
        %v4395 = vmax.bf16 %v4331, 0
        %v4396 = vmax.bf16 %v4332, 0
        %v4397 = vmax.bf16 %v4333, 0
        %v4398 = vmax.bf16 %v4334, 0
        %v4399 = vmax.bf16 %v4335, 0
        %v4400 = vmax.bf16 %v4336, 0
        %v4401 = vmax.bf16 %v4337, 0
        %v4402 = vmax.bf16 %v4338, 0
        %v4403 = vmax.bf16 %v4339, 0
        %v4404 = vmax.bf16 %v4340, 0
        %v4405 = vmax.bf16 %v4341, 0
        %v4406 = vmax.bf16 %v4342, 0
        %v4407 = vmax.bf16 %v4343, 0
        %v4408 = vmax.bf16 %v4344, 0
        %v4409 = vmax.bf16 %v4345, 0
        %v4410 = vmax.bf16 %v4346, 0
        %v4411 = vmax.bf16 %v4347, 0
        %v4412 = vmax.bf16 %v4348, 0
        %v4413 = vmax.bf16 %v4349, 0
        %v4414 = vmax.bf16 %v4350, 0
        %v4415 = vmax.bf16 %v4351, 0
        %v4416 = vmax.bf16 %v4352, 0
        %v4417 = vmax.bf16 %v4353, 0
        %v4418 = vmax.bf16 %v4354, 0
        %v4419 = vmax.bf16 %v4355, 0
        %v4420 = vmax.bf16 %v4356, 0
        %v4421 = vmax.bf16 %v4357, 0
        %v4422 = vmax.bf16 %v4358, 0
        %v4423 = vmax.bf16 %v4359, 0
        %v4424 = vmax.bf16 %v4360, 0
        %v4425 = vmax.bf16 %v4361, 0
        %v4426 = vmax.bf16 %v4362, 0
        %v4427 = vmax.bf16 %v4363, 0
        %v4428 = vmax.bf16 %v4364, 0
        %v4429 = vmax.bf16 %v4365, 0
        %v4430 = vmax.bf16 %v4366, 0
        %v4431 = vmax.bf16 %v4367, 0
        %v4432 = vld [vmem:[#allocation6] sm:$0xff]
        %v4433 = vld [vmem:[#allocation6 + $0x8] sm:$0xff]
        %v4434 = vld [vmem:[#allocation6 + $0x10] sm:$0xff]
        %v4435 = vld [vmem:[#allocation6 + $0x18] sm:$0xff]
        %v4436 = vld [vmem:[#allocation6 + $0x20] sm:$0xff]
        %v4437 = vld [vmem:[#allocation6 + $0x28] sm:$0xff]
        %v4438 = vld [vmem:[#allocation6 + $0x30] sm:$0xff]
        %v4439 = vld [vmem:[#allocation6 + $0x38] sm:$0xff]
        %v4440 = vld [vmem:[#allocation6 + $0x40] sm:$0xff]
        %v4441 = vld [vmem:[#allocation6 + $0x48] sm:$0xff]
        %v4442 = vld [vmem:[#allocation6 + $0x50] sm:$0xff]
        %v4443 = vld [vmem:[#allocation6 + $0x58] sm:$0xff]
        %v4444 = vld [vmem:[#allocation6 + $0x60] sm:$0xff]
        %v4445 = vld [vmem:[#allocation6 + $0x68] sm:$0xff]
        %v4446 = vld [vmem:[#allocation6 + $0x70] sm:$0xff]
        %v4447 = vld [vmem:[#allocation6 + $0x78] sm:$0xff]
        %v4448 = vld [vmem:[#allocation6 + $0x80] sm:$0xff]
        %v4449 = vld [vmem:[#allocation6 + $0x88] sm:$0xff]
        %v4450 = vld [vmem:[#allocation6 + $0x90] sm:$0xff]
        %v4451 = vld [vmem:[#allocation6 + $0x98] sm:$0xff]
        %v4452 = vld [vmem:[#allocation6 + $0xa0] sm:$0xff]
        %v4453 = vld [vmem:[#allocation6 + $0xa8] sm:$0xff]
        %v4454 = vld [vmem:[#allocation6 + $0xb0] sm:$0xff]
        %v4455 = vld [vmem:[#allocation6 + $0xb8] sm:$0xff]
        %v4456 = vld [vmem:[#allocation6 + $0xc0] sm:$0xff]
        %v4457 = vld [vmem:[#allocation6 + $0xc8] sm:$0xff]
        %v4458 = vld [vmem:[#allocation6 + $0xd0] sm:$0xff]
        %v4459 = vld [vmem:[#allocation6 + $0xd8] sm:$0xff]
        %v4460 = vld [vmem:[#allocation6 + $0xe0] sm:$0xff]
        %v4461 = vld [vmem:[#allocation6 + $0xe8] sm:$0xff]
        %v4462 = vld [vmem:[#allocation6 + $0xf0] sm:$0xff]
        %v4463 = vld [vmem:[#allocation6 + $0xf8] sm:$0xff]
        %v4464 = vld [vmem:[#allocation6 + $0x100] sm:$0xff]
        %v4465 = vld [vmem:[#allocation6 + $0x108] sm:$0xff]
        %v4466 = vld [vmem:[#allocation6 + $0x110] sm:$0xff]
        %v4467 = vld [vmem:[#allocation6 + $0x118] sm:$0xff]
        %v4468 = vld [vmem:[#allocation6 + $0x120] sm:$0xff]
        %v4469 = vld [vmem:[#allocation6 + $0x128] sm:$0xff]
        %v4470 = vld [vmem:[#allocation6 + $0x130] sm:$0xff]
        %v4471 = vld [vmem:[#allocation6 + $0x138] sm:$0xff]
        %v4472 = vld [vmem:[#allocation6 + $0x140] sm:$0xff]
        %v4473 = vld [vmem:[#allocation6 + $0x148] sm:$0xff]
        %v4474 = vld [vmem:[#allocation6 + $0x150] sm:$0xff]
        %v4475 = vld [vmem:[#allocation6 + $0x158] sm:$0xff]
        %v4476 = vld [vmem:[#allocation6 + $0x160] sm:$0xff]
        %v4477 = vld [vmem:[#allocation6 + $0x168] sm:$0xff]
        %v4478 = vld [vmem:[#allocation6 + $0x170] sm:$0xff]
        %v4479 = vld [vmem:[#allocation6 + $0x178] sm:$0xff]
        %v4480 = vld [vmem:[#allocation6 + $0x180] sm:$0xff]
        %v4481 = vld [vmem:[#allocation6 + $0x188] sm:$0xff]
        %v4482 = vld [vmem:[#allocation6 + $0x190] sm:$0xff]
        %v4483 = vld [vmem:[#allocation6 + $0x198] sm:$0xff]
        %v4484 = vld [vmem:[#allocation6 + $0x1a0] sm:$0xff]
        %v4485 = vld [vmem:[#allocation6 + $0x1a8] sm:$0xff]
        %v4486 = vld [vmem:[#allocation6 + $0x1b0] sm:$0xff]
        %v4487 = vld [vmem:[#allocation6 + $0x1b8] sm:$0xff]
        %v4488 = vld [vmem:[#allocation6 + $0x1c0] sm:$0xff]
        %v4489 = vld [vmem:[#allocation6 + $0x1c8] sm:$0xff]
        %v4490 = vld [vmem:[#allocation6 + $0x1d0] sm:$0xff]
        %v4491 = vld [vmem:[#allocation6 + $0x1d8] sm:$0xff]
        %v4492 = vld [vmem:[#allocation6 + $0x1e0] sm:$0xff]
        %v4493 = vld [vmem:[#allocation6 + $0x1e8] sm:$0xff]
        %v4494 = vld [vmem:[#allocation6 + $0x1f0] sm:$0xff]
        %v4495 = vld [vmem:[#allocation6 + $0x1f8] sm:$0xff]
        %v4496 = vld [vmem:[#allocation6 + $0x200] sm:$0xff]
        %v4497 = vld [vmem:[#allocation6 + $0x208] sm:$0xff]
        %v4498 = vld [vmem:[#allocation6 + $0x210] sm:$0xff]
        %v4499 = vld [vmem:[#allocation6 + $0x218] sm:$0xff]
        %v4500 = vld [vmem:[#allocation6 + $0x220] sm:$0xff]
        %v4501 = vld [vmem:[#allocation6 + $0x228] sm:$0xff]
        %v4502 = vld [vmem:[#allocation6 + $0x230] sm:$0xff]
        %v4503 = vld [vmem:[#allocation6 + $0x238] sm:$0xff]
        %v4504 = vld [vmem:[#allocation6 + $0x240] sm:$0xff]
        %v4505 = vld [vmem:[#allocation6 + $0x248] sm:$0xff]
        %v4506 = vld [vmem:[#allocation6 + $0x250] sm:$0xff]
        %v4507 = vld [vmem:[#allocation6 + $0x258] sm:$0xff]
        %v4508 = vld [vmem:[#allocation6 + $0x260] sm:$0xff]
        %v4509 = vld [vmem:[#allocation6 + $0x268] sm:$0xff]
        %v4510 = vld [vmem:[#allocation6 + $0x270] sm:$0xff]
        %v4511 = vld [vmem:[#allocation6 + $0x278] sm:$0xff]
        %v4512 = vld [vmem:[#allocation6 + $0x280] sm:$0xff]
        %v4513 = vld [vmem:[#allocation6 + $0x288] sm:$0xff]
        %v4514 = vld [vmem:[#allocation6 + $0x290] sm:$0xff]
        %v4515 = vld [vmem:[#allocation6 + $0x298] sm:$0xff]
        %v4516 = vld [vmem:[#allocation6 + $0x2a0] sm:$0xff]
        %v4517 = vld [vmem:[#allocation6 + $0x2a8] sm:$0xff]
        %v4518 = vld [vmem:[#allocation6 + $0x2b0] sm:$0xff]
        %v4519 = vld [vmem:[#allocation6 + $0x2b8] sm:$0xff]
        %v4520 = vld [vmem:[#allocation6 + $0x2c0] sm:$0xff]
        %v4521 = vld [vmem:[#allocation6 + $0x2c8] sm:$0xff]
        %v4522 = vld [vmem:[#allocation6 + $0x2d0] sm:$0xff]
        %v4523 = vld [vmem:[#allocation6 + $0x2d8] sm:$0xff]
        %v4524 = vld [vmem:[#allocation6 + $0x2e0] sm:$0xff]
        %v4525 = vld [vmem:[#allocation6 + $0x2e8] sm:$0xff]
        %v4526 = vld [vmem:[#allocation6 + $0x2f0] sm:$0xff]
        %v4527 = vld [vmem:[#allocation6 + $0x2f8] sm:$0xff]
        %v4528 = vld [vmem:[#allocation6 + $0x300] sm:$0xff]
        %v4529 = vld [vmem:[#allocation6 + $0x308] sm:$0xff]
        %v4530 = vld [vmem:[#allocation6 + $0x310] sm:$0xff]
        %v4531 = vld [vmem:[#allocation6 + $0x318] sm:$0xff]
        %v4532 = vld [vmem:[#allocation6 + $0x320] sm:$0xff]
        %v4533 = vld [vmem:[#allocation6 + $0x328] sm:$0xff]
        %v4534 = vld [vmem:[#allocation6 + $0x330] sm:$0xff]
        %v4535 = vld [vmem:[#allocation6 + $0x338] sm:$0xff]
        %v4536 = vld [vmem:[#allocation6 + $0x340] sm:$0xff]
        %v4537 = vld [vmem:[#allocation6 + $0x348] sm:$0xff]
        %v4538 = vld [vmem:[#allocation6 + $0x350] sm:$0xff]
        %v4539 = vld [vmem:[#allocation6 + $0x358] sm:$0xff]
        %v4540 = vld [vmem:[#allocation6 + $0x360] sm:$0xff]
        %v4541 = vld [vmem:[#allocation6 + $0x368] sm:$0xff]
        %v4542 = vld [vmem:[#allocation6 + $0x370] sm:$0xff]
        %v4543 = vld [vmem:[#allocation6 + $0x378] sm:$0xff]
        %v4544 = vld [vmem:[#allocation6 + $0x380] sm:$0xff]
        %v4545 = vld [vmem:[#allocation6 + $0x388] sm:$0xff]
        %v4546 = vld [vmem:[#allocation6 + $0x390] sm:$0xff]
        %v4547 = vld [vmem:[#allocation6 + $0x398] sm:$0xff]
        %v4548 = vld [vmem:[#allocation6 + $0x3a0] sm:$0xff]
        %v4549 = vld [vmem:[#allocation6 + $0x3a8] sm:$0xff]
        %v4550 = vld [vmem:[#allocation6 + $0x3b0] sm:$0xff]
        %v4551 = vld [vmem:[#allocation6 + $0x3b8] sm:$0xff]
        %v4552 = vld [vmem:[#allocation6 + $0x3c0] sm:$0xff]
        %v4553 = vld [vmem:[#allocation6 + $0x3c8] sm:$0xff]
        %v4554 = vld [vmem:[#allocation6 + $0x3d0] sm:$0xff]
        %v4555 = vld [vmem:[#allocation6 + $0x3d8] sm:$0xff]
        %v4556 = vld [vmem:[#allocation6 + $0x3e0] sm:$0xff]
        %v4557 = vld [vmem:[#allocation6 + $0x3e8] sm:$0xff]
        %v4558 = vld [vmem:[#allocation6 + $0x3f0] sm:$0xff]
        %v4559 = vld [vmem:[#allocation6 + $0x3f8] sm:$0xff]
        %v4560 = vld [vmem:[%s10] sm:$0xf]
        %v4689 = vunpack.c.l.b16 %v4432
        %v4690 = vunpack.c.h.b16 %v4432
        %v4691 = vunpack.c.l.b16 %v4433
        %v4692 = vunpack.c.h.b16 %v4433
        %v4693 = vunpack.c.l.b16 %v4434
        %v4694 = vunpack.c.h.b16 %v4434
        %v4695 = vunpack.c.l.b16 %v4435
        %v4696 = vunpack.c.h.b16 %v4435
        %v4697 = vunpack.c.l.b16 %v4436
        %v4698 = vunpack.c.h.b16 %v4436
        %v4699 = vunpack.c.l.b16 %v4437
        %v4700 = vunpack.c.h.b16 %v4437
        %v4701 = vunpack.c.l.b16 %v4438
        %v4702 = vunpack.c.h.b16 %v4438
        %v4703 = vunpack.c.l.b16 %v4439
        %v4704 = vunpack.c.h.b16 %v4439
        %v4705 = vunpack.c.l.b16 %v4440
        %v4706 = vunpack.c.h.b16 %v4440
        %v4707 = vunpack.c.l.b16 %v4441
        %v4708 = vunpack.c.h.b16 %v4441
        %v4709 = vunpack.c.l.b16 %v4442
        %v4710 = vunpack.c.h.b16 %v4442
        %v4711 = vunpack.c.l.b16 %v4443
        %v4712 = vunpack.c.h.b16 %v4443
        %v4713 = vunpack.c.l.b16 %v4444
        %v4714 = vunpack.c.h.b16 %v4444
        %v4715 = vunpack.c.l.b16 %v4445
        %v4716 = vunpack.c.h.b16 %v4445
        %v4717 = vunpack.c.l.b16 %v4446
        %v4718 = vunpack.c.h.b16 %v4446
        %v4719 = vunpack.c.l.b16 %v4447
        %v4720 = vunpack.c.h.b16 %v4447
        %v4721 = vunpack.c.l.b16 %v4448
        %v4722 = vunpack.c.h.b16 %v4448
        %v4723 = vunpack.c.l.b16 %v4449
        %v4724 = vunpack.c.h.b16 %v4449
        %v4725 = vunpack.c.l.b16 %v4450
        %v4726 = vunpack.c.h.b16 %v4450
        %v4727 = vunpack.c.l.b16 %v4451
        %v4728 = vunpack.c.h.b16 %v4451
        %v4729 = vunpack.c.l.b16 %v4452
        %v4730 = vunpack.c.h.b16 %v4452
        %v4731 = vunpack.c.l.b16 %v4453
        %v4732 = vunpack.c.h.b16 %v4453
        %v4733 = vunpack.c.l.b16 %v4454
        %v4734 = vunpack.c.h.b16 %v4454
        %v4735 = vunpack.c.l.b16 %v4455
        %v4736 = vunpack.c.h.b16 %v4455
        %v4737 = vunpack.c.l.b16 %v4456
        %v4738 = vunpack.c.h.b16 %v4456
        %v4739 = vunpack.c.l.b16 %v4457
        %v4740 = vunpack.c.h.b16 %v4457
        %v4741 = vunpack.c.l.b16 %v4458
        %v4742 = vunpack.c.h.b16 %v4458
        %v4743 = vunpack.c.l.b16 %v4459
        %v4744 = vunpack.c.h.b16 %v4459
        %v4745 = vunpack.c.l.b16 %v4460
        %v4746 = vunpack.c.h.b16 %v4460
        %v4747 = vunpack.c.l.b16 %v4461
        %v4748 = vunpack.c.h.b16 %v4461
        %v4749 = vunpack.c.l.b16 %v4462
        %v4750 = vunpack.c.h.b16 %v4462
        %v4751 = vunpack.c.l.b16 %v4463
        %v4752 = vunpack.c.h.b16 %v4463
        %v4753 = vunpack.c.l.b16 %v4464
        %v4754 = vunpack.c.h.b16 %v4464
        %v4755 = vunpack.c.l.b16 %v4465
        %v4756 = vunpack.c.h.b16 %v4465
        %v4757 = vunpack.c.l.b16 %v4466
        %v4758 = vunpack.c.h.b16 %v4466
        %v4759 = vunpack.c.l.b16 %v4467
        %v4760 = vunpack.c.h.b16 %v4467
        %v4761 = vunpack.c.l.b16 %v4468
        %v4762 = vunpack.c.h.b16 %v4468
        %v4763 = vunpack.c.l.b16 %v4469
        %v4764 = vunpack.c.h.b16 %v4469
        %v4765 = vunpack.c.l.b16 %v4470
        %v4766 = vunpack.c.h.b16 %v4470
        %v4767 = vunpack.c.l.b16 %v4471
        %v4768 = vunpack.c.h.b16 %v4471
        %v4769 = vunpack.c.l.b16 %v4472
        %v4770 = vunpack.c.h.b16 %v4472
        %v4771 = vunpack.c.l.b16 %v4473
        %v4772 = vunpack.c.h.b16 %v4473
        %v4773 = vunpack.c.l.b16 %v4474
        %v4774 = vunpack.c.h.b16 %v4474
        %v4775 = vunpack.c.l.b16 %v4475
        %v4776 = vunpack.c.h.b16 %v4475
        %v4777 = vunpack.c.l.b16 %v4476
        %v4778 = vunpack.c.h.b16 %v4476
        %v4779 = vunpack.c.l.b16 %v4477
        %v4780 = vunpack.c.h.b16 %v4477
        %v4781 = vunpack.c.l.b16 %v4478
        %v4782 = vunpack.c.h.b16 %v4478
        %v4783 = vunpack.c.l.b16 %v4479
        %v4784 = vunpack.c.h.b16 %v4479
        %v4785 = vunpack.c.l.b16 %v4480
        %v4786 = vunpack.c.h.b16 %v4480
        %v4787 = vunpack.c.l.b16 %v4481
        %v4788 = vunpack.c.h.b16 %v4481
        %v4789 = vunpack.c.l.b16 %v4482
        %v4790 = vunpack.c.h.b16 %v4482
        %v4791 = vunpack.c.l.b16 %v4483
        %v4792 = vunpack.c.h.b16 %v4483
        %v4793 = vunpack.c.l.b16 %v4484
        %v4794 = vunpack.c.h.b16 %v4484
        %v4795 = vunpack.c.l.b16 %v4485
        %v4796 = vunpack.c.h.b16 %v4485
        %v4797 = vunpack.c.l.b16 %v4486
        %v4798 = vunpack.c.h.b16 %v4486
        %v4799 = vunpack.c.l.b16 %v4487
        %v4800 = vunpack.c.h.b16 %v4487
        %v4801 = vunpack.c.l.b16 %v4488
        %v4802 = vunpack.c.h.b16 %v4488
        %v4803 = vunpack.c.l.b16 %v4489
        %v4804 = vunpack.c.h.b16 %v4489
        %v4805 = vunpack.c.l.b16 %v4490
        %v4806 = vunpack.c.h.b16 %v4490
        %v4807 = vunpack.c.l.b16 %v4491
        %v4808 = vunpack.c.h.b16 %v4491
        %v4809 = vunpack.c.l.b16 %v4492
        %v4810 = vunpack.c.h.b16 %v4492
        %v4811 = vunpack.c.l.b16 %v4493
        %v4812 = vunpack.c.h.b16 %v4493
        %v4813 = vunpack.c.l.b16 %v4494
        %v4814 = vunpack.c.h.b16 %v4494
        %v4815 = vunpack.c.l.b16 %v4495
        %v4816 = vunpack.c.h.b16 %v4495
        %v4817 = vunpack.c.l.b16 %v4496
        %v4818 = vunpack.c.h.b16 %v4496
        %v4819 = vunpack.c.l.b16 %v4497
        %v4820 = vunpack.c.h.b16 %v4497
        %v4821 = vunpack.c.l.b16 %v4498
        %v4822 = vunpack.c.h.b16 %v4498
        %v4823 = vunpack.c.l.b16 %v4499
        %v4824 = vunpack.c.h.b16 %v4499
        %v4825 = vunpack.c.l.b16 %v4500
        %v4826 = vunpack.c.h.b16 %v4500
        %v4827 = vunpack.c.l.b16 %v4501
        %v4828 = vunpack.c.h.b16 %v4501
        %v4829 = vunpack.c.l.b16 %v4502
        %v4830 = vunpack.c.h.b16 %v4502
        %v4831 = vunpack.c.l.b16 %v4503
        %v4832 = vunpack.c.h.b16 %v4503
        %v4833 = vunpack.c.l.b16 %v4504
        %v4834 = vunpack.c.h.b16 %v4504
        %v4835 = vunpack.c.l.b16 %v4505
        %v4836 = vunpack.c.h.b16 %v4505
        %v4837 = vunpack.c.l.b16 %v4506
        %v4838 = vunpack.c.h.b16 %v4506
        %v4839 = vunpack.c.l.b16 %v4507
        %v4840 = vunpack.c.h.b16 %v4507
        %v4841 = vunpack.c.l.b16 %v4508
        %v4842 = vunpack.c.h.b16 %v4508
        %v4843 = vunpack.c.l.b16 %v4509
        %v4844 = vunpack.c.h.b16 %v4509
        %v4845 = vunpack.c.l.b16 %v4510
        %v4846 = vunpack.c.h.b16 %v4510
        %v4847 = vunpack.c.l.b16 %v4511
        %v4848 = vunpack.c.h.b16 %v4511
        %v4849 = vunpack.c.l.b16 %v4512
        %v4850 = vunpack.c.h.b16 %v4512
        %v4851 = vunpack.c.l.b16 %v4513
        %v4852 = vunpack.c.h.b16 %v4513
        %v4853 = vunpack.c.l.b16 %v4514
        %v4854 = vunpack.c.h.b16 %v4514
        %v4855 = vunpack.c.l.b16 %v4515
        %v4856 = vunpack.c.h.b16 %v4515
        %v4857 = vunpack.c.l.b16 %v4516
        %v4858 = vunpack.c.h.b16 %v4516
        %v4859 = vunpack.c.l.b16 %v4517
        %v4860 = vunpack.c.h.b16 %v4517
        %v4861 = vunpack.c.l.b16 %v4518
        %v4862 = vunpack.c.h.b16 %v4518
        %v4863 = vunpack.c.l.b16 %v4519
        %v4864 = vunpack.c.h.b16 %v4519
        %v4865 = vunpack.c.l.b16 %v4520
        %v4866 = vunpack.c.h.b16 %v4520
        %v4867 = vunpack.c.l.b16 %v4521
        %v4868 = vunpack.c.h.b16 %v4521
        %v4869 = vunpack.c.l.b16 %v4522
        %v4870 = vunpack.c.h.b16 %v4522
        %v4871 = vunpack.c.l.b16 %v4523
        %v4872 = vunpack.c.h.b16 %v4523
        %v4873 = vunpack.c.l.b16 %v4524
        %v4874 = vunpack.c.h.b16 %v4524
        %v4875 = vunpack.c.l.b16 %v4525
        %v4876 = vunpack.c.h.b16 %v4525
        %v4877 = vunpack.c.l.b16 %v4526
        %v4878 = vunpack.c.h.b16 %v4526
        %v4879 = vunpack.c.l.b16 %v4527
        %v4880 = vunpack.c.h.b16 %v4527
        %v4881 = vunpack.c.l.b16 %v4528
        %v4882 = vunpack.c.h.b16 %v4528
        %v4883 = vunpack.c.l.b16 %v4529
        %v4884 = vunpack.c.h.b16 %v4529
        %v4885 = vunpack.c.l.b16 %v4530
        %v4886 = vunpack.c.h.b16 %v4530
        %v4887 = vunpack.c.l.b16 %v4531
        %v4888 = vunpack.c.h.b16 %v4531
        %v4889 = vunpack.c.l.b16 %v4532
        %v4890 = vunpack.c.h.b16 %v4532
        %v4891 = vunpack.c.l.b16 %v4533
        %v4892 = vunpack.c.h.b16 %v4533
        %v4893 = vunpack.c.l.b16 %v4534
        %v4894 = vunpack.c.h.b16 %v4534
        %v4895 = vunpack.c.l.b16 %v4535
        %v4896 = vunpack.c.h.b16 %v4535
        %v4897 = vunpack.c.l.b16 %v4536
        %v4898 = vunpack.c.h.b16 %v4536
        %v4899 = vunpack.c.l.b16 %v4537
        %v4900 = vunpack.c.h.b16 %v4537
        %v4901 = vunpack.c.l.b16 %v4538
        %v4902 = vunpack.c.h.b16 %v4538
        %v4903 = vunpack.c.l.b16 %v4539
        %v4904 = vunpack.c.h.b16 %v4539
        %v4905 = vunpack.c.l.b16 %v4540
        %v4906 = vunpack.c.h.b16 %v4540
        %v4907 = vunpack.c.l.b16 %v4541
        %v4908 = vunpack.c.h.b16 %v4541
        %v4909 = vunpack.c.l.b16 %v4542
        %v4910 = vunpack.c.h.b16 %v4542
        %v4911 = vunpack.c.l.b16 %v4543
        %v4912 = vunpack.c.h.b16 %v4543
        %v4913 = vunpack.c.l.b16 %v4544
        %v4914 = vunpack.c.h.b16 %v4544
        %v4915 = vunpack.c.l.b16 %v4545
        %v4916 = vunpack.c.h.b16 %v4545
        %v4917 = vunpack.c.l.b16 %v4546
        %v4918 = vunpack.c.h.b16 %v4546
        %v4919 = vunpack.c.l.b16 %v4547
        %v4920 = vunpack.c.h.b16 %v4547
        %v4921 = vunpack.c.l.b16 %v4548
        %v4922 = vunpack.c.h.b16 %v4548
        %v4923 = vunpack.c.l.b16 %v4549
        %v4924 = vunpack.c.h.b16 %v4549
        %v4925 = vunpack.c.l.b16 %v4550
        %v4926 = vunpack.c.h.b16 %v4550
        %v4927 = vunpack.c.l.b16 %v4551
        %v4928 = vunpack.c.h.b16 %v4551
        %v4929 = vunpack.c.l.b16 %v4552
        %v4930 = vunpack.c.h.b16 %v4552
        %v4931 = vunpack.c.l.b16 %v4553
        %v4932 = vunpack.c.h.b16 %v4553
        %v4933 = vunpack.c.l.b16 %v4554
        %v4934 = vunpack.c.h.b16 %v4554
        %v4935 = vunpack.c.l.b16 %v4555
        %v4936 = vunpack.c.h.b16 %v4555
        %v4937 = vunpack.c.l.b16 %v4556
        %v4938 = vunpack.c.h.b16 %v4556
        %v4939 = vunpack.c.l.b16 %v4557
        %v4940 = vunpack.c.h.b16 %v4557
        %v4941 = vunpack.c.l.b16 %v4558
        %v4942 = vunpack.c.h.b16 %v4558
        %v4943 = vunpack.c.l.b16 %v4559
        %v4944 = vunpack.c.h.b16 %v4559
        %v4945 = vpack.c.b16 %v4693, %v4689
        %v4946 = vpack.c.b16 %v4694, %v4690
        %v4947 = vpack.c.b16 %v4695, %v4691
        %v4948 = vpack.c.b16 %v4696, %v4692
        %v4949 = vpack.c.b16 %v4701, %v4697
        %v4950 = vpack.c.b16 %v4702, %v4698
        %v4951 = vpack.c.b16 %v4703, %v4699
        %v4952 = vpack.c.b16 %v4704, %v4700
        %v4953 = vpack.c.b16 %v4709, %v4705
        %v4954 = vpack.c.b16 %v4710, %v4706
        %v4955 = vpack.c.b16 %v4711, %v4707
        %v4956 = vpack.c.b16 %v4712, %v4708
        %v4957 = vpack.c.b16 %v4717, %v4713
        %v4958 = vpack.c.b16 %v4718, %v4714
        %v4959 = vpack.c.b16 %v4719, %v4715
        %v4960 = vpack.c.b16 %v4720, %v4716
        %v4961 = vpack.c.b16 %v4725, %v4721
        %v4962 = vpack.c.b16 %v4726, %v4722
        %v4963 = vpack.c.b16 %v4727, %v4723
        %v4964 = vpack.c.b16 %v4728, %v4724
        %v4965 = vpack.c.b16 %v4733, %v4729
        %v4966 = vpack.c.b16 %v4734, %v4730
        %v4967 = vpack.c.b16 %v4735, %v4731
        %v4968 = vpack.c.b16 %v4736, %v4732
        %v4969 = vpack.c.b16 %v4741, %v4737
        %v4970 = vpack.c.b16 %v4742, %v4738
        %v4971 = vpack.c.b16 %v4743, %v4739
        %v4972 = vpack.c.b16 %v4744, %v4740
        %v4973 = vpack.c.b16 %v4749, %v4745
        %v4974 = vpack.c.b16 %v4750, %v4746
        %v4975 = vpack.c.b16 %v4751, %v4747
        %v4976 = vpack.c.b16 %v4752, %v4748
        %v4977 = vpack.c.b16 %v4757, %v4753
        %v4978 = vpack.c.b16 %v4758, %v4754
        %v4979 = vpack.c.b16 %v4759, %v4755
        %v4980 = vpack.c.b16 %v4760, %v4756
        %v4981 = vpack.c.b16 %v4765, %v4761
        %v4982 = vpack.c.b16 %v4766, %v4762
        %v4983 = vpack.c.b16 %v4767, %v4763
        %v4984 = vpack.c.b16 %v4768, %v4764
        %v4985 = vpack.c.b16 %v4773, %v4769
        %v4986 = vpack.c.b16 %v4774, %v4770
        %v4987 = vpack.c.b16 %v4775, %v4771
        %v4988 = vpack.c.b16 %v4776, %v4772
        %v4989 = vpack.c.b16 %v4781, %v4777
        %v4990 = vpack.c.b16 %v4782, %v4778
        %v4991 = vpack.c.b16 %v4783, %v4779
        %v4992 = vpack.c.b16 %v4784, %v4780
        %v4993 = vpack.c.b16 %v4789, %v4785
        %v4994 = vpack.c.b16 %v4790, %v4786
        %v4995 = vpack.c.b16 %v4791, %v4787
        %v4996 = vpack.c.b16 %v4792, %v4788
        %v4997 = vpack.c.b16 %v4797, %v4793
        %v4998 = vpack.c.b16 %v4798, %v4794
        %v4999 = vpack.c.b16 %v4799, %v4795
        %v5000 = vpack.c.b16 %v4800, %v4796
        %v5001 = vpack.c.b16 %v4805, %v4801
        %v5002 = vpack.c.b16 %v4806, %v4802
        %v5003 = vpack.c.b16 %v4807, %v4803
        %v5004 = vpack.c.b16 %v4808, %v4804
        %v5005 = vpack.c.b16 %v4813, %v4809
        %v5006 = vpack.c.b16 %v4814, %v4810
        %v5007 = vpack.c.b16 %v4815, %v4811
        %v5008 = vpack.c.b16 %v4816, %v4812
        %v5009 = vpack.c.b16 %v4821, %v4817
        %v5010 = vpack.c.b16 %v4822, %v4818
        %v5011 = vpack.c.b16 %v4823, %v4819
        %v5012 = vpack.c.b16 %v4824, %v4820
        %v5013 = vpack.c.b16 %v4829, %v4825
        %v5014 = vpack.c.b16 %v4830, %v4826
        %v5015 = vpack.c.b16 %v4831, %v4827
        %v5016 = vpack.c.b16 %v4832, %v4828
        %v5017 = vpack.c.b16 %v4837, %v4833
        %v5018 = vpack.c.b16 %v4838, %v4834
        %v5019 = vpack.c.b16 %v4839, %v4835
        %v5020 = vpack.c.b16 %v4840, %v4836
        %v5021 = vpack.c.b16 %v4845, %v4841
        %v5022 = vpack.c.b16 %v4846, %v4842
        %v5023 = vpack.c.b16 %v4847, %v4843
        %v5024 = vpack.c.b16 %v4848, %v4844
        %v5025 = vpack.c.b16 %v4853, %v4849
        %v5026 = vpack.c.b16 %v4854, %v4850
        %v5027 = vpack.c.b16 %v4855, %v4851
        %v5028 = vpack.c.b16 %v4856, %v4852
        %v5029 = vpack.c.b16 %v4861, %v4857
        %v5030 = vpack.c.b16 %v4862, %v4858
        %v5031 = vpack.c.b16 %v4863, %v4859
        %v5032 = vpack.c.b16 %v4864, %v4860
        %v5033 = vpack.c.b16 %v4869, %v4865
        %v5034 = vpack.c.b16 %v4870, %v4866
        %v5035 = vpack.c.b16 %v4871, %v4867
        %v5036 = vpack.c.b16 %v4872, %v4868
        %v5037 = vpack.c.b16 %v4877, %v4873
        %v5038 = vpack.c.b16 %v4878, %v4874
        %v5039 = vpack.c.b16 %v4879, %v4875
        %v5040 = vpack.c.b16 %v4880, %v4876
        %v5041 = vpack.c.b16 %v4885, %v4881
        %v5042 = vpack.c.b16 %v4886, %v4882
        %v5043 = vpack.c.b16 %v4887, %v4883
        %v5044 = vpack.c.b16 %v4888, %v4884
        %v5045 = vpack.c.b16 %v4893, %v4889
        %v5046 = vpack.c.b16 %v4894, %v4890
        %v5047 = vpack.c.b16 %v4895, %v4891
        %v5048 = vpack.c.b16 %v4896, %v4892
        %v5049 = vpack.c.b16 %v4901, %v4897
        %v5050 = vpack.c.b16 %v4902, %v4898
        %v5051 = vpack.c.b16 %v4903, %v4899
        %v5052 = vpack.c.b16 %v4904, %v4900
        %v5053 = vpack.c.b16 %v4909, %v4905
        %v5054 = vpack.c.b16 %v4910, %v4906
        %v5055 = vpack.c.b16 %v4911, %v4907
        %v5056 = vpack.c.b16 %v4912, %v4908
        %v5057 = vpack.c.b16 %v4917, %v4913
        %v5058 = vpack.c.b16 %v4918, %v4914
        %v5059 = vpack.c.b16 %v4919, %v4915
        %v5060 = vpack.c.b16 %v4920, %v4916
        %v5061 = vpack.c.b16 %v4925, %v4921
        %v5062 = vpack.c.b16 %v4926, %v4922
        %v5063 = vpack.c.b16 %v4927, %v4923
        %v5064 = vpack.c.b16 %v4928, %v4924
        %v5065 = vpack.c.b16 %v4933, %v4929
        %v5066 = vpack.c.b16 %v4934, %v4930
        %v5067 = vpack.c.b16 %v4935, %v4931
        %v5068 = vpack.c.b16 %v4936, %v4932
        %v5069 = vpack.c.b16 %v4941, %v4937
        %v5070 = vpack.c.b16 %v4942, %v4938
        %v5071 = vpack.c.b16 %v4943, %v4939
        %v5072 = vpack.c.b16 %v4944, %v4940
        %5201 = vmatprep.subr.bf16.mxu0 %v4946
        %5202 = vmatpush1.bf16.msra.mxu0 %v4945
        %5203 = vmatprep.subr.bf16.mxu0 %v4950
        %5204 = vmatpush1.bf16.msra.mxu0 %v4949
        %5205 = vmatprep.subr.bf16.mxu0 %v4954
        %5206 = vmatpush1.bf16.msra.mxu0 %v4953
        %5207 = vmatprep.subr.bf16.mxu0 %v4958
        %5208 = vmatpush1.bf16.msra.mxu0 %v4957
        %5209 = vmatprep.subr.bf16.mxu0 %v4962
        %5210 = vmatpush1.bf16.msra.mxu0 %v4961
        %5211 = vmatprep.subr.bf16.mxu0 %v4966
        %5212 = vmatpush1.bf16.msra.mxu0 %v4965
        %5213 = vmatprep.subr.bf16.mxu0 %v4970
        %5214 = vmatpush1.bf16.msra.mxu0 %v4969
        %5215 = vmatprep.subr.bf16.mxu0 %v4974
        %5216 = vmatpush1.bf16.msra.mxu0 %v4973
        %5217 = vmatprep.subr.bf16.mxu0 %v4978
        %5218 = vmatpush1.bf16.msra.mxu0 %v4977
        %5219 = vmatprep.subr.bf16.mxu0 %v4982
        %5220 = vmatpush1.bf16.msra.mxu0 %v4981
        %5221 = vmatprep.subr.bf16.mxu0 %v4986
        %5222 = vmatpush1.bf16.msra.mxu0 %v4985
        %5223 = vmatprep.subr.bf16.mxu0 %v4990
        %5224 = vmatpush1.bf16.msra.mxu0 %v4989
        %5225 = vmatprep.subr.bf16.mxu0 %v4994
        %5226 = vmatpush1.bf16.msra.mxu0 %v4993
        %5227 = vmatprep.subr.bf16.mxu0 %v4998
        %5228 = vmatpush1.bf16.msra.mxu0 %v4997
        %5229 = vmatprep.subr.bf16.mxu0 %v5002
        %5230 = vmatpush1.bf16.msra.mxu0 %v5001
        %5231 = vmatprep.subr.bf16.mxu0 %v5006
        %5232 = vmatpush1.bf16.msra.mxu0 %v5005
        %5233 = vmatprep.mubr.bf16.mxu0 %v4369
        %5234 = vmatmul.mubr.bf16.gmra.mrb[0].mxu0 %v4368
        %v5235 = vpop.f32.mrb[0].mxu0
        %v5236 = vadd.f32 0.0, %v5235
        %v5237 = vpop.f32.mrb[0].mxu0
        %v5238 = vadd.f32 0.0, %v5237
        %v5239 = vpop.f32.mrb[0].mxu0
        %v5240 = vadd.f32 0.0, %v5239
        %v5241 = vpop.f32.mrb[0].mxu0
        %v5242 = vadd.f32 0.0, %v5241
        %5243 = vmatprep.mubr.bf16.mxu0 %v4373
        %5244 = vmatmul.mubr.bf16.gmra.mrb[0].mxu0 %v4372
        %v5245 = vpop.f32.mrb[0].mxu0
        %v5246 = vadd.f32 0.0, %v5245
        %v5247 = vpop.f32.mrb[0].mxu0
        %v5248 = vadd.f32 0.0, %v5247
        %v5249 = vpop.f32.mrb[0].mxu0
        %v5250 = vadd.f32 0.0, %v5249
        %v5251 = vpop.f32.mrb[0].mxu0
        %v5252 = vadd.f32 0.0, %v5251
        %5253 = vmatprep.mubr.bf16.mxu0 %v4377
        %5254 = vmatmul.mubr.bf16.gmra.mrb[0].mxu0 %v4376
        %v5255 = vpop.f32.mrb[0].mxu0
        %v5256 = vadd.f32 0.0, %v5255
        %v5257 = vpop.f32.mrb[0].mxu0
        %v5258 = vadd.f32 0.0, %v5257
        %v5259 = vpop.f32.mrb[0].mxu0
        %v5260 = vadd.f32 0.0, %v5259
        %v5261 = vpop.f32.mrb[0].mxu0
        %v5262 = vadd.f32 0.0, %v5261
        %5263 = vmatprep.mubr.bf16.mxu0 %v4381
        %5264 = vmatmul.mubr.bf16.gmra.mrb[0].mxu0 %v4380
        %v5265 = vpop.f32.mrb[0].mxu0
        %v5266 = vadd.f32 0.0, %v5265
        %v5267 = vpop.f32.mrb[0].mxu0
        %v5268 = vadd.f32 0.0, %v5267
        %v5269 = vpop.f32.mrb[0].mxu0
        %v5270 = vadd.f32 0.0, %v5269
        %v5271 = vpop.f32.mrb[0].mxu0
        %v5272 = vadd.f32 0.0, %v5271
        %5273 = vmatprep.mubr.bf16.mxu0 %v4385
        %5274 = vmatmul.mubr.bf16.gmra.mrb[0].mxu0 %v4384
        %v5275 = vpop.f32.mrb[0].mxu0
        %v5276 = vadd.f32 0.0, %v5275
        %v5277 = vpop.f32.mrb[0].mxu0
        %v5278 = vadd.f32 0.0, %v5277
        %v5279 = vpop.f32.mrb[0].mxu0
        %v5280 = vadd.f32 0.0, %v5279
        %v5281 = vpop.f32.mrb[0].mxu0
        %v5282 = vadd.f32 0.0, %v5281
        %5283 = vmatprep.mubr.bf16.mxu0 %v4389
        %5284 = vmatmul.mubr.bf16.gmra.mrb[0].mxu0 %v4388
        %v5285 = vpop.f32.mrb[0].mxu0
        %v5286 = vadd.f32 0.0, %v5285
        %v5287 = vpop.f32.mrb[0].mxu0
        %v5288 = vadd.f32 0.0, %v5287
        %v5289 = vpop.f32.mrb[0].mxu0
        %v5290 = vadd.f32 0.0, %v5289
        %v5291 = vpop.f32.mrb[0].mxu0
        %v5292 = vadd.f32 0.0, %v5291
        %5293 = vmatprep.mubr.bf16.mxu0 %v4393
        %5294 = vmatmul.mubr.bf16.gmra.mrb[0].mxu0 %v4392
        %v5295 = vpop.f32.mrb[0].mxu0
        %v5296 = vadd.f32 0.0, %v5295
        %v5297 = vpop.f32.mrb[0].mxu0
        %v5298 = vadd.f32 0.0, %v5297
        %v5299 = vpop.f32.mrb[0].mxu0
        %v5300 = vadd.f32 0.0, %v5299
        %v5301 = vpop.f32.mrb[0].mxu0
        %v5302 = vadd.f32 0.0, %v5301
        %5303 = vmatprep.mubr.bf16.mxu0 %v4397
        %5304 = vmatmul.mubr.bf16.gmra.mrb[0].mxu0 %v4396
        %v5305 = vpop.f32.mrb[0].mxu0
        %v5306 = vadd.f32 0.0, %v5305
        %v5307 = vpop.f32.mrb[0].mxu0
        %v5308 = vadd.f32 0.0, %v5307
        %v5309 = vpop.f32.mrb[0].mxu0
        %v5310 = vadd.f32 0.0, %v5309
        %v5311 = vpop.f32.mrb[0].mxu0
        %v5312 = vadd.f32 0.0, %v5311
        %5313 = vmatprep.mubr.bf16.mxu0 %v4401
        %5314 = vmatmul.mubr.bf16.gmra.mrb[0].mxu0 %v4400
        %v5315 = vpop.f32.mrb[0].mxu0
        %v5316 = vadd.f32 0.0, %v5315
        %v5317 = vpop.f32.mrb[0].mxu0
        %v5318 = vadd.f32 0.0, %v5317
        %v5319 = vpop.f32.mrb[0].mxu0
        %v5320 = vadd.f32 0.0, %v5319
        %v5321 = vpop.f32.mrb[0].mxu0
        %v5322 = vadd.f32 0.0, %v5321
        %5323 = vmatprep.mubr.bf16.mxu0 %v4405
        %5324 = vmatmul.mubr.bf16.gmra.mrb[0].mxu0 %v4404
        %v5325 = vpop.f32.mrb[0].mxu0
        %v5326 = vadd.f32 0.0, %v5325
        %v5327 = vpop.f32.mrb[0].mxu0
        %v5328 = vadd.f32 0.0, %v5327
        %v5329 = vpop.f32.mrb[0].mxu0
        %v5330 = vadd.f32 0.0, %v5329
        %v5331 = vpop.f32.mrb[0].mxu0
        %v5332 = vadd.f32 0.0, %v5331
        %5333 = vmatprep.mubr.bf16.mxu0 %v4409
        %5334 = vmatmul.mubr.bf16.gmra.mrb[0].mxu0 %v4408
        %v5335 = vpop.f32.mrb[0].mxu0
        %v5336 = vadd.f32 0.0, %v5335
        %v5337 = vpop.f32.mrb[0].mxu0
        %v5338 = vadd.f32 0.0, %v5337
        %v5339 = vpop.f32.mrb[0].mxu0
        %v5340 = vadd.f32 0.0, %v5339
        %v5341 = vpop.f32.mrb[0].mxu0
        %v5342 = vadd.f32 0.0, %v5341
        %5343 = vmatprep.mubr.bf16.mxu0 %v4413
        %5344 = vmatmul.mubr.bf16.gmra.mrb[0].mxu0 %v4412
        %v5345 = vpop.f32.mrb[0].mxu0
        %v5346 = vadd.f32 0.0, %v5345
        %v5347 = vpop.f32.mrb[0].mxu0
        %v5348 = vadd.f32 0.0, %v5347
        %v5349 = vpop.f32.mrb[0].mxu0
        %v5350 = vadd.f32 0.0, %v5349
        %v5351 = vpop.f32.mrb[0].mxu0
        %v5352 = vadd.f32 0.0, %v5351
        %5353 = vmatprep.mubr.bf16.mxu0 %v4417
        %5354 = vmatmul.mubr.bf16.gmra.mrb[0].mxu0 %v4416
        %v5355 = vpop.f32.mrb[0].mxu0
        %v5356 = vadd.f32 0.0, %v5355
        %v5357 = vpop.f32.mrb[0].mxu0
        %v5358 = vadd.f32 0.0, %v5357
        %v5359 = vpop.f32.mrb[0].mxu0
        %v5360 = vadd.f32 0.0, %v5359
        %v5361 = vpop.f32.mrb[0].mxu0
        %v5362 = vadd.f32 0.0, %v5361
        %5363 = vmatprep.mubr.bf16.mxu0 %v4421
        %5364 = vmatmul.mubr.bf16.gmra.mrb[0].mxu0 %v4420
        %v5365 = vpop.f32.mrb[0].mxu0
        %v5366 = vadd.f32 0.0, %v5365
        %v5367 = vpop.f32.mrb[0].mxu0
        %v5368 = vadd.f32 0.0, %v5367
        %v5369 = vpop.f32.mrb[0].mxu0
        %v5370 = vadd.f32 0.0, %v5369
        %v5371 = vpop.f32.mrb[0].mxu0
        %v5372 = vadd.f32 0.0, %v5371
        %5373 = vmatprep.mubr.bf16.mxu0 %v4425
        %5374 = vmatmul.mubr.bf16.gmra.mrb[0].mxu0 %v4424
        %v5375 = vpop.f32.mrb[0].mxu0
        %v5376 = vadd.f32 0.0, %v5375
        %v5377 = vpop.f32.mrb[0].mxu0
        %v5378 = vadd.f32 0.0, %v5377
        %v5379 = vpop.f32.mrb[0].mxu0
        %v5380 = vadd.f32 0.0, %v5379
        %v5381 = vpop.f32.mrb[0].mxu0
        %v5382 = vadd.f32 0.0, %v5381
        %5383 = vmatprep.mubr.bf16.mxu0 %v4429
        %5384 = vmatmul.mubr.bf16.gmra.mrb[0].mxu0 %v4428
        %v5385 = vpop.f32.mrb[0].mxu0
        %v5386 = vadd.f32 0.0, %v5385
        %v5387 = vpop.f32.mrb[0].mxu0
        %v5388 = vadd.f32 0.0, %v5387
        %v5389 = vpop.f32.mrb[0].mxu0
        %v5390 = vadd.f32 0.0, %v5389
        %v5391 = vpop.f32.mrb[0].mxu0
        %v5392 = vadd.f32 0.0, %v5391
        %5393 = vdwg.mxu0
        %5394 = vmatprep.subr.bf16.mxu0 %v5010
        %5395 = vmatpush1.bf16.msra.mxu0 %v5009
        %5396 = vmatprep.subr.bf16.mxu0 %v5014
        %5397 = vmatpush1.bf16.msra.mxu0 %v5013
        %5398 = vmatprep.subr.bf16.mxu0 %v5018
        %5399 = vmatpush1.bf16.msra.mxu0 %v5017
        %5400 = vmatprep.subr.bf16.mxu0 %v5022
        %5401 = vmatpush1.bf16.msra.mxu0 %v5021
        %5402 = vmatprep.subr.bf16.mxu0 %v5026
        %5403 = vmatpush1.bf16.msra.mxu0 %v5025
        %5404 = vmatprep.subr.bf16.mxu0 %v5030
        %5405 = vmatpush1.bf16.msra.mxu0 %v5029
        %5406 = vmatprep.subr.bf16.mxu0 %v5034
        %5407 = vmatpush1.bf16.msra.mxu0 %v5033
        %5408 = vmatprep.subr.bf16.mxu0 %v5038
        %5409 = vmatpush1.bf16.msra.mxu0 %v5037
        %5410 = vmatprep.subr.bf16.mxu0 %v5042
        %5411 = vmatpush1.bf16.msra.mxu0 %v5041
        %5412 = vmatprep.subr.bf16.mxu0 %v5046
        %5413 = vmatpush1.bf16.msra.mxu0 %v5045
        %5414 = vmatprep.subr.bf16.mxu0 %v5050
        %5415 = vmatpush1.bf16.msra.mxu0 %v5049
        %5416 = vmatprep.subr.bf16.mxu0 %v5054
        %5417 = vmatpush1.bf16.msra.mxu0 %v5053
        %5418 = vmatprep.subr.bf16.mxu0 %v5058
        %5419 = vmatpush1.bf16.msra.mxu0 %v5057
        %5420 = vmatprep.subr.bf16.mxu0 %v5062
        %5421 = vmatpush1.bf16.msra.mxu0 %v5061
        %5422 = vmatprep.subr.bf16.mxu0 %v5066
        %5423 = vmatpush1.bf16.msra.mxu0 %v5065
        %5424 = vmatprep.subr.bf16.mxu0 %v5070
        %5425 = vmatpush1.bf16.msra.mxu0 %v5069
        %5426 = vmatprep.mubr.bf16.mxu0 %v4371
        %5427 = vmatmul.mubr.bf16.gmra.mrb[0].mxu0 %v4370
        %v5428 = vpop.f32.mrb[0].mxu0
        %v5429 = vadd.f32 %v5236, %v5428
        %v5430 = vpop.f32.mrb[0].mxu0
        %v5431 = vadd.f32 %v5238, %v5430
        %v5432 = vpop.f32.mrb[0].mxu0
        %v5433 = vadd.f32 %v5240, %v5432
        %v5434 = vpop.f32.mrb[0].mxu0
        %v5435 = vadd.f32 %v5242, %v5434
        %5436 = vmatprep.mubr.bf16.mxu0 %v4375
        %5437 = vmatmul.mubr.bf16.gmra.mrb[0].mxu0 %v4374
        %v5438 = vpop.f32.mrb[0].mxu0
        %v5439 = vadd.f32 %v5246, %v5438
        %v5440 = vpop.f32.mrb[0].mxu0
        %v5441 = vadd.f32 %v5248, %v5440
        %v5442 = vpop.f32.mrb[0].mxu0
        %v5443 = vadd.f32 %v5250, %v5442
        %v5444 = vpop.f32.mrb[0].mxu0
        %v5445 = vadd.f32 %v5252, %v5444
        %5446 = vmatprep.mubr.bf16.mxu0 %v4379
        %5447 = vmatmul.mubr.bf16.gmra.mrb[0].mxu0 %v4378
        %v5448 = vpop.f32.mrb[0].mxu0
        %v5449 = vadd.f32 %v5256, %v5448
        %v5450 = vpop.f32.mrb[0].mxu0
        %v5451 = vadd.f32 %v5258, %v5450
        %v5452 = vpop.f32.mrb[0].mxu0
        %v5453 = vadd.f32 %v5260, %v5452
        %v5454 = vpop.f32.mrb[0].mxu0
        %v5455 = vadd.f32 %v5262, %v5454
        %5456 = vmatprep.mubr.bf16.mxu0 %v4383
        %5457 = vmatmul.mubr.bf16.gmra.mrb[0].mxu0 %v4382
        %v5458 = vpop.f32.mrb[0].mxu0
        %v5459 = vadd.f32 %v5266, %v5458
        %v5460 = vpop.f32.mrb[0].mxu0
        %v5461 = vadd.f32 %v5268, %v5460
        %v5462 = vpop.f32.mrb[0].mxu0
        %v5463 = vadd.f32 %v5270, %v5462
        %v5464 = vpop.f32.mrb[0].mxu0
        %v5465 = vadd.f32 %v5272, %v5464
        %5466 = vmatprep.mubr.bf16.mxu0 %v4387
        %5467 = vmatmul.mubr.bf16.gmra.mrb[0].mxu0 %v4386
        %v5468 = vpop.f32.mrb[0].mxu0
        %v5469 = vadd.f32 %v5276, %v5468
        %v5470 = vpop.f32.mrb[0].mxu0
        %v5471 = vadd.f32 %v5278, %v5470
        %v5472 = vpop.f32.mrb[0].mxu0
        %v5473 = vadd.f32 %v5280, %v5472
        %v5474 = vpop.f32.mrb[0].mxu0
        %v5475 = vadd.f32 %v5282, %v5474
        %5476 = vmatprep.mubr.bf16.mxu0 %v4391
        %5477 = vmatmul.mubr.bf16.gmra.mrb[0].mxu0 %v4390
        %v5478 = vpop.f32.mrb[0].mxu0
        %v5479 = vadd.f32 %v5286, %v5478
        %v5480 = vpop.f32.mrb[0].mxu0
        %v5481 = vadd.f32 %v5288, %v5480
        %v5482 = vpop.f32.mrb[0].mxu0
        %v5483 = vadd.f32 %v5290, %v5482
        %v5484 = vpop.f32.mrb[0].mxu0
        %v5485 = vadd.f32 %v5292, %v5484
        %5486 = vmatprep.mubr.bf16.mxu0 %v4395
        %5487 = vmatmul.mubr.bf16.gmra.mrb[0].mxu0 %v4394
        %v5488 = vpop.f32.mrb[0].mxu0
        %v5489 = vadd.f32 %v5296, %v5488
        %v5490 = vpop.f32.mrb[0].mxu0
        %v5491 = vadd.f32 %v5298, %v5490
        %v5492 = vpop.f32.mrb[0].mxu0
        %v5493 = vadd.f32 %v5300, %v5492
        %v5494 = vpop.f32.mrb[0].mxu0
        %v5495 = vadd.f32 %v5302, %v5494
        %5496 = vmatprep.mubr.bf16.mxu0 %v4399
        %5497 = vmatmul.mubr.bf16.gmra.mrb[0].mxu0 %v4398
        %v5498 = vpop.f32.mrb[0].mxu0
        %v5499 = vadd.f32 %v5306, %v5498
        %v5500 = vpop.f32.mrb[0].mxu0
        %v5501 = vadd.f32 %v5308, %v5500
        %v5502 = vpop.f32.mrb[0].mxu0
        %v5503 = vadd.f32 %v5310, %v5502
        %v5504 = vpop.f32.mrb[0].mxu0
        %v5505 = vadd.f32 %v5312, %v5504
        %5506 = vmatprep.mubr.bf16.mxu0 %v4403
        %5507 = vmatmul.mubr.bf16.gmra.mrb[0].mxu0 %v4402
        %v5508 = vpop.f32.mrb[0].mxu0
        %v5509 = vadd.f32 %v5316, %v5508
        %v5510 = vpop.f32.mrb[0].mxu0
        %v5511 = vadd.f32 %v5318, %v5510
        %v5512 = vpop.f32.mrb[0].mxu0
        %v5513 = vadd.f32 %v5320, %v5512
        %v5514 = vpop.f32.mrb[0].mxu0
        %v5515 = vadd.f32 %v5322, %v5514
        %5516 = vmatprep.mubr.bf16.mxu0 %v4407
        %5517 = vmatmul.mubr.bf16.gmra.mrb[0].mxu0 %v4406
        %v5518 = vpop.f32.mrb[0].mxu0
        %v5519 = vadd.f32 %v5326, %v5518
        %v5520 = vpop.f32.mrb[0].mxu0
        %v5521 = vadd.f32 %v5328, %v5520
        %v5522 = vpop.f32.mrb[0].mxu0
        %v5523 = vadd.f32 %v5330, %v5522
        %v5524 = vpop.f32.mrb[0].mxu0
        %v5525 = vadd.f32 %v5332, %v5524
        %5526 = vmatprep.mubr.bf16.mxu0 %v4411
        %5527 = vmatmul.mubr.bf16.gmra.mrb[0].mxu0 %v4410
        %v5528 = vpop.f32.mrb[0].mxu0
        %v5529 = vadd.f32 %v5336, %v5528
        %v5530 = vpop.f32.mrb[0].mxu0
        %v5531 = vadd.f32 %v5338, %v5530
        %v5532 = vpop.f32.mrb[0].mxu0
        %v5533 = vadd.f32 %v5340, %v5532
        %v5534 = vpop.f32.mrb[0].mxu0
        %v5535 = vadd.f32 %v5342, %v5534
        %5536 = vmatprep.mubr.bf16.mxu0 %v4415
        %5537 = vmatmul.mubr.bf16.gmra.mrb[0].mxu0 %v4414
        %v5538 = vpop.f32.mrb[0].mxu0
        %v5539 = vadd.f32 %v5346, %v5538
        %v5540 = vpop.f32.mrb[0].mxu0
        %v5541 = vadd.f32 %v5348, %v5540
        %v5542 = vpop.f32.mrb[0].mxu0
        %v5543 = vadd.f32 %v5350, %v5542
        %v5544 = vpop.f32.mrb[0].mxu0
        %v5545 = vadd.f32 %v5352, %v5544
        %5546 = vmatprep.mubr.bf16.mxu0 %v4419
        %5547 = vmatmul.mubr.bf16.gmra.mrb[0].mxu0 %v4418
        %v5548 = vpop.f32.mrb[0].mxu0
        %v5549 = vadd.f32 %v5356, %v5548
        %v5550 = vpop.f32.mrb[0].mxu0
        %v5551 = vadd.f32 %v5358, %v5550
        %v5552 = vpop.f32.mrb[0].mxu0
        %v5553 = vadd.f32 %v5360, %v5552
        %v5554 = vpop.f32.mrb[0].mxu0
        %v5555 = vadd.f32 %v5362, %v5554
        %5556 = vmatprep.mubr.bf16.mxu0 %v4423
        %5557 = vmatmul.mubr.bf16.gmra.mrb[0].mxu0 %v4422
        %v5558 = vpop.f32.mrb[0].mxu0
        %v5559 = vadd.f32 %v5366, %v5558
        %v5560 = vpop.f32.mrb[0].mxu0
        %v5561 = vadd.f32 %v5368, %v5560
        %v5562 = vpop.f32.mrb[0].mxu0
        %v5563 = vadd.f32 %v5370, %v5562
        %v5564 = vpop.f32.mrb[0].mxu0
        %v5565 = vadd.f32 %v5372, %v5564
        %5566 = vmatprep.mubr.bf16.mxu0 %v4427
        %5567 = vmatmul.mubr.bf16.gmra.mrb[0].mxu0 %v4426
        %v5568 = vpop.f32.mrb[0].mxu0
        %v5569 = vadd.f32 %v5376, %v5568
        %v5570 = vpop.f32.mrb[0].mxu0
        %v5571 = vadd.f32 %v5378, %v5570
        %v5572 = vpop.f32.mrb[0].mxu0
        %v5573 = vadd.f32 %v5380, %v5572
        %v5574 = vpop.f32.mrb[0].mxu0
        %v5575 = vadd.f32 %v5382, %v5574
        %5576 = vmatprep.mubr.bf16.mxu0 %v4431
        %5577 = vmatmul.mubr.bf16.gmra.mrb[0].mxu0 %v4430
        %v5578 = vpop.f32.mrb[0].mxu0
        %v5579 = vadd.f32 %v5386, %v5578
        %v5580 = vpop.f32.mrb[0].mxu0
        %v5581 = vadd.f32 %v5388, %v5580
        %v5582 = vpop.f32.mrb[0].mxu0
        %v5583 = vadd.f32 %v5390, %v5582
        %v5584 = vpop.f32.mrb[0].mxu0
        %v5585 = vadd.f32 %v5392, %v5584
        %5586 = vdwg.mxu0
        %5587 = vmatprep.subr.bf16.mxu0 %v4948
        %5588 = vmatpush1.bf16.msra.mxu0 %v4947
        %5589 = vmatprep.subr.bf16.mxu0 %v4952
        %5590 = vmatpush1.bf16.msra.mxu0 %v4951
        %5591 = vmatprep.subr.bf16.mxu0 %v4956
        %5592 = vmatpush1.bf16.msra.mxu0 %v4955
        %5593 = vmatprep.subr.bf16.mxu0 %v4960
        %5594 = vmatpush1.bf16.msra.mxu0 %v4959
        %5595 = vmatprep.subr.bf16.mxu0 %v4964
        %5596 = vmatpush1.bf16.msra.mxu0 %v4963
        %5597 = vmatprep.subr.bf16.mxu0 %v4968
        %5598 = vmatpush1.bf16.msra.mxu0 %v4967
        %5599 = vmatprep.subr.bf16.mxu0 %v4972
        %5600 = vmatpush1.bf16.msra.mxu0 %v4971
        %5601 = vmatprep.subr.bf16.mxu0 %v4976
        %5602 = vmatpush1.bf16.msra.mxu0 %v4975
        %5603 = vmatprep.subr.bf16.mxu0 %v4980
        %5604 = vmatpush1.bf16.msra.mxu0 %v4979
        %5605 = vmatprep.subr.bf16.mxu0 %v4984
        %5606 = vmatpush1.bf16.msra.mxu0 %v4983
        %5607 = vmatprep.subr.bf16.mxu0 %v4988
        %5608 = vmatpush1.bf16.msra.mxu0 %v4987
        %5609 = vmatprep.subr.bf16.mxu0 %v4992
        %5610 = vmatpush1.bf16.msra.mxu0 %v4991
        %5611 = vmatprep.subr.bf16.mxu0 %v4996
        %5612 = vmatpush1.bf16.msra.mxu0 %v4995
        %5613 = vmatprep.subr.bf16.mxu0 %v5000
        %5614 = vmatpush1.bf16.msra.mxu0 %v4999
        %5615 = vmatprep.subr.bf16.mxu0 %v5004
        %5616 = vmatpush1.bf16.msra.mxu0 %v5003
        %5617 = vmatprep.subr.bf16.mxu0 %v5008
        %5618 = vmatpush1.bf16.msra.mxu0 %v5007
        %5619 = vmatprep.mubr.bf16.mxu0 %v4369
        %5620 = vmatmul.mubr.bf16.gmra.mrb[0].mxu0 %v4368
        %v5621 = vpop.f32.mrb[0].mxu0
        %v5622 = vadd.f32 0.0, %v5621
        %v5623 = vpop.f32.mrb[0].mxu0
        %v5624 = vadd.f32 0.0, %v5623
        %v5625 = vpop.f32.mrb[0].mxu0
        %v5626 = vadd.f32 0.0, %v5625
        %v5627 = vpop.f32.mrb[0].mxu0
        %v5628 = vadd.f32 0.0, %v5627
        %5629 = vmatprep.mubr.bf16.mxu0 %v4373
        %5630 = vmatmul.mubr.bf16.gmra.mrb[0].mxu0 %v4372
        %v5631 = vpop.f32.mrb[0].mxu0
        %v5632 = vadd.f32 0.0, %v5631
        %v5633 = vpop.f32.mrb[0].mxu0
        %v5634 = vadd.f32 0.0, %v5633
        %v5635 = vpop.f32.mrb[0].mxu0
        %v5636 = vadd.f32 0.0, %v5635
        %v5637 = vpop.f32.mrb[0].mxu0
        %v5638 = vadd.f32 0.0, %v5637
        %5639 = vmatprep.mubr.bf16.mxu0 %v4377
        %5640 = vmatmul.mubr.bf16.gmra.mrb[0].mxu0 %v4376
        %v5641 = vpop.f32.mrb[0].mxu0
        %v5642 = vadd.f32 0.0, %v5641
        %v5643 = vpop.f32.mrb[0].mxu0
        %v5644 = vadd.f32 0.0, %v5643
        %v5645 = vpop.f32.mrb[0].mxu0
        %v5646 = vadd.f32 0.0, %v5645
        %v5647 = vpop.f32.mrb[0].mxu0
        %v5648 = vadd.f32 0.0, %v5647
        %5649 = vmatprep.mubr.bf16.mxu0 %v4381
        %5650 = vmatmul.mubr.bf16.gmra.mrb[0].mxu0 %v4380
        %v5651 = vpop.f32.mrb[0].mxu0
        %v5652 = vadd.f32 0.0, %v5651
        %v5653 = vpop.f32.mrb[0].mxu0
        %v5654 = vadd.f32 0.0, %v5653
        %v5655 = vpop.f32.mrb[0].mxu0
        %v5656 = vadd.f32 0.0, %v5655
        %v5657 = vpop.f32.mrb[0].mxu0
        %v5658 = vadd.f32 0.0, %v5657
        %5659 = vmatprep.mubr.bf16.mxu0 %v4385
        %5660 = vmatmul.mubr.bf16.gmra.mrb[0].mxu0 %v4384
        %v5661 = vpop.f32.mrb[0].mxu0
        %v5662 = vadd.f32 0.0, %v5661
        %v5663 = vpop.f32.mrb[0].mxu0
        %v5664 = vadd.f32 0.0, %v5663
        %v5665 = vpop.f32.mrb[0].mxu0
        %v5666 = vadd.f32 0.0, %v5665
        %v5667 = vpop.f32.mrb[0].mxu0
        %v5668 = vadd.f32 0.0, %v5667
        %5669 = vmatprep.mubr.bf16.mxu0 %v4389
        %5670 = vmatmul.mubr.bf16.gmra.mrb[0].mxu0 %v4388
        %v5671 = vpop.f32.mrb[0].mxu0
        %v5672 = vadd.f32 0.0, %v5671
        %v5673 = vpop.f32.mrb[0].mxu0
        %v5674 = vadd.f32 0.0, %v5673
        %v5675 = vpop.f32.mrb[0].mxu0
        %v5676 = vadd.f32 0.0, %v5675
        %v5677 = vpop.f32.mrb[0].mxu0
        %v5678 = vadd.f32 0.0, %v5677
        %5679 = vmatprep.mubr.bf16.mxu0 %v4393
        %5680 = vmatmul.mubr.bf16.gmra.mrb[0].mxu0 %v4392
        %v5681 = vpop.f32.mrb[0].mxu0
        %v5682 = vadd.f32 0.0, %v5681
        %v5683 = vpop.f32.mrb[0].mxu0
        %v5684 = vadd.f32 0.0, %v5683
        %v5685 = vpop.f32.mrb[0].mxu0
        %v5686 = vadd.f32 0.0, %v5685
        %v5687 = vpop.f32.mrb[0].mxu0
        %v5688 = vadd.f32 0.0, %v5687
        %5689 = vmatprep.mubr.bf16.mxu0 %v4397
        %5690 = vmatmul.mubr.bf16.gmra.mrb[0].mxu0 %v4396
        %v5691 = vpop.f32.mrb[0].mxu0
        %v5692 = vadd.f32 0.0, %v5691
        %v5693 = vpop.f32.mrb[0].mxu0
        %v5694 = vadd.f32 0.0, %v5693
        %v5695 = vpop.f32.mrb[0].mxu0
        %v5696 = vadd.f32 0.0, %v5695
        %v5697 = vpop.f32.mrb[0].mxu0
        %v5698 = vadd.f32 0.0, %v5697
        %5699 = vmatprep.mubr.bf16.mxu0 %v4401
        %5700 = vmatmul.mubr.bf16.gmra.mrb[0].mxu0 %v4400
        %v5701 = vpop.f32.mrb[0].mxu0
        %v5702 = vadd.f32 0.0, %v5701
        %v5703 = vpop.f32.mrb[0].mxu0
        %v5704 = vadd.f32 0.0, %v5703
        %v5705 = vpop.f32.mrb[0].mxu0
        %v5706 = vadd.f32 0.0, %v5705
        %v5707 = vpop.f32.mrb[0].mxu0
        %v5708 = vadd.f32 0.0, %v5707
        %5709 = vmatprep.mubr.bf16.mxu0 %v4405
        %5710 = vmatmul.mubr.bf16.gmra.mrb[0].mxu0 %v4404
        %v5711 = vpop.f32.mrb[0].mxu0
        %v5712 = vadd.f32 0.0, %v5711
        %v5713 = vpop.f32.mrb[0].mxu0
        %v5714 = vadd.f32 0.0, %v5713
        %v5715 = vpop.f32.mrb[0].mxu0
        %v5716 = vadd.f32 0.0, %v5715
        %v5717 = vpop.f32.mrb[0].mxu0
        %v5718 = vadd.f32 0.0, %v5717
        %5719 = vmatprep.mubr.bf16.mxu0 %v4409
        %5720 = vmatmul.mubr.bf16.gmra.mrb[0].mxu0 %v4408
        %v5721 = vpop.f32.mrb[0].mxu0
        %v5722 = vadd.f32 0.0, %v5721
        %v5723 = vpop.f32.mrb[0].mxu0
        %v5724 = vadd.f32 0.0, %v5723
        %v5725 = vpop.f32.mrb[0].mxu0
        %v5726 = vadd.f32 0.0, %v5725
        %v5727 = vpop.f32.mrb[0].mxu0
        %v5728 = vadd.f32 0.0, %v5727
        %5729 = vmatprep.mubr.bf16.mxu0 %v4413
        %5730 = vmatmul.mubr.bf16.gmra.mrb[0].mxu0 %v4412
        %v5731 = vpop.f32.mrb[0].mxu0
        %v5732 = vadd.f32 0.0, %v5731
        %v5733 = vpop.f32.mrb[0].mxu0
        %v5734 = vadd.f32 0.0, %v5733
        %v5735 = vpop.f32.mrb[0].mxu0
        %v5736 = vadd.f32 0.0, %v5735
        %v5737 = vpop.f32.mrb[0].mxu0
        %v5738 = vadd.f32 0.0, %v5737
        %5739 = vmatprep.mubr.bf16.mxu0 %v4417
        %5740 = vmatmul.mubr.bf16.gmra.mrb[0].mxu0 %v4416
        %v5741 = vpop.f32.mrb[0].mxu0
        %v5742 = vadd.f32 0.0, %v5741
        %v5743 = vpop.f32.mrb[0].mxu0
        %v5744 = vadd.f32 0.0, %v5743
        %v5745 = vpop.f32.mrb[0].mxu0
        %v5746 = vadd.f32 0.0, %v5745
        %v5747 = vpop.f32.mrb[0].mxu0
        %v5748 = vadd.f32 0.0, %v5747
        %5749 = vmatprep.mubr.bf16.mxu0 %v4421
        %5750 = vmatmul.mubr.bf16.gmra.mrb[0].mxu0 %v4420
        %v5751 = vpop.f32.mrb[0].mxu0
        %v5752 = vadd.f32 0.0, %v5751
        %v5753 = vpop.f32.mrb[0].mxu0
        %v5754 = vadd.f32 0.0, %v5753
        %v5755 = vpop.f32.mrb[0].mxu0
        %v5756 = vadd.f32 0.0, %v5755
        %v5757 = vpop.f32.mrb[0].mxu0
        %v5758 = vadd.f32 0.0, %v5757
        %5759 = vmatprep.mubr.bf16.mxu0 %v4425
        %5760 = vmatmul.mubr.bf16.gmra.mrb[0].mxu0 %v4424
        %v5761 = vpop.f32.mrb[0].mxu0
        %v5762 = vadd.f32 0.0, %v5761
        %v5763 = vpop.f32.mrb[0].mxu0
        %v5764 = vadd.f32 0.0, %v5763
        %v5765 = vpop.f32.mrb[0].mxu0
        %v5766 = vadd.f32 0.0, %v5765
        %v5767 = vpop.f32.mrb[0].mxu0
        %v5768 = vadd.f32 0.0, %v5767
        %5769 = vmatprep.mubr.bf16.mxu0 %v4429
        %5770 = vmatmul.mubr.bf16.gmra.mrb[0].mxu0 %v4428
        %v5771 = vpop.f32.mrb[0].mxu0
        %v5772 = vadd.f32 0.0, %v5771
        %v5773 = vpop.f32.mrb[0].mxu0
        %v5774 = vadd.f32 0.0, %v5773
        %v5775 = vpop.f32.mrb[0].mxu0
        %v5776 = vadd.f32 0.0, %v5775
        %v5777 = vpop.f32.mrb[0].mxu0
        %v5778 = vadd.f32 0.0, %v5777
        %5779 = vdwg.mxu0
        %5780 = vmatprep.subr.bf16.mxu0 %v5012
        %5781 = vmatpush1.bf16.msra.mxu0 %v5011
        %5782 = vmatprep.subr.bf16.mxu0 %v5016
        %5783 = vmatpush1.bf16.msra.mxu0 %v5015
        %5784 = vmatprep.subr.bf16.mxu0 %v5020
        %5785 = vmatpush1.bf16.msra.mxu0 %v5019
        %5786 = vmatprep.subr.bf16.mxu0 %v5024
        %5787 = vmatpush1.bf16.msra.mxu0 %v5023
        %5788 = vmatprep.subr.bf16.mxu0 %v5028
        %5789 = vmatpush1.bf16.msra.mxu0 %v5027
        %5790 = vmatprep.subr.bf16.mxu0 %v5032
        %5791 = vmatpush1.bf16.msra.mxu0 %v5031
        %5792 = vmatprep.subr.bf16.mxu0 %v5036
        %5793 = vmatpush1.bf16.msra.mxu0 %v5035
        %5794 = vmatprep.subr.bf16.mxu0 %v5040
        %5795 = vmatpush1.bf16.msra.mxu0 %v5039
        %5796 = vmatprep.subr.bf16.mxu0 %v5044
        %5797 = vmatpush1.bf16.msra.mxu0 %v5043
        %5798 = vmatprep.subr.bf16.mxu0 %v5048
        %5799 = vmatpush1.bf16.msra.mxu0 %v5047
        %5800 = vmatprep.subr.bf16.mxu0 %v5052
        %5801 = vmatpush1.bf16.msra.mxu0 %v5051
        %5802 = vmatprep.subr.bf16.mxu0 %v5056
        %5803 = vmatpush1.bf16.msra.mxu0 %v5055
        %5804 = vmatprep.subr.bf16.mxu0 %v5060
        %5805 = vmatpush1.bf16.msra.mxu0 %v5059
        %5806 = vmatprep.subr.bf16.mxu0 %v5064
        %5807 = vmatpush1.bf16.msra.mxu0 %v5063
        %5808 = vmatprep.subr.bf16.mxu0 %v5068
        %5809 = vmatpush1.bf16.msra.mxu0 %v5067
        %5810 = vmatprep.subr.bf16.mxu0 %v5072
        %5811 = vmatpush1.bf16.msra.mxu0 %v5071
        %5812 = vmatprep.mubr.bf16.mxu0 %v4371
        %5813 = vmatmul.mubr.bf16.gmra.mrb[0].mxu0 %v4370
        %v5814 = vpop.f32.mrb[0].mxu0
        %v5815 = vadd.f32 %v5622, %v5814
        %v5816 = vpop.f32.mrb[0].mxu0
        %v5817 = vadd.f32 %v5624, %v5816
        %v5818 = vpop.f32.mrb[0].mxu0
        %v5819 = vadd.f32 %v5626, %v5818
        %v5820 = vpop.f32.mrb[0].mxu0
        %v5821 = vadd.f32 %v5628, %v5820
        %5822 = vmatprep.mubr.bf16.mxu0 %v4375
        %5823 = vmatmul.mubr.bf16.gmra.mrb[0].mxu0 %v4374
        %v5824 = vpop.f32.mrb[0].mxu0
        %v5825 = vadd.f32 %v5632, %v5824
        %v5826 = vpop.f32.mrb[0].mxu0
        %v5827 = vadd.f32 %v5634, %v5826
        %v5828 = vpop.f32.mrb[0].mxu0
        %v5829 = vadd.f32 %v5636, %v5828
        %v5830 = vpop.f32.mrb[0].mxu0
        %v5831 = vadd.f32 %v5638, %v5830
        %5832 = vmatprep.mubr.bf16.mxu0 %v4379
        %5833 = vmatmul.mubr.bf16.gmra.mrb[0].mxu0 %v4378
        %v5834 = vpop.f32.mrb[0].mxu0
        %v5835 = vadd.f32 %v5642, %v5834
        %v5836 = vpop.f32.mrb[0].mxu0
        %v5837 = vadd.f32 %v5644, %v5836
        %v5838 = vpop.f32.mrb[0].mxu0
        %v5839 = vadd.f32 %v5646, %v5838
        %v5840 = vpop.f32.mrb[0].mxu0
        %v5841 = vadd.f32 %v5648, %v5840
        %5842 = vmatprep.mubr.bf16.mxu0 %v4383
        %5843 = vmatmul.mubr.bf16.gmra.mrb[0].mxu0 %v4382
        %v5844 = vpop.f32.mrb[0].mxu0
        %v5845 = vadd.f32 %v5652, %v5844
        %v5846 = vpop.f32.mrb[0].mxu0
        %v5847 = vadd.f32 %v5654, %v5846
        %v5848 = vpop.f32.mrb[0].mxu0
        %v5849 = vadd.f32 %v5656, %v5848
        %v5850 = vpop.f32.mrb[0].mxu0
        %v5851 = vadd.f32 %v5658, %v5850
        %5852 = vmatprep.mubr.bf16.mxu0 %v4387
        %5853 = vmatmul.mubr.bf16.gmra.mrb[0].mxu0 %v4386
        %v5854 = vpop.f32.mrb[0].mxu0
        %v5855 = vadd.f32 %v5662, %v5854
        %v5856 = vpop.f32.mrb[0].mxu0
        %v5857 = vadd.f32 %v5664, %v5856
        %v5858 = vpop.f32.mrb[0].mxu0
        %v5859 = vadd.f32 %v5666, %v5858
        %v5860 = vpop.f32.mrb[0].mxu0
        %v5861 = vadd.f32 %v5668, %v5860
        %5862 = vmatprep.mubr.bf16.mxu0 %v4391
        %5863 = vmatmul.mubr.bf16.gmra.mrb[0].mxu0 %v4390
        %v5864 = vpop.f32.mrb[0].mxu0
        %v5865 = vadd.f32 %v5672, %v5864
        %v5866 = vpop.f32.mrb[0].mxu0
        %v5867 = vadd.f32 %v5674, %v5866
        %v5868 = vpop.f32.mrb[0].mxu0
        %v5869 = vadd.f32 %v5676, %v5868
        %v5870 = vpop.f32.mrb[0].mxu0
        %v5871 = vadd.f32 %v5678, %v5870
        %5872 = vmatprep.mubr.bf16.mxu0 %v4395
        %5873 = vmatmul.mubr.bf16.gmra.mrb[0].mxu0 %v4394
        %v5874 = vpop.f32.mrb[0].mxu0
        %v5875 = vadd.f32 %v5682, %v5874
        %v5876 = vpop.f32.mrb[0].mxu0
        %v5877 = vadd.f32 %v5684, %v5876
        %v5878 = vpop.f32.mrb[0].mxu0
        %v5879 = vadd.f32 %v5686, %v5878
        %v5880 = vpop.f32.mrb[0].mxu0
        %v5881 = vadd.f32 %v5688, %v5880
        %5882 = vmatprep.mubr.bf16.mxu0 %v4399
        %5883 = vmatmul.mubr.bf16.gmra.mrb[0].mxu0 %v4398
        %v5884 = vpop.f32.mrb[0].mxu0
        %v5885 = vadd.f32 %v5692, %v5884
        %v5886 = vpop.f32.mrb[0].mxu0
        %v5887 = vadd.f32 %v5694, %v5886
        %v5888 = vpop.f32.mrb[0].mxu0
        %v5889 = vadd.f32 %v5696, %v5888
        %v5890 = vpop.f32.mrb[0].mxu0
        %v5891 = vadd.f32 %v5698, %v5890
        %5892 = vmatprep.mubr.bf16.mxu0 %v4403
        %5893 = vmatmul.mubr.bf16.gmra.mrb[0].mxu0 %v4402
        %v5894 = vpop.f32.mrb[0].mxu0
        %v5895 = vadd.f32 %v5702, %v5894
        %v5896 = vpop.f32.mrb[0].mxu0
        %v5897 = vadd.f32 %v5704, %v5896
        %v5898 = vpop.f32.mrb[0].mxu0
        %v5899 = vadd.f32 %v5706, %v5898
        %v5900 = vpop.f32.mrb[0].mxu0
        %v5901 = vadd.f32 %v5708, %v5900
        %5902 = vmatprep.mubr.bf16.mxu0 %v4407
        %5903 = vmatmul.mubr.bf16.gmra.mrb[0].mxu0 %v4406
        %v5904 = vpop.f32.mrb[0].mxu0
        %v5905 = vadd.f32 %v5712, %v5904
        %v5906 = vpop.f32.mrb[0].mxu0
        %v5907 = vadd.f32 %v5714, %v5906
        %v5908 = vpop.f32.mrb[0].mxu0
        %v5909 = vadd.f32 %v5716, %v5908
        %v5910 = vpop.f32.mrb[0].mxu0
        %v5911 = vadd.f32 %v5718, %v5910
        %5912 = vmatprep.mubr.bf16.mxu0 %v4411
        %5913 = vmatmul.mubr.bf16.gmra.mrb[0].mxu0 %v4410
        %v5914 = vpop.f32.mrb[0].mxu0
        %v5915 = vadd.f32 %v5722, %v5914
        %v5916 = vpop.f32.mrb[0].mxu0
        %v5917 = vadd.f32 %v5724, %v5916
        %v5918 = vpop.f32.mrb[0].mxu0
        %v5919 = vadd.f32 %v5726, %v5918
        %v5920 = vpop.f32.mrb[0].mxu0
        %v5921 = vadd.f32 %v5728, %v5920
        %5922 = vmatprep.mubr.bf16.mxu0 %v4415
        %5923 = vmatmul.mubr.bf16.gmra.mrb[0].mxu0 %v4414
        %v5924 = vpop.f32.mrb[0].mxu0
        %v5925 = vadd.f32 %v5732, %v5924
        %v5926 = vpop.f32.mrb[0].mxu0
        %v5927 = vadd.f32 %v5734, %v5926
        %v5928 = vpop.f32.mrb[0].mxu0
        %v5929 = vadd.f32 %v5736, %v5928
        %v5930 = vpop.f32.mrb[0].mxu0
        %v5931 = vadd.f32 %v5738, %v5930
        %5932 = vmatprep.mubr.bf16.mxu0 %v4419
        %5933 = vmatmul.mubr.bf16.gmra.mrb[0].mxu0 %v4418
        %v5934 = vpop.f32.mrb[0].mxu0
        %v5935 = vadd.f32 %v5742, %v5934
        %v5936 = vpop.f32.mrb[0].mxu0
        %v5937 = vadd.f32 %v5744, %v5936
        %v5938 = vpop.f32.mrb[0].mxu0
        %v5939 = vadd.f32 %v5746, %v5938
        %v5940 = vpop.f32.mrb[0].mxu0
        %v5941 = vadd.f32 %v5748, %v5940
        %5942 = vmatprep.mubr.bf16.mxu0 %v4423
        %5943 = vmatmul.mubr.bf16.gmra.mrb[0].mxu0 %v4422
        %v5944 = vpop.f32.mrb[0].mxu0
        %v5945 = vadd.f32 %v5752, %v5944
        %v5946 = vpop.f32.mrb[0].mxu0
        %v5947 = vadd.f32 %v5754, %v5946
        %v5948 = vpop.f32.mrb[0].mxu0
        %v5949 = vadd.f32 %v5756, %v5948
        %v5950 = vpop.f32.mrb[0].mxu0
        %v5951 = vadd.f32 %v5758, %v5950
        %5952 = vmatprep.mubr.bf16.mxu0 %v4427
        %5953 = vmatmul.mubr.bf16.gmra.mrb[0].mxu0 %v4426
        %v5954 = vpop.f32.mrb[0].mxu0
        %v5955 = vadd.f32 %v5762, %v5954
        %v5956 = vpop.f32.mrb[0].mxu0
        %v5957 = vadd.f32 %v5764, %v5956
        %v5958 = vpop.f32.mrb[0].mxu0
        %v5959 = vadd.f32 %v5766, %v5958
        %v5960 = vpop.f32.mrb[0].mxu0
        %v5961 = vadd.f32 %v5768, %v5960
        %5962 = vmatprep.mubr.bf16.mxu0 %v4431
        %5963 = vmatmul.mubr.bf16.gmra.mrb[0].mxu0 %v4430
        %v5964 = vpop.f32.mrb[0].mxu0
        %v5965 = vadd.f32 %v5772, %v5964
        %v5966 = vpop.f32.mrb[0].mxu0
        %v5967 = vadd.f32 %v5774, %v5966
        %v5968 = vpop.f32.mrb[0].mxu0
        %v5969 = vadd.f32 %v5776, %v5968
        %v5970 = vpop.f32.mrb[0].mxu0
        %v5971 = vadd.f32 %v5778, %v5970
        %5972 = vdwg.mxu0
        %v5973 = vpack.c.bf16 %v5433, %v5429
        %v5974 = vpack.c.bf16 %v5435, %v5431
        %v5975 = vpack.c.bf16 %v5819, %v5815
        %v5976 = vpack.c.bf16 %v5821, %v5817
        %v5977 = vpack.c.bf16 %v5443, %v5439
        %v5978 = vpack.c.bf16 %v5445, %v5441
        %v5979 = vpack.c.bf16 %v5829, %v5825
        %v5980 = vpack.c.bf16 %v5831, %v5827
        %v5981 = vpack.c.bf16 %v5453, %v5449
        %v5982 = vpack.c.bf16 %v5455, %v5451
        %v5983 = vpack.c.bf16 %v5839, %v5835
        %v5984 = vpack.c.bf16 %v5841, %v5837
        %v5985 = vpack.c.bf16 %v5463, %v5459
        %v5986 = vpack.c.bf16 %v5465, %v5461
        %v5987 = vpack.c.bf16 %v5849, %v5845
        %v5988 = vpack.c.bf16 %v5851, %v5847
        %v5989 = vpack.c.bf16 %v5473, %v5469
        %v5990 = vpack.c.bf16 %v5475, %v5471
        %v5991 = vpack.c.bf16 %v5859, %v5855
        %v5992 = vpack.c.bf16 %v5861, %v5857
        %v5993 = vpack.c.bf16 %v5483, %v5479
        %v5994 = vpack.c.bf16 %v5485, %v5481
        %v5995 = vpack.c.bf16 %v5869, %v5865
        %v5996 = vpack.c.bf16 %v5871, %v5867
        %v5997 = vpack.c.bf16 %v5493, %v5489
        %v5998 = vpack.c.bf16 %v5495, %v5491
        %v5999 = vpack.c.bf16 %v5879, %v5875
        %v6000 = vpack.c.bf16 %v5881, %v5877
        %v6001 = vpack.c.bf16 %v5503, %v5499
        %v6002 = vpack.c.bf16 %v5505, %v5501
        %v6003 = vpack.c.bf16 %v5889, %v5885
        %v6004 = vpack.c.bf16 %v5891, %v5887
        %v6005 = vpack.c.bf16 %v5513, %v5509
        %v6006 = vpack.c.bf16 %v5515, %v5511
        %v6007 = vpack.c.bf16 %v5899, %v5895
        %v6008 = vpack.c.bf16 %v5901, %v5897
        %v6009 = vpack.c.bf16 %v5523, %v5519
        %v6010 = vpack.c.bf16 %v5525, %v5521
        %v6011 = vpack.c.bf16 %v5909, %v5905
        %v6012 = vpack.c.bf16 %v5911, %v5907
        %v6013 = vpack.c.bf16 %v5533, %v5529
        %v6014 = vpack.c.bf16 %v5535, %v5531
        %v6015 = vpack.c.bf16 %v5919, %v5915
        %v6016 = vpack.c.bf16 %v5921, %v5917
        %v6017 = vpack.c.bf16 %v5543, %v5539
        %v6018 = vpack.c.bf16 %v5545, %v5541
        %v6019 = vpack.c.bf16 %v5929, %v5925
        %v6020 = vpack.c.bf16 %v5931, %v5927
        %v6021 = vpack.c.bf16 %v5553, %v5549
        %v6022 = vpack.c.bf16 %v5555, %v5551
        %v6023 = vpack.c.bf16 %v5939, %v5935
        %v6024 = vpack.c.bf16 %v5941, %v5937
        %v6025 = vpack.c.bf16 %v5563, %v5559
        %v6026 = vpack.c.bf16 %v5565, %v5561
        %v6027 = vpack.c.bf16 %v5949, %v5945
        %v6028 = vpack.c.bf16 %v5951, %v5947
        %v6029 = vpack.c.bf16 %v5573, %v5569
        %v6030 = vpack.c.bf16 %v5575, %v5571
        %v6031 = vpack.c.bf16 %v5959, %v5955
        %v6032 = vpack.c.bf16 %v5961, %v5957
        %v6033 = vpack.c.bf16 %v5583, %v5579
        %v6034 = vpack.c.bf16 %v5585, %v5581
        %v6035 = vpack.c.bf16 %v5969, %v5965
        %v6036 = vpack.c.bf16 %v5971, %v5967
        %v6039 = vunpack.c.l.s4 1966171168
        %v6040 = vunpack.c.0.s8 %v6039
        %v6041 = vlaneseq
        %v6042 = vshrl.u32 %v6041, 7
        %v6043 = vsub.s32 %v6040, %v6042
        %v6044 = vrot.slane %v4560, %v6043
        %v6045 = vcombine.high %v6044, %v6044
        %v6047 = vunpack.c.l.s4 1966171168
        %v6048 = vunpack.c.0.s8 %v6047
        %v6049 = vlaneseq
        %v6050 = vshrl.u32 %v6049, 7
        %v6051 = vsub.s32 %v6048, %v6050
        %v6052 = vrot.slane %v6044, %v6051
        %v6054 = vunpack.c.l.s4 1966171168
        %v6055 = vunpack.c.0.s8 %v6054
        %v6056 = vlaneseq
        %v6057 = vshrl.u32 %v6056, 7
        %v6058 = vsub.s32 %v6055, %v6057
        %v6059 = vrot.slane %v6045, %v6058
        %v6060 = vcombine.high %v6052, %v6052
        %v6061 = vcombine.high %v6059, %v6059
        %v6063 = vpack.i.b16 %v6052, %v6052
        %v6065 = vlaneseq
        %v6066 = vshrl.u32 %v6065, 7
        %v6067 = vsub.s32 0, %v6066
        %v6068 = vrot.slane %v6063, %v6067
        %v6070 = vpack.i.b16 %v6059, %v6059
        %v6072 = vlaneseq
        %v6073 = vshrl.u32 %v6072, 7
        %v6074 = vsub.s32 0, %v6073
        %v6075 = vrot.slane %v6070, %v6074
        %v6077 = vpack.i.b16 %v6060, %v6060
        %v6079 = vlaneseq
        %v6080 = vshrl.u32 %v6079, 7
        %v6081 = vsub.s32 0, %v6080
        %v6082 = vrot.slane %v6077, %v6081
        %v6084 = vpack.i.b16 %v6061, %v6061
        %v6086 = vlaneseq
        %v6087 = vshrl.u32 %v6086, 7
        %v6088 = vsub.s32 0, %v6087
        %v6089 = vrot.slane %v6084, %v6088
        %v6090 = vadd.bf16 %v5973, %v6068
        %v6091 = vadd.bf16 %v5974, %v6075
        %v6092 = vadd.bf16 %v5975, %v6082
        %v6093 = vadd.bf16 %v5976, %v6089
        %v6094 = vadd.bf16 %v5977, %v6068
        %v6095 = vadd.bf16 %v5978, %v6075
        %v6096 = vadd.bf16 %v5979, %v6082
        %v6097 = vadd.bf16 %v5980, %v6089
        %v6098 = vadd.bf16 %v5981, %v6068
        %v6099 = vadd.bf16 %v5982, %v6075
        %v6100 = vadd.bf16 %v5983, %v6082
        %v6101 = vadd.bf16 %v5984, %v6089
        %v6102 = vadd.bf16 %v5985, %v6068
        %v6103 = vadd.bf16 %v5986, %v6075
        %v6104 = vadd.bf16 %v5987, %v6082
        %v6105 = vadd.bf16 %v5988, %v6089
        %v6106 = vadd.bf16 %v5989, %v6068
        %v6107 = vadd.bf16 %v5990, %v6075
        %v6108 = vadd.bf16 %v5991, %v6082
        %v6109 = vadd.bf16 %v5992, %v6089
        %v6110 = vadd.bf16 %v5993, %v6068
        %v6111 = vadd.bf16 %v5994, %v6075
        %v6112 = vadd.bf16 %v5995, %v6082
        %v6113 = vadd.bf16 %v5996, %v6089
        %v6114 = vadd.bf16 %v5997, %v6068
        %v6115 = vadd.bf16 %v5998, %v6075
        %v6116 = vadd.bf16 %v5999, %v6082
        %v6117 = vadd.bf16 %v6000, %v6089
        %v6118 = vadd.bf16 %v6001, %v6068
        %v6119 = vadd.bf16 %v6002, %v6075
        %v6120 = vadd.bf16 %v6003, %v6082
        %v6121 = vadd.bf16 %v6004, %v6089
        %v6122 = vadd.bf16 %v6005, %v6068
        %v6123 = vadd.bf16 %v6006, %v6075
        %v6124 = vadd.bf16 %v6007, %v6082
        %v6125 = vadd.bf16 %v6008, %v6089
        %v6126 = vadd.bf16 %v6009, %v6068
        %v6127 = vadd.bf16 %v6010, %v6075
        %v6128 = vadd.bf16 %v6011, %v6082
        %v6129 = vadd.bf16 %v6012, %v6089
        %v6130 = vadd.bf16 %v6013, %v6068
        %v6131 = vadd.bf16 %v6014, %v6075
        %v6132 = vadd.bf16 %v6015, %v6082
        %v6133 = vadd.bf16 %v6016, %v6089
        %v6134 = vadd.bf16 %v6017, %v6068
        %v6135 = vadd.bf16 %v6018, %v6075
        %v6136 = vadd.bf16 %v6019, %v6082
        %v6137 = vadd.bf16 %v6020, %v6089
        %v6138 = vadd.bf16 %v6021, %v6068
        %v6139 = vadd.bf16 %v6022, %v6075
        %v6140 = vadd.bf16 %v6023, %v6082
        %v6141 = vadd.bf16 %v6024, %v6089
        %v6142 = vadd.bf16 %v6025, %v6068
        %v6143 = vadd.bf16 %v6026, %v6075
        %v6144 = vadd.bf16 %v6027, %v6082
        %v6145 = vadd.bf16 %v6028, %v6089
        %v6146 = vadd.bf16 %v6029, %v6068
        %v6147 = vadd.bf16 %v6030, %v6075
        %v6148 = vadd.bf16 %v6031, %v6082
        %v6149 = vadd.bf16 %v6032, %v6089
        %v6150 = vadd.bf16 %v6033, %v6068
        %v6151 = vadd.bf16 %v6034, %v6075
        %v6152 = vadd.bf16 %v6035, %v6082
        %v6153 = vadd.bf16 %v6036, %v6089
        %v6154 = vmax.bf16 %v6090, 0
        %v6155 = vmax.bf16 %v6091, 0
        %v6156 = vmax.bf16 %v6092, 0
        %v6157 = vmax.bf16 %v6093, 0
        %v6158 = vmax.bf16 %v6094, 0
        %v6159 = vmax.bf16 %v6095, 0
        %v6160 = vmax.bf16 %v6096, 0
        %v6161 = vmax.bf16 %v6097, 0
        %v6162 = vmax.bf16 %v6098, 0
        %v6163 = vmax.bf16 %v6099, 0
        %v6164 = vmax.bf16 %v6100, 0
        %v6165 = vmax.bf16 %v6101, 0
        %v6166 = vmax.bf16 %v6102, 0
        %v6167 = vmax.bf16 %v6103, 0
        %v6168 = vmax.bf16 %v6104, 0
        %v6169 = vmax.bf16 %v6105, 0
        %v6170 = vmax.bf16 %v6106, 0
        %v6171 = vmax.bf16 %v6107, 0
        %v6172 = vmax.bf16 %v6108, 0
        %v6173 = vmax.bf16 %v6109, 0
        %v6174 = vmax.bf16 %v6110, 0
        %v6175 = vmax.bf16 %v6111, 0
        %v6176 = vmax.bf16 %v6112, 0
        %v6177 = vmax.bf16 %v6113, 0
        %v6178 = vmax.bf16 %v6114, 0
        %v6179 = vmax.bf16 %v6115, 0
        %v6180 = vmax.bf16 %v6116, 0
        %v6181 = vmax.bf16 %v6117, 0
        %v6182 = vmax.bf16 %v6118, 0
        %v6183 = vmax.bf16 %v6119, 0
        %v6184 = vmax.bf16 %v6120, 0
        %v6185 = vmax.bf16 %v6121, 0
        %v6186 = vmax.bf16 %v6122, 0
        %v6187 = vmax.bf16 %v6123, 0
        %v6188 = vmax.bf16 %v6124, 0
        %v6189 = vmax.bf16 %v6125, 0
        %v6190 = vmax.bf16 %v6126, 0
        %v6191 = vmax.bf16 %v6127, 0
        %v6192 = vmax.bf16 %v6128, 0
        %v6193 = vmax.bf16 %v6129, 0
        %v6194 = vmax.bf16 %v6130, 0
        %v6195 = vmax.bf16 %v6131, 0
        %v6196 = vmax.bf16 %v6132, 0
        %v6197 = vmax.bf16 %v6133, 0
        %v6198 = vmax.bf16 %v6134, 0
        %v6199 = vmax.bf16 %v6135, 0
        %v6200 = vmax.bf16 %v6136, 0
        %v6201 = vmax.bf16 %v6137, 0
        %v6202 = vmax.bf16 %v6138, 0
        %v6203 = vmax.bf16 %v6139, 0
        %v6204 = vmax.bf16 %v6140, 0
        %v6205 = vmax.bf16 %v6141, 0
        %v6206 = vmax.bf16 %v6142, 0
        %v6207 = vmax.bf16 %v6143, 0
        %v6208 = vmax.bf16 %v6144, 0
        %v6209 = vmax.bf16 %v6145, 0
        %v6210 = vmax.bf16 %v6146, 0
        %v6211 = vmax.bf16 %v6147, 0
        %v6212 = vmax.bf16 %v6148, 0
        %v6213 = vmax.bf16 %v6149, 0
        %v6214 = vmax.bf16 %v6150, 0
        %v6215 = vmax.bf16 %v6151, 0
        %v6216 = vmax.bf16 %v6152, 0
        %v6217 = vmax.bf16 %v6153, 0
        %v6218 = vld [vmem:[#allocation7] sm:$0xff]
        %v6219 = vld [vmem:[#allocation7 + $0x8] sm:$0xff]
        %v6220 = vld [vmem:[#allocation7 + $0x10] sm:$0xff]
        %v6221 = vld [vmem:[#allocation7 + $0x18] sm:$0xff]
        %v6222 = vld [vmem:[#allocation7 + $0x20] sm:$0xff]
        %v6223 = vld [vmem:[#allocation7 + $0x28] sm:$0xff]
        %v6224 = vld [vmem:[#allocation7 + $0x30] sm:$0xff]
        %v6225 = vld [vmem:[#allocation7 + $0x38] sm:$0xff]
        %v6226 = vld [vmem:[#allocation7 + $0x40] sm:$0xff]
        %v6227 = vld [vmem:[#allocation7 + $0x48] sm:$0xff]
        %v6228 = vld [vmem:[#allocation7 + $0x50] sm:$0xff]
        %v6229 = vld [vmem:[#allocation7 + $0x58] sm:$0xff]
        %v6230 = vld [vmem:[#allocation7 + $0x60] sm:$0xff]
        %v6231 = vld [vmem:[#allocation7 + $0x68] sm:$0xff]
        %v6232 = vld [vmem:[#allocation7 + $0x70] sm:$0xff]
        %v6233 = vld [vmem:[#allocation7 + $0x78] sm:$0xff]
        %v6234 = vld [vmem:[#allocation7 + $0x80] sm:$0xff]
        %v6235 = vld [vmem:[#allocation7 + $0x88] sm:$0xff]
        %v6236 = vld [vmem:[#allocation7 + $0x90] sm:$0xff]
        %v6237 = vld [vmem:[#allocation7 + $0x98] sm:$0xff]
        %v6238 = vld [vmem:[#allocation7 + $0xa0] sm:$0xff]
        %v6239 = vld [vmem:[#allocation7 + $0xa8] sm:$0xff]
        %v6240 = vld [vmem:[#allocation7 + $0xb0] sm:$0xff]
        %v6241 = vld [vmem:[#allocation7 + $0xb8] sm:$0xff]
        %v6242 = vld [vmem:[#allocation7 + $0xc0] sm:$0xff]
        %v6243 = vld [vmem:[#allocation7 + $0xc8] sm:$0xff]
        %v6244 = vld [vmem:[#allocation7 + $0xd0] sm:$0xff]
        %v6245 = vld [vmem:[#allocation7 + $0xd8] sm:$0xff]
        %v6246 = vld [vmem:[#allocation7 + $0xe0] sm:$0xff]
        %v6247 = vld [vmem:[#allocation7 + $0xe8] sm:$0xff]
        %v6248 = vld [vmem:[#allocation7 + $0xf0] sm:$0xff]
        %v6249 = vld [vmem:[#allocation7 + $0xf8] sm:$0xff]
        %v6250 = vld [vmem:[#allocation7 + $0x100] sm:$0xff]
        %v6251 = vld [vmem:[#allocation7 + $0x108] sm:$0xff]
        %v6252 = vld [vmem:[#allocation7 + $0x110] sm:$0xff]
        %v6253 = vld [vmem:[#allocation7 + $0x118] sm:$0xff]
        %v6254 = vld [vmem:[#allocation7 + $0x120] sm:$0xff]
        %v6255 = vld [vmem:[#allocation7 + $0x128] sm:$0xff]
        %v6256 = vld [vmem:[#allocation7 + $0x130] sm:$0xff]
        %v6257 = vld [vmem:[#allocation7 + $0x138] sm:$0xff]
        %v6258 = vld [vmem:[#allocation7 + $0x140] sm:$0xff]
        %v6259 = vld [vmem:[#allocation7 + $0x148] sm:$0xff]
        %v6260 = vld [vmem:[#allocation7 + $0x150] sm:$0xff]
        %v6261 = vld [vmem:[#allocation7 + $0x158] sm:$0xff]
        %v6262 = vld [vmem:[#allocation7 + $0x160] sm:$0xff]
        %v6263 = vld [vmem:[#allocation7 + $0x168] sm:$0xff]
        %v6264 = vld [vmem:[#allocation7 + $0x170] sm:$0xff]
        %v6265 = vld [vmem:[#allocation7 + $0x178] sm:$0xff]
        %v6266 = vld [vmem:[#allocation7 + $0x180] sm:$0xff]
        %v6267 = vld [vmem:[#allocation7 + $0x188] sm:$0xff]
        %v6268 = vld [vmem:[#allocation7 + $0x190] sm:$0xff]
        %v6269 = vld [vmem:[#allocation7 + $0x198] sm:$0xff]
        %v6270 = vld [vmem:[#allocation7 + $0x1a0] sm:$0xff]
        %v6271 = vld [vmem:[#allocation7 + $0x1a8] sm:$0xff]
        %v6272 = vld [vmem:[#allocation7 + $0x1b0] sm:$0xff]
        %v6273 = vld [vmem:[#allocation7 + $0x1b8] sm:$0xff]
        %v6274 = vld [vmem:[#allocation7 + $0x1c0] sm:$0xff]
        %v6275 = vld [vmem:[#allocation7 + $0x1c8] sm:$0xff]
        %v6276 = vld [vmem:[#allocation7 + $0x1d0] sm:$0xff]
        %v6277 = vld [vmem:[#allocation7 + $0x1d8] sm:$0xff]
        %v6278 = vld [vmem:[#allocation7 + $0x1e0] sm:$0xff]
        %v6279 = vld [vmem:[#allocation7 + $0x1e8] sm:$0xff]
        %v6280 = vld [vmem:[#allocation7 + $0x1f0] sm:$0xff]
        %v6281 = vld [vmem:[#allocation7 + $0x1f8] sm:$0xff]
        %v6282 = vld [vmem:[#allocation7 + $0x200] sm:$0xff]
        %v6283 = vld [vmem:[#allocation7 + $0x208] sm:$0xff]
        %v6284 = vld [vmem:[#allocation7 + $0x210] sm:$0xff]
        %v6285 = vld [vmem:[#allocation7 + $0x218] sm:$0xff]
        %v6286 = vld [vmem:[#allocation7 + $0x220] sm:$0xff]
        %v6287 = vld [vmem:[#allocation7 + $0x228] sm:$0xff]
        %v6288 = vld [vmem:[#allocation7 + $0x230] sm:$0xff]
        %v6289 = vld [vmem:[#allocation7 + $0x238] sm:$0xff]
        %v6290 = vld [vmem:[#allocation7 + $0x240] sm:$0xff]
        %v6291 = vld [vmem:[#allocation7 + $0x248] sm:$0xff]
        %v6292 = vld [vmem:[#allocation7 + $0x250] sm:$0xff]
        %v6293 = vld [vmem:[#allocation7 + $0x258] sm:$0xff]
        %v6294 = vld [vmem:[#allocation7 + $0x260] sm:$0xff]
        %v6295 = vld [vmem:[#allocation7 + $0x268] sm:$0xff]
        %v6296 = vld [vmem:[#allocation7 + $0x270] sm:$0xff]
        %v6297 = vld [vmem:[#allocation7 + $0x278] sm:$0xff]
        %v6298 = vld [vmem:[#allocation7 + $0x280] sm:$0xff]
        %v6299 = vld [vmem:[#allocation7 + $0x288] sm:$0xff]
        %v6300 = vld [vmem:[#allocation7 + $0x290] sm:$0xff]
        %v6301 = vld [vmem:[#allocation7 + $0x298] sm:$0xff]
        %v6302 = vld [vmem:[#allocation7 + $0x2a0] sm:$0xff]
        %v6303 = vld [vmem:[#allocation7 + $0x2a8] sm:$0xff]
        %v6304 = vld [vmem:[#allocation7 + $0x2b0] sm:$0xff]
        %v6305 = vld [vmem:[#allocation7 + $0x2b8] sm:$0xff]
        %v6306 = vld [vmem:[#allocation7 + $0x2c0] sm:$0xff]
        %v6307 = vld [vmem:[#allocation7 + $0x2c8] sm:$0xff]
        %v6308 = vld [vmem:[#allocation7 + $0x2d0] sm:$0xff]
        %v6309 = vld [vmem:[#allocation7 + $0x2d8] sm:$0xff]
        %v6310 = vld [vmem:[#allocation7 + $0x2e0] sm:$0xff]
        %v6311 = vld [vmem:[#allocation7 + $0x2e8] sm:$0xff]
        %v6312 = vld [vmem:[#allocation7 + $0x2f0] sm:$0xff]
        %v6313 = vld [vmem:[#allocation7 + $0x2f8] sm:$0xff]
        %v6314 = vld [vmem:[#allocation7 + $0x300] sm:$0xff]
        %v6315 = vld [vmem:[#allocation7 + $0x308] sm:$0xff]
        %v6316 = vld [vmem:[#allocation7 + $0x310] sm:$0xff]
        %v6317 = vld [vmem:[#allocation7 + $0x318] sm:$0xff]
        %v6318 = vld [vmem:[#allocation7 + $0x320] sm:$0xff]
        %v6319 = vld [vmem:[#allocation7 + $0x328] sm:$0xff]
        %v6320 = vld [vmem:[#allocation7 + $0x330] sm:$0xff]
        %v6321 = vld [vmem:[#allocation7 + $0x338] sm:$0xff]
        %v6322 = vld [vmem:[#allocation7 + $0x340] sm:$0xff]
        %v6323 = vld [vmem:[#allocation7 + $0x348] sm:$0xff]
        %v6324 = vld [vmem:[#allocation7 + $0x350] sm:$0xff]
        %v6325 = vld [vmem:[#allocation7 + $0x358] sm:$0xff]
        %v6326 = vld [vmem:[#allocation7 + $0x360] sm:$0xff]
        %v6327 = vld [vmem:[#allocation7 + $0x368] sm:$0xff]
        %v6328 = vld [vmem:[#allocation7 + $0x370] sm:$0xff]
        %v6329 = vld [vmem:[#allocation7 + $0x378] sm:$0xff]
        %v6330 = vld [vmem:[#allocation7 + $0x380] sm:$0xff]
        %v6331 = vld [vmem:[#allocation7 + $0x388] sm:$0xff]
        %v6332 = vld [vmem:[#allocation7 + $0x390] sm:$0xff]
        %v6333 = vld [vmem:[#allocation7 + $0x398] sm:$0xff]
        %v6334 = vld [vmem:[#allocation7 + $0x3a0] sm:$0xff]
        %v6335 = vld [vmem:[#allocation7 + $0x3a8] sm:$0xff]
        %v6336 = vld [vmem:[#allocation7 + $0x3b0] sm:$0xff]
        %v6337 = vld [vmem:[#allocation7 + $0x3b8] sm:$0xff]
        %v6338 = vld [vmem:[#allocation7 + $0x3c0] sm:$0xff]
        %v6339 = vld [vmem:[#allocation7 + $0x3c8] sm:$0xff]
        %v6340 = vld [vmem:[#allocation7 + $0x3d0] sm:$0xff]
        %v6341 = vld [vmem:[#allocation7 + $0x3d8] sm:$0xff]
        %v6342 = vld [vmem:[#allocation7 + $0x3e0] sm:$0xff]
        %v6343 = vld [vmem:[#allocation7 + $0x3e8] sm:$0xff]
        %v6344 = vld [vmem:[#allocation7 + $0x3f0] sm:$0xff]
        %v6345 = vld [vmem:[#allocation7 + $0x3f8] sm:$0xff]
        %v6346 = vld [vmem:[%s12] sm:$0xf]
        %v6475 = vunpack.c.l.b16 %v6218
        %v6476 = vunpack.c.h.b16 %v6218
        %v6477 = vunpack.c.l.b16 %v6219
        %v6478 = vunpack.c.h.b16 %v6219
        %v6479 = vunpack.c.l.b16 %v6220
        %v6480 = vunpack.c.h.b16 %v6220
        %v6481 = vunpack.c.l.b16 %v6221
        %v6482 = vunpack.c.h.b16 %v6221
        %v6483 = vunpack.c.l.b16 %v6222
        %v6484 = vunpack.c.h.b16 %v6222
        %v6485 = vunpack.c.l.b16 %v6223
        %v6486 = vunpack.c.h.b16 %v6223
        %v6487 = vunpack.c.l.b16 %v6224
        %v6488 = vunpack.c.h.b16 %v6224
        %v6489 = vunpack.c.l.b16 %v6225
        %v6490 = vunpack.c.h.b16 %v6225
        %v6491 = vunpack.c.l.b16 %v6226
        %v6492 = vunpack.c.h.b16 %v6226
        %v6493 = vunpack.c.l.b16 %v6227
        %v6494 = vunpack.c.h.b16 %v6227
        %v6495 = vunpack.c.l.b16 %v6228
        %v6496 = vunpack.c.h.b16 %v6228
        %v6497 = vunpack.c.l.b16 %v6229
        %v6498 = vunpack.c.h.b16 %v6229
        %v6499 = vunpack.c.l.b16 %v6230
        %v6500 = vunpack.c.h.b16 %v6230
        %v6501 = vunpack.c.l.b16 %v6231
        %v6502 = vunpack.c.h.b16 %v6231
        %v6503 = vunpack.c.l.b16 %v6232
        %v6504 = vunpack.c.h.b16 %v6232
        %v6505 = vunpack.c.l.b16 %v6233
        %v6506 = vunpack.c.h.b16 %v6233
        %v6507 = vunpack.c.l.b16 %v6234
        %v6508 = vunpack.c.h.b16 %v6234
        %v6509 = vunpack.c.l.b16 %v6235
        %v6510 = vunpack.c.h.b16 %v6235
        %v6511 = vunpack.c.l.b16 %v6236
        %v6512 = vunpack.c.h.b16 %v6236
        %v6513 = vunpack.c.l.b16 %v6237
        %v6514 = vunpack.c.h.b16 %v6237
        %v6515 = vunpack.c.l.b16 %v6238
        %v6516 = vunpack.c.h.b16 %v6238
        %v6517 = vunpack.c.l.b16 %v6239
        %v6518 = vunpack.c.h.b16 %v6239
        %v6519 = vunpack.c.l.b16 %v6240
        %v6520 = vunpack.c.h.b16 %v6240
        %v6521 = vunpack.c.l.b16 %v6241
        %v6522 = vunpack.c.h.b16 %v6241
        %v6523 = vunpack.c.l.b16 %v6242
        %v6524 = vunpack.c.h.b16 %v6242
        %v6525 = vunpack.c.l.b16 %v6243
        %v6526 = vunpack.c.h.b16 %v6243
        %v6527 = vunpack.c.l.b16 %v6244
        %v6528 = vunpack.c.h.b16 %v6244
        %v6529 = vunpack.c.l.b16 %v6245
        %v6530 = vunpack.c.h.b16 %v6245
        %v6531 = vunpack.c.l.b16 %v6246
        %v6532 = vunpack.c.h.b16 %v6246
        %v6533 = vunpack.c.l.b16 %v6247
        %v6534 = vunpack.c.h.b16 %v6247
        %v6535 = vunpack.c.l.b16 %v6248
        %v6536 = vunpack.c.h.b16 %v6248
        %v6537 = vunpack.c.l.b16 %v6249
        %v6538 = vunpack.c.h.b16 %v6249
        %v6539 = vunpack.c.l.b16 %v6250
        %v6540 = vunpack.c.h.b16 %v6250
        %v6541 = vunpack.c.l.b16 %v6251
        %v6542 = vunpack.c.h.b16 %v6251
        %v6543 = vunpack.c.l.b16 %v6252
        %v6544 = vunpack.c.h.b16 %v6252
        %v6545 = vunpack.c.l.b16 %v6253
        %v6546 = vunpack.c.h.b16 %v6253
        %v6547 = vunpack.c.l.b16 %v6254
        %v6548 = vunpack.c.h.b16 %v6254
        %v6549 = vunpack.c.l.b16 %v6255
        %v6550 = vunpack.c.h.b16 %v6255
        %v6551 = vunpack.c.l.b16 %v6256
        %v6552 = vunpack.c.h.b16 %v6256
        %v6553 = vunpack.c.l.b16 %v6257
        %v6554 = vunpack.c.h.b16 %v6257
        %v6555 = vunpack.c.l.b16 %v6258
        %v6556 = vunpack.c.h.b16 %v6258
        %v6557 = vunpack.c.l.b16 %v6259
        %v6558 = vunpack.c.h.b16 %v6259
        %v6559 = vunpack.c.l.b16 %v6260
        %v6560 = vunpack.c.h.b16 %v6260
        %v6561 = vunpack.c.l.b16 %v6261
        %v6562 = vunpack.c.h.b16 %v6261
        %v6563 = vunpack.c.l.b16 %v6262
        %v6564 = vunpack.c.h.b16 %v6262
        %v6565 = vunpack.c.l.b16 %v6263
        %v6566 = vunpack.c.h.b16 %v6263
        %v6567 = vunpack.c.l.b16 %v6264
        %v6568 = vunpack.c.h.b16 %v6264
        %v6569 = vunpack.c.l.b16 %v6265
        %v6570 = vunpack.c.h.b16 %v6265
        %v6571 = vunpack.c.l.b16 %v6266
        %v6572 = vunpack.c.h.b16 %v6266
        %v6573 = vunpack.c.l.b16 %v6267
        %v6574 = vunpack.c.h.b16 %v6267
        %v6575 = vunpack.c.l.b16 %v6268
        %v6576 = vunpack.c.h.b16 %v6268
        %v6577 = vunpack.c.l.b16 %v6269
        %v6578 = vunpack.c.h.b16 %v6269
        %v6579 = vunpack.c.l.b16 %v6270
        %v6580 = vunpack.c.h.b16 %v6270
        %v6581 = vunpack.c.l.b16 %v6271
        %v6582 = vunpack.c.h.b16 %v6271
        %v6583 = vunpack.c.l.b16 %v6272
        %v6584 = vunpack.c.h.b16 %v6272
        %v6585 = vunpack.c.l.b16 %v6273
        %v6586 = vunpack.c.h.b16 %v6273
        %v6587 = vunpack.c.l.b16 %v6274
        %v6588 = vunpack.c.h.b16 %v6274
        %v6589 = vunpack.c.l.b16 %v6275
        %v6590 = vunpack.c.h.b16 %v6275
        %v6591 = vunpack.c.l.b16 %v6276
        %v6592 = vunpack.c.h.b16 %v6276
        %v6593 = vunpack.c.l.b16 %v6277
        %v6594 = vunpack.c.h.b16 %v6277
        %v6595 = vunpack.c.l.b16 %v6278
        %v6596 = vunpack.c.h.b16 %v6278
        %v6597 = vunpack.c.l.b16 %v6279
        %v6598 = vunpack.c.h.b16 %v6279
        %v6599 = vunpack.c.l.b16 %v6280
        %v6600 = vunpack.c.h.b16 %v6280
        %v6601 = vunpack.c.l.b16 %v6281
        %v6602 = vunpack.c.h.b16 %v6281
        %v6603 = vunpack.c.l.b16 %v6282
        %v6604 = vunpack.c.h.b16 %v6282
        %v6605 = vunpack.c.l.b16 %v6283
        %v6606 = vunpack.c.h.b16 %v6283
        %v6607 = vunpack.c.l.b16 %v6284
        %v6608 = vunpack.c.h.b16 %v6284
        %v6609 = vunpack.c.l.b16 %v6285
        %v6610 = vunpack.c.h.b16 %v6285
        %v6611 = vunpack.c.l.b16 %v6286
        %v6612 = vunpack.c.h.b16 %v6286
        %v6613 = vunpack.c.l.b16 %v6287
        %v6614 = vunpack.c.h.b16 %v6287
        %v6615 = vunpack.c.l.b16 %v6288
        %v6616 = vunpack.c.h.b16 %v6288
        %v6617 = vunpack.c.l.b16 %v6289
        %v6618 = vunpack.c.h.b16 %v6289
        %v6619 = vunpack.c.l.b16 %v6290
        %v6620 = vunpack.c.h.b16 %v6290
        %v6621 = vunpack.c.l.b16 %v6291
        %v6622 = vunpack.c.h.b16 %v6291
        %v6623 = vunpack.c.l.b16 %v6292
        %v6624 = vunpack.c.h.b16 %v6292
        %v6625 = vunpack.c.l.b16 %v6293
        %v6626 = vunpack.c.h.b16 %v6293
        %v6627 = vunpack.c.l.b16 %v6294
        %v6628 = vunpack.c.h.b16 %v6294
        %v6629 = vunpack.c.l.b16 %v6295
        %v6630 = vunpack.c.h.b16 %v6295
        %v6631 = vunpack.c.l.b16 %v6296
        %v6632 = vunpack.c.h.b16 %v6296
        %v6633 = vunpack.c.l.b16 %v6297
        %v6634 = vunpack.c.h.b16 %v6297
        %v6635 = vunpack.c.l.b16 %v6298
        %v6636 = vunpack.c.h.b16 %v6298
        %v6637 = vunpack.c.l.b16 %v6299
        %v6638 = vunpack.c.h.b16 %v6299
        %v6639 = vunpack.c.l.b16 %v6300
        %v6640 = vunpack.c.h.b16 %v6300
        %v6641 = vunpack.c.l.b16 %v6301
        %v6642 = vunpack.c.h.b16 %v6301
        %v6643 = vunpack.c.l.b16 %v6302
        %v6644 = vunpack.c.h.b16 %v6302
        %v6645 = vunpack.c.l.b16 %v6303
        %v6646 = vunpack.c.h.b16 %v6303
        %v6647 = vunpack.c.l.b16 %v6304
        %v6648 = vunpack.c.h.b16 %v6304
        %v6649 = vunpack.c.l.b16 %v6305
        %v6650 = vunpack.c.h.b16 %v6305
        %v6651 = vunpack.c.l.b16 %v6306
        %v6652 = vunpack.c.h.b16 %v6306
        %v6653 = vunpack.c.l.b16 %v6307
        %v6654 = vunpack.c.h.b16 %v6307
        %v6655 = vunpack.c.l.b16 %v6308
        %v6656 = vunpack.c.h.b16 %v6308
        %v6657 = vunpack.c.l.b16 %v6309
        %v6658 = vunpack.c.h.b16 %v6309
        %v6659 = vunpack.c.l.b16 %v6310
        %v6660 = vunpack.c.h.b16 %v6310
        %v6661 = vunpack.c.l.b16 %v6311
        %v6662 = vunpack.c.h.b16 %v6311
        %v6663 = vunpack.c.l.b16 %v6312
        %v6664 = vunpack.c.h.b16 %v6312
        %v6665 = vunpack.c.l.b16 %v6313
        %v6666 = vunpack.c.h.b16 %v6313
        %v6667 = vunpack.c.l.b16 %v6314
        %v6668 = vunpack.c.h.b16 %v6314
        %v6669 = vunpack.c.l.b16 %v6315
        %v6670 = vunpack.c.h.b16 %v6315
        %v6671 = vunpack.c.l.b16 %v6316
        %v6672 = vunpack.c.h.b16 %v6316
        %v6673 = vunpack.c.l.b16 %v6317
        %v6674 = vunpack.c.h.b16 %v6317
        %v6675 = vunpack.c.l.b16 %v6318
        %v6676 = vunpack.c.h.b16 %v6318
        %v6677 = vunpack.c.l.b16 %v6319
        %v6678 = vunpack.c.h.b16 %v6319
        %v6679 = vunpack.c.l.b16 %v6320
        %v6680 = vunpack.c.h.b16 %v6320
        %v6681 = vunpack.c.l.b16 %v6321
        %v6682 = vunpack.c.h.b16 %v6321
        %v6683 = vunpack.c.l.b16 %v6322
        %v6684 = vunpack.c.h.b16 %v6322
        %v6685 = vunpack.c.l.b16 %v6323
        %v6686 = vunpack.c.h.b16 %v6323
        %v6687 = vunpack.c.l.b16 %v6324
        %v6688 = vunpack.c.h.b16 %v6324
        %v6689 = vunpack.c.l.b16 %v6325
        %v6690 = vunpack.c.h.b16 %v6325
        %v6691 = vunpack.c.l.b16 %v6326
        %v6692 = vunpack.c.h.b16 %v6326
        %v6693 = vunpack.c.l.b16 %v6327
        %v6694 = vunpack.c.h.b16 %v6327
        %v6695 = vunpack.c.l.b16 %v6328
        %v6696 = vunpack.c.h.b16 %v6328
        %v6697 = vunpack.c.l.b16 %v6329
        %v6698 = vunpack.c.h.b16 %v6329
        %v6699 = vunpack.c.l.b16 %v6330
        %v6700 = vunpack.c.h.b16 %v6330
        %v6701 = vunpack.c.l.b16 %v6331
        %v6702 = vunpack.c.h.b16 %v6331
        %v6703 = vunpack.c.l.b16 %v6332
        %v6704 = vunpack.c.h.b16 %v6332
        %v6705 = vunpack.c.l.b16 %v6333
        %v6706 = vunpack.c.h.b16 %v6333
        %v6707 = vunpack.c.l.b16 %v6334
        %v6708 = vunpack.c.h.b16 %v6334
        %v6709 = vunpack.c.l.b16 %v6335
        %v6710 = vunpack.c.h.b16 %v6335
        %v6711 = vunpack.c.l.b16 %v6336
        %v6712 = vunpack.c.h.b16 %v6336
        %v6713 = vunpack.c.l.b16 %v6337
        %v6714 = vunpack.c.h.b16 %v6337
        %v6715 = vunpack.c.l.b16 %v6338
        %v6716 = vunpack.c.h.b16 %v6338
        %v6717 = vunpack.c.l.b16 %v6339
        %v6718 = vunpack.c.h.b16 %v6339
        %v6719 = vunpack.c.l.b16 %v6340
        %v6720 = vunpack.c.h.b16 %v6340
        %v6721 = vunpack.c.l.b16 %v6341
        %v6722 = vunpack.c.h.b16 %v6341
        %v6723 = vunpack.c.l.b16 %v6342
        %v6724 = vunpack.c.h.b16 %v6342
        %v6725 = vunpack.c.l.b16 %v6343
        %v6726 = vunpack.c.h.b16 %v6343
        %v6727 = vunpack.c.l.b16 %v6344
        %v6728 = vunpack.c.h.b16 %v6344
        %v6729 = vunpack.c.l.b16 %v6345
        %v6730 = vunpack.c.h.b16 %v6345
        %v6731 = vpack.c.b16 %v6479, %v6475
        %v6732 = vpack.c.b16 %v6480, %v6476
        %v6733 = vpack.c.b16 %v6481, %v6477
        %v6734 = vpack.c.b16 %v6482, %v6478
        %v6735 = vpack.c.b16 %v6487, %v6483
        %v6736 = vpack.c.b16 %v6488, %v6484
        %v6737 = vpack.c.b16 %v6489, %v6485
        %v6738 = vpack.c.b16 %v6490, %v6486
        %v6739 = vpack.c.b16 %v6495, %v6491
        %v6740 = vpack.c.b16 %v6496, %v6492
        %v6741 = vpack.c.b16 %v6497, %v6493
        %v6742 = vpack.c.b16 %v6498, %v6494
        %v6743 = vpack.c.b16 %v6503, %v6499
        %v6744 = vpack.c.b16 %v6504, %v6500
        %v6745 = vpack.c.b16 %v6505, %v6501
        %v6746 = vpack.c.b16 %v6506, %v6502
        %v6747 = vpack.c.b16 %v6511, %v6507
        %v6748 = vpack.c.b16 %v6512, %v6508
        %v6749 = vpack.c.b16 %v6513, %v6509
        %v6750 = vpack.c.b16 %v6514, %v6510
        %v6751 = vpack.c.b16 %v6519, %v6515
        %v6752 = vpack.c.b16 %v6520, %v6516
        %v6753 = vpack.c.b16 %v6521, %v6517
        %v6754 = vpack.c.b16 %v6522, %v6518
        %v6755 = vpack.c.b16 %v6527, %v6523
        %v6756 = vpack.c.b16 %v6528, %v6524
        %v6757 = vpack.c.b16 %v6529, %v6525
        %v6758 = vpack.c.b16 %v6530, %v6526
        %v6759 = vpack.c.b16 %v6535, %v6531
        %v6760 = vpack.c.b16 %v6536, %v6532
        %v6761 = vpack.c.b16 %v6537, %v6533
        %v6762 = vpack.c.b16 %v6538, %v6534
        %v6763 = vpack.c.b16 %v6543, %v6539
        %v6764 = vpack.c.b16 %v6544, %v6540
        %v6765 = vpack.c.b16 %v6545, %v6541
        %v6766 = vpack.c.b16 %v6546, %v6542
        %v6767 = vpack.c.b16 %v6551, %v6547
        %v6768 = vpack.c.b16 %v6552, %v6548
        %v6769 = vpack.c.b16 %v6553, %v6549
        %v6770 = vpack.c.b16 %v6554, %v6550
        %v6771 = vpack.c.b16 %v6559, %v6555
        %v6772 = vpack.c.b16 %v6560, %v6556
        %v6773 = vpack.c.b16 %v6561, %v6557
        %v6774 = vpack.c.b16 %v6562, %v6558
        %v6775 = vpack.c.b16 %v6567, %v6563
        %v6776 = vpack.c.b16 %v6568, %v6564
        %v6777 = vpack.c.b16 %v6569, %v6565
        %v6778 = vpack.c.b16 %v6570, %v6566
        %v6779 = vpack.c.b16 %v6575, %v6571
        %v6780 = vpack.c.b16 %v6576, %v6572
        %v6781 = vpack.c.b16 %v6577, %v6573
        %v6782 = vpack.c.b16 %v6578, %v6574
        %v6783 = vpack.c.b16 %v6583, %v6579
        %v6784 = vpack.c.b16 %v6584, %v6580
        %v6785 = vpack.c.b16 %v6585, %v6581
        %v6786 = vpack.c.b16 %v6586, %v6582
        %v6787 = vpack.c.b16 %v6591, %v6587
        %v6788 = vpack.c.b16 %v6592, %v6588
        %v6789 = vpack.c.b16 %v6593, %v6589
        %v6790 = vpack.c.b16 %v6594, %v6590
        %v6791 = vpack.c.b16 %v6599, %v6595
        %v6792 = vpack.c.b16 %v6600, %v6596
        %v6793 = vpack.c.b16 %v6601, %v6597
        %v6794 = vpack.c.b16 %v6602, %v6598
        %v6795 = vpack.c.b16 %v6607, %v6603
        %v6796 = vpack.c.b16 %v6608, %v6604
        %v6797 = vpack.c.b16 %v6609, %v6605
        %v6798 = vpack.c.b16 %v6610, %v6606
        %v6799 = vpack.c.b16 %v6615, %v6611
        %v6800 = vpack.c.b16 %v6616, %v6612
        %v6801 = vpack.c.b16 %v6617, %v6613
        %v6802 = vpack.c.b16 %v6618, %v6614
        %v6803 = vpack.c.b16 %v6623, %v6619
        %v6804 = vpack.c.b16 %v6624, %v6620
        %v6805 = vpack.c.b16 %v6625, %v6621
        %v6806 = vpack.c.b16 %v6626, %v6622
        %v6807 = vpack.c.b16 %v6631, %v6627
        %v6808 = vpack.c.b16 %v6632, %v6628
        %v6809 = vpack.c.b16 %v6633, %v6629
        %v6810 = vpack.c.b16 %v6634, %v6630
        %v6811 = vpack.c.b16 %v6639, %v6635
        %v6812 = vpack.c.b16 %v6640, %v6636
        %v6813 = vpack.c.b16 %v6641, %v6637
        %v6814 = vpack.c.b16 %v6642, %v6638
        %v6815 = vpack.c.b16 %v6647, %v6643
        %v6816 = vpack.c.b16 %v6648, %v6644
        %v6817 = vpack.c.b16 %v6649, %v6645
        %v6818 = vpack.c.b16 %v6650, %v6646
        %v6819 = vpack.c.b16 %v6655, %v6651
        %v6820 = vpack.c.b16 %v6656, %v6652
        %v6821 = vpack.c.b16 %v6657, %v6653
        %v6822 = vpack.c.b16 %v6658, %v6654
        %v6823 = vpack.c.b16 %v6663, %v6659
        %v6824 = vpack.c.b16 %v6664, %v6660
        %v6825 = vpack.c.b16 %v6665, %v6661
        %v6826 = vpack.c.b16 %v6666, %v6662
        %v6827 = vpack.c.b16 %v6671, %v6667
        %v6828 = vpack.c.b16 %v6672, %v6668
        %v6829 = vpack.c.b16 %v6673, %v6669
        %v6830 = vpack.c.b16 %v6674, %v6670
        %v6831 = vpack.c.b16 %v6679, %v6675
        %v6832 = vpack.c.b16 %v6680, %v6676
        %v6833 = vpack.c.b16 %v6681, %v6677
        %v6834 = vpack.c.b16 %v6682, %v6678
        %v6835 = vpack.c.b16 %v6687, %v6683
        %v6836 = vpack.c.b16 %v6688, %v6684
        %v6837 = vpack.c.b16 %v6689, %v6685
        %v6838 = vpack.c.b16 %v6690, %v6686
        %v6839 = vpack.c.b16 %v6695, %v6691
        %v6840 = vpack.c.b16 %v6696, %v6692
        %v6841 = vpack.c.b16 %v6697, %v6693
        %v6842 = vpack.c.b16 %v6698, %v6694
        %v6843 = vpack.c.b16 %v6703, %v6699
        %v6844 = vpack.c.b16 %v6704, %v6700
        %v6845 = vpack.c.b16 %v6705, %v6701
        %v6846 = vpack.c.b16 %v6706, %v6702
        %v6847 = vpack.c.b16 %v6711, %v6707
        %v6848 = vpack.c.b16 %v6712, %v6708
        %v6849 = vpack.c.b16 %v6713, %v6709
        %v6850 = vpack.c.b16 %v6714, %v6710
        %v6851 = vpack.c.b16 %v6719, %v6715
        %v6852 = vpack.c.b16 %v6720, %v6716
        %v6853 = vpack.c.b16 %v6721, %v6717
        %v6854 = vpack.c.b16 %v6722, %v6718
        %v6855 = vpack.c.b16 %v6727, %v6723
        %v6856 = vpack.c.b16 %v6728, %v6724
        %v6857 = vpack.c.b16 %v6729, %v6725
        %v6858 = vpack.c.b16 %v6730, %v6726
        %6987 = vmatprep.subr.bf16.mxu0 %v6732
        %6988 = vmatpush1.bf16.msra.mxu0 %v6731
        %6989 = vmatprep.subr.bf16.mxu0 %v6736
        %6990 = vmatpush1.bf16.msra.mxu0 %v6735
        %6991 = vmatprep.subr.bf16.mxu0 %v6740
        %6992 = vmatpush1.bf16.msra.mxu0 %v6739
        %6993 = vmatprep.subr.bf16.mxu0 %v6744
        %6994 = vmatpush1.bf16.msra.mxu0 %v6743
        %6995 = vmatprep.subr.bf16.mxu0 %v6748
        %6996 = vmatpush1.bf16.msra.mxu0 %v6747
        %6997 = vmatprep.subr.bf16.mxu0 %v6752
        %6998 = vmatpush1.bf16.msra.mxu0 %v6751
        %6999 = vmatprep.subr.bf16.mxu0 %v6756
        %7000 = vmatpush1.bf16.msra.mxu0 %v6755
        %7001 = vmatprep.subr.bf16.mxu0 %v6760
        %7002 = vmatpush1.bf16.msra.mxu0 %v6759
        %7003 = vmatprep.subr.bf16.mxu0 %v6764
        %7004 = vmatpush1.bf16.msra.mxu0 %v6763
        %7005 = vmatprep.subr.bf16.mxu0 %v6768
        %7006 = vmatpush1.bf16.msra.mxu0 %v6767
        %7007 = vmatprep.subr.bf16.mxu0 %v6772
        %7008 = vmatpush1.bf16.msra.mxu0 %v6771
        %7009 = vmatprep.subr.bf16.mxu0 %v6776
        %7010 = vmatpush1.bf16.msra.mxu0 %v6775
        %7011 = vmatprep.subr.bf16.mxu0 %v6780
        %7012 = vmatpush1.bf16.msra.mxu0 %v6779
        %7013 = vmatprep.subr.bf16.mxu0 %v6784
        %7014 = vmatpush1.bf16.msra.mxu0 %v6783
        %7015 = vmatprep.subr.bf16.mxu0 %v6788
        %7016 = vmatpush1.bf16.msra.mxu0 %v6787
        %7017 = vmatprep.subr.bf16.mxu0 %v6792
        %7018 = vmatpush1.bf16.msra.mxu0 %v6791
        %7019 = vmatprep.mubr.bf16.mxu0 %v6155
        %7020 = vmatmul.mubr.bf16.gmra.mrb[0].mxu0 %v6154
        %v7021 = vpop.f32.mrb[0].mxu0
        %v7022 = vadd.f32 0.0, %v7021
        %v7023 = vpop.f32.mrb[0].mxu0
        %v7024 = vadd.f32 0.0, %v7023
        %v7025 = vpop.f32.mrb[0].mxu0
        %v7026 = vadd.f32 0.0, %v7025
        %v7027 = vpop.f32.mrb[0].mxu0
        %v7028 = vadd.f32 0.0, %v7027
        %7029 = vmatprep.mubr.bf16.mxu0 %v6159
        %7030 = vmatmul.mubr.bf16.gmra.mrb[0].mxu0 %v6158
        %v7031 = vpop.f32.mrb[0].mxu0
        %v7032 = vadd.f32 0.0, %v7031
        %v7033 = vpop.f32.mrb[0].mxu0
        %v7034 = vadd.f32 0.0, %v7033
        %v7035 = vpop.f32.mrb[0].mxu0
        %v7036 = vadd.f32 0.0, %v7035
        %v7037 = vpop.f32.mrb[0].mxu0
        %v7038 = vadd.f32 0.0, %v7037
        %7039 = vmatprep.mubr.bf16.mxu0 %v6163
        %7040 = vmatmul.mubr.bf16.gmra.mrb[0].mxu0 %v6162
        %v7041 = vpop.f32.mrb[0].mxu0
        %v7042 = vadd.f32 0.0, %v7041
        %v7043 = vpop.f32.mrb[0].mxu0
        %v7044 = vadd.f32 0.0, %v7043
        %v7045 = vpop.f32.mrb[0].mxu0
        %v7046 = vadd.f32 0.0, %v7045
        %v7047 = vpop.f32.mrb[0].mxu0
        %v7048 = vadd.f32 0.0, %v7047
        %7049 = vmatprep.mubr.bf16.mxu0 %v6167
        %7050 = vmatmul.mubr.bf16.gmra.mrb[0].mxu0 %v6166
        %v7051 = vpop.f32.mrb[0].mxu0
        %v7052 = vadd.f32 0.0, %v7051
        %v7053 = vpop.f32.mrb[0].mxu0
        %v7054 = vadd.f32 0.0, %v7053
        %v7055 = vpop.f32.mrb[0].mxu0
        %v7056 = vadd.f32 0.0, %v7055
        %v7057 = vpop.f32.mrb[0].mxu0
        %v7058 = vadd.f32 0.0, %v7057
        %7059 = vmatprep.mubr.bf16.mxu0 %v6171
        %7060 = vmatmul.mubr.bf16.gmra.mrb[0].mxu0 %v6170
        %v7061 = vpop.f32.mrb[0].mxu0
        %v7062 = vadd.f32 0.0, %v7061
        %v7063 = vpop.f32.mrb[0].mxu0
        %v7064 = vadd.f32 0.0, %v7063
        %v7065 = vpop.f32.mrb[0].mxu0
        %v7066 = vadd.f32 0.0, %v7065
        %v7067 = vpop.f32.mrb[0].mxu0
        %v7068 = vadd.f32 0.0, %v7067
        %7069 = vmatprep.mubr.bf16.mxu0 %v6175
        %7070 = vmatmul.mubr.bf16.gmra.mrb[0].mxu0 %v6174
        %v7071 = vpop.f32.mrb[0].mxu0
        %v7072 = vadd.f32 0.0, %v7071
        %v7073 = vpop.f32.mrb[0].mxu0
        %v7074 = vadd.f32 0.0, %v7073
        %v7075 = vpop.f32.mrb[0].mxu0
        %v7076 = vadd.f32 0.0, %v7075
        %v7077 = vpop.f32.mrb[0].mxu0
        %v7078 = vadd.f32 0.0, %v7077
        %7079 = vmatprep.mubr.bf16.mxu0 %v6179
        %7080 = vmatmul.mubr.bf16.gmra.mrb[0].mxu0 %v6178
        %v7081 = vpop.f32.mrb[0].mxu0
        %v7082 = vadd.f32 0.0, %v7081
        %v7083 = vpop.f32.mrb[0].mxu0
        %v7084 = vadd.f32 0.0, %v7083
        %v7085 = vpop.f32.mrb[0].mxu0
        %v7086 = vadd.f32 0.0, %v7085
        %v7087 = vpop.f32.mrb[0].mxu0
        %v7088 = vadd.f32 0.0, %v7087
        %7089 = vmatprep.mubr.bf16.mxu0 %v6183
        %7090 = vmatmul.mubr.bf16.gmra.mrb[0].mxu0 %v6182
        %v7091 = vpop.f32.mrb[0].mxu0
        %v7092 = vadd.f32 0.0, %v7091
        %v7093 = vpop.f32.mrb[0].mxu0
        %v7094 = vadd.f32 0.0, %v7093
        %v7095 = vpop.f32.mrb[0].mxu0
        %v7096 = vadd.f32 0.0, %v7095
        %v7097 = vpop.f32.mrb[0].mxu0
        %v7098 = vadd.f32 0.0, %v7097
        %7099 = vmatprep.mubr.bf16.mxu0 %v6187
        %7100 = vmatmul.mubr.bf16.gmra.mrb[0].mxu0 %v6186
        %v7101 = vpop.f32.mrb[0].mxu0
        %v7102 = vadd.f32 0.0, %v7101
        %v7103 = vpop.f32.mrb[0].mxu0
        %v7104 = vadd.f32 0.0, %v7103
        %v7105 = vpop.f32.mrb[0].mxu0
        %v7106 = vadd.f32 0.0, %v7105
        %v7107 = vpop.f32.mrb[0].mxu0
        %v7108 = vadd.f32 0.0, %v7107
        %7109 = vmatprep.mubr.bf16.mxu0 %v6191
        %7110 = vmatmul.mubr.bf16.gmra.mrb[0].mxu0 %v6190
        %v7111 = vpop.f32.mrb[0].mxu0
        %v7112 = vadd.f32 0.0, %v7111
        %v7113 = vpop.f32.mrb[0].mxu0
        %v7114 = vadd.f32 0.0, %v7113
        %v7115 = vpop.f32.mrb[0].mxu0
        %v7116 = vadd.f32 0.0, %v7115
        %v7117 = vpop.f32.mrb[0].mxu0
        %v7118 = vadd.f32 0.0, %v7117
        %7119 = vmatprep.mubr.bf16.mxu0 %v6195
        %7120 = vmatmul.mubr.bf16.gmra.mrb[0].mxu0 %v6194
        %v7121 = vpop.f32.mrb[0].mxu0
        %v7122 = vadd.f32 0.0, %v7121
        %v7123 = vpop.f32.mrb[0].mxu0
        %v7124 = vadd.f32 0.0, %v7123
        %v7125 = vpop.f32.mrb[0].mxu0
        %v7126 = vadd.f32 0.0, %v7125
        %v7127 = vpop.f32.mrb[0].mxu0
        %v7128 = vadd.f32 0.0, %v7127
        %7129 = vmatprep.mubr.bf16.mxu0 %v6199
        %7130 = vmatmul.mubr.bf16.gmra.mrb[0].mxu0 %v6198
        %v7131 = vpop.f32.mrb[0].mxu0
        %v7132 = vadd.f32 0.0, %v7131
        %v7133 = vpop.f32.mrb[0].mxu0
        %v7134 = vadd.f32 0.0, %v7133
        %v7135 = vpop.f32.mrb[0].mxu0
        %v7136 = vadd.f32 0.0, %v7135
        %v7137 = vpop.f32.mrb[0].mxu0
        %v7138 = vadd.f32 0.0, %v7137
        %7139 = vmatprep.mubr.bf16.mxu0 %v6203
        %7140 = vmatmul.mubr.bf16.gmra.mrb[0].mxu0 %v6202
        %v7141 = vpop.f32.mrb[0].mxu0
        %v7142 = vadd.f32 0.0, %v7141
        %v7143 = vpop.f32.mrb[0].mxu0
        %v7144 = vadd.f32 0.0, %v7143
        %v7145 = vpop.f32.mrb[0].mxu0
        %v7146 = vadd.f32 0.0, %v7145
        %v7147 = vpop.f32.mrb[0].mxu0
        %v7148 = vadd.f32 0.0, %v7147
        %7149 = vmatprep.mubr.bf16.mxu0 %v6207
        %7150 = vmatmul.mubr.bf16.gmra.mrb[0].mxu0 %v6206
        %v7151 = vpop.f32.mrb[0].mxu0
        %v7152 = vadd.f32 0.0, %v7151
        %v7153 = vpop.f32.mrb[0].mxu0
        %v7154 = vadd.f32 0.0, %v7153
        %v7155 = vpop.f32.mrb[0].mxu0
        %v7156 = vadd.f32 0.0, %v7155
        %v7157 = vpop.f32.mrb[0].mxu0
        %v7158 = vadd.f32 0.0, %v7157
        %7159 = vmatprep.mubr.bf16.mxu0 %v6211
        %7160 = vmatmul.mubr.bf16.gmra.mrb[0].mxu0 %v6210
        %v7161 = vpop.f32.mrb[0].mxu0
        %v7162 = vadd.f32 0.0, %v7161
        %v7163 = vpop.f32.mrb[0].mxu0
        %v7164 = vadd.f32 0.0, %v7163
        %v7165 = vpop.f32.mrb[0].mxu0
        %v7166 = vadd.f32 0.0, %v7165
        %v7167 = vpop.f32.mrb[0].mxu0
        %v7168 = vadd.f32 0.0, %v7167
        %7169 = vmatprep.mubr.bf16.mxu0 %v6215
        %7170 = vmatmul.mubr.bf16.gmra.mrb[0].mxu0 %v6214
        %v7171 = vpop.f32.mrb[0].mxu0
        %v7172 = vadd.f32 0.0, %v7171
        %v7173 = vpop.f32.mrb[0].mxu0
        %v7174 = vadd.f32 0.0, %v7173
        %v7175 = vpop.f32.mrb[0].mxu0
        %v7176 = vadd.f32 0.0, %v7175
        %v7177 = vpop.f32.mrb[0].mxu0
        %v7178 = vadd.f32 0.0, %v7177
        %7179 = vdwg.mxu0
        %7180 = vmatprep.subr.bf16.mxu0 %v6796
        %7181 = vmatpush1.bf16.msra.mxu0 %v6795
        %7182 = vmatprep.subr.bf16.mxu0 %v6800
        %7183 = vmatpush1.bf16.msra.mxu0 %v6799
        %7184 = vmatprep.subr.bf16.mxu0 %v6804
        %7185 = vmatpush1.bf16.msra.mxu0 %v6803
        %7186 = vmatprep.subr.bf16.mxu0 %v6808
        %7187 = vmatpush1.bf16.msra.mxu0 %v6807
        %7188 = vmatprep.subr.bf16.mxu0 %v6812
        %7189 = vmatpush1.bf16.msra.mxu0 %v6811
        %7190 = vmatprep.subr.bf16.mxu0 %v6816
        %7191 = vmatpush1.bf16.msra.mxu0 %v6815
        %7192 = vmatprep.subr.bf16.mxu0 %v6820
        %7193 = vmatpush1.bf16.msra.mxu0 %v6819
        %7194 = vmatprep.subr.bf16.mxu0 %v6824
        %7195 = vmatpush1.bf16.msra.mxu0 %v6823
        %7196 = vmatprep.subr.bf16.mxu0 %v6828
        %7197 = vmatpush1.bf16.msra.mxu0 %v6827
        %7198 = vmatprep.subr.bf16.mxu0 %v6832
        %7199 = vmatpush1.bf16.msra.mxu0 %v6831
        %7200 = vmatprep.subr.bf16.mxu0 %v6836
        %7201 = vmatpush1.bf16.msra.mxu0 %v6835
        %7202 = vmatprep.subr.bf16.mxu0 %v6840
        %7203 = vmatpush1.bf16.msra.mxu0 %v6839
        %7204 = vmatprep.subr.bf16.mxu0 %v6844
        %7205 = vmatpush1.bf16.msra.mxu0 %v6843
        %7206 = vmatprep.subr.bf16.mxu0 %v6848
        %7207 = vmatpush1.bf16.msra.mxu0 %v6847
        %7208 = vmatprep.subr.bf16.mxu0 %v6852
        %7209 = vmatpush1.bf16.msra.mxu0 %v6851
        %7210 = vmatprep.subr.bf16.mxu0 %v6856
        %7211 = vmatpush1.bf16.msra.mxu0 %v6855
        %7212 = vmatprep.mubr.bf16.mxu0 %v6157
        %7213 = vmatmul.mubr.bf16.gmra.mrb[0].mxu0 %v6156
        %v7214 = vpop.f32.mrb[0].mxu0
        %v7215 = vadd.f32 %v7022, %v7214
        %v7216 = vpop.f32.mrb[0].mxu0
        %v7217 = vadd.f32 %v7024, %v7216
        %v7218 = vpop.f32.mrb[0].mxu0
        %v7219 = vadd.f32 %v7026, %v7218
        %v7220 = vpop.f32.mrb[0].mxu0
        %v7221 = vadd.f32 %v7028, %v7220
        %7222 = vmatprep.mubr.bf16.mxu0 %v6161
        %7223 = vmatmul.mubr.bf16.gmra.mrb[0].mxu0 %v6160
        %v7224 = vpop.f32.mrb[0].mxu0
        %v7225 = vadd.f32 %v7032, %v7224
        %v7226 = vpop.f32.mrb[0].mxu0
        %v7227 = vadd.f32 %v7034, %v7226
        %v7228 = vpop.f32.mrb[0].mxu0
        %v7229 = vadd.f32 %v7036, %v7228
        %v7230 = vpop.f32.mrb[0].mxu0
        %v7231 = vadd.f32 %v7038, %v7230
        %7232 = vmatprep.mubr.bf16.mxu0 %v6165
        %7233 = vmatmul.mubr.bf16.gmra.mrb[0].mxu0 %v6164
        %v7234 = vpop.f32.mrb[0].mxu0
        %v7235 = vadd.f32 %v7042, %v7234
        %v7236 = vpop.f32.mrb[0].mxu0
        %v7237 = vadd.f32 %v7044, %v7236
        %v7238 = vpop.f32.mrb[0].mxu0
        %v7239 = vadd.f32 %v7046, %v7238
        %v7240 = vpop.f32.mrb[0].mxu0
        %v7241 = vadd.f32 %v7048, %v7240
        %7242 = vmatprep.mubr.bf16.mxu0 %v6169
        %7243 = vmatmul.mubr.bf16.gmra.mrb[0].mxu0 %v6168
        %v7244 = vpop.f32.mrb[0].mxu0
        %v7245 = vadd.f32 %v7052, %v7244
        %v7246 = vpop.f32.mrb[0].mxu0
        %v7247 = vadd.f32 %v7054, %v7246
        %v7248 = vpop.f32.mrb[0].mxu0
        %v7249 = vadd.f32 %v7056, %v7248
        %v7250 = vpop.f32.mrb[0].mxu0
        %v7251 = vadd.f32 %v7058, %v7250
        %7252 = vmatprep.mubr.bf16.mxu0 %v6173
        %7253 = vmatmul.mubr.bf16.gmra.mrb[0].mxu0 %v6172
        %v7254 = vpop.f32.mrb[0].mxu0
        %v7255 = vadd.f32 %v7062, %v7254
        %v7256 = vpop.f32.mrb[0].mxu0
        %v7257 = vadd.f32 %v7064, %v7256
        %v7258 = vpop.f32.mrb[0].mxu0
        %v7259 = vadd.f32 %v7066, %v7258
        %v7260 = vpop.f32.mrb[0].mxu0
        %v7261 = vadd.f32 %v7068, %v7260
        %7262 = vmatprep.mubr.bf16.mxu0 %v6177
        %7263 = vmatmul.mubr.bf16.gmra.mrb[0].mxu0 %v6176
        %v7264 = vpop.f32.mrb[0].mxu0
        %v7265 = vadd.f32 %v7072, %v7264
        %v7266 = vpop.f32.mrb[0].mxu0
        %v7267 = vadd.f32 %v7074, %v7266
        %v7268 = vpop.f32.mrb[0].mxu0
        %v7269 = vadd.f32 %v7076, %v7268
        %v7270 = vpop.f32.mrb[0].mxu0
        %v7271 = vadd.f32 %v7078, %v7270
        %7272 = vmatprep.mubr.bf16.mxu0 %v6181
        %7273 = vmatmul.mubr.bf16.gmra.mrb[0].mxu0 %v6180
        %v7274 = vpop.f32.mrb[0].mxu0
        %v7275 = vadd.f32 %v7082, %v7274
        %v7276 = vpop.f32.mrb[0].mxu0
        %v7277 = vadd.f32 %v7084, %v7276
        %v7278 = vpop.f32.mrb[0].mxu0
        %v7279 = vadd.f32 %v7086, %v7278
        %v7280 = vpop.f32.mrb[0].mxu0
        %v7281 = vadd.f32 %v7088, %v7280
        %7282 = vmatprep.mubr.bf16.mxu0 %v6185
        %7283 = vmatmul.mubr.bf16.gmra.mrb[0].mxu0 %v6184
        %v7284 = vpop.f32.mrb[0].mxu0
        %v7285 = vadd.f32 %v7092, %v7284
        %v7286 = vpop.f32.mrb[0].mxu0
        %v7287 = vadd.f32 %v7094, %v7286
        %v7288 = vpop.f32.mrb[0].mxu0
        %v7289 = vadd.f32 %v7096, %v7288
        %v7290 = vpop.f32.mrb[0].mxu0
        %v7291 = vadd.f32 %v7098, %v7290
        %7292 = vmatprep.mubr.bf16.mxu0 %v6189
        %7293 = vmatmul.mubr.bf16.gmra.mrb[0].mxu0 %v6188
        %v7294 = vpop.f32.mrb[0].mxu0
        %v7295 = vadd.f32 %v7102, %v7294
        %v7296 = vpop.f32.mrb[0].mxu0
        %v7297 = vadd.f32 %v7104, %v7296
        %v7298 = vpop.f32.mrb[0].mxu0
        %v7299 = vadd.f32 %v7106, %v7298
        %v7300 = vpop.f32.mrb[0].mxu0
        %v7301 = vadd.f32 %v7108, %v7300
        %7302 = vmatprep.mubr.bf16.mxu0 %v6193
        %7303 = vmatmul.mubr.bf16.gmra.mrb[0].mxu0 %v6192
        %v7304 = vpop.f32.mrb[0].mxu0
        %v7305 = vadd.f32 %v7112, %v7304
        %v7306 = vpop.f32.mrb[0].mxu0
        %v7307 = vadd.f32 %v7114, %v7306
        %v7308 = vpop.f32.mrb[0].mxu0
        %v7309 = vadd.f32 %v7116, %v7308
        %v7310 = vpop.f32.mrb[0].mxu0
        %v7311 = vadd.f32 %v7118, %v7310
        %7312 = vmatprep.mubr.bf16.mxu0 %v6197
        %7313 = vmatmul.mubr.bf16.gmra.mrb[0].mxu0 %v6196
        %v7314 = vpop.f32.mrb[0].mxu0
        %v7315 = vadd.f32 %v7122, %v7314
        %v7316 = vpop.f32.mrb[0].mxu0
        %v7317 = vadd.f32 %v7124, %v7316
        %v7318 = vpop.f32.mrb[0].mxu0
        %v7319 = vadd.f32 %v7126, %v7318
        %v7320 = vpop.f32.mrb[0].mxu0
        %v7321 = vadd.f32 %v7128, %v7320
        %7322 = vmatprep.mubr.bf16.mxu0 %v6201
        %7323 = vmatmul.mubr.bf16.gmra.mrb[0].mxu0 %v6200
        %v7324 = vpop.f32.mrb[0].mxu0
        %v7325 = vadd.f32 %v7132, %v7324
        %v7326 = vpop.f32.mrb[0].mxu0
        %v7327 = vadd.f32 %v7134, %v7326
        %v7328 = vpop.f32.mrb[0].mxu0
        %v7329 = vadd.f32 %v7136, %v7328
        %v7330 = vpop.f32.mrb[0].mxu0
        %v7331 = vadd.f32 %v7138, %v7330
        %7332 = vmatprep.mubr.bf16.mxu0 %v6205
        %7333 = vmatmul.mubr.bf16.gmra.mrb[0].mxu0 %v6204
        %v7334 = vpop.f32.mrb[0].mxu0
        %v7335 = vadd.f32 %v7142, %v7334
        %v7336 = vpop.f32.mrb[0].mxu0
        %v7337 = vadd.f32 %v7144, %v7336
        %v7338 = vpop.f32.mrb[0].mxu0
        %v7339 = vadd.f32 %v7146, %v7338
        %v7340 = vpop.f32.mrb[0].mxu0
        %v7341 = vadd.f32 %v7148, %v7340
        %7342 = vmatprep.mubr.bf16.mxu0 %v6209
        %7343 = vmatmul.mubr.bf16.gmra.mrb[0].mxu0 %v6208
        %v7344 = vpop.f32.mrb[0].mxu0
        %v7345 = vadd.f32 %v7152, %v7344
        %v7346 = vpop.f32.mrb[0].mxu0
        %v7347 = vadd.f32 %v7154, %v7346
        %v7348 = vpop.f32.mrb[0].mxu0
        %v7349 = vadd.f32 %v7156, %v7348
        %v7350 = vpop.f32.mrb[0].mxu0
        %v7351 = vadd.f32 %v7158, %v7350
        %7352 = vmatprep.mubr.bf16.mxu0 %v6213
        %7353 = vmatmul.mubr.bf16.gmra.mrb[0].mxu0 %v6212
        %v7354 = vpop.f32.mrb[0].mxu0
        %v7355 = vadd.f32 %v7162, %v7354
        %v7356 = vpop.f32.mrb[0].mxu0
        %v7357 = vadd.f32 %v7164, %v7356
        %v7358 = vpop.f32.mrb[0].mxu0
        %v7359 = vadd.f32 %v7166, %v7358
        %v7360 = vpop.f32.mrb[0].mxu0
        %v7361 = vadd.f32 %v7168, %v7360
        %7362 = vmatprep.mubr.bf16.mxu0 %v6217
        %7363 = vmatmul.mubr.bf16.gmra.mrb[0].mxu0 %v6216
        %v7364 = vpop.f32.mrb[0].mxu0
        %v7365 = vadd.f32 %v7172, %v7364
        %v7366 = vpop.f32.mrb[0].mxu0
        %v7367 = vadd.f32 %v7174, %v7366
        %v7368 = vpop.f32.mrb[0].mxu0
        %v7369 = vadd.f32 %v7176, %v7368
        %v7370 = vpop.f32.mrb[0].mxu0
        %v7371 = vadd.f32 %v7178, %v7370
        %7372 = vdwg.mxu0
        %7373 = vmatprep.subr.bf16.mxu0 %v6734
        %7374 = vmatpush1.bf16.msra.mxu0 %v6733
        %7375 = vmatprep.subr.bf16.mxu0 %v6738
        %7376 = vmatpush1.bf16.msra.mxu0 %v6737
        %7377 = vmatprep.subr.bf16.mxu0 %v6742
        %7378 = vmatpush1.bf16.msra.mxu0 %v6741
        %7379 = vmatprep.subr.bf16.mxu0 %v6746
        %7380 = vmatpush1.bf16.msra.mxu0 %v6745
        %7381 = vmatprep.subr.bf16.mxu0 %v6750
        %7382 = vmatpush1.bf16.msra.mxu0 %v6749
        %7383 = vmatprep.subr.bf16.mxu0 %v6754
        %7384 = vmatpush1.bf16.msra.mxu0 %v6753
        %7385 = vmatprep.subr.bf16.mxu0 %v6758
        %7386 = vmatpush1.bf16.msra.mxu0 %v6757
        %7387 = vmatprep.subr.bf16.mxu0 %v6762
        %7388 = vmatpush1.bf16.msra.mxu0 %v6761
        %7389 = vmatprep.subr.bf16.mxu0 %v6766
        %7390 = vmatpush1.bf16.msra.mxu0 %v6765
        %7391 = vmatprep.subr.bf16.mxu0 %v6770
        %7392 = vmatpush1.bf16.msra.mxu0 %v6769
        %7393 = vmatprep.subr.bf16.mxu0 %v6774
        %7394 = vmatpush1.bf16.msra.mxu0 %v6773
        %7395 = vmatprep.subr.bf16.mxu0 %v6778
        %7396 = vmatpush1.bf16.msra.mxu0 %v6777
        %7397 = vmatprep.subr.bf16.mxu0 %v6782
        %7398 = vmatpush1.bf16.msra.mxu0 %v6781
        %7399 = vmatprep.subr.bf16.mxu0 %v6786
        %7400 = vmatpush1.bf16.msra.mxu0 %v6785
        %7401 = vmatprep.subr.bf16.mxu0 %v6790
        %7402 = vmatpush1.bf16.msra.mxu0 %v6789
        %7403 = vmatprep.subr.bf16.mxu0 %v6794
        %7404 = vmatpush1.bf16.msra.mxu0 %v6793
        %7405 = vmatprep.mubr.bf16.mxu0 %v6155
        %7406 = vmatmul.mubr.bf16.gmra.mrb[0].mxu0 %v6154
        %v7407 = vpop.f32.mrb[0].mxu0
        %v7408 = vadd.f32 0.0, %v7407
        %v7409 = vpop.f32.mrb[0].mxu0
        %v7410 = vadd.f32 0.0, %v7409
        %v7411 = vpop.f32.mrb[0].mxu0
        %v7412 = vadd.f32 0.0, %v7411
        %v7413 = vpop.f32.mrb[0].mxu0
        %v7414 = vadd.f32 0.0, %v7413
        %7415 = vmatprep.mubr.bf16.mxu0 %v6159
        %7416 = vmatmul.mubr.bf16.gmra.mrb[0].mxu0 %v6158
        %v7417 = vpop.f32.mrb[0].mxu0
        %v7418 = vadd.f32 0.0, %v7417
        %v7419 = vpop.f32.mrb[0].mxu0
        %v7420 = vadd.f32 0.0, %v7419
        %v7421 = vpop.f32.mrb[0].mxu0
        %v7422 = vadd.f32 0.0, %v7421
        %v7423 = vpop.f32.mrb[0].mxu0
        %v7424 = vadd.f32 0.0, %v7423
        %7425 = vmatprep.mubr.bf16.mxu0 %v6163
        %7426 = vmatmul.mubr.bf16.gmra.mrb[0].mxu0 %v6162
        %v7427 = vpop.f32.mrb[0].mxu0
        %v7428 = vadd.f32 0.0, %v7427
        %v7429 = vpop.f32.mrb[0].mxu0
        %v7430 = vadd.f32 0.0, %v7429
        %v7431 = vpop.f32.mrb[0].mxu0
        %v7432 = vadd.f32 0.0, %v7431
        %v7433 = vpop.f32.mrb[0].mxu0
        %v7434 = vadd.f32 0.0, %v7433
        %7435 = vmatprep.mubr.bf16.mxu0 %v6167
        %7436 = vmatmul.mubr.bf16.gmra.mrb[0].mxu0 %v6166
        %v7437 = vpop.f32.mrb[0].mxu0
        %v7438 = vadd.f32 0.0, %v7437
        %v7439 = vpop.f32.mrb[0].mxu0
        %v7440 = vadd.f32 0.0, %v7439
        %v7441 = vpop.f32.mrb[0].mxu0
        %v7442 = vadd.f32 0.0, %v7441
        %v7443 = vpop.f32.mrb[0].mxu0
        %v7444 = vadd.f32 0.0, %v7443
        %7445 = vmatprep.mubr.bf16.mxu0 %v6171
        %7446 = vmatmul.mubr.bf16.gmra.mrb[0].mxu0 %v6170
        %v7447 = vpop.f32.mrb[0].mxu0
        %v7448 = vadd.f32 0.0, %v7447
        %v7449 = vpop.f32.mrb[0].mxu0
        %v7450 = vadd.f32 0.0, %v7449
        %v7451 = vpop.f32.mrb[0].mxu0
        %v7452 = vadd.f32 0.0, %v7451
        %v7453 = vpop.f32.mrb[0].mxu0
        %v7454 = vadd.f32 0.0, %v7453
        %7455 = vmatprep.mubr.bf16.mxu0 %v6175
        %7456 = vmatmul.mubr.bf16.gmra.mrb[0].mxu0 %v6174
        %v7457 = vpop.f32.mrb[0].mxu0
        %v7458 = vadd.f32 0.0, %v7457
        %v7459 = vpop.f32.mrb[0].mxu0
        %v7460 = vadd.f32 0.0, %v7459
        %v7461 = vpop.f32.mrb[0].mxu0
        %v7462 = vadd.f32 0.0, %v7461
        %v7463 = vpop.f32.mrb[0].mxu0
        %v7464 = vadd.f32 0.0, %v7463
        %7465 = vmatprep.mubr.bf16.mxu0 %v6179
        %7466 = vmatmul.mubr.bf16.gmra.mrb[0].mxu0 %v6178
        %v7467 = vpop.f32.mrb[0].mxu0
        %v7468 = vadd.f32 0.0, %v7467
        %v7469 = vpop.f32.mrb[0].mxu0
        %v7470 = vadd.f32 0.0, %v7469
        %v7471 = vpop.f32.mrb[0].mxu0
        %v7472 = vadd.f32 0.0, %v7471
        %v7473 = vpop.f32.mrb[0].mxu0
        %v7474 = vadd.f32 0.0, %v7473
        %7475 = vmatprep.mubr.bf16.mxu0 %v6183
        %7476 = vmatmul.mubr.bf16.gmra.mrb[0].mxu0 %v6182
        %v7477 = vpop.f32.mrb[0].mxu0
        %v7478 = vadd.f32 0.0, %v7477
        %v7479 = vpop.f32.mrb[0].mxu0
        %v7480 = vadd.f32 0.0, %v7479
        %v7481 = vpop.f32.mrb[0].mxu0
        %v7482 = vadd.f32 0.0, %v7481
        %v7483 = vpop.f32.mrb[0].mxu0
        %v7484 = vadd.f32 0.0, %v7483
        %7485 = vmatprep.mubr.bf16.mxu0 %v6187
        %7486 = vmatmul.mubr.bf16.gmra.mrb[0].mxu0 %v6186
        %v7487 = vpop.f32.mrb[0].mxu0
        %v7488 = vadd.f32 0.0, %v7487
        %v7489 = vpop.f32.mrb[0].mxu0
        %v7490 = vadd.f32 0.0, %v7489
        %v7491 = vpop.f32.mrb[0].mxu0
        %v7492 = vadd.f32 0.0, %v7491
        %v7493 = vpop.f32.mrb[0].mxu0
        %v7494 = vadd.f32 0.0, %v7493
        %7495 = vmatprep.mubr.bf16.mxu0 %v6191
        %7496 = vmatmul.mubr.bf16.gmra.mrb[0].mxu0 %v6190
        %v7497 = vpop.f32.mrb[0].mxu0
        %v7498 = vadd.f32 0.0, %v7497
        %v7499 = vpop.f32.mrb[0].mxu0
        %v7500 = vadd.f32 0.0, %v7499
        %v7501 = vpop.f32.mrb[0].mxu0
        %v7502 = vadd.f32 0.0, %v7501
        %v7503 = vpop.f32.mrb[0].mxu0
        %v7504 = vadd.f32 0.0, %v7503
        %7505 = vmatprep.mubr.bf16.mxu0 %v6195
        %7506 = vmatmul.mubr.bf16.gmra.mrb[0].mxu0 %v6194
        %v7507 = vpop.f32.mrb[0].mxu0
        %v7508 = vadd.f32 0.0, %v7507
        %v7509 = vpop.f32.mrb[0].mxu0
        %v7510 = vadd.f32 0.0, %v7509
        %v7511 = vpop.f32.mrb[0].mxu0
        %v7512 = vadd.f32 0.0, %v7511
        %v7513 = vpop.f32.mrb[0].mxu0
        %v7514 = vadd.f32 0.0, %v7513
        %7515 = vmatprep.mubr.bf16.mxu0 %v6199
        %7516 = vmatmul.mubr.bf16.gmra.mrb[0].mxu0 %v6198
        %v7517 = vpop.f32.mrb[0].mxu0
        %v7518 = vadd.f32 0.0, %v7517
        %v7519 = vpop.f32.mrb[0].mxu0
        %v7520 = vadd.f32 0.0, %v7519
        %v7521 = vpop.f32.mrb[0].mxu0
        %v7522 = vadd.f32 0.0, %v7521
        %v7523 = vpop.f32.mrb[0].mxu0
        %v7524 = vadd.f32 0.0, %v7523
        %7525 = vmatprep.mubr.bf16.mxu0 %v6203
        %7526 = vmatmul.mubr.bf16.gmra.mrb[0].mxu0 %v6202
        %v7527 = vpop.f32.mrb[0].mxu0
        %v7528 = vadd.f32 0.0, %v7527
        %v7529 = vpop.f32.mrb[0].mxu0
        %v7530 = vadd.f32 0.0, %v7529
        %v7531 = vpop.f32.mrb[0].mxu0
        %v7532 = vadd.f32 0.0, %v7531
        %v7533 = vpop.f32.mrb[0].mxu0
        %v7534 = vadd.f32 0.0, %v7533
        %7535 = vmatprep.mubr.bf16.mxu0 %v6207
        %7536 = vmatmul.mubr.bf16.gmra.mrb[0].mxu0 %v6206
        %v7537 = vpop.f32.mrb[0].mxu0
        %v7538 = vadd.f32 0.0, %v7537
        %v7539 = vpop.f32.mrb[0].mxu0
        %v7540 = vadd.f32 0.0, %v7539
        %v7541 = vpop.f32.mrb[0].mxu0
        %v7542 = vadd.f32 0.0, %v7541
        %v7543 = vpop.f32.mrb[0].mxu0
        %v7544 = vadd.f32 0.0, %v7543
        %7545 = vmatprep.mubr.bf16.mxu0 %v6211
        %7546 = vmatmul.mubr.bf16.gmra.mrb[0].mxu0 %v6210
        %v7547 = vpop.f32.mrb[0].mxu0
        %v7548 = vadd.f32 0.0, %v7547
        %v7549 = vpop.f32.mrb[0].mxu0
        %v7550 = vadd.f32 0.0, %v7549
        %v7551 = vpop.f32.mrb[0].mxu0
        %v7552 = vadd.f32 0.0, %v7551
        %v7553 = vpop.f32.mrb[0].mxu0
        %v7554 = vadd.f32 0.0, %v7553
        %7555 = vmatprep.mubr.bf16.mxu0 %v6215
        %7556 = vmatmul.mubr.bf16.gmra.mrb[0].mxu0 %v6214
        %v7557 = vpop.f32.mrb[0].mxu0
        %v7558 = vadd.f32 0.0, %v7557
        %v7559 = vpop.f32.mrb[0].mxu0
        %v7560 = vadd.f32 0.0, %v7559
        %v7561 = vpop.f32.mrb[0].mxu0
        %v7562 = vadd.f32 0.0, %v7561
        %v7563 = vpop.f32.mrb[0].mxu0
        %v7564 = vadd.f32 0.0, %v7563
        %7565 = vdwg.mxu0
        %7566 = vmatprep.subr.bf16.mxu0 %v6798
        %7567 = vmatpush1.bf16.msra.mxu0 %v6797
        %7568 = vmatprep.subr.bf16.mxu0 %v6802
        %7569 = vmatpush1.bf16.msra.mxu0 %v6801
        %7570 = vmatprep.subr.bf16.mxu0 %v6806
        %7571 = vmatpush1.bf16.msra.mxu0 %v6805
        %7572 = vmatprep.subr.bf16.mxu0 %v6810
        %7573 = vmatpush1.bf16.msra.mxu0 %v6809
        %7574 = vmatprep.subr.bf16.mxu0 %v6814
        %7575 = vmatpush1.bf16.msra.mxu0 %v6813
        %7576 = vmatprep.subr.bf16.mxu0 %v6818
        %7577 = vmatpush1.bf16.msra.mxu0 %v6817
        %7578 = vmatprep.subr.bf16.mxu0 %v6822
        %7579 = vmatpush1.bf16.msra.mxu0 %v6821
        %7580 = vmatprep.subr.bf16.mxu0 %v6826
        %7581 = vmatpush1.bf16.msra.mxu0 %v6825
        %7582 = vmatprep.subr.bf16.mxu0 %v6830
        %7583 = vmatpush1.bf16.msra.mxu0 %v6829
        %7584 = vmatprep.subr.bf16.mxu0 %v6834
        %7585 = vmatpush1.bf16.msra.mxu0 %v6833
        %7586 = vmatprep.subr.bf16.mxu0 %v6838
        %7587 = vmatpush1.bf16.msra.mxu0 %v6837
        %7588 = vmatprep.subr.bf16.mxu0 %v6842
        %7589 = vmatpush1.bf16.msra.mxu0 %v6841
        %7590 = vmatprep.subr.bf16.mxu0 %v6846
        %7591 = vmatpush1.bf16.msra.mxu0 %v6845
        %7592 = vmatprep.subr.bf16.mxu0 %v6850
        %7593 = vmatpush1.bf16.msra.mxu0 %v6849
        %7594 = vmatprep.subr.bf16.mxu0 %v6854
        %7595 = vmatpush1.bf16.msra.mxu0 %v6853
        %7596 = vmatprep.subr.bf16.mxu0 %v6858
        %7597 = vmatpush1.bf16.msra.mxu0 %v6857
        %7598 = vmatprep.mubr.bf16.mxu0 %v6157
        %7599 = vmatmul.mubr.bf16.gmra.mrb[0].mxu0 %v6156
        %v7600 = vpop.f32.mrb[0].mxu0
        %v7601 = vadd.f32 %v7408, %v7600
        %v7602 = vpop.f32.mrb[0].mxu0
        %v7603 = vadd.f32 %v7410, %v7602
        %v7604 = vpop.f32.mrb[0].mxu0
        %v7605 = vadd.f32 %v7412, %v7604
        %v7606 = vpop.f32.mrb[0].mxu0
        %v7607 = vadd.f32 %v7414, %v7606
        %7608 = vmatprep.mubr.bf16.mxu0 %v6161
        %7609 = vmatmul.mubr.bf16.gmra.mrb[0].mxu0 %v6160
        %v7610 = vpop.f32.mrb[0].mxu0
        %v7611 = vadd.f32 %v7418, %v7610
        %v7612 = vpop.f32.mrb[0].mxu0
        %v7613 = vadd.f32 %v7420, %v7612
        %v7614 = vpop.f32.mrb[0].mxu0
        %v7615 = vadd.f32 %v7422, %v7614
        %v7616 = vpop.f32.mrb[0].mxu0
        %v7617 = vadd.f32 %v7424, %v7616
        %7618 = vmatprep.mubr.bf16.mxu0 %v6165
        %7619 = vmatmul.mubr.bf16.gmra.mrb[0].mxu0 %v6164
        %v7620 = vpop.f32.mrb[0].mxu0
        %v7621 = vadd.f32 %v7428, %v7620
        %v7622 = vpop.f32.mrb[0].mxu0
        %v7623 = vadd.f32 %v7430, %v7622
        %v7624 = vpop.f32.mrb[0].mxu0
        %v7625 = vadd.f32 %v7432, %v7624
        %v7626 = vpop.f32.mrb[0].mxu0
        %v7627 = vadd.f32 %v7434, %v7626
        %7628 = vmatprep.mubr.bf16.mxu0 %v6169
        %7629 = vmatmul.mubr.bf16.gmra.mrb[0].mxu0 %v6168
        %v7630 = vpop.f32.mrb[0].mxu0
        %v7631 = vadd.f32 %v7438, %v7630
        %v7632 = vpop.f32.mrb[0].mxu0
        %v7633 = vadd.f32 %v7440, %v7632
        %v7634 = vpop.f32.mrb[0].mxu0
        %v7635 = vadd.f32 %v7442, %v7634
        %v7636 = vpop.f32.mrb[0].mxu0
        %v7637 = vadd.f32 %v7444, %v7636
        %7638 = vmatprep.mubr.bf16.mxu0 %v6173
        %7639 = vmatmul.mubr.bf16.gmra.mrb[0].mxu0 %v6172
        %v7640 = vpop.f32.mrb[0].mxu0
        %v7641 = vadd.f32 %v7448, %v7640
        %v7642 = vpop.f32.mrb[0].mxu0
        %v7643 = vadd.f32 %v7450, %v7642
        %v7644 = vpop.f32.mrb[0].mxu0
        %v7645 = vadd.f32 %v7452, %v7644
        %v7646 = vpop.f32.mrb[0].mxu0
        %v7647 = vadd.f32 %v7454, %v7646
        %7648 = vmatprep.mubr.bf16.mxu0 %v6177
        %7649 = vmatmul.mubr.bf16.gmra.mrb[0].mxu0 %v6176
        %v7650 = vpop.f32.mrb[0].mxu0
        %v7651 = vadd.f32 %v7458, %v7650
        %v7652 = vpop.f32.mrb[0].mxu0
        %v7653 = vadd.f32 %v7460, %v7652
        %v7654 = vpop.f32.mrb[0].mxu0
        %v7655 = vadd.f32 %v7462, %v7654
        %v7656 = vpop.f32.mrb[0].mxu0
        %v7657 = vadd.f32 %v7464, %v7656
        %7658 = vmatprep.mubr.bf16.mxu0 %v6181
        %7659 = vmatmul.mubr.bf16.gmra.mrb[0].mxu0 %v6180
        %v7660 = vpop.f32.mrb[0].mxu0
        %v7661 = vadd.f32 %v7468, %v7660
        %v7662 = vpop.f32.mrb[0].mxu0
        %v7663 = vadd.f32 %v7470, %v7662
        %v7664 = vpop.f32.mrb[0].mxu0
        %v7665 = vadd.f32 %v7472, %v7664
        %v7666 = vpop.f32.mrb[0].mxu0
        %v7667 = vadd.f32 %v7474, %v7666
        %7668 = vmatprep.mubr.bf16.mxu0 %v6185
        %7669 = vmatmul.mubr.bf16.gmra.mrb[0].mxu0 %v6184
        %v7670 = vpop.f32.mrb[0].mxu0
        %v7671 = vadd.f32 %v7478, %v7670
        %v7672 = vpop.f32.mrb[0].mxu0
        %v7673 = vadd.f32 %v7480, %v7672
        %v7674 = vpop.f32.mrb[0].mxu0
        %v7675 = vadd.f32 %v7482, %v7674
        %v7676 = vpop.f32.mrb[0].mxu0
        %v7677 = vadd.f32 %v7484, %v7676
        %7678 = vmatprep.mubr.bf16.mxu0 %v6189
        %7679 = vmatmul.mubr.bf16.gmra.mrb[0].mxu0 %v6188
        %v7680 = vpop.f32.mrb[0].mxu0
        %v7681 = vadd.f32 %v7488, %v7680
        %v7682 = vpop.f32.mrb[0].mxu0
        %v7683 = vadd.f32 %v7490, %v7682
        %v7684 = vpop.f32.mrb[0].mxu0
        %v7685 = vadd.f32 %v7492, %v7684
        %v7686 = vpop.f32.mrb[0].mxu0
        %v7687 = vadd.f32 %v7494, %v7686
        %7688 = vmatprep.mubr.bf16.mxu0 %v6193
        %7689 = vmatmul.mubr.bf16.gmra.mrb[0].mxu0 %v6192
        %v7690 = vpop.f32.mrb[0].mxu0
        %v7691 = vadd.f32 %v7498, %v7690
        %v7692 = vpop.f32.mrb[0].mxu0
        %v7693 = vadd.f32 %v7500, %v7692
        %v7694 = vpop.f32.mrb[0].mxu0
        %v7695 = vadd.f32 %v7502, %v7694
        %v7696 = vpop.f32.mrb[0].mxu0
        %v7697 = vadd.f32 %v7504, %v7696
        %7698 = vmatprep.mubr.bf16.mxu0 %v6197
        %7699 = vmatmul.mubr.bf16.gmra.mrb[0].mxu0 %v6196
        %v7700 = vpop.f32.mrb[0].mxu0
        %v7701 = vadd.f32 %v7508, %v7700
        %v7702 = vpop.f32.mrb[0].mxu0
        %v7703 = vadd.f32 %v7510, %v7702
        %v7704 = vpop.f32.mrb[0].mxu0
        %v7705 = vadd.f32 %v7512, %v7704
        %v7706 = vpop.f32.mrb[0].mxu0
        %v7707 = vadd.f32 %v7514, %v7706
        %7708 = vmatprep.mubr.bf16.mxu0 %v6201
        %7709 = vmatmul.mubr.bf16.gmra.mrb[0].mxu0 %v6200
        %v7710 = vpop.f32.mrb[0].mxu0
        %v7711 = vadd.f32 %v7518, %v7710
        %v7712 = vpop.f32.mrb[0].mxu0
        %v7713 = vadd.f32 %v7520, %v7712
        %v7714 = vpop.f32.mrb[0].mxu0
        %v7715 = vadd.f32 %v7522, %v7714
        %v7716 = vpop.f32.mrb[0].mxu0
        %v7717 = vadd.f32 %v7524, %v7716
        %7718 = vmatprep.mubr.bf16.mxu0 %v6205
        %7719 = vmatmul.mubr.bf16.gmra.mrb[0].mxu0 %v6204
        %v7720 = vpop.f32.mrb[0].mxu0
        %v7721 = vadd.f32 %v7528, %v7720
        %v7722 = vpop.f32.mrb[0].mxu0
        %v7723 = vadd.f32 %v7530, %v7722
        %v7724 = vpop.f32.mrb[0].mxu0
        %v7725 = vadd.f32 %v7532, %v7724
        %v7726 = vpop.f32.mrb[0].mxu0
        %v7727 = vadd.f32 %v7534, %v7726
        %7728 = vmatprep.mubr.bf16.mxu0 %v6209
        %7729 = vmatmul.mubr.bf16.gmra.mrb[0].mxu0 %v6208
        %v7730 = vpop.f32.mrb[0].mxu0
        %v7731 = vadd.f32 %v7538, %v7730
        %v7732 = vpop.f32.mrb[0].mxu0
        %v7733 = vadd.f32 %v7540, %v7732
        %v7734 = vpop.f32.mrb[0].mxu0
        %v7735 = vadd.f32 %v7542, %v7734
        %v7736 = vpop.f32.mrb[0].mxu0
        %v7737 = vadd.f32 %v7544, %v7736
        %7738 = vmatprep.mubr.bf16.mxu0 %v6213
        %7739 = vmatmul.mubr.bf16.gmra.mrb[0].mxu0 %v6212
        %v7740 = vpop.f32.mrb[0].mxu0
        %v7741 = vadd.f32 %v7548, %v7740
        %v7742 = vpop.f32.mrb[0].mxu0
        %v7743 = vadd.f32 %v7550, %v7742
        %v7744 = vpop.f32.mrb[0].mxu0
        %v7745 = vadd.f32 %v7552, %v7744
        %v7746 = vpop.f32.mrb[0].mxu0
        %v7747 = vadd.f32 %v7554, %v7746
        %7748 = vmatprep.mubr.bf16.mxu0 %v6217
        %7749 = vmatmul.mubr.bf16.gmra.mrb[0].mxu0 %v6216
        %v7750 = vpop.f32.mrb[0].mxu0
        %v7751 = vadd.f32 %v7558, %v7750
        %v7752 = vpop.f32.mrb[0].mxu0
        %v7753 = vadd.f32 %v7560, %v7752
        %v7754 = vpop.f32.mrb[0].mxu0
        %v7755 = vadd.f32 %v7562, %v7754
        %v7756 = vpop.f32.mrb[0].mxu0
        %v7757 = vadd.f32 %v7564, %v7756
        %7758 = vdwg.mxu0
        %v7759 = vpack.c.bf16 %v7219, %v7215
        %v7760 = vpack.c.bf16 %v7221, %v7217
        %v7761 = vpack.c.bf16 %v7605, %v7601
        %v7762 = vpack.c.bf16 %v7607, %v7603
        %v7763 = vpack.c.bf16 %v7229, %v7225
        %v7764 = vpack.c.bf16 %v7231, %v7227
        %v7765 = vpack.c.bf16 %v7615, %v7611
        %v7766 = vpack.c.bf16 %v7617, %v7613
        %v7767 = vpack.c.bf16 %v7239, %v7235
        %v7768 = vpack.c.bf16 %v7241, %v7237
        %v7769 = vpack.c.bf16 %v7625, %v7621
        %v7770 = vpack.c.bf16 %v7627, %v7623
        %v7771 = vpack.c.bf16 %v7249, %v7245
        %v7772 = vpack.c.bf16 %v7251, %v7247
        %v7773 = vpack.c.bf16 %v7635, %v7631
        %v7774 = vpack.c.bf16 %v7637, %v7633
        %v7775 = vpack.c.bf16 %v7259, %v7255
        %v7776 = vpack.c.bf16 %v7261, %v7257
        %v7777 = vpack.c.bf16 %v7645, %v7641
        %v7778 = vpack.c.bf16 %v7647, %v7643
        %v7779 = vpack.c.bf16 %v7269, %v7265
        %v7780 = vpack.c.bf16 %v7271, %v7267
        %v7781 = vpack.c.bf16 %v7655, %v7651
        %v7782 = vpack.c.bf16 %v7657, %v7653
        %v7783 = vpack.c.bf16 %v7279, %v7275
        %v7784 = vpack.c.bf16 %v7281, %v7277
        %v7785 = vpack.c.bf16 %v7665, %v7661
        %v7786 = vpack.c.bf16 %v7667, %v7663
        %v7787 = vpack.c.bf16 %v7289, %v7285
        %v7788 = vpack.c.bf16 %v7291, %v7287
        %v7789 = vpack.c.bf16 %v7675, %v7671
        %v7790 = vpack.c.bf16 %v7677, %v7673
        %v7791 = vpack.c.bf16 %v7299, %v7295
        %v7792 = vpack.c.bf16 %v7301, %v7297
        %v7793 = vpack.c.bf16 %v7685, %v7681
        %v7794 = vpack.c.bf16 %v7687, %v7683
        %v7795 = vpack.c.bf16 %v7309, %v7305
        %v7796 = vpack.c.bf16 %v7311, %v7307
        %v7797 = vpack.c.bf16 %v7695, %v7691
        %v7798 = vpack.c.bf16 %v7697, %v7693
        %v7799 = vpack.c.bf16 %v7319, %v7315
        %v7800 = vpack.c.bf16 %v7321, %v7317
        %v7801 = vpack.c.bf16 %v7705, %v7701
        %v7802 = vpack.c.bf16 %v7707, %v7703
        %v7803 = vpack.c.bf16 %v7329, %v7325
        %v7804 = vpack.c.bf16 %v7331, %v7327
        %v7805 = vpack.c.bf16 %v7715, %v7711
        %v7806 = vpack.c.bf16 %v7717, %v7713
        %v7807 = vpack.c.bf16 %v7339, %v7335
        %v7808 = vpack.c.bf16 %v7341, %v7337
        %v7809 = vpack.c.bf16 %v7725, %v7721
        %v7810 = vpack.c.bf16 %v7727, %v7723
        %v7811 = vpack.c.bf16 %v7349, %v7345
        %v7812 = vpack.c.bf16 %v7351, %v7347
        %v7813 = vpack.c.bf16 %v7735, %v7731
        %v7814 = vpack.c.bf16 %v7737, %v7733
        %v7815 = vpack.c.bf16 %v7359, %v7355
        %v7816 = vpack.c.bf16 %v7361, %v7357
        %v7817 = vpack.c.bf16 %v7745, %v7741
        %v7818 = vpack.c.bf16 %v7747, %v7743
        %v7819 = vpack.c.bf16 %v7369, %v7365
        %v7820 = vpack.c.bf16 %v7371, %v7367
        %v7821 = vpack.c.bf16 %v7755, %v7751
        %v7822 = vpack.c.bf16 %v7757, %v7753
        %v7825 = vunpack.c.l.s4 1966171168
        %v7826 = vunpack.c.0.s8 %v7825
        %v7827 = vlaneseq
        %v7828 = vshrl.u32 %v7827, 7
        %v7829 = vsub.s32 %v7826, %v7828
        %v7830 = vrot.slane %v6346, %v7829
        %v7831 = vcombine.high %v7830, %v7830
        %v7833 = vunpack.c.l.s4 1966171168
        %v7834 = vunpack.c.0.s8 %v7833
        %v7835 = vlaneseq
        %v7836 = vshrl.u32 %v7835, 7
        %v7837 = vsub.s32 %v7834, %v7836
        %v7838 = vrot.slane %v7830, %v7837
        %v7840 = vunpack.c.l.s4 1966171168
        %v7841 = vunpack.c.0.s8 %v7840
        %v7842 = vlaneseq
        %v7843 = vshrl.u32 %v7842, 7
        %v7844 = vsub.s32 %v7841, %v7843
        %v7845 = vrot.slane %v7831, %v7844
        %v7846 = vcombine.high %v7838, %v7838
        %v7847 = vcombine.high %v7845, %v7845
        %v7849 = vpack.i.b16 %v7838, %v7838
        %v7851 = vlaneseq
        %v7852 = vshrl.u32 %v7851, 7
        %v7853 = vsub.s32 0, %v7852
        %v7854 = vrot.slane %v7849, %v7853
        %v7856 = vpack.i.b16 %v7845, %v7845
        %v7858 = vlaneseq
        %v7859 = vshrl.u32 %v7858, 7
        %v7860 = vsub.s32 0, %v7859
        %v7861 = vrot.slane %v7856, %v7860
        %v7863 = vpack.i.b16 %v7846, %v7846
        %v7865 = vlaneseq
        %v7866 = vshrl.u32 %v7865, 7
        %v7867 = vsub.s32 0, %v7866
        %v7868 = vrot.slane %v7863, %v7867
        %v7870 = vpack.i.b16 %v7847, %v7847
        %v7872 = vlaneseq
        %v7873 = vshrl.u32 %v7872, 7
        %v7874 = vsub.s32 0, %v7873
        %v7875 = vrot.slane %v7870, %v7874
        %v7876 = vadd.bf16 %v7759, %v7854
        %v7877 = vadd.bf16 %v7760, %v7861
        %v7878 = vadd.bf16 %v7761, %v7868
        %v7879 = vadd.bf16 %v7762, %v7875
        %v7880 = vadd.bf16 %v7763, %v7854
        %v7881 = vadd.bf16 %v7764, %v7861
        %v7882 = vadd.bf16 %v7765, %v7868
        %v7883 = vadd.bf16 %v7766, %v7875
        %v7884 = vadd.bf16 %v7767, %v7854
        %v7885 = vadd.bf16 %v7768, %v7861
        %v7886 = vadd.bf16 %v7769, %v7868
        %v7887 = vadd.bf16 %v7770, %v7875
        %v7888 = vadd.bf16 %v7771, %v7854
        %v7889 = vadd.bf16 %v7772, %v7861
        %v7890 = vadd.bf16 %v7773, %v7868
        %v7891 = vadd.bf16 %v7774, %v7875
        %v7892 = vadd.bf16 %v7775, %v7854
        %v7893 = vadd.bf16 %v7776, %v7861
        %v7894 = vadd.bf16 %v7777, %v7868
        %v7895 = vadd.bf16 %v7778, %v7875
        %v7896 = vadd.bf16 %v7779, %v7854
        %v7897 = vadd.bf16 %v7780, %v7861
        %v7898 = vadd.bf16 %v7781, %v7868
        %v7899 = vadd.bf16 %v7782, %v7875
        %v7900 = vadd.bf16 %v7783, %v7854
        %v7901 = vadd.bf16 %v7784, %v7861
        %v7902 = vadd.bf16 %v7785, %v7868
        %v7903 = vadd.bf16 %v7786, %v7875
        %v7904 = vadd.bf16 %v7787, %v7854
        %v7905 = vadd.bf16 %v7788, %v7861
        %v7906 = vadd.bf16 %v7789, %v7868
        %v7907 = vadd.bf16 %v7790, %v7875
        %v7908 = vadd.bf16 %v7791, %v7854
        %v7909 = vadd.bf16 %v7792, %v7861
        %v7910 = vadd.bf16 %v7793, %v7868
        %v7911 = vadd.bf16 %v7794, %v7875
        %v7912 = vadd.bf16 %v7795, %v7854
        %v7913 = vadd.bf16 %v7796, %v7861
        %v7914 = vadd.bf16 %v7797, %v7868
        %v7915 = vadd.bf16 %v7798, %v7875
        %v7916 = vadd.bf16 %v7799, %v7854
        %v7917 = vadd.bf16 %v7800, %v7861
        %v7918 = vadd.bf16 %v7801, %v7868
        %v7919 = vadd.bf16 %v7802, %v7875
        %v7920 = vadd.bf16 %v7803, %v7854
        %v7921 = vadd.bf16 %v7804, %v7861
        %v7922 = vadd.bf16 %v7805, %v7868
        %v7923 = vadd.bf16 %v7806, %v7875
        %v7924 = vadd.bf16 %v7807, %v7854
        %v7925 = vadd.bf16 %v7808, %v7861
        %v7926 = vadd.bf16 %v7809, %v7868
        %v7927 = vadd.bf16 %v7810, %v7875
        %v7928 = vadd.bf16 %v7811, %v7854
        %v7929 = vadd.bf16 %v7812, %v7861
        %v7930 = vadd.bf16 %v7813, %v7868
        %v7931 = vadd.bf16 %v7814, %v7875
        %v7932 = vadd.bf16 %v7815, %v7854
        %v7933 = vadd.bf16 %v7816, %v7861
        %v7934 = vadd.bf16 %v7817, %v7868
        %v7935 = vadd.bf16 %v7818, %v7875
        %v7936 = vadd.bf16 %v7819, %v7854
        %v7937 = vadd.bf16 %v7820, %v7861
        %v7938 = vadd.bf16 %v7821, %v7868
        %v7939 = vadd.bf16 %v7822, %v7875
        %v7940 = vmax.bf16 %v7876, 0
        %v7941 = vmax.bf16 %v7877, 0
        %v7942 = vmax.bf16 %v7878, 0
        %v7943 = vmax.bf16 %v7879, 0
        %v7944 = vmax.bf16 %v7880, 0
        %v7945 = vmax.bf16 %v7881, 0
        %v7946 = vmax.bf16 %v7882, 0
        %v7947 = vmax.bf16 %v7883, 0
        %v7948 = vmax.bf16 %v7884, 0
        %v7949 = vmax.bf16 %v7885, 0
        %v7950 = vmax.bf16 %v7886, 0
        %v7951 = vmax.bf16 %v7887, 0
        %v7952 = vmax.bf16 %v7888, 0
        %v7953 = vmax.bf16 %v7889, 0
        %v7954 = vmax.bf16 %v7890, 0
        %v7955 = vmax.bf16 %v7891, 0
        %v7956 = vmax.bf16 %v7892, 0
        %v7957 = vmax.bf16 %v7893, 0
        %v7958 = vmax.bf16 %v7894, 0
        %v7959 = vmax.bf16 %v7895, 0
        %v7960 = vmax.bf16 %v7896, 0
        %v7961 = vmax.bf16 %v7897, 0
        %v7962 = vmax.bf16 %v7898, 0
        %v7963 = vmax.bf16 %v7899, 0
        %v7964 = vmax.bf16 %v7900, 0
        %v7965 = vmax.bf16 %v7901, 0
        %v7966 = vmax.bf16 %v7902, 0
        %v7967 = vmax.bf16 %v7903, 0
        %v7968 = vmax.bf16 %v7904, 0
        %v7969 = vmax.bf16 %v7905, 0
        %v7970 = vmax.bf16 %v7906, 0
        %v7971 = vmax.bf16 %v7907, 0
        %v7972 = vmax.bf16 %v7908, 0
        %v7973 = vmax.bf16 %v7909, 0
        %v7974 = vmax.bf16 %v7910, 0
        %v7975 = vmax.bf16 %v7911, 0
        %v7976 = vmax.bf16 %v7912, 0
        %v7977 = vmax.bf16 %v7913, 0
        %v7978 = vmax.bf16 %v7914, 0
        %v7979 = vmax.bf16 %v7915, 0
        %v7980 = vmax.bf16 %v7916, 0
        %v7981 = vmax.bf16 %v7917, 0
        %v7982 = vmax.bf16 %v7918, 0
        %v7983 = vmax.bf16 %v7919, 0
        %v7984 = vmax.bf16 %v7920, 0
        %v7985 = vmax.bf16 %v7921, 0
        %v7986 = vmax.bf16 %v7922, 0
        %v7987 = vmax.bf16 %v7923, 0
        %v7988 = vmax.bf16 %v7924, 0
        %v7989 = vmax.bf16 %v7925, 0
        %v7990 = vmax.bf16 %v7926, 0
        %v7991 = vmax.bf16 %v7927, 0
        %v7992 = vmax.bf16 %v7928, 0
        %v7993 = vmax.bf16 %v7929, 0
        %v7994 = vmax.bf16 %v7930, 0
        %v7995 = vmax.bf16 %v7931, 0
        %v7996 = vmax.bf16 %v7932, 0
        %v7997 = vmax.bf16 %v7933, 0
        %v7998 = vmax.bf16 %v7934, 0
        %v7999 = vmax.bf16 %v7935, 0
        %v8000 = vmax.bf16 %v7936, 0
        %v8001 = vmax.bf16 %v7937, 0
        %v8002 = vmax.bf16 %v7938, 0
        %v8003 = vmax.bf16 %v7939, 0
        %v8004 = vld [vmem:[#allocation9] sm:$0xff]
        %v8005 = vld [vmem:[#allocation9 + $0x8] sm:$0xff]
        %v8006 = vld [vmem:[#allocation9 + $0x10] sm:$0xff]
        %v8007 = vld [vmem:[#allocation9 + $0x18] sm:$0xff]
        %v8008 = vld [vmem:[#allocation9 + $0x20] sm:$0xff]
        %v8009 = vld [vmem:[#allocation9 + $0x28] sm:$0xff]
        %v8010 = vld [vmem:[#allocation9 + $0x30] sm:$0xff]
        %v8011 = vld [vmem:[#allocation9 + $0x38] sm:$0xff]
        %v8012 = vld [vmem:[#allocation9 + $0x40] sm:$0xff]
        %v8013 = vld [vmem:[#allocation9 + $0x48] sm:$0xff]
        %v8014 = vld [vmem:[#allocation9 + $0x50] sm:$0xff]
        %v8015 = vld [vmem:[#allocation9 + $0x58] sm:$0xff]
        %v8016 = vld [vmem:[#allocation9 + $0x60] sm:$0xff]
        %v8017 = vld [vmem:[#allocation9 + $0x68] sm:$0xff]
        %v8018 = vld [vmem:[#allocation9 + $0x70] sm:$0xff]
        %v8019 = vld [vmem:[#allocation9 + $0x78] sm:$0xff]
        %v8020 = vld [vmem:[#allocation9 + $0x80] sm:$0xff]
        %v8021 = vld [vmem:[#allocation9 + $0x88] sm:$0xff]
        %v8022 = vld [vmem:[#allocation9 + $0x90] sm:$0xff]
        %v8023 = vld [vmem:[#allocation9 + $0x98] sm:$0xff]
        %v8024 = vld [vmem:[#allocation9 + $0xa0] sm:$0xff]
        %v8025 = vld [vmem:[#allocation9 + $0xa8] sm:$0xff]
        %v8026 = vld [vmem:[#allocation9 + $0xb0] sm:$0xff]
        %v8027 = vld [vmem:[#allocation9 + $0xb8] sm:$0xff]
        %v8028 = vld [vmem:[#allocation9 + $0xc0] sm:$0xff]
        %v8029 = vld [vmem:[#allocation9 + $0xc8] sm:$0xff]
        %v8030 = vld [vmem:[#allocation9 + $0xd0] sm:$0xff]
        %v8031 = vld [vmem:[#allocation9 + $0xd8] sm:$0xff]
        %v8032 = vld [vmem:[#allocation9 + $0xe0] sm:$0xff]
        %v8033 = vld [vmem:[#allocation9 + $0xe8] sm:$0xff]
        %v8034 = vld [vmem:[#allocation9 + $0xf0] sm:$0xff]
        %v8035 = vld [vmem:[#allocation9 + $0xf8] sm:$0xff]
        %v8036 = vld [vmem:[#allocation9 + $0x100] sm:$0xff]
        %v8037 = vld [vmem:[#allocation9 + $0x108] sm:$0xff]
        %v8038 = vld [vmem:[#allocation9 + $0x110] sm:$0xff]
        %v8039 = vld [vmem:[#allocation9 + $0x118] sm:$0xff]
        %v8040 = vld [vmem:[#allocation9 + $0x120] sm:$0xff]
        %v8041 = vld [vmem:[#allocation9 + $0x128] sm:$0xff]
        %v8042 = vld [vmem:[#allocation9 + $0x130] sm:$0xff]
        %v8043 = vld [vmem:[#allocation9 + $0x138] sm:$0xff]
        %v8044 = vld [vmem:[#allocation9 + $0x140] sm:$0xff]
        %v8045 = vld [vmem:[#allocation9 + $0x148] sm:$0xff]
        %v8046 = vld [vmem:[#allocation9 + $0x150] sm:$0xff]
        %v8047 = vld [vmem:[#allocation9 + $0x158] sm:$0xff]
        %v8048 = vld [vmem:[#allocation9 + $0x160] sm:$0xff]
        %v8049 = vld [vmem:[#allocation9 + $0x168] sm:$0xff]
        %v8050 = vld [vmem:[#allocation9 + $0x170] sm:$0xff]
        %v8051 = vld [vmem:[#allocation9 + $0x178] sm:$0xff]
        %v8052 = vld [vmem:[#allocation9 + $0x180] sm:$0xff]
        %v8053 = vld [vmem:[#allocation9 + $0x188] sm:$0xff]
        %v8054 = vld [vmem:[#allocation9 + $0x190] sm:$0xff]
        %v8055 = vld [vmem:[#allocation9 + $0x198] sm:$0xff]
        %v8056 = vld [vmem:[#allocation9 + $0x1a0] sm:$0xff]
        %v8057 = vld [vmem:[#allocation9 + $0x1a8] sm:$0xff]
        %v8058 = vld [vmem:[#allocation9 + $0x1b0] sm:$0xff]
        %v8059 = vld [vmem:[#allocation9 + $0x1b8] sm:$0xff]
        %v8060 = vld [vmem:[#allocation9 + $0x1c0] sm:$0xff]
        %v8061 = vld [vmem:[#allocation9 + $0x1c8] sm:$0xff]
        %v8062 = vld [vmem:[#allocation9 + $0x1d0] sm:$0xff]
        %v8063 = vld [vmem:[#allocation9 + $0x1d8] sm:$0xff]
        %v8064 = vld [vmem:[#allocation9 + $0x1e0] sm:$0xff]
        %v8065 = vld [vmem:[#allocation9 + $0x1e8] sm:$0xff]
        %v8066 = vld [vmem:[#allocation9 + $0x1f0] sm:$0xff]
        %v8067 = vld [vmem:[#allocation9 + $0x1f8] sm:$0xff]
        %v8068 = vld [vmem:[%s14] sm:$0x3]
        %v8133 = vunpack.c.l.b16 %v8004
        %v8134 = vunpack.c.h.b16 %v8004
        %v8135 = vunpack.c.l.b16 %v8005
        %v8136 = vunpack.c.h.b16 %v8005
        %v8137 = vunpack.c.l.b16 %v8006
        %v8138 = vunpack.c.h.b16 %v8006
        %v8139 = vunpack.c.l.b16 %v8007
        %v8140 = vunpack.c.h.b16 %v8007
        %v8141 = vunpack.c.l.b16 %v8008
        %v8142 = vunpack.c.h.b16 %v8008
        %v8143 = vunpack.c.l.b16 %v8009
        %v8144 = vunpack.c.h.b16 %v8009
        %v8145 = vunpack.c.l.b16 %v8010
        %v8146 = vunpack.c.h.b16 %v8010
        %v8147 = vunpack.c.l.b16 %v8011
        %v8148 = vunpack.c.h.b16 %v8011
        %v8149 = vunpack.c.l.b16 %v8012
        %v8150 = vunpack.c.h.b16 %v8012
        %v8151 = vunpack.c.l.b16 %v8013
        %v8152 = vunpack.c.h.b16 %v8013
        %v8153 = vunpack.c.l.b16 %v8014
        %v8154 = vunpack.c.h.b16 %v8014
        %v8155 = vunpack.c.l.b16 %v8015
        %v8156 = vunpack.c.h.b16 %v8015
        %v8157 = vunpack.c.l.b16 %v8016
        %v8158 = vunpack.c.h.b16 %v8016
        %v8159 = vunpack.c.l.b16 %v8017
        %v8160 = vunpack.c.h.b16 %v8017
        %v8161 = vunpack.c.l.b16 %v8018
        %v8162 = vunpack.c.h.b16 %v8018
        %v8163 = vunpack.c.l.b16 %v8019
        %v8164 = vunpack.c.h.b16 %v8019
        %v8165 = vunpack.c.l.b16 %v8020
        %v8166 = vunpack.c.h.b16 %v8020
        %v8167 = vunpack.c.l.b16 %v8021
        %v8168 = vunpack.c.h.b16 %v8021
        %v8169 = vunpack.c.l.b16 %v8022
        %v8170 = vunpack.c.h.b16 %v8022
        %v8171 = vunpack.c.l.b16 %v8023
        %v8172 = vunpack.c.h.b16 %v8023
        %v8173 = vunpack.c.l.b16 %v8024
        %v8174 = vunpack.c.h.b16 %v8024
        %v8175 = vunpack.c.l.b16 %v8025
        %v8176 = vunpack.c.h.b16 %v8025
        %v8177 = vunpack.c.l.b16 %v8026
        %v8178 = vunpack.c.h.b16 %v8026
        %v8179 = vunpack.c.l.b16 %v8027
        %v8180 = vunpack.c.h.b16 %v8027
        %v8181 = vunpack.c.l.b16 %v8028
        %v8182 = vunpack.c.h.b16 %v8028
        %v8183 = vunpack.c.l.b16 %v8029
        %v8184 = vunpack.c.h.b16 %v8029
        %v8185 = vunpack.c.l.b16 %v8030
        %v8186 = vunpack.c.h.b16 %v8030
        %v8187 = vunpack.c.l.b16 %v8031
        %v8188 = vunpack.c.h.b16 %v8031
        %v8189 = vunpack.c.l.b16 %v8032
        %v8190 = vunpack.c.h.b16 %v8032
        %v8191 = vunpack.c.l.b16 %v8033
        %v8192 = vunpack.c.h.b16 %v8033
        %v8193 = vunpack.c.l.b16 %v8034
        %v8194 = vunpack.c.h.b16 %v8034
        %v8195 = vunpack.c.l.b16 %v8035
        %v8196 = vunpack.c.h.b16 %v8035
        %v8197 = vunpack.c.l.b16 %v8036
        %v8198 = vunpack.c.h.b16 %v8036
        %v8199 = vunpack.c.l.b16 %v8037
        %v8200 = vunpack.c.h.b16 %v8037
        %v8201 = vunpack.c.l.b16 %v8038
        %v8202 = vunpack.c.h.b16 %v8038
        %v8203 = vunpack.c.l.b16 %v8039
        %v8204 = vunpack.c.h.b16 %v8039
        %v8205 = vunpack.c.l.b16 %v8040
        %v8206 = vunpack.c.h.b16 %v8040
        %v8207 = vunpack.c.l.b16 %v8041
        %v8208 = vunpack.c.h.b16 %v8041
        %v8209 = vunpack.c.l.b16 %v8042
        %v8210 = vunpack.c.h.b16 %v8042
        %v8211 = vunpack.c.l.b16 %v8043
        %v8212 = vunpack.c.h.b16 %v8043
        %v8213 = vunpack.c.l.b16 %v8044
        %v8214 = vunpack.c.h.b16 %v8044
        %v8215 = vunpack.c.l.b16 %v8045
        %v8216 = vunpack.c.h.b16 %v8045
        %v8217 = vunpack.c.l.b16 %v8046
        %v8218 = vunpack.c.h.b16 %v8046
        %v8219 = vunpack.c.l.b16 %v8047
        %v8220 = vunpack.c.h.b16 %v8047
        %v8221 = vunpack.c.l.b16 %v8048
        %v8222 = vunpack.c.h.b16 %v8048
        %v8223 = vunpack.c.l.b16 %v8049
        %v8224 = vunpack.c.h.b16 %v8049
        %v8225 = vunpack.c.l.b16 %v8050
        %v8226 = vunpack.c.h.b16 %v8050
        %v8227 = vunpack.c.l.b16 %v8051
        %v8228 = vunpack.c.h.b16 %v8051
        %v8229 = vunpack.c.l.b16 %v8052
        %v8230 = vunpack.c.h.b16 %v8052
        %v8231 = vunpack.c.l.b16 %v8053
        %v8232 = vunpack.c.h.b16 %v8053
        %v8233 = vunpack.c.l.b16 %v8054
        %v8234 = vunpack.c.h.b16 %v8054
        %v8235 = vunpack.c.l.b16 %v8055
        %v8236 = vunpack.c.h.b16 %v8055
        %v8237 = vunpack.c.l.b16 %v8056
        %v8238 = vunpack.c.h.b16 %v8056
        %v8239 = vunpack.c.l.b16 %v8057
        %v8240 = vunpack.c.h.b16 %v8057
        %v8241 = vunpack.c.l.b16 %v8058
        %v8242 = vunpack.c.h.b16 %v8058
        %v8243 = vunpack.c.l.b16 %v8059
        %v8244 = vunpack.c.h.b16 %v8059
        %v8245 = vunpack.c.l.b16 %v8060
        %v8246 = vunpack.c.h.b16 %v8060
        %v8247 = vunpack.c.l.b16 %v8061
        %v8248 = vunpack.c.h.b16 %v8061
        %v8249 = vunpack.c.l.b16 %v8062
        %v8250 = vunpack.c.h.b16 %v8062
        %v8251 = vunpack.c.l.b16 %v8063
        %v8252 = vunpack.c.h.b16 %v8063
        %v8253 = vunpack.c.l.b16 %v8064
        %v8254 = vunpack.c.h.b16 %v8064
        %v8255 = vunpack.c.l.b16 %v8065
        %v8256 = vunpack.c.h.b16 %v8065
        %v8257 = vunpack.c.l.b16 %v8066
        %v8258 = vunpack.c.h.b16 %v8066
        %v8259 = vunpack.c.l.b16 %v8067
        %v8260 = vunpack.c.h.b16 %v8067
        %v8261 = vpack.c.b16 %v8135, %v8133
        %v8262 = vpack.c.b16 %v8136, %v8134
        %v8263 = vpack.c.b16 %v8139, %v8137
        %v8264 = vpack.c.b16 %v8140, %v8138
        %v8265 = vpack.c.b16 %v8143, %v8141
        %v8266 = vpack.c.b16 %v8144, %v8142
        %v8267 = vpack.c.b16 %v8147, %v8145
        %v8268 = vpack.c.b16 %v8148, %v8146
        %v8269 = vpack.c.b16 %v8151, %v8149
        %v8270 = vpack.c.b16 %v8152, %v8150
        %v8271 = vpack.c.b16 %v8155, %v8153
        %v8272 = vpack.c.b16 %v8156, %v8154
        %v8273 = vpack.c.b16 %v8159, %v8157
        %v8274 = vpack.c.b16 %v8160, %v8158
        %v8275 = vpack.c.b16 %v8163, %v8161
        %v8276 = vpack.c.b16 %v8164, %v8162
        %v8277 = vpack.c.b16 %v8167, %v8165
        %v8278 = vpack.c.b16 %v8168, %v8166
        %v8279 = vpack.c.b16 %v8171, %v8169
        %v8280 = vpack.c.b16 %v8172, %v8170
        %v8281 = vpack.c.b16 %v8175, %v8173
        %v8282 = vpack.c.b16 %v8176, %v8174
        %v8283 = vpack.c.b16 %v8179, %v8177
        %v8284 = vpack.c.b16 %v8180, %v8178
        %v8285 = vpack.c.b16 %v8183, %v8181
        %v8286 = vpack.c.b16 %v8184, %v8182
        %v8287 = vpack.c.b16 %v8187, %v8185
        %v8288 = vpack.c.b16 %v8188, %v8186
        %v8289 = vpack.c.b16 %v8191, %v8189
        %v8290 = vpack.c.b16 %v8192, %v8190
        %v8291 = vpack.c.b16 %v8195, %v8193
        %v8292 = vpack.c.b16 %v8196, %v8194
        %v8293 = vpack.c.b16 %v8199, %v8197
        %v8294 = vpack.c.b16 %v8200, %v8198
        %v8295 = vpack.c.b16 %v8203, %v8201
        %v8296 = vpack.c.b16 %v8204, %v8202
        %v8297 = vpack.c.b16 %v8207, %v8205
        %v8298 = vpack.c.b16 %v8208, %v8206
        %v8299 = vpack.c.b16 %v8211, %v8209
        %v8300 = vpack.c.b16 %v8212, %v8210
        %v8301 = vpack.c.b16 %v8215, %v8213
        %v8302 = vpack.c.b16 %v8216, %v8214
        %v8303 = vpack.c.b16 %v8219, %v8217
        %v8304 = vpack.c.b16 %v8220, %v8218
        %v8305 = vpack.c.b16 %v8223, %v8221
        %v8306 = vpack.c.b16 %v8224, %v8222
        %v8307 = vpack.c.b16 %v8227, %v8225
        %v8308 = vpack.c.b16 %v8228, %v8226
        %v8309 = vpack.c.b16 %v8231, %v8229
        %v8310 = vpack.c.b16 %v8232, %v8230
        %v8311 = vpack.c.b16 %v8235, %v8233
        %v8312 = vpack.c.b16 %v8236, %v8234
        %v8313 = vpack.c.b16 %v8239, %v8237
        %v8314 = vpack.c.b16 %v8240, %v8238
        %v8315 = vpack.c.b16 %v8243, %v8241
        %v8316 = vpack.c.b16 %v8244, %v8242
        %v8317 = vpack.c.b16 %v8247, %v8245
        %v8318 = vpack.c.b16 %v8248, %v8246
        %v8319 = vpack.c.b16 %v8251, %v8249
        %v8320 = vpack.c.b16 %v8252, %v8250
        %v8321 = vpack.c.b16 %v8255, %v8253
        %v8322 = vpack.c.b16 %v8256, %v8254
        %v8323 = vpack.c.b16 %v8259, %v8257
        %v8324 = vpack.c.b16 %v8260, %v8258
        %8389 = vmatprep.subr.bf16.mxu0 %v8262
        %8390 = vmatpush1.bf16.msra.mxu0 %v8261
        %8391 = vmatprep.subr.bf16.mxu0 %v8264
        %8392 = vmatpush1.bf16.msra.mxu0 %v8263
        %8393 = vmatprep.subr.bf16.mxu0 %v8266
        %8394 = vmatpush1.bf16.msra.mxu0 %v8265
        %8395 = vmatprep.subr.bf16.mxu0 %v8268
        %8396 = vmatpush1.bf16.msra.mxu0 %v8267
        %8397 = vmatprep.subr.bf16.mxu0 %v8270
        %8398 = vmatpush1.bf16.msra.mxu0 %v8269
        %8399 = vmatprep.subr.bf16.mxu0 %v8272
        %8400 = vmatpush1.bf16.msra.mxu0 %v8271
        %8401 = vmatprep.subr.bf16.mxu0 %v8274
        %8402 = vmatpush1.bf16.msra.mxu0 %v8273
        %8403 = vmatprep.subr.bf16.mxu0 %v8276
        %8404 = vmatpush1.bf16.msra.mxu0 %v8275
        %8405 = vmatprep.subr.bf16.mxu0 %v8278
        %8406 = vmatpush1.bf16.msra.mxu0 %v8277
        %8407 = vmatprep.subr.bf16.mxu0 %v8280
        %8408 = vmatpush1.bf16.msra.mxu0 %v8279
        %8409 = vmatprep.subr.bf16.mxu0 %v8282
        %8410 = vmatpush1.bf16.msra.mxu0 %v8281
        %8411 = vmatprep.subr.bf16.mxu0 %v8284
        %8412 = vmatpush1.bf16.msra.mxu0 %v8283
        %8413 = vmatprep.subr.bf16.mxu0 %v8286
        %8414 = vmatpush1.bf16.msra.mxu0 %v8285
        %8415 = vmatprep.subr.bf16.mxu0 %v8288
        %8416 = vmatpush1.bf16.msra.mxu0 %v8287
        %8417 = vmatprep.subr.bf16.mxu0 %v8290
        %8418 = vmatpush1.bf16.msra.mxu0 %v8289
        %8419 = vmatprep.subr.bf16.mxu0 %v8292
        %8420 = vmatpush1.bf16.msra.mxu0 %v8291
        %8421 = vmatprep.mubr.bf16.mxu0 %v7941
        %8422 = vmatmul.mubr.bf16.gmra.mrb[0].mxu0 %v7940
        %v8423 = vpop.f32.mrb[0].mxu0
        %v8424 = vadd.f32 0.0, %v8423
        %v8425 = vpop.f32.mrb[0].mxu0
        %v8426 = vadd.f32 0.0, %v8425
        %v8427 = vpop.f32.mrb[0].mxu0
        %v8428 = vadd.f32 0.0, %v8427
        %v8429 = vpop.f32.mrb[0].mxu0
        %v8430 = vadd.f32 0.0, %v8429
        %8431 = vmatprep.mubr.bf16.mxu0 %v7945
        %8432 = vmatmul.mubr.bf16.gmra.mrb[0].mxu0 %v7944
        %v8433 = vpop.f32.mrb[0].mxu0
        %v8434 = vadd.f32 0.0, %v8433
        %v8435 = vpop.f32.mrb[0].mxu0
        %v8436 = vadd.f32 0.0, %v8435
        %v8437 = vpop.f32.mrb[0].mxu0
        %v8438 = vadd.f32 0.0, %v8437
        %v8439 = vpop.f32.mrb[0].mxu0
        %v8440 = vadd.f32 0.0, %v8439
        %8441 = vmatprep.mubr.bf16.mxu0 %v7949
        %8442 = vmatmul.mubr.bf16.gmra.mrb[0].mxu0 %v7948
        %v8443 = vpop.f32.mrb[0].mxu0
        %v8444 = vadd.f32 0.0, %v8443
        %v8445 = vpop.f32.mrb[0].mxu0
        %v8446 = vadd.f32 0.0, %v8445
        %v8447 = vpop.f32.mrb[0].mxu0
        %v8448 = vadd.f32 0.0, %v8447
        %v8449 = vpop.f32.mrb[0].mxu0
        %v8450 = vadd.f32 0.0, %v8449
        %8451 = vmatprep.mubr.bf16.mxu0 %v7953
        %8452 = vmatmul.mubr.bf16.gmra.mrb[0].mxu0 %v7952
        %v8453 = vpop.f32.mrb[0].mxu0
        %v8454 = vadd.f32 0.0, %v8453
        %v8455 = vpop.f32.mrb[0].mxu0
        %v8456 = vadd.f32 0.0, %v8455
        %v8457 = vpop.f32.mrb[0].mxu0
        %v8458 = vadd.f32 0.0, %v8457
        %v8459 = vpop.f32.mrb[0].mxu0
        %v8460 = vadd.f32 0.0, %v8459
        %8461 = vmatprep.mubr.bf16.mxu0 %v7957
        %8462 = vmatmul.mubr.bf16.gmra.mrb[0].mxu0 %v7956
        %v8463 = vpop.f32.mrb[0].mxu0
        %v8464 = vadd.f32 0.0, %v8463
        %v8465 = vpop.f32.mrb[0].mxu0
        %v8466 = vadd.f32 0.0, %v8465
        %v8467 = vpop.f32.mrb[0].mxu0
        %v8468 = vadd.f32 0.0, %v8467
        %v8469 = vpop.f32.mrb[0].mxu0
        %v8470 = vadd.f32 0.0, %v8469
        %8471 = vmatprep.mubr.bf16.mxu0 %v7961
        %8472 = vmatmul.mubr.bf16.gmra.mrb[0].mxu0 %v7960
        %v8473 = vpop.f32.mrb[0].mxu0
        %v8474 = vadd.f32 0.0, %v8473
        %v8475 = vpop.f32.mrb[0].mxu0
        %v8476 = vadd.f32 0.0, %v8475
        %v8477 = vpop.f32.mrb[0].mxu0
        %v8478 = vadd.f32 0.0, %v8477
        %v8479 = vpop.f32.mrb[0].mxu0
        %v8480 = vadd.f32 0.0, %v8479
        %8481 = vmatprep.mubr.bf16.mxu0 %v7965
        %8482 = vmatmul.mubr.bf16.gmra.mrb[0].mxu0 %v7964
        %v8483 = vpop.f32.mrb[0].mxu0
        %v8484 = vadd.f32 0.0, %v8483
        %v8485 = vpop.f32.mrb[0].mxu0
        %v8486 = vadd.f32 0.0, %v8485
        %v8487 = vpop.f32.mrb[0].mxu0
        %v8488 = vadd.f32 0.0, %v8487
        %v8489 = vpop.f32.mrb[0].mxu0
        %v8490 = vadd.f32 0.0, %v8489
        %8491 = vmatprep.mubr.bf16.mxu0 %v7969
        %8492 = vmatmul.mubr.bf16.gmra.mrb[0].mxu0 %v7968
        %v8493 = vpop.f32.mrb[0].mxu0
        %v8494 = vadd.f32 0.0, %v8493
        %v8495 = vpop.f32.mrb[0].mxu0
        %v8496 = vadd.f32 0.0, %v8495
        %v8497 = vpop.f32.mrb[0].mxu0
        %v8498 = vadd.f32 0.0, %v8497
        %v8499 = vpop.f32.mrb[0].mxu0
        %v8500 = vadd.f32 0.0, %v8499
        %8501 = vmatprep.mubr.bf16.mxu0 %v7973
        %8502 = vmatmul.mubr.bf16.gmra.mrb[0].mxu0 %v7972
        %v8503 = vpop.f32.mrb[0].mxu0
        %v8504 = vadd.f32 0.0, %v8503
        %v8505 = vpop.f32.mrb[0].mxu0
        %v8506 = vadd.f32 0.0, %v8505
        %v8507 = vpop.f32.mrb[0].mxu0
        %v8508 = vadd.f32 0.0, %v8507
        %v8509 = vpop.f32.mrb[0].mxu0
        %v8510 = vadd.f32 0.0, %v8509
        %8511 = vmatprep.mubr.bf16.mxu0 %v7977
        %8512 = vmatmul.mubr.bf16.gmra.mrb[0].mxu0 %v7976
        %v8513 = vpop.f32.mrb[0].mxu0
        %v8514 = vadd.f32 0.0, %v8513
        %v8515 = vpop.f32.mrb[0].mxu0
        %v8516 = vadd.f32 0.0, %v8515
        %v8517 = vpop.f32.mrb[0].mxu0
        %v8518 = vadd.f32 0.0, %v8517
        %v8519 = vpop.f32.mrb[0].mxu0
        %v8520 = vadd.f32 0.0, %v8519
        %8521 = vmatprep.mubr.bf16.mxu0 %v7981
        %8522 = vmatmul.mubr.bf16.gmra.mrb[0].mxu0 %v7980
        %v8523 = vpop.f32.mrb[0].mxu0
        %v8524 = vadd.f32 0.0, %v8523
        %v8525 = vpop.f32.mrb[0].mxu0
        %v8526 = vadd.f32 0.0, %v8525
        %v8527 = vpop.f32.mrb[0].mxu0
        %v8528 = vadd.f32 0.0, %v8527
        %v8529 = vpop.f32.mrb[0].mxu0
        %v8530 = vadd.f32 0.0, %v8529
        %8531 = vmatprep.mubr.bf16.mxu0 %v7985
        %8532 = vmatmul.mubr.bf16.gmra.mrb[0].mxu0 %v7984
        %v8533 = vpop.f32.mrb[0].mxu0
        %v8534 = vadd.f32 0.0, %v8533
        %v8535 = vpop.f32.mrb[0].mxu0
        %v8536 = vadd.f32 0.0, %v8535
        %v8537 = vpop.f32.mrb[0].mxu0
        %v8538 = vadd.f32 0.0, %v8537
        %v8539 = vpop.f32.mrb[0].mxu0
        %v8540 = vadd.f32 0.0, %v8539
        %8541 = vmatprep.mubr.bf16.mxu0 %v7989
        %8542 = vmatmul.mubr.bf16.gmra.mrb[0].mxu0 %v7988
        %v8543 = vpop.f32.mrb[0].mxu0
        %v8544 = vadd.f32 0.0, %v8543
        %v8545 = vpop.f32.mrb[0].mxu0
        %v8546 = vadd.f32 0.0, %v8545
        %v8547 = vpop.f32.mrb[0].mxu0
        %v8548 = vadd.f32 0.0, %v8547
        %v8549 = vpop.f32.mrb[0].mxu0
        %v8550 = vadd.f32 0.0, %v8549
        %8551 = vmatprep.mubr.bf16.mxu0 %v7993
        %8552 = vmatmul.mubr.bf16.gmra.mrb[0].mxu0 %v7992
        %v8553 = vpop.f32.mrb[0].mxu0
        %v8554 = vadd.f32 0.0, %v8553
        %v8555 = vpop.f32.mrb[0].mxu0
        %v8556 = vadd.f32 0.0, %v8555
        %v8557 = vpop.f32.mrb[0].mxu0
        %v8558 = vadd.f32 0.0, %v8557
        %v8559 = vpop.f32.mrb[0].mxu0
        %v8560 = vadd.f32 0.0, %v8559
        %8561 = vmatprep.mubr.bf16.mxu0 %v7997
        %8562 = vmatmul.mubr.bf16.gmra.mrb[0].mxu0 %v7996
        %v8563 = vpop.f32.mrb[0].mxu0
        %v8564 = vadd.f32 0.0, %v8563
        %v8565 = vpop.f32.mrb[0].mxu0
        %v8566 = vadd.f32 0.0, %v8565
        %v8567 = vpop.f32.mrb[0].mxu0
        %v8568 = vadd.f32 0.0, %v8567
        %v8569 = vpop.f32.mrb[0].mxu0
        %v8570 = vadd.f32 0.0, %v8569
        %8571 = vmatprep.mubr.bf16.mxu0 %v8001
        %8572 = vmatmul.mubr.bf16.gmra.mrb[0].mxu0 %v8000
        %v8573 = vpop.f32.mrb[0].mxu0
        %v8574 = vadd.f32 0.0, %v8573
        %v8575 = vpop.f32.mrb[0].mxu0
        %v8576 = vadd.f32 0.0, %v8575
        %v8577 = vpop.f32.mrb[0].mxu0
        %v8578 = vadd.f32 0.0, %v8577
        %v8579 = vpop.f32.mrb[0].mxu0
        %v8580 = vadd.f32 0.0, %v8579
        %8581 = vdwg.mxu0
        %8582 = vmatprep.subr.bf16.mxu0 %v8294
        %8583 = vmatpush1.bf16.msra.mxu0 %v8293
        %8584 = vmatprep.subr.bf16.mxu0 %v8296
        %8585 = vmatpush1.bf16.msra.mxu0 %v8295
        %8586 = vmatprep.subr.bf16.mxu0 %v8298
        %8587 = vmatpush1.bf16.msra.mxu0 %v8297
        %8588 = vmatprep.subr.bf16.mxu0 %v8300
        %8589 = vmatpush1.bf16.msra.mxu0 %v8299
        %8590 = vmatprep.subr.bf16.mxu0 %v8302
        %8591 = vmatpush1.bf16.msra.mxu0 %v8301
        %8592 = vmatprep.subr.bf16.mxu0 %v8304
        %8593 = vmatpush1.bf16.msra.mxu0 %v8303
        %8594 = vmatprep.subr.bf16.mxu0 %v8306
        %8595 = vmatpush1.bf16.msra.mxu0 %v8305
        %8596 = vmatprep.subr.bf16.mxu0 %v8308
        %8597 = vmatpush1.bf16.msra.mxu0 %v8307
        %8598 = vmatprep.subr.bf16.mxu0 %v8310
        %8599 = vmatpush1.bf16.msra.mxu0 %v8309
        %8600 = vmatprep.subr.bf16.mxu0 %v8312
        %8601 = vmatpush1.bf16.msra.mxu0 %v8311
        %8602 = vmatprep.subr.bf16.mxu0 %v8314
        %8603 = vmatpush1.bf16.msra.mxu0 %v8313
        %8604 = vmatprep.subr.bf16.mxu0 %v8316
        %8605 = vmatpush1.bf16.msra.mxu0 %v8315
        %8606 = vmatprep.subr.bf16.mxu0 %v8318
        %8607 = vmatpush1.bf16.msra.mxu0 %v8317
        %8608 = vmatprep.subr.bf16.mxu0 %v8320
        %8609 = vmatpush1.bf16.msra.mxu0 %v8319
        %8610 = vmatprep.subr.bf16.mxu0 %v8322
        %8611 = vmatpush1.bf16.msra.mxu0 %v8321
        %8612 = vmatprep.subr.bf16.mxu0 %v8324
        %8613 = vmatpush1.bf16.msra.mxu0 %v8323
        %8614 = vmatprep.mubr.bf16.mxu0 %v7943
        %8615 = vmatmul.mubr.bf16.gmra.mrb[0].mxu0 %v7942
        %v8616 = vpop.f32.mrb[0].mxu0
        %v8617 = vadd.f32 %v8424, %v8616
        %v8618 = vpop.f32.mrb[0].mxu0
        %v8619 = vadd.f32 %v8426, %v8618
        %v8620 = vpop.f32.mrb[0].mxu0
        %v8621 = vadd.f32 %v8428, %v8620
        %v8622 = vpop.f32.mrb[0].mxu0
        %v8623 = vadd.f32 %v8430, %v8622
        %8624 = vmatprep.mubr.bf16.mxu0 %v7947
        %8625 = vmatmul.mubr.bf16.gmra.mrb[0].mxu0 %v7946
        %v8626 = vpop.f32.mrb[0].mxu0
        %v8627 = vadd.f32 %v8434, %v8626
        %v8628 = vpop.f32.mrb[0].mxu0
        %v8629 = vadd.f32 %v8436, %v8628
        %v8630 = vpop.f32.mrb[0].mxu0
        %v8631 = vadd.f32 %v8438, %v8630
        %v8632 = vpop.f32.mrb[0].mxu0
        %v8633 = vadd.f32 %v8440, %v8632
        %8634 = vmatprep.mubr.bf16.mxu0 %v7951
        %8635 = vmatmul.mubr.bf16.gmra.mrb[0].mxu0 %v7950
        %v8636 = vpop.f32.mrb[0].mxu0
        %v8637 = vadd.f32 %v8444, %v8636
        %v8638 = vpop.f32.mrb[0].mxu0
        %v8639 = vadd.f32 %v8446, %v8638
        %v8640 = vpop.f32.mrb[0].mxu0
        %v8641 = vadd.f32 %v8448, %v8640
        %v8642 = vpop.f32.mrb[0].mxu0
        %v8643 = vadd.f32 %v8450, %v8642
        %8644 = vmatprep.mubr.bf16.mxu0 %v7955
        %8645 = vmatmul.mubr.bf16.gmra.mrb[0].mxu0 %v7954
        %v8646 = vpop.f32.mrb[0].mxu0
        %v8647 = vadd.f32 %v8454, %v8646
        %v8648 = vpop.f32.mrb[0].mxu0
        %v8649 = vadd.f32 %v8456, %v8648
        %v8650 = vpop.f32.mrb[0].mxu0
        %v8651 = vadd.f32 %v8458, %v8650
        %v8652 = vpop.f32.mrb[0].mxu0
        %v8653 = vadd.f32 %v8460, %v8652
        %8654 = vmatprep.mubr.bf16.mxu0 %v7959
        %8655 = vmatmul.mubr.bf16.gmra.mrb[0].mxu0 %v7958
        %v8656 = vpop.f32.mrb[0].mxu0
        %v8657 = vadd.f32 %v8464, %v8656
        %v8658 = vpop.f32.mrb[0].mxu0
        %v8659 = vadd.f32 %v8466, %v8658
        %v8660 = vpop.f32.mrb[0].mxu0
        %v8661 = vadd.f32 %v8468, %v8660
        %v8662 = vpop.f32.mrb[0].mxu0
        %v8663 = vadd.f32 %v8470, %v8662
        %8664 = vmatprep.mubr.bf16.mxu0 %v7963
        %8665 = vmatmul.mubr.bf16.gmra.mrb[0].mxu0 %v7962
        %v8666 = vpop.f32.mrb[0].mxu0
        %v8667 = vadd.f32 %v8474, %v8666
        %v8668 = vpop.f32.mrb[0].mxu0
        %v8669 = vadd.f32 %v8476, %v8668
        %v8670 = vpop.f32.mrb[0].mxu0
        %v8671 = vadd.f32 %v8478, %v8670
        %v8672 = vpop.f32.mrb[0].mxu0
        %v8673 = vadd.f32 %v8480, %v8672
        %8674 = vmatprep.mubr.bf16.mxu0 %v7967
        %8675 = vmatmul.mubr.bf16.gmra.mrb[0].mxu0 %v7966
        %v8676 = vpop.f32.mrb[0].mxu0
        %v8677 = vadd.f32 %v8484, %v8676
        %v8678 = vpop.f32.mrb[0].mxu0
        %v8679 = vadd.f32 %v8486, %v8678
        %v8680 = vpop.f32.mrb[0].mxu0
        %v8681 = vadd.f32 %v8488, %v8680
        %v8682 = vpop.f32.mrb[0].mxu0
        %v8683 = vadd.f32 %v8490, %v8682
        %8684 = vmatprep.mubr.bf16.mxu0 %v7971
        %8685 = vmatmul.mubr.bf16.gmra.mrb[0].mxu0 %v7970
        %v8686 = vpop.f32.mrb[0].mxu0
        %v8687 = vadd.f32 %v8494, %v8686
        %v8688 = vpop.f32.mrb[0].mxu0
        %v8689 = vadd.f32 %v8496, %v8688
        %v8690 = vpop.f32.mrb[0].mxu0
        %v8691 = vadd.f32 %v8498, %v8690
        %v8692 = vpop.f32.mrb[0].mxu0
        %v8693 = vadd.f32 %v8500, %v8692
        %8694 = vmatprep.mubr.bf16.mxu0 %v7975
        %8695 = vmatmul.mubr.bf16.gmra.mrb[0].mxu0 %v7974
        %v8696 = vpop.f32.mrb[0].mxu0
        %v8697 = vadd.f32 %v8504, %v8696
        %v8698 = vpop.f32.mrb[0].mxu0
        %v8699 = vadd.f32 %v8506, %v8698
        %v8700 = vpop.f32.mrb[0].mxu0
        %v8701 = vadd.f32 %v8508, %v8700
        %v8702 = vpop.f32.mrb[0].mxu0
        %v8703 = vadd.f32 %v8510, %v8702
        %8704 = vmatprep.mubr.bf16.mxu0 %v7979
        %8705 = vmatmul.mubr.bf16.gmra.mrb[0].mxu0 %v7978
        %v8706 = vpop.f32.mrb[0].mxu0
        %v8707 = vadd.f32 %v8514, %v8706
        %v8708 = vpop.f32.mrb[0].mxu0
        %v8709 = vadd.f32 %v8516, %v8708
        %v8710 = vpop.f32.mrb[0].mxu0
        %v8711 = vadd.f32 %v8518, %v8710
        %v8712 = vpop.f32.mrb[0].mxu0
        %v8713 = vadd.f32 %v8520, %v8712
        %8714 = vmatprep.mubr.bf16.mxu0 %v7983
        %8715 = vmatmul.mubr.bf16.gmra.mrb[0].mxu0 %v7982
        %v8716 = vpop.f32.mrb[0].mxu0
        %v8717 = vadd.f32 %v8524, %v8716
        %v8718 = vpop.f32.mrb[0].mxu0
        %v8719 = vadd.f32 %v8526, %v8718
        %v8720 = vpop.f32.mrb[0].mxu0
        %v8721 = vadd.f32 %v8528, %v8720
        %v8722 = vpop.f32.mrb[0].mxu0
        %v8723 = vadd.f32 %v8530, %v8722
        %8724 = vmatprep.mubr.bf16.mxu0 %v7987
        %8725 = vmatmul.mubr.bf16.gmra.mrb[0].mxu0 %v7986
        %v8726 = vpop.f32.mrb[0].mxu0
        %v8727 = vadd.f32 %v8534, %v8726
        %v8728 = vpop.f32.mrb[0].mxu0
        %v8729 = vadd.f32 %v8536, %v8728
        %v8730 = vpop.f32.mrb[0].mxu0
        %v8731 = vadd.f32 %v8538, %v8730
        %v8732 = vpop.f32.mrb[0].mxu0
        %v8733 = vadd.f32 %v8540, %v8732
        %8734 = vmatprep.mubr.bf16.mxu0 %v7991
        %8735 = vmatmul.mubr.bf16.gmra.mrb[0].mxu0 %v7990
        %v8736 = vpop.f32.mrb[0].mxu0
        %v8737 = vadd.f32 %v8544, %v8736
        %v8738 = vpop.f32.mrb[0].mxu0
        %v8739 = vadd.f32 %v8546, %v8738
        %v8740 = vpop.f32.mrb[0].mxu0
        %v8741 = vadd.f32 %v8548, %v8740
        %v8742 = vpop.f32.mrb[0].mxu0
        %v8743 = vadd.f32 %v8550, %v8742
        %8744 = vmatprep.mubr.bf16.mxu0 %v7995
        %8745 = vmatmul.mubr.bf16.gmra.mrb[0].mxu0 %v7994
        %v8746 = vpop.f32.mrb[0].mxu0
        %v8747 = vadd.f32 %v8554, %v8746
        %v8748 = vpop.f32.mrb[0].mxu0
        %v8749 = vadd.f32 %v8556, %v8748
        %v8750 = vpop.f32.mrb[0].mxu0
        %v8751 = vadd.f32 %v8558, %v8750
        %v8752 = vpop.f32.mrb[0].mxu0
        %v8753 = vadd.f32 %v8560, %v8752
        %8754 = vmatprep.mubr.bf16.mxu0 %v7999
        %8755 = vmatmul.mubr.bf16.gmra.mrb[0].mxu0 %v7998
        %v8756 = vpop.f32.mrb[0].mxu0
        %v8757 = vadd.f32 %v8564, %v8756
        %v8758 = vpop.f32.mrb[0].mxu0
        %v8759 = vadd.f32 %v8566, %v8758
        %v8760 = vpop.f32.mrb[0].mxu0
        %v8761 = vadd.f32 %v8568, %v8760
        %v8762 = vpop.f32.mrb[0].mxu0
        %v8763 = vadd.f32 %v8570, %v8762
        %8764 = vmatprep.mubr.bf16.mxu0 %v8003
        %8765 = vmatmul.mubr.bf16.gmra.mrb[0].mxu0 %v8002
        %v8766 = vpop.f32.mrb[0].mxu0
        %v8767 = vadd.f32 %v8574, %v8766
        %v8768 = vpop.f32.mrb[0].mxu0
        %v8769 = vadd.f32 %v8576, %v8768
        %v8770 = vpop.f32.mrb[0].mxu0
        %v8771 = vadd.f32 %v8578, %v8770
        %v8772 = vpop.f32.mrb[0].mxu0
        %v8773 = vadd.f32 %v8580, %v8772
        %8774 = vdwg.mxu0
        %v8775 = vpack.c.bf16 %v8621, %v8617
        %v8776 = vpack.c.bf16 %v8623, %v8619
        %v8777 = vpack.c.bf16 %v8631, %v8627
        %v8778 = vpack.c.bf16 %v8633, %v8629
        %v8779 = vpack.c.bf16 %v8641, %v8637
        %v8780 = vpack.c.bf16 %v8643, %v8639
        %v8781 = vpack.c.bf16 %v8651, %v8647
        %v8782 = vpack.c.bf16 %v8653, %v8649
        %v8783 = vpack.c.bf16 %v8661, %v8657
        %v8784 = vpack.c.bf16 %v8663, %v8659
        %v8785 = vpack.c.bf16 %v8671, %v8667
        %v8786 = vpack.c.bf16 %v8673, %v8669
        %v8787 = vpack.c.bf16 %v8681, %v8677
        %v8788 = vpack.c.bf16 %v8683, %v8679
        %v8789 = vpack.c.bf16 %v8691, %v8687
        %v8790 = vpack.c.bf16 %v8693, %v8689
        %v8791 = vpack.c.bf16 %v8701, %v8697
        %v8792 = vpack.c.bf16 %v8703, %v8699
        %v8793 = vpack.c.bf16 %v8711, %v8707
        %v8794 = vpack.c.bf16 %v8713, %v8709
        %v8795 = vpack.c.bf16 %v8721, %v8717
        %v8796 = vpack.c.bf16 %v8723, %v8719
        %v8797 = vpack.c.bf16 %v8731, %v8727
        %v8798 = vpack.c.bf16 %v8733, %v8729
        %v8799 = vpack.c.bf16 %v8741, %v8737
        %v8800 = vpack.c.bf16 %v8743, %v8739
        %v8801 = vpack.c.bf16 %v8751, %v8747
        %v8802 = vpack.c.bf16 %v8753, %v8749
        %v8803 = vpack.c.bf16 %v8761, %v8757
        %v8804 = vpack.c.bf16 %v8763, %v8759
        %v8805 = vpack.c.bf16 %v8771, %v8767
        %v8806 = vpack.c.bf16 %v8773, %v8769
        %v8809 = vunpack.c.l.s4 1966171168
        %v8810 = vunpack.c.0.s8 %v8809
        %v8811 = vlaneseq
        %v8812 = vshrl.u32 %v8811, 7
        %v8813 = vsub.s32 %v8810, %v8812
        %v8814 = vrot.slane %v8068, %v8813
        %v8815 = vcombine.high %v8814, %v8814
        %v8817 = vunpack.c.l.s4 1966171168
        %v8818 = vunpack.c.0.s8 %v8817
        %v8819 = vlaneseq
        %v8820 = vshrl.u32 %v8819, 7
        %v8821 = vsub.s32 %v8818, %v8820
        %v8822 = vrot.slane %v8814, %v8821
        %v8824 = vunpack.c.l.s4 1966171168
        %v8825 = vunpack.c.0.s8 %v8824
        %v8826 = vlaneseq
        %v8827 = vshrl.u32 %v8826, 7
        %v8828 = vsub.s32 %v8825, %v8827
        %v8829 = vrot.slane %v8815, %v8828
        %v8831 = vpack.i.b16 %v8822, %v8822
        %v8833 = vlaneseq
        %v8834 = vshrl.u32 %v8833, 7
        %v8835 = vsub.s32 0, %v8834
        %v8836 = vrot.slane %v8831, %v8835
        %v8838 = vpack.i.b16 %v8829, %v8829
        %v8840 = vlaneseq
        %v8841 = vshrl.u32 %v8840, 7
        %v8842 = vsub.s32 0, %v8841
        %v8843 = vrot.slane %v8838, %v8842
        %v8844 = vadd.bf16 %v8775, %v8836
        %v8845 = vadd.bf16 %v8776, %v8843
        %v8846 = vadd.bf16 %v8777, %v8836
        %v8847 = vadd.bf16 %v8778, %v8843
        %v8848 = vadd.bf16 %v8779, %v8836
        %v8849 = vadd.bf16 %v8780, %v8843
        %v8850 = vadd.bf16 %v8781, %v8836
        %v8851 = vadd.bf16 %v8782, %v8843
        %v8852 = vadd.bf16 %v8783, %v8836
        %v8853 = vadd.bf16 %v8784, %v8843
        %v8854 = vadd.bf16 %v8785, %v8836
        %v8855 = vadd.bf16 %v8786, %v8843
        %v8856 = vadd.bf16 %v8787, %v8836
        %v8857 = vadd.bf16 %v8788, %v8843
        %v8858 = vadd.bf16 %v8789, %v8836
        %v8859 = vadd.bf16 %v8790, %v8843
        %v8860 = vadd.bf16 %v8791, %v8836
        %v8861 = vadd.bf16 %v8792, %v8843
        %v8862 = vadd.bf16 %v8793, %v8836
        %v8863 = vadd.bf16 %v8794, %v8843
        %v8864 = vadd.bf16 %v8795, %v8836
        %v8865 = vadd.bf16 %v8796, %v8843
        %v8866 = vadd.bf16 %v8797, %v8836
        %v8867 = vadd.bf16 %v8798, %v8843
        %v8868 = vadd.bf16 %v8799, %v8836
        %v8869 = vadd.bf16 %v8800, %v8843
        %v8870 = vadd.bf16 %v8801, %v8836
        %v8871 = vadd.bf16 %v8802, %v8843
        %v8872 = vadd.bf16 %v8803, %v8836
        %v8873 = vadd.bf16 %v8804, %v8843
        %v8874 = vadd.bf16 %v8805, %v8836
        %v8875 = vadd.bf16 %v8806, %v8843
        %v8876 = vmax.bf16 %v8844, 0
        %v8877 = vmax.bf16 %v8845, 0
        %v8878 = vmax.bf16 %v8846, 0
        %v8879 = vmax.bf16 %v8847, 0
        %v8880 = vmax.bf16 %v8848, 0
        %v8881 = vmax.bf16 %v8849, 0
        %v8882 = vmax.bf16 %v8850, 0
        %v8883 = vmax.bf16 %v8851, 0
        %v8884 = vmax.bf16 %v8852, 0
        %v8885 = vmax.bf16 %v8853, 0
        %v8886 = vmax.bf16 %v8854, 0
        %v8887 = vmax.bf16 %v8855, 0
        %v8888 = vmax.bf16 %v8856, 0
        %v8889 = vmax.bf16 %v8857, 0
        %v8890 = vmax.bf16 %v8858, 0
        %v8891 = vmax.bf16 %v8859, 0
        %v8892 = vmax.bf16 %v8860, 0
        %v8893 = vmax.bf16 %v8861, 0
        %v8894 = vmax.bf16 %v8862, 0
        %v8895 = vmax.bf16 %v8863, 0
        %v8896 = vmax.bf16 %v8864, 0
        %v8897 = vmax.bf16 %v8865, 0
        %v8898 = vmax.bf16 %v8866, 0
        %v8899 = vmax.bf16 %v8867, 0
        %v8900 = vmax.bf16 %v8868, 0
        %v8901 = vmax.bf16 %v8869, 0
        %v8902 = vmax.bf16 %v8870, 0
        %v8903 = vmax.bf16 %v8871, 0
        %v8904 = vmax.bf16 %v8872, 0
        %v8905 = vmax.bf16 %v8873, 0
        %v8906 = vmax.bf16 %v8874, 0
        %v8907 = vmax.bf16 %v8875, 0
        %v8908 = vld [vmem:[#allocation10] sm:$0xf]
        %v8909 = vld [vmem:[#allocation10 + $0x4] sm:$0xf]
        %v8910 = vld [vmem:[#allocation10 + $0x8] sm:$0xf]
        %v8911 = vld [vmem:[#allocation10 + $0xc] sm:$0xf]
        %v8912 = vld [vmem:[#allocation10 + $0x10] sm:$0xf]
        %v8913 = vld [vmem:[#allocation10 + $0x14] sm:$0xf]
        %v8914 = vld [vmem:[#allocation10 + $0x18] sm:$0xf]
        %v8915 = vld [vmem:[#allocation10 + $0x1c] sm:$0xf]
        %v8916 = vld [vmem:[#allocation10 + $0x20] sm:$0xf]
        %v8917 = vld [vmem:[#allocation10 + $0x24] sm:$0xf]
        %v8918 = vld [vmem:[#allocation10 + $0x28] sm:$0xf]
        %v8919 = vld [vmem:[#allocation10 + $0x2c] sm:$0xf]
        %v8920 = vld [vmem:[#allocation10 + $0x30] sm:$0xf]
        %v8921 = vld [vmem:[#allocation10 + $0x34] sm:$0xf]
        %v8922 = vld [vmem:[#allocation10 + $0x38] sm:$0xf]
        %v8923 = vld [vmem:[#allocation10 + $0x3c] sm:$0xf]
        %v8924 = vld [vmem:[#allocation10 + $0x40] sm:$0xf]
        %v8925 = vld [vmem:[#allocation10 + $0x44] sm:$0xf]
        %v8926 = vld [vmem:[#allocation10 + $0x48] sm:$0xf]
        %v8927 = vld [vmem:[#allocation10 + $0x4c] sm:$0xf]
        %v8928 = vld [vmem:[#allocation10 + $0x50] sm:$0xf]
        %v8929 = vld [vmem:[#allocation10 + $0x54] sm:$0xf]
        %v8930 = vld [vmem:[#allocation10 + $0x58] sm:$0xf]
        %v8931 = vld [vmem:[#allocation10 + $0x5c] sm:$0xf]
        %v8932 = vld [vmem:[#allocation10 + $0x60] sm:$0xf]
        %v8933 = vld [vmem:[#allocation10 + $0x64] sm:$0xf]
        %v8934 = vld [vmem:[#allocation10 + $0x68] sm:$0xf]
        %v8935 = vld [vmem:[#allocation10 + $0x6c] sm:$0xf]
        %v8936 = vld [vmem:[#allocation10 + $0x70] sm:$0xf]
        %v8937 = vld [vmem:[#allocation10 + $0x74] sm:$0xf]
        %v8938 = vld [vmem:[#allocation10 + $0x78] sm:$0xf]
        %v8939 = vld [vmem:[#allocation10 + $0x7c] sm:$0xf]
        %v8940 = vld [vmem:[%s16] sm:$0x1]
        %v8973 = vunpack.c.l.b16 %v8908
        %v8974 = vunpack.c.l.b16 %v8909
        %v8975 = vunpack.c.l.b16 %v8910
        %v8976 = vunpack.c.l.b16 %v8911
        %v8977 = vunpack.c.l.b16 %v8912
        %v8978 = vunpack.c.l.b16 %v8913
        %v8979 = vunpack.c.l.b16 %v8914
        %v8980 = vunpack.c.l.b16 %v8915
        %v8981 = vunpack.c.l.b16 %v8916
        %v8982 = vunpack.c.l.b16 %v8917
        %v8983 = vunpack.c.l.b16 %v8918
        %v8984 = vunpack.c.l.b16 %v8919
        %v8985 = vunpack.c.l.b16 %v8920
        %v8986 = vunpack.c.l.b16 %v8921
        %v8987 = vunpack.c.l.b16 %v8922
        %v8988 = vunpack.c.l.b16 %v8923
        %v8989 = vunpack.c.l.b16 %v8924
        %v8990 = vunpack.c.l.b16 %v8925
        %v8991 = vunpack.c.l.b16 %v8926
        %v8992 = vunpack.c.l.b16 %v8927
        %v8993 = vunpack.c.l.b16 %v8928
        %v8994 = vunpack.c.l.b16 %v8929
        %v8995 = vunpack.c.l.b16 %v8930
        %v8996 = vunpack.c.l.b16 %v8931
        %v8997 = vunpack.c.l.b16 %v8932
        %v8998 = vunpack.c.l.b16 %v8933
        %v8999 = vunpack.c.l.b16 %v8934
        %v9000 = vunpack.c.l.b16 %v8935
        %v9001 = vunpack.c.l.b16 %v8936
        %v9002 = vunpack.c.l.b16 %v8937
        %v9003 = vunpack.c.l.b16 %v8938
        %v9004 = vunpack.c.l.b16 %v8939
        %v9005 = vpack.c.b16 %v8974, %v8973
        %v9006 = vpack.c.b16 %v8976, %v8975
        %v9007 = vpack.c.b16 %v8978, %v8977
        %v9008 = vpack.c.b16 %v8980, %v8979
        %v9009 = vpack.c.b16 %v8982, %v8981
        %v9010 = vpack.c.b16 %v8984, %v8983
        %v9011 = vpack.c.b16 %v8986, %v8985
        %v9012 = vpack.c.b16 %v8988, %v8987
        %v9013 = vpack.c.b16 %v8990, %v8989
        %v9014 = vpack.c.b16 %v8992, %v8991
        %v9015 = vpack.c.b16 %v8994, %v8993
        %v9016 = vpack.c.b16 %v8996, %v8995
        %v9017 = vpack.c.b16 %v8998, %v8997
        %v9018 = vpack.c.b16 %v9000, %v8999
        %v9019 = vpack.c.b16 %v9002, %v9001
        %v9020 = vpack.c.b16 %v9004, %v9003
        %9037 = vmatprep.subr.bf16.mxu0 0
        %9038 = vmatpush1.bf16.msra.mxu0 %v9005
        %9039 = vmatprep.subr.bf16.mxu0 0
        %9040 = vmatpush1.bf16.msra.mxu0 %v9006
        %9041 = vmatprep.subr.bf16.mxu0 0
        %9042 = vmatpush1.bf16.msra.mxu0 %v9007
        %9043 = vmatprep.subr.bf16.mxu0 0
        %9044 = vmatpush1.bf16.msra.mxu0 %v9008
        %9045 = vmatprep.subr.bf16.mxu0 0
        %9046 = vmatpush1.bf16.msra.mxu0 %v9009
        %9047 = vmatprep.subr.bf16.mxu0 0
        %9048 = vmatpush1.bf16.msra.mxu0 %v9010
        %9049 = vmatprep.subr.bf16.mxu0 0
        %9050 = vmatpush1.bf16.msra.mxu0 %v9011
        %9051 = vmatprep.subr.bf16.mxu0 0
        %9052 = vmatpush1.bf16.msra.mxu0 %v9012
        %9053 = vmatprep.subr.bf16.mxu0 0
        %9054 = vmatpush1.bf16.msra.mxu0 %v9013
        %9055 = vmatprep.subr.bf16.mxu0 0
        %9056 = vmatpush1.bf16.msra.mxu0 %v9014
        %9057 = vmatprep.subr.bf16.mxu0 0
        %9058 = vmatpush1.bf16.msra.mxu0 %v9015
        %9059 = vmatprep.subr.bf16.mxu0 0
        %9060 = vmatpush1.bf16.msra.mxu0 %v9016
        %9061 = vmatprep.subr.bf16.mxu0 0
        %9062 = vmatpush1.bf16.msra.mxu0 %v9017
        %9063 = vmatprep.subr.bf16.mxu0 0
        %9064 = vmatpush1.bf16.msra.mxu0 %v9018
        %9065 = vmatprep.subr.bf16.mxu0 0
        %9066 = vmatpush1.bf16.msra.mxu0 %v9019
        %9067 = vmatprep.subr.bf16.mxu0 0
        %9068 = vmatpush1.bf16.msra.mxu0 %v9020
        %9069 = vmatprep.mubr.bf16.mxu0 %v8877
        %9070 = vmatmul.mubr.bf16.gmra.mrb[0].mxu0 %v8876
        %v9071 = vpop.f32.mrb[0].mxu0
        %v9072 = vadd.f32 0.0, %v9071
        %v9073 = vpop.f32.mrb[0].mxu0
        %v9074 = vpop.f32.mrb[0].mxu0
        %v9075 = vadd.f32 0.0, %v9074
        %v9076 = vpop.f32.mrb[0].mxu0
        %9077 = vmatprep.mubr.bf16.mxu0 %v8879
        %9078 = vmatmul.mubr.bf16.gmra.mrb[0].mxu0 %v8878
        %v9079 = vpop.f32.mrb[0].mxu0
        %v9080 = vadd.f32 0.0, %v9079
        %v9081 = vpop.f32.mrb[0].mxu0
        %v9082 = vpop.f32.mrb[0].mxu0
        %v9083 = vadd.f32 0.0, %v9082
        %v9084 = vpop.f32.mrb[0].mxu0
        %9085 = vmatprep.mubr.bf16.mxu0 %v8881
        %9086 = vmatmul.mubr.bf16.gmra.mrb[0].mxu0 %v8880
        %v9087 = vpop.f32.mrb[0].mxu0
        %v9088 = vadd.f32 0.0, %v9087
        %v9089 = vpop.f32.mrb[0].mxu0
        %v9090 = vpop.f32.mrb[0].mxu0
        %v9091 = vadd.f32 0.0, %v9090
        %v9092 = vpop.f32.mrb[0].mxu0
        %9093 = vmatprep.mubr.bf16.mxu0 %v8883
        %9094 = vmatmul.mubr.bf16.gmra.mrb[0].mxu0 %v8882
        %v9095 = vpop.f32.mrb[0].mxu0
        %v9096 = vadd.f32 0.0, %v9095
        %v9097 = vpop.f32.mrb[0].mxu0
        %v9098 = vpop.f32.mrb[0].mxu0
        %v9099 = vadd.f32 0.0, %v9098
        %v9100 = vpop.f32.mrb[0].mxu0
        %9101 = vmatprep.mubr.bf16.mxu0 %v8885
        %9102 = vmatmul.mubr.bf16.gmra.mrb[0].mxu0 %v8884
        %v9103 = vpop.f32.mrb[0].mxu0
        %v9104 = vadd.f32 0.0, %v9103
        %v9105 = vpop.f32.mrb[0].mxu0
        %v9106 = vpop.f32.mrb[0].mxu0
        %v9107 = vadd.f32 0.0, %v9106
        %v9108 = vpop.f32.mrb[0].mxu0
        %9109 = vmatprep.mubr.bf16.mxu0 %v8887
        %9110 = vmatmul.mubr.bf16.gmra.mrb[0].mxu0 %v8886
        %v9111 = vpop.f32.mrb[0].mxu0
        %v9112 = vadd.f32 0.0, %v9111
        %v9113 = vpop.f32.mrb[0].mxu0
        %v9114 = vpop.f32.mrb[0].mxu0
        %v9115 = vadd.f32 0.0, %v9114
        %v9116 = vpop.f32.mrb[0].mxu0
        %9117 = vmatprep.mubr.bf16.mxu0 %v8889
        %9118 = vmatmul.mubr.bf16.gmra.mrb[0].mxu0 %v8888
        %v9119 = vpop.f32.mrb[0].mxu0
        %v9120 = vadd.f32 0.0, %v9119
        %v9121 = vpop.f32.mrb[0].mxu0
        %v9122 = vpop.f32.mrb[0].mxu0
        %v9123 = vadd.f32 0.0, %v9122
        %v9124 = vpop.f32.mrb[0].mxu0
        %9125 = vmatprep.mubr.bf16.mxu0 %v8891
        %9126 = vmatmul.mubr.bf16.gmra.mrb[0].mxu0 %v8890
        %v9127 = vpop.f32.mrb[0].mxu0
        %v9128 = vadd.f32 0.0, %v9127
        %v9129 = vpop.f32.mrb[0].mxu0
        %v9130 = vpop.f32.mrb[0].mxu0
        %v9131 = vadd.f32 0.0, %v9130
        %v9132 = vpop.f32.mrb[0].mxu0
        %9133 = vmatprep.mubr.bf16.mxu0 %v8893
        %9134 = vmatmul.mubr.bf16.gmra.mrb[0].mxu0 %v8892
        %v9135 = vpop.f32.mrb[0].mxu0
        %v9136 = vadd.f32 0.0, %v9135
        %v9137 = vpop.f32.mrb[0].mxu0
        %v9138 = vpop.f32.mrb[0].mxu0
        %v9139 = vadd.f32 0.0, %v9138
        %v9140 = vpop.f32.mrb[0].mxu0
        %9141 = vmatprep.mubr.bf16.mxu0 %v8895
        %9142 = vmatmul.mubr.bf16.gmra.mrb[0].mxu0 %v8894
        %v9143 = vpop.f32.mrb[0].mxu0
        %v9144 = vadd.f32 0.0, %v9143
        %v9145 = vpop.f32.mrb[0].mxu0
        %v9146 = vpop.f32.mrb[0].mxu0
        %v9147 = vadd.f32 0.0, %v9146
        %v9148 = vpop.f32.mrb[0].mxu0
        %9149 = vmatprep.mubr.bf16.mxu0 %v8897
        %9150 = vmatmul.mubr.bf16.gmra.mrb[0].mxu0 %v8896
        %v9151 = vpop.f32.mrb[0].mxu0
        %v9152 = vadd.f32 0.0, %v9151
        %v9153 = vpop.f32.mrb[0].mxu0
        %v9154 = vpop.f32.mrb[0].mxu0
        %v9155 = vadd.f32 0.0, %v9154
        %v9156 = vpop.f32.mrb[0].mxu0
        %9157 = vmatprep.mubr.bf16.mxu0 %v8899
        %9158 = vmatmul.mubr.bf16.gmra.mrb[0].mxu0 %v8898
        %v9159 = vpop.f32.mrb[0].mxu0
        %v9160 = vadd.f32 0.0, %v9159
        %v9161 = vpop.f32.mrb[0].mxu0
        %v9162 = vpop.f32.mrb[0].mxu0
        %v9163 = vadd.f32 0.0, %v9162
        %v9164 = vpop.f32.mrb[0].mxu0
        %9165 = vmatprep.mubr.bf16.mxu0 %v8901
        %9166 = vmatmul.mubr.bf16.gmra.mrb[0].mxu0 %v8900
        %v9167 = vpop.f32.mrb[0].mxu0
        %v9168 = vadd.f32 0.0, %v9167
        %v9169 = vpop.f32.mrb[0].mxu0
        %v9170 = vpop.f32.mrb[0].mxu0
        %v9171 = vadd.f32 0.0, %v9170
        %v9172 = vpop.f32.mrb[0].mxu0
        %9173 = vmatprep.mubr.bf16.mxu0 %v8903
        %9174 = vmatmul.mubr.bf16.gmra.mrb[0].mxu0 %v8902
        %v9175 = vpop.f32.mrb[0].mxu0
        %v9176 = vadd.f32 0.0, %v9175
        %v9177 = vpop.f32.mrb[0].mxu0
        %v9178 = vpop.f32.mrb[0].mxu0
        %v9179 = vadd.f32 0.0, %v9178
        %v9180 = vpop.f32.mrb[0].mxu0
        %9181 = vmatprep.mubr.bf16.mxu0 %v8905
        %9182 = vmatmul.mubr.bf16.gmra.mrb[0].mxu0 %v8904
        %v9183 = vpop.f32.mrb[0].mxu0
        %v9184 = vadd.f32 0.0, %v9183
        %v9185 = vpop.f32.mrb[0].mxu0
        %v9186 = vpop.f32.mrb[0].mxu0
        %v9187 = vadd.f32 0.0, %v9186
        %v9188 = vpop.f32.mrb[0].mxu0
        %9189 = vmatprep.mubr.bf16.mxu0 %v8907
        %9190 = vmatmul.mubr.bf16.gmra.mrb[0].mxu0 %v8906
        %v9191 = vpop.f32.mrb[0].mxu0
        %v9192 = vadd.f32 0.0, %v9191
        %v9193 = vpop.f32.mrb[0].mxu0
        %v9194 = vpop.f32.mrb[0].mxu0
        %v9195 = vadd.f32 0.0, %v9194
        %v9196 = vpop.f32.mrb[0].mxu0
        %9197 = vdwg.mxu0
        %v9198 = vpack.c.bf16 %v9075, %v9072
        %v9199 = vpack.c.bf16 %v9083, %v9080
        %v9200 = vpack.c.bf16 %v9091, %v9088
        %v9201 = vpack.c.bf16 %v9099, %v9096
        %v9202 = vpack.c.bf16 %v9107, %v9104
        %v9203 = vpack.c.bf16 %v9115, %v9112
        %v9204 = vpack.c.bf16 %v9123, %v9120
        %v9205 = vpack.c.bf16 %v9131, %v9128
        %v9206 = vpack.c.bf16 %v9139, %v9136
        %v9207 = vpack.c.bf16 %v9147, %v9144
        %v9208 = vpack.c.bf16 %v9155, %v9152
        %v9209 = vpack.c.bf16 %v9163, %v9160
        %v9210 = vpack.c.bf16 %v9171, %v9168
        %v9211 = vpack.c.bf16 %v9179, %v9176
        %v9212 = vpack.c.bf16 %v9187, %v9184
        %v9213 = vpack.c.bf16 %v9195, %v9192
        %v9215 = vpack.i.b16 %v8940, %v8940
        %v9217 = vlaneseq
        %v9218 = vshrl.u32 %v9217, 7
        %v9219 = vsub.s32 0, %v9218
        %v9220 = vrot.slane %v9215, %v9219
        %v9221 = vadd.bf16 %v9198, %v9220
        %v9222 = vadd.bf16 %v9199, %v9220
        %v9223 = vadd.bf16 %v9200, %v9220
        %v9224 = vadd.bf16 %v9201, %v9220
        %v9225 = vadd.bf16 %v9202, %v9220
        %v9226 = vadd.bf16 %v9203, %v9220
        %v9227 = vadd.bf16 %v9204, %v9220
        %v9228 = vadd.bf16 %v9205, %v9220
        %v9229 = vadd.bf16 %v9206, %v9220
        %v9230 = vadd.bf16 %v9207, %v9220
        %v9231 = vadd.bf16 %v9208, %v9220
        %v9232 = vadd.bf16 %v9209, %v9220
        %v9233 = vadd.bf16 %v9210, %v9220
        %v9234 = vadd.bf16 %v9211, %v9220
        %v9235 = vadd.bf16 %v9212, %v9220
        %v9236 = vadd.bf16 %v9213, %v9220
        %v9237 = vmax.bf16 %v9221, 0
        %v9238 = vmax.bf16 %v9222, 0
        %v9239 = vmax.bf16 %v9223, 0
        %v9240 = vmax.bf16 %v9224, 0
        %v9241 = vmax.bf16 %v9225, 0
        %v9242 = vmax.bf16 %v9226, 0
        %v9243 = vmax.bf16 %v9227, 0
        %v9244 = vmax.bf16 %v9228, 0
        %v9245 = vmax.bf16 %v9229, 0
        %v9246 = vmax.bf16 %v9230, 0
        %v9247 = vmax.bf16 %v9231, 0
        %v9248 = vmax.bf16 %v9232, 0
        %v9249 = vmax.bf16 %v9233, 0
        %v9250 = vmax.bf16 %v9234, 0
        %v9251 = vmax.bf16 %v9235, 0
        %v9252 = vmax.bf16 %v9236, 0
        %v9253 = vld [vmem:[%s17] sm:$0xf]
        %v9254 = vld [vmem:[%s17 + $0x4] sm:$0xf]
        %v9255 = vld [vmem:[%s17 + $0x8] sm:$0xf]
        %v9256 = vld [vmem:[%s17 + $0xc] sm:$0xf]
        %v9257 = vld [vmem:[%s17 + $0x10] sm:$0xf]
        %v9258 = vld [vmem:[%s17 + $0x14] sm:$0xf]
        %v9259 = vld [vmem:[%s17 + $0x18] sm:$0xf]
        %v9260 = vld [vmem:[%s17 + $0x1c] sm:$0xf]
        %v9261 = vld [vmem:[%s17 + $0x20] sm:$0xf]
        %v9262 = vld [vmem:[%s17 + $0x24] sm:$0xf]
        %v9263 = vld [vmem:[%s17 + $0x28] sm:$0xf]
        %v9264 = vld [vmem:[%s17 + $0x2c] sm:$0xf]
        %v9265 = vld [vmem:[%s17 + $0x30] sm:$0xf]
        %v9266 = vld [vmem:[%s17 + $0x34] sm:$0xf]
        %v9267 = vld [vmem:[%s17 + $0x38] sm:$0xf]
        %v9268 = vld [vmem:[%s17 + $0x3c] sm:$0xf]
        %v9269 = vld [vmem:[%s18] sm:$0x1]
        %v9271 = vlaneseq
        %v9272 = vshrl.u32 %v9271, 7
        %v9273 = vsub.s32 0, %v9272
        %v9274 = vrot.slane %v9269, %v9273
        %v9292 = vunpack.c.l.b16 %v9253
        %v9293 = vunpack.c.l.b16 %v9254
        %v9294 = vunpack.c.l.b16 %v9255
        %v9295 = vunpack.c.l.b16 %v9256
        %v9296 = vunpack.c.l.b16 %v9257
        %v9297 = vunpack.c.l.b16 %v9258
        %v9298 = vunpack.c.l.b16 %v9259
        %v9299 = vunpack.c.l.b16 %v9260
        %v9300 = vunpack.c.l.b16 %v9261
        %v9301 = vunpack.c.l.b16 %v9262
        %v9302 = vunpack.c.l.b16 %v9263
        %v9303 = vunpack.c.l.b16 %v9264
        %v9304 = vunpack.c.l.b16 %v9265
        %v9305 = vunpack.c.l.b16 %v9266
        %v9306 = vunpack.c.l.b16 %v9267
        %v9307 = vunpack.c.l.b16 %v9268
        %v9308 = vpack.c.b16 %v9293, %v9292
        %v9309 = vpack.c.b16 %v9295, %v9294
        %v9310 = vpack.c.b16 %v9297, %v9296
        %v9311 = vpack.c.b16 %v9299, %v9298
        %v9312 = vpack.c.b16 %v9301, %v9300
        %v9313 = vpack.c.b16 %v9303, %v9302
        %v9314 = vpack.c.b16 %v9305, %v9304
        %v9315 = vpack.c.b16 %v9307, %v9306
        %9324 = vmatprep.subr.bf16.mxu0 0
        %9325 = vmatpush1.bf16.msra.mxu0 %v9308
        %9326 = vmatprep.subr.bf16.mxu0 0
        %9327 = vmatpush1.bf16.msra.mxu0 %v9309
        %9328 = vmatprep.subr.bf16.mxu0 0
        %9329 = vmatpush1.bf16.msra.mxu0 %v9310
        %9330 = vmatprep.subr.bf16.mxu0 0
        %9331 = vmatpush1.bf16.msra.mxu0 %v9311
        %9332 = vmatprep.subr.bf16.mxu0 0
        %9333 = vmatpush1.bf16.msra.mxu0 %v9312
        %9334 = vmatprep.subr.bf16.mxu0 0
        %9335 = vmatpush1.bf16.msra.mxu0 %v9313
        %9336 = vmatprep.subr.bf16.mxu0 0
        %9337 = vmatpush1.bf16.msra.mxu0 %v9314
        %9338 = vmatprep.subr.bf16.mxu0 0
        %9339 = vmatpush1.bf16.msra.mxu0 %v9315
        %9340 = vmatprep.subr.bf16.mxu0 0
        %9341 = vmatpush1.bf16.msra.mxu0 0
        %9342 = vmatprep.subr.bf16.mxu0 0
        %9343 = vmatpush1.bf16.msra.mxu0 0
        %9344 = vmatprep.subr.bf16.mxu0 0
        %9345 = vmatpush1.bf16.msra.mxu0 0
        %9346 = vmatprep.subr.bf16.mxu0 0
        %9347 = vmatpush1.bf16.msra.mxu0 0
        %9348 = vmatprep.subr.bf16.mxu0 0
        %9349 = vmatpush1.bf16.msra.mxu0 0
        %9350 = vmatprep.subr.bf16.mxu0 0
        %9351 = vmatpush1.bf16.msra.mxu0 0
        %9352 = vmatprep.subr.bf16.mxu0 0
        %9353 = vmatpush1.bf16.msra.mxu0 0
        %9354 = vmatprep.subr.bf16.mxu0 0
        %9355 = vmatpush1.bf16.msra.mxu0 0
        %9356 = vmatprep.mubr.bf16.mxu0 0
        %9357 = vmatmul.mubr.bf16.gmra.mrb[0].mxu0 %v9237
        %v9358 = vpop.f32.mrb[0].mxu0
        %v9359 = vadd.f32 %v9274, %v9358
        %v9360 = vpop.f32.mrb[0].mxu0
        %v9361 = vpop.f32.mrb[0].mxu0
        %v9362 = vadd.f32 %v9274, %v9361
        %v9363 = vpop.f32.mrb[0].mxu0
        %9364 = vmatprep.mubr.bf16.mxu0 0
        %9365 = vmatmul.mubr.bf16.gmra.mrb[0].mxu0 %v9238
        %v9366 = vpop.f32.mrb[0].mxu0
        %v9367 = vadd.f32 %v9274, %v9366
        %v9368 = vpop.f32.mrb[0].mxu0
        %v9369 = vpop.f32.mrb[0].mxu0
        %v9370 = vadd.f32 %v9274, %v9369
        %v9371 = vpop.f32.mrb[0].mxu0
        %9372 = vmatprep.mubr.bf16.mxu0 0
        %9373 = vmatmul.mubr.bf16.gmra.mrb[0].mxu0 %v9239
        %v9374 = vpop.f32.mrb[0].mxu0
        %v9375 = vadd.f32 %v9274, %v9374
        %v9376 = vpop.f32.mrb[0].mxu0
        %v9377 = vpop.f32.mrb[0].mxu0
        %v9378 = vadd.f32 %v9274, %v9377
        %v9379 = vpop.f32.mrb[0].mxu0
        %9380 = vmatprep.mubr.bf16.mxu0 0
        %9381 = vmatmul.mubr.bf16.gmra.mrb[0].mxu0 %v9240
        %v9382 = vpop.f32.mrb[0].mxu0
        %v9383 = vadd.f32 %v9274, %v9382
        %v9384 = vpop.f32.mrb[0].mxu0
        %v9385 = vpop.f32.mrb[0].mxu0
        %v9386 = vadd.f32 %v9274, %v9385
        %v9387 = vpop.f32.mrb[0].mxu0
        %9388 = vmatprep.mubr.bf16.mxu0 0
        %9389 = vmatmul.mubr.bf16.gmra.mrb[0].mxu0 %v9241
        %v9390 = vpop.f32.mrb[0].mxu0
        %v9391 = vadd.f32 %v9274, %v9390
        %v9392 = vpop.f32.mrb[0].mxu0
        %v9393 = vpop.f32.mrb[0].mxu0
        %v9394 = vadd.f32 %v9274, %v9393
        %v9395 = vpop.f32.mrb[0].mxu0
        %9396 = vmatprep.mubr.bf16.mxu0 0
        %9397 = vmatmul.mubr.bf16.gmra.mrb[0].mxu0 %v9242
        %v9398 = vpop.f32.mrb[0].mxu0
        %v9399 = vadd.f32 %v9274, %v9398
        %v9400 = vpop.f32.mrb[0].mxu0
        %v9401 = vpop.f32.mrb[0].mxu0
        %v9402 = vadd.f32 %v9274, %v9401
        %v9403 = vpop.f32.mrb[0].mxu0
        %9404 = vmatprep.mubr.bf16.mxu0 0
        %9405 = vmatmul.mubr.bf16.gmra.mrb[0].mxu0 %v9243
        %v9406 = vpop.f32.mrb[0].mxu0
        %v9407 = vadd.f32 %v9274, %v9406
        %v9408 = vpop.f32.mrb[0].mxu0
        %v9409 = vpop.f32.mrb[0].mxu0
        %v9410 = vadd.f32 %v9274, %v9409
        %v9411 = vpop.f32.mrb[0].mxu0
        %9412 = vmatprep.mubr.bf16.mxu0 0
        %9413 = vmatmul.mubr.bf16.gmra.mrb[0].mxu0 %v9244
        %v9414 = vpop.f32.mrb[0].mxu0
        %v9415 = vadd.f32 %v9274, %v9414
        %v9416 = vpop.f32.mrb[0].mxu0
        %v9417 = vpop.f32.mrb[0].mxu0
        %v9418 = vadd.f32 %v9274, %v9417
        %v9419 = vpop.f32.mrb[0].mxu0
        %9420 = vmatprep.mubr.bf16.mxu0 0
        %9421 = vmatmul.mubr.bf16.gmra.mrb[0].mxu0 %v9245
        %v9422 = vpop.f32.mrb[0].mxu0
        %v9423 = vadd.f32 %v9274, %v9422
        %v9424 = vpop.f32.mrb[0].mxu0
        %v9425 = vpop.f32.mrb[0].mxu0
        %v9426 = vadd.f32 %v9274, %v9425
        %v9427 = vpop.f32.mrb[0].mxu0
        %9428 = vmatprep.mubr.bf16.mxu0 0
        %9429 = vmatmul.mubr.bf16.gmra.mrb[0].mxu0 %v9246
        %v9430 = vpop.f32.mrb[0].mxu0
        %v9431 = vadd.f32 %v9274, %v9430
        %v9432 = vpop.f32.mrb[0].mxu0
        %v9433 = vpop.f32.mrb[0].mxu0
        %v9434 = vadd.f32 %v9274, %v9433
        %v9435 = vpop.f32.mrb[0].mxu0
        %9436 = vmatprep.mubr.bf16.mxu0 0
        %9437 = vmatmul.mubr.bf16.gmra.mrb[0].mxu0 %v9247
        %v9438 = vpop.f32.mrb[0].mxu0
        %v9439 = vadd.f32 %v9274, %v9438
        %v9440 = vpop.f32.mrb[0].mxu0
        %v9441 = vpop.f32.mrb[0].mxu0
        %v9442 = vadd.f32 %v9274, %v9441
        %v9443 = vpop.f32.mrb[0].mxu0
        %9444 = vmatprep.mubr.bf16.mxu0 0
        %9445 = vmatmul.mubr.bf16.gmra.mrb[0].mxu0 %v9248
        %v9446 = vpop.f32.mrb[0].mxu0
        %v9447 = vadd.f32 %v9274, %v9446
        %v9448 = vpop.f32.mrb[0].mxu0
        %v9449 = vpop.f32.mrb[0].mxu0
        %v9450 = vadd.f32 %v9274, %v9449
        %v9451 = vpop.f32.mrb[0].mxu0
        %9452 = vmatprep.mubr.bf16.mxu0 0
        %9453 = vmatmul.mubr.bf16.gmra.mrb[0].mxu0 %v9249
        %v9454 = vpop.f32.mrb[0].mxu0
        %v9455 = vadd.f32 %v9274, %v9454
        %v9456 = vpop.f32.mrb[0].mxu0
        %v9457 = vpop.f32.mrb[0].mxu0
        %v9458 = vadd.f32 %v9274, %v9457
        %v9459 = vpop.f32.mrb[0].mxu0
        %9460 = vmatprep.mubr.bf16.mxu0 0
        %9461 = vmatmul.mubr.bf16.gmra.mrb[0].mxu0 %v9250
        %v9462 = vpop.f32.mrb[0].mxu0
        %v9463 = vadd.f32 %v9274, %v9462
        %v9464 = vpop.f32.mrb[0].mxu0
        %v9465 = vpop.f32.mrb[0].mxu0
        %v9466 = vadd.f32 %v9274, %v9465
        %v9467 = vpop.f32.mrb[0].mxu0
        %9468 = vmatprep.mubr.bf16.mxu0 0
        %9469 = vmatmul.mubr.bf16.gmra.mrb[0].mxu0 %v9251
        %v9470 = vpop.f32.mrb[0].mxu0
        %v9471 = vadd.f32 %v9274, %v9470
        %v9472 = vpop.f32.mrb[0].mxu0
        %v9473 = vpop.f32.mrb[0].mxu0
        %v9474 = vadd.f32 %v9274, %v9473
        %v9475 = vpop.f32.mrb[0].mxu0
        %9476 = vmatprep.mubr.bf16.mxu0 0
        %9477 = vmatmul.mubr.bf16.gmra.mrb[0].mxu0 %v9252
        %v9478 = vpop.f32.mrb[0].mxu0
        %v9479 = vadd.f32 %v9274, %v9478
        %v9480 = vpop.f32.mrb[0].mxu0
        %v9481 = vpop.f32.mrb[0].mxu0
        %v9482 = vadd.f32 %v9274, %v9481
        %v9483 = vpop.f32.mrb[0].mxu0
        %9484 = vdwg.mxu0
        %v9485 = vxor.u32 %v9359, 2147483648
        %v9486 = vxor.u32 %v9362, 2147483648
        %v9487 = vxor.u32 %v9367, 2147483648
        %v9488 = vxor.u32 %v9370, 2147483648
        %v9489 = vxor.u32 %v9375, 2147483648
        %v9490 = vxor.u32 %v9378, 2147483648
        %v9491 = vxor.u32 %v9383, 2147483648
        %v9492 = vxor.u32 %v9386, 2147483648
        %v9493 = vxor.u32 %v9391, 2147483648
        %v9494 = vxor.u32 %v9394, 2147483648
        %v9495 = vxor.u32 %v9399, 2147483648
        %v9496 = vxor.u32 %v9402, 2147483648
        %v9497 = vxor.u32 %v9407, 2147483648
        %v9498 = vxor.u32 %v9410, 2147483648
        %v9499 = vxor.u32 %v9415, 2147483648
        %v9500 = vxor.u32 %v9418, 2147483648
        %v9501 = vxor.u32 %v9423, 2147483648
        %v9502 = vxor.u32 %v9426, 2147483648
        %v9503 = vxor.u32 %v9431, 2147483648
        %v9504 = vxor.u32 %v9434, 2147483648
        %v9505 = vxor.u32 %v9439, 2147483648
        %v9506 = vxor.u32 %v9442, 2147483648
        %v9507 = vxor.u32 %v9447, 2147483648
        %v9508 = vxor.u32 %v9450, 2147483648
        %v9509 = vxor.u32 %v9455, 2147483648
        %v9510 = vxor.u32 %v9458, 2147483648
        %v9511 = vxor.u32 %v9463, 2147483648
        %v9512 = vxor.u32 %v9466, 2147483648
        %v9513 = vxor.u32 %v9471, 2147483648
        %v9514 = vxor.u32 %v9474, 2147483648
        %v9515 = vxor.u32 %v9479, 2147483648
        %v9516 = vxor.u32 %v9482, 2147483648
        %v9517 = vmul.f32 %v9485, 1.442695
        %v9518 = vpow.pop %v9517
        %v9519 = vmul.f32 %v9486, 1.442695
        %v9520 = vpow.pop %v9519
        %v9521 = vmul.f32 %v9487, 1.442695
        %v9522 = vpow.pop %v9521
        %v9523 = vmul.f32 %v9488, 1.442695
        %v9524 = vpow.pop %v9523
        %v9525 = vmul.f32 %v9489, 1.442695
        %v9526 = vpow.pop %v9525
        %v9527 = vmul.f32 %v9490, 1.442695
        %v9528 = vpow.pop %v9527
        %v9529 = vmul.f32 %v9491, 1.442695
        %v9530 = vpow.pop %v9529
        %v9531 = vmul.f32 %v9492, 1.442695
        %v9532 = vpow.pop %v9531
        %v9533 = vmul.f32 %v9493, 1.442695
        %v9534 = vpow.pop %v9533
        %v9535 = vmul.f32 %v9494, 1.442695
        %v9536 = vpow.pop %v9535
        %v9537 = vmul.f32 %v9495, 1.442695
        %v9538 = vpow.pop %v9537
        %v9539 = vmul.f32 %v9496, 1.442695
        %v9540 = vpow.pop %v9539
        %v9541 = vmul.f32 %v9497, 1.442695
        %v9542 = vpow.pop %v9541
        %v9543 = vmul.f32 %v9498, 1.442695
        %v9544 = vpow.pop %v9543
        %v9545 = vmul.f32 %v9499, 1.442695
        %v9546 = vpow.pop %v9545
        %v9547 = vmul.f32 %v9500, 1.442695
        %v9548 = vpow.pop %v9547
        %v9549 = vmul.f32 %v9501, 1.442695
        %v9550 = vpow.pop %v9549
        %v9551 = vmul.f32 %v9502, 1.442695
        %v9552 = vpow.pop %v9551
        %v9553 = vmul.f32 %v9503, 1.442695
        %v9554 = vpow.pop %v9553
        %v9555 = vmul.f32 %v9504, 1.442695
        %v9556 = vpow.pop %v9555
        %v9557 = vmul.f32 %v9505, 1.442695
        %v9558 = vpow.pop %v9557
        %v9559 = vmul.f32 %v9506, 1.442695
        %v9560 = vpow.pop %v9559
        %v9561 = vmul.f32 %v9507, 1.442695
        %v9562 = vpow.pop %v9561
        %v9563 = vmul.f32 %v9508, 1.442695
        %v9564 = vpow.pop %v9563
        %v9565 = vmul.f32 %v9509, 1.442695
        %v9566 = vpow.pop %v9565
        %v9567 = vmul.f32 %v9510, 1.442695
        %v9568 = vpow.pop %v9567
        %v9569 = vmul.f32 %v9511, 1.442695
        %v9570 = vpow.pop %v9569
        %v9571 = vmul.f32 %v9512, 1.442695
        %v9572 = vpow.pop %v9571
        %v9573 = vmul.f32 %v9513, 1.442695
        %v9574 = vpow.pop %v9573
        %v9575 = vmul.f32 %v9514, 1.442695
        %v9576 = vpow.pop %v9575
        %v9577 = vmul.f32 %v9515, 1.442695
        %v9578 = vpow.pop %v9577
        %v9579 = vmul.f32 %v9516, 1.442695
        %v9580 = vpow.pop %v9579
        %v9581 = vadd.f32 %v9518, 1.0
        %v9582 = vadd.f32 %v9520, 1.0
        %v9583 = vadd.f32 %v9522, 1.0
        %v9584 = vadd.f32 %v9524, 1.0
        %v9585 = vadd.f32 %v9526, 1.0
        %v9586 = vadd.f32 %v9528, 1.0
        %v9587 = vadd.f32 %v9530, 1.0
        %v9588 = vadd.f32 %v9532, 1.0
        %v9589 = vadd.f32 %v9534, 1.0
        %v9590 = vadd.f32 %v9536, 1.0
        %v9591 = vadd.f32 %v9538, 1.0
        %v9592 = vadd.f32 %v9540, 1.0
        %v9593 = vadd.f32 %v9542, 1.0
        %v9594 = vadd.f32 %v9544, 1.0
        %v9595 = vadd.f32 %v9546, 1.0
        %v9596 = vadd.f32 %v9548, 1.0
        %v9597 = vadd.f32 %v9550, 1.0
        %v9598 = vadd.f32 %v9552, 1.0
        %v9599 = vadd.f32 %v9554, 1.0
        %v9600 = vadd.f32 %v9556, 1.0
        %v9601 = vadd.f32 %v9558, 1.0
        %v9602 = vadd.f32 %v9560, 1.0
        %v9603 = vadd.f32 %v9562, 1.0
        %v9604 = vadd.f32 %v9564, 1.0
        %v9605 = vadd.f32 %v9566, 1.0
        %v9606 = vadd.f32 %v9568, 1.0
        %v9607 = vadd.f32 %v9570, 1.0
        %v9608 = vadd.f32 %v9572, 1.0
        %v9609 = vadd.f32 %v9574, 1.0
        %v9610 = vadd.f32 %v9576, 1.0
        %v9611 = vadd.f32 %v9578, 1.0
        %v9612 = vadd.f32 %v9580, 1.0
        %v9613 = vrcp.pop %v9581
        %v9614 = vmul.f32 1.0, %v9613
        %v9615 = vrcp.pop %v9582
        %v9616 = vmul.f32 1.0, %v9615
        %v9617 = vrcp.pop %v9583
        %v9618 = vmul.f32 1.0, %v9617
        %v9619 = vrcp.pop %v9584
        %v9620 = vmul.f32 1.0, %v9619
        %v9621 = vrcp.pop %v9585
        %v9622 = vmul.f32 1.0, %v9621
        %v9623 = vrcp.pop %v9586
        %v9624 = vmul.f32 1.0, %v9623
        %v9625 = vrcp.pop %v9587
        %v9626 = vmul.f32 1.0, %v9625
        %v9627 = vrcp.pop %v9588
        %v9628 = vmul.f32 1.0, %v9627
        %v9629 = vrcp.pop %v9589
        %v9630 = vmul.f32 1.0, %v9629
        %v9631 = vrcp.pop %v9590
        %v9632 = vmul.f32 1.0, %v9631
        %v9633 = vrcp.pop %v9591
        %v9634 = vmul.f32 1.0, %v9633
        %v9635 = vrcp.pop %v9592
        %v9636 = vmul.f32 1.0, %v9635
        %v9637 = vrcp.pop %v9593
        %v9638 = vmul.f32 1.0, %v9637
        %v9639 = vrcp.pop %v9594
        %v9640 = vmul.f32 1.0, %v9639
        %v9641 = vrcp.pop %v9595
        %v9642 = vmul.f32 1.0, %v9641
        %v9643 = vrcp.pop %v9596
        %v9644 = vmul.f32 1.0, %v9643
        %v9645 = vrcp.pop %v9597
        %v9646 = vmul.f32 1.0, %v9645
        %v9647 = vrcp.pop %v9598
        %v9648 = vmul.f32 1.0, %v9647
        %v9649 = vrcp.pop %v9599
        %v9650 = vmul.f32 1.0, %v9649
        %v9651 = vrcp.pop %v9600
        %v9652 = vmul.f32 1.0, %v9651
        %v9653 = vrcp.pop %v9601
        %v9654 = vmul.f32 1.0, %v9653
        %v9655 = vrcp.pop %v9602
        %v9656 = vmul.f32 1.0, %v9655
        %v9657 = vrcp.pop %v9603
        %v9658 = vmul.f32 1.0, %v9657
        %v9659 = vrcp.pop %v9604
        %v9660 = vmul.f32 1.0, %v9659
        %v9661 = vrcp.pop %v9605
        %v9662 = vmul.f32 1.0, %v9661
        %v9663 = vrcp.pop %v9606
        %v9664 = vmul.f32 1.0, %v9663
        %v9665 = vrcp.pop %v9607
        %v9666 = vmul.f32 1.0, %v9665
        %v9667 = vrcp.pop %v9608
        %v9668 = vmul.f32 1.0, %v9667
        %v9669 = vrcp.pop %v9609
        %v9670 = vmul.f32 1.0, %v9669
        %v9671 = vrcp.pop %v9610
        %v9672 = vmul.f32 1.0, %v9671
        %v9673 = vrcp.pop %v9611
        %v9674 = vmul.f32 1.0, %v9673
        %v9675 = vrcp.pop %v9612
        %v9676 = vmul.f32 1.0, %v9675
        %vm9677 = vcmask 23552
        %9678 = vst.msk [vmem:[%s692] sm:$0xff] %vm9677, %v9614
        %9679 = vst.msk [vmem:[%s692 + $0x8] sm:$0xff] %vm9677, %v9616
        %9680 = vst.msk [vmem:[%s692 + $0x10] sm:$0xff] %vm9677, %v9618
        %9681 = vst.msk [vmem:[%s692 + $0x18] sm:$0xff] %vm9677, %v9620
        %9682 = vst.msk [vmem:[%s692 + $0x20] sm:$0xff] %vm9677, %v9622
        %9683 = vst.msk [vmem:[%s692 + $0x28] sm:$0xff] %vm9677, %v9624
        %9684 = vst.msk [vmem:[%s692 + $0x30] sm:$0xff] %vm9677, %v9626
        %9685 = vst.msk [vmem:[%s692 + $0x38] sm:$0xff] %vm9677, %v9628
        %9686 = vst.msk [vmem:[%s692 + $0x40] sm:$0xff] %vm9677, %v9630
        %9687 = vst.msk [vmem:[%s692 + $0x48] sm:$0xff] %vm9677, %v9632
        %9688 = vst.msk [vmem:[%s692 + $0x50] sm:$0xff] %vm9677, %v9634
        %9689 = vst.msk [vmem:[%s692 + $0x58] sm:$0xff] %vm9677, %v9636
        %9690 = vst.msk [vmem:[%s692 + $0x60] sm:$0xff] %vm9677, %v9638
        %9691 = vst.msk [vmem:[%s692 + $0x68] sm:$0xff] %vm9677, %v9640
        %9692 = vst.msk [vmem:[%s692 + $0x70] sm:$0xff] %vm9677, %v9642
        %9693 = vst.msk [vmem:[%s692 + $0x78] sm:$0xff] %vm9677, %v9644
        %9694 = vst.msk [vmem:[%s692 + $0x80] sm:$0xff] %vm9677, %v9646
        %9695 = vst.msk [vmem:[%s692 + $0x88] sm:$0xff] %vm9677, %v9648
        %9696 = vst.msk [vmem:[%s692 + $0x90] sm:$0xff] %vm9677, %v9650
        %9697 = vst.msk [vmem:[%s692 + $0x98] sm:$0xff] %vm9677, %v9652
        %9698 = vst.msk [vmem:[%s692 + $0xa0] sm:$0xff] %vm9677, %v9654
        %9699 = vst.msk [vmem:[%s692 + $0xa8] sm:$0xff] %vm9677, %v9656
        %9700 = vst.msk [vmem:[%s692 + $0xb0] sm:$0xff] %vm9677, %v9658
        %9701 = vst.msk [vmem:[%s692 + $0xb8] sm:$0xff] %vm9677, %v9660
        %9702 = vst.msk [vmem:[%s692 + $0xc0] sm:$0xff] %vm9677, %v9662
        %9703 = vst.msk [vmem:[%s692 + $0xc8] sm:$0xff] %vm9677, %v9664
        %9704 = vst.msk [vmem:[%s692 + $0xd0] sm:$0xff] %vm9677, %v9666
        %9705 = vst.msk [vmem:[%s692 + $0xd8] sm:$0xff] %vm9677, %v9668
        %9706 = vst.msk [vmem:[%s692 + $0xe0] sm:$0xff] %vm9677, %v9670
        %9707 = vst.msk [vmem:[%s692 + $0xe8] sm:$0xff] %vm9677, %v9672
        %9708 = vst.msk [vmem:[%s692 + $0xf0] sm:$0xff] %vm9677, %v9674
        %9709 = vst.msk [vmem:[%s692 + $0xf8] sm:$0xff] %vm9677, %v9676
        %s9710 = smul.u32 32, %s34
        %p9711 = scmp.lt.s32.totalorder %s9710, 63
        %s9712 = scalar_select %p9711, %s9710, 63
        %s9713 = smul.addr %s9712, 8
        %s9714 = scalar_lea.vmem %s19, %s9713
        // Predicated region
        $region121: #{tpu_custom_call.1} parent=95 // pred_check
          %p9715 = pneg %p456
        $region122: #{tpu_custom_call.1} parent=95 // pred_check_branch
          %9717 = sbr.rel (%p9715) target = $region124
        $region123: #{tpu_custom_call.1} parent=95 // pred_region
          %s9718 = smul.u32 32, %s34
        $region124: #{tpu_custom_call.1} parent=95 // pred_fallthru
          _
      $region96: #{tpu_custom_call.1} parent=5 // pred_fallthru
        _
      %p9719 = scmp.le.s32.totalorder 2, %s29
      // Predicated region
      $region125: #{tpu_custom_call.1} parent=5 // pred_check
        %p9720 = pneg %p9719
      $region126: #{tpu_custom_call.1} parent=5 // pred_check_branch
        %9722 = sbr.rel (%p9720) target = $region128
      $region127: #{tpu_custom_call.1} parent=5 // pred_region
        %s9723 = ssub.s32 %s29, 2
        // Predicated region
        $region129: #{tpu_custom_call.1} parent=127 // pred_check
          %p9724 = pneg %p462
        $region130: #{tpu_custom_call.1} parent=127 // pred_check_branch
          %9726 = sbr.rel (%p9724) target = $region132
        $region131: #{tpu_custom_call.1} parent=127 // pred_region
          %s9727 = smul.u32 32, %s35
          %p9728 = scmp.lt.s32.totalorder %s9727, 63
          %s9729 = scalar_select %p9728, %s9727, 63
          %s9730 = smul.addr %s9729, 8
          %s9731 = scalar_lea.vmem %s19, %s9730
        $region132: #{tpu_custom_call.1} parent=127 // pred_fallthru
          _
      $region128: #{tpu_custom_call.1} parent=5 // pred_fallthru
        _
    $region6: #{tpu_custom_call.1} parent=1 // loop_footer
      %s33 = sadd.s32 1, %s29
    $region7: #{tpu_custom_call.1} parent=1 // loop_footer_branch
      %28 = sbr.rel target = $region3
    $region8: #{tpu_custom_call.1} parent=1 // loop_exit
      _
    %9732 = vsyncpa [#allocation3], 1
    %s9733 = scalar_lea.sflag [#allocation3], 1
    %9734 = vsyncpa %s9733, 1
    %9735 = vsyncpa [#allocation5], 1
    %9736 = vsyncpa [#allocation8], 1
    %9737 = vsyncpa [#allocation11], 1

</llo_original>
